<compile_context>
chip_gen: v6e
topology: v6e:2x2x1
jax: 0.10.0
libtpu: 0.0.40
codegen_flags: <defaults>
</compile_context>

<pallas_src>
import functools
import math

import jax
import jax.numpy as jnp
from jax.experimental import pallas as pl
from jax.experimental.pallas import tpu as pltpu

D_MODEL = 768
D_IMG = 2048
D_BOX = 4
HASH_LEN = 16
NUM_CLASSES = 100
OUT_PAD = 128                      # lane-dense packed output width
_ATTN_SCALE = 1.0 / math.sqrt(D_MODEL)


def _test_model_kernel(
    img_ref, box_ref,
    w_img_ref, w_box_ref, b_fused_ref,
    w_qkv_ref, b_qkv_ref,
    w_hash_ref, b_hash_ref,
    w_pack_ref, b_pack_ref,
    out_ref,
    *, tile_b, seq,
):
    # ---- img_downdim (weights pre-scaled by 0.5): bf16 MXU, f32 accumulate.
    x = jnp.dot(img_ref[...], w_img_ref[...],
                preferred_element_type=jnp.float32)               # (tb*N, 768)
    x = x + b_fused_ref[...]                                      # 0.5*(b_img + b_box)

    # ---- box_updim (weights pre-scaled by 0.5): K=4 -> 4 VPU broadcast FMAs
    #      instead of a padded-K MXU pass.
    box = box_ref[...]                                            # (tb*N, 4)
    w_box = w_box_ref[...]                                        # (4, 768)
    for i in range(D_BOX):
        x = x + box[:, i:i + 1] * w_box[i:i + 1, :]
    # x == (img_downdim(img) + box_updim(box)) / 2

    # ---- Fused Q/K/V projection: one (768, 2304) bf16 matmul.
    qkv = jnp.dot(x.astype(jnp.bfloat16), w_qkv_ref[...],
                  preferred_element_type=jnp.float32) + b_qkv_ref[...]
    qkv = qkv.reshape(tile_b, seq, 3 * D_MODEL)                   # tile-aligned split
    q = qkv[..., 0:D_MODEL].astype(jnp.bfloat16)                  # scale folded into Wq
    k = qkv[..., D_MODEL:2 * D_MODEL].astype(jnp.bfloat16)
    v = qkv[..., 2 * D_MODEL:3 * D_MODEL]                         # f32

    # ---- Single-head SDPA with an explicit batch axis (no k transpose, no
    #      cross-batch leakage). bf16 inputs, f32 accumulation on the MXU.
    scores = jnp.einsum('bqd,bkd->bqk', q, k,
                        preferred_element_type=jnp.float32)       # (tb, N, N)
    scores = scores - jnp.max(scores, axis=-1, keepdims=True)
    p = jnp.exp(scores)
    p = p * pl.reciprocal(jnp.sum(p, axis=-1, keepdims=True), approx=True)

    # ---- out.mean(1) folded BEFORE the V matmul: mean_q(P@V) == (mean_q P)@V.
    #      M=1 batched matmuls waste the MXU; do the weighted sum on VPU/XLU.
    p_mean = jnp.mean(p, axis=1)                                  # (tb, N)
    pooled = jnp.sum(p_mean[:, :, None] * v, axis=1)              # (tb, 768) f32

    # ---- hashlayer: Linear(768, 16) + tanh (tiny, keep f32 for accuracy).
    h = jnp.tanh(jnp.dot(pooled, w_hash_ref[...],
                         preferred_element_type=jnp.float32) + b_hash_ref[...])

    # ---- classifier + lane-dense packing fused into one matmul:
    #      packed = h @ [I_16 | W_cls | 0] + [0 | b_cls | 0]   -> (tb, 128)
    out_ref[...] = jnp.dot(h, w_pack_ref[...],
                           preferred_element_type=jnp.float32) + b_pack_ref[...]


def prepare_params(params):
    """One-time weight packing — hoisted out of the per-call forward."""
    (w_box, b_box), (w_img, b_img), (wq, bq), (wk, bk), (wv, bv), \
        (w_hash, b_hash), (w_cls, b_cls) = params

    # Fold the (img + box)/2 averaging into the projection weights & biases.
    w_img_b = (0.5 * w_img).astype(jnp.bfloat16)                  # (2048, 768) bf16
    w_box_h = 0.5 * w_box                                         # (4, 768)    f32
    b_fused = 0.5 * (b_img + b_box)                               # (1, 768)    f32

    # Fold the 1/sqrt(d) attention scale into the Q projection; fuse Q/K/V.
    w_qkv = jnp.concatenate([wq * _ATTN_SCALE, wk, wv],
                            axis=1).astype(jnp.bfloat16)          # (768, 2304) bf16
    b_qkv = jnp.concatenate([bq * _ATTN_SCALE, bk, bv], axis=1)   # (1, 2304)   f32

    # Packed output weights: [identity | classifier | zero pad] -> 128 lanes.
    pad_cols = OUT_PAD - HASH_LEN - NUM_CLASSES
    w_pack = jnp.concatenate(
        [jnp.eye(HASH_LEN, dtype=jnp.float32), w_cls,
         jnp.zeros((HASH_LEN, pad_cols), jnp.float32)], axis=1)   # (16, 128)
    b_pack = jnp.concatenate(
        [jnp.zeros((1, HASH_LEN), jnp.float32), b_cls,
         jnp.zeros((1, pad_cols), jnp.float32)], axis=1)          # (1, 128)

    return (w_img_b, w_box_h, b_fused, w_qkv, b_qkv,
            w_hash, b_hash, w_pack, b_pack)


def _pick_batch_tile(batch, seq, target_tokens=512):
    """Largest sublane-aligned batch tile with ~target_tokens tokens that
    divides the batch evenly; falls back to the full batch (single tile)."""
    cand = min(batch, max(8, (max(1, target_tokens // max(seq, 1)) // 8) * 8))
    while cand >= 8:
        if batch % cand == 0:
            return cand
        cand -= 8
    return batch


def test_model_forward(img, box, prepared):
    B, N, _ = img.shape
    (w_img_b, w_box_h, b_fused, w_qkv, b_qkv,
     w_hash, b_hash, w_pack, b_pack) = prepared

    tb = _pick_batch_tile(B, N)
    num_tiles = B // tb
    tok = tb * N

    # img is the dominant activation input at scale: ship it in bf16.
    img2 = img.astype(jnp.bfloat16).reshape(B * N, D_IMG)
    box2 = box.reshape(B * N, D_BOX).astype(jnp.float32)

    args = (img2, box2, w_img_b, w_box_h, b_fused, w_qkv, b_qkv,
            w_hash, b_hash, w_pack, b_pack)

    def _const(shape):
        # Weight spec: constant index_map -> fetched once, held resident.
        return pl.BlockSpec(shape, lambda i: tuple(0 for _ in shape))

    in_specs = [
        pl.BlockSpec((tok, D_IMG), lambda i: (i, 0)),             # img tile (bf16)
        pl.BlockSpec((tok, D_BOX), lambda i: (i, 0)),             # box tile
        _const((D_IMG, D_MODEL)),                                 # w_img (bf16)
        _const((D_BOX, D_MODEL)),                                 # w_box
        _const((1, D_MODEL)),                                     # b_fused
        _const((D_MODEL, 3 * D_MODEL)),                           # w_qkv (bf16)
        _const((1, 3 * D_MODEL)),                                 # b_qkv
        _const((D_MODEL, HASH_LEN)),                              # w_hash
        _const((1, HASH_LEN)),                                    # b_hash
        _const((HASH_LEN, OUT_PAD)),                              # w_pack
        _const((1, OUT_PAD)),                                     # b_pack
    ]

    packed = pl.pallas_call(
        functools.partial(_test_model_kernel, tile_b=tb, seq=N),
        out_shape=jax.ShapeDtypeStruct((B, OUT_PAD), jnp.float32),
        grid=(num_tiles,),
        in_specs=in_specs,
        out_specs=pl.BlockSpec((tb, OUT_PAD), lambda i: (i, 0)),
        compiler_params=pltpu.CompilerParams(
            dimension_semantics=("parallel",),     # v7x: shard tiles across TCs
            vmem_limit_bytes=48 * 1024 * 1024,     # safe on v7x (64 MiB physical)
        ),
    )(*args)

    out1 = packed[:, :HASH_LEN]
    out2 = packed[:, HASH_LEN:HASH_LEN + NUM_CLASSES]
    return out1, out2


def _init_linear(key, d_in, d_out):
    """Deterministic PyTorch-Linear-style init (uniform +-1/sqrt(d_in))."""
    kw, kb = jax.random.split(key)
    bound = 1.0 / math.sqrt(d_in)
    w = jax.random.uniform(kw, (d_in, d_out), jnp.float32, -bound, bound)
    b = jax.random.uniform(kb, (1, d_out), jnp.float32, -bound, bound)
    return w, b


if __name__ == "__main__":
    key = jax.random.PRNGKey(0)
    keys = jax.random.split(key, 10)

    # Parameters (deterministic synthetic init; shapes dictated by the module).
    params = [
        _init_linear(keys[0], D_BOX, D_MODEL),         # box_updim
        _init_linear(keys[1], D_IMG, D_MODEL),         # img_downdim
        _init_linear(keys[2], D_MODEL, D_MODEL),       # attention Q
        _init_linear(keys[3], D_MODEL, D_MODEL),       # attention K
        _init_linear(keys[4], D_MODEL, D_MODEL),       # attention V
        _init_linear(keys[5], D_MODEL, HASH_LEN),      # hashlayer
        _init_linear(keys[6], HASH_LEN, NUM_CLASSES),  # classifier
    ]

    # One-time weight packing (NOT per forward call).
    prepared = prepare_params(params)
    jax.block_until_ready(prepared)

    # Small example inputs: batch=2, seq (num boxes)=8.
    B, N = 2, 8
    img = jax.random.normal(keys[7], (B, N, D_IMG), jnp.float32)
    box = jax.random.uniform(keys[8], (B, N, D_BOX), jnp.float32)

    out1, out2 = test_model_forward(img, box, prepared)
    jax.block_until_ready((out1, out2))

    assert out1.shape == (B, HASH_LEN) and out2.shape == (B, NUM_CLASSES)
    print("KERNEL_OK")
</pallas_src>

<mosaic_0001>
module attributes {stable_mosaic.version = 11 : i64} {
  func.func @_test_model_kernel(%arg0: i32, %arg1: memref<16x2048xbf16, #tpu.memory_space<vmem>>, %arg2: memref<16x4xf32, #tpu.memory_space<vmem>>, %arg3: memref<2048x768xbf16, #tpu.memory_space<vmem>>, %arg4: memref<4x768xf32, #tpu.memory_space<vmem>>, %arg5: memref<1x768xf32, #tpu.memory_space<vmem>>, %arg6: memref<768x2304xbf16, #tpu.memory_space<vmem>>, %arg7: memref<1x2304xf32, #tpu.memory_space<vmem>>, %arg8: memref<768x16xf32, #tpu.memory_space<vmem>>, %arg9: memref<1x16xf32, #tpu.memory_space<vmem>>, %arg10: memref<16x128xf32, #tpu.memory_space<vmem>>, %arg11: memref<1x128xf32, #tpu.memory_space<vmem>>, %arg12: memref<2x128xf32, #tpu.memory_space<vmem>>) attributes {dimension_semantics = [#tpu.dimension_semantics<parallel>], iteration_bounds = array<i64: 1>, scalar_prefetch = 0 : i64, scratch_operands = 0 : i64, tpu.core_type = #tpu.core_type<tc>, window_params = [{transform_indices = @transform_0, window_bounds = array<i64: 16, 2048>}, {transform_indices = @transform_1, window_bounds = array<i64: 16, 4>}, {pipeline_mode = #tpu.pipeline_mode<synchronous>, transform_indices = @transform_2, window_bounds = array<i64: 2048, 768>}, {pipeline_mode = #tpu.pipeline_mode<synchronous>, transform_indices = @transform_3, window_bounds = array<i64: 4, 768>}, {pipeline_mode = #tpu.pipeline_mode<synchronous>, transform_indices = @transform_4, window_bounds = array<i64: 1, 768>}, {pipeline_mode = #tpu.pipeline_mode<synchronous>, transform_indices = @transform_5, window_bounds = array<i64: 768, 2304>}, {pipeline_mode = #tpu.pipeline_mode<synchronous>, transform_indices = @transform_6, window_bounds = array<i64: 1, 2304>}, {pipeline_mode = #tpu.pipeline_mode<synchronous>, transform_indices = @transform_7, window_bounds = array<i64: 768, 16>}, {pipeline_mode = #tpu.pipeline_mode<synchronous>, transform_indices = @transform_8, window_bounds = array<i64: 1, 16>}, {pipeline_mode = #tpu.pipeline_mode<synchronous>, transform_indices = @transform_9, window_bounds = array<i64: 16, 128>}, {pipeline_mode = #tpu.pipeline_mode<synchronous>, transform_indices = @transform_10, window_bounds = array<i64: 1, 128>}, {transform_indices = @transform_11, window_bounds = array<i64: 2, 128>}]} {
    %c0 = arith.constant 0 : index
    %c0_0 = arith.constant 0 : index
    %0 = vector.load %arg1[%c0, %c0_0] : memref<16x2048xbf16, #tpu.memory_space<vmem>>, vector<16x2048xbf16>
    %c0_1 = arith.constant 0 : index
    %c0_2 = arith.constant 0 : index
    %1 = vector.load %arg3[%c0_1, %c0_2] : memref<2048x768xbf16, #tpu.memory_space<vmem>>, vector<2048x768xbf16>
    %cst = arith.constant dense<0.000000e+00> : vector<16x768xf32>
    %2 = tpu.matmul %0, %1, %cst {dimension_numbers = #tpu.dot_dimension_numbers<[1], [0], [0], [1], [0, 0, 1, 1], [], []>} : vector<16x2048xbf16>, vector<2048x768xbf16>, vector<16x768xf32> -> vector<16x768xf32>
    %c0_3 = arith.constant 0 : index
    %c0_4 = arith.constant 0 : index
    %3 = vector.load %arg5[%c0_3, %c0_4] : memref<1x768xf32, #tpu.memory_space<vmem>>, vector<1x768xf32>
    %4 = vector.broadcast %3 : vector<1x768xf32> to vector<16x768xf32>
    %5 = arith.addf %2, %4 : vector<16x768xf32>
    %c0_5 = arith.constant 0 : index
    %c0_6 = arith.constant 0 : index
    %6 = vector.load %arg2[%c0_5, %c0_6] : memref<16x4xf32, #tpu.memory_space<vmem>>, vector<16x4xf32>
    %c0_7 = arith.constant 0 : index
    %c0_8 = arith.constant 0 : index
    %7 = vector.load %arg4[%c0_7, %c0_8] : memref<4x768xf32, #tpu.memory_space<vmem>>, vector<4x768xf32>
    %8 = vector.extract_strided_slice %6 {offsets = [0, 0], sizes = [16, 1], strides = [1, 1]} : vector<16x4xf32> to vector<16x1xf32>
    %9 = vector.extract_strided_slice %7 {offsets = [0, 0], sizes = [1, 768], strides = [1, 1]} : vector<4x768xf32> to vector<1x768xf32>
    %10 = vector.broadcast %8 : vector<16x1xf32> to vector<16x768xf32>
    %11 = vector.broadcast %9 : vector<1x768xf32> to vector<16x768xf32>
    %12 = arith.mulf %10, %11 : vector<16x768xf32>
    %13 = arith.addf %5, %12 : vector<16x768xf32>
    %14 = vector.extract_strided_slice %6 {offsets = [0, 1], sizes = [16, 1], strides = [1, 1]} : vector<16x4xf32> to vector<16x1xf32>
    %15 = vector.extract_strided_slice %7 {offsets = [1, 0], sizes = [1, 768], strides = [1, 1]} : vector<4x768xf32> to vector<1x768xf32>
    %16 = vector.broadcast %14 : vector<16x1xf32> to vector<16x768xf32>
    %17 = vector.broadcast %15 : vector<1x768xf32> to vector<16x768xf32>
    %18 = arith.mulf %16, %17 : vector<16x768xf32>
    %19 = arith.addf %13, %18 : vector<16x768xf32>
    %20 = vector.extract_strided_slice %6 {offsets = [0, 2], sizes = [16, 1], strides = [1, 1]} : vector<16x4xf32> to vector<16x1xf32>
    %21 = vector.extract_strided_slice %7 {offsets = [2, 0], sizes = [1, 768], strides = [1, 1]} : vector<4x768xf32> to vector<1x768xf32>
    %22 = vector.broadcast %20 : vector<16x1xf32> to vector<16x768xf32>
    %23 = vector.broadcast %21 : vector<1x768xf32> to vector<16x768xf32>
    %24 = arith.mulf %22, %23 : vector<16x768xf32>
    %25 = arith.addf %19, %24 : vector<16x768xf32>
    %26 = vector.extract_strided_slice %6 {offsets = [0, 3], sizes = [16, 1], strides = [1, 1]} : vector<16x4xf32> to vector<16x1xf32>
    %27 = vector.extract_strided_slice %7 {offsets = [3, 0], sizes = [1, 768], strides = [1, 1]} : vector<4x768xf32> to vector<1x768xf32>
    %28 = vector.broadcast %26 : vector<16x1xf32> to vector<16x768xf32>
    %29 = vector.broadcast %27 : vector<1x768xf32> to vector<16x768xf32>
    %30 = arith.mulf %28, %29 : vector<16x768xf32>
    %31 = arith.addf %25, %30 : vector<16x768xf32>
    %32 = arith.truncf %31 : vector<16x768xf32> to vector<16x768xbf16>
    %c0_9 = arith.constant 0 : index
    %c0_10 = arith.constant 0 : index
    %33 = vector.load %arg6[%c0_9, %c0_10] : memref<768x2304xbf16, #tpu.memory_space<vmem>>, vector<768x2304xbf16>
    %cst_11 = arith.constant dense<0.000000e+00> : vector<16x2304xf32>
    %34 = tpu.matmul %32, %33, %cst_11 {dimension_numbers = #tpu.dot_dimension_numbers<[1], [0], [0], [1], [0, 0, 1, 1], [], []>} : vector<16x768xbf16>, vector<768x2304xbf16>, vector<16x2304xf32> -> vector<16x2304xf32>
    %c0_12 = arith.constant 0 : index
    %c0_13 = arith.constant 0 : index
    %35 = vector.load %arg7[%c0_12, %c0_13] : memref<1x2304xf32, #tpu.memory_space<vmem>>, vector<1x2304xf32>
    %36 = vector.broadcast %35 : vector<1x2304xf32> to vector<16x2304xf32>
    %37 = arith.addf %34, %36 : vector<16x2304xf32>
    %38 = vector.shape_cast %37 : vector<16x2304xf32> to vector<2x8x2304xf32>
    %39 = vector.extract_strided_slice %38 {offsets = [0, 0, 0], sizes = [2, 8, 768], strides = [1, 1, 1]} : vector<2x8x2304xf32> to vector<2x8x768xf32>
    %40 = arith.truncf %39 : vector<2x8x768xf32> to vector<2x8x768xbf16>
    %41 = vector.extract_strided_slice %38 {offsets = [0, 0, 768], sizes = [2, 8, 768], strides = [1, 1, 1]} : vector<2x8x2304xf32> to vector<2x8x768xf32>
    %42 = arith.truncf %41 : vector<2x8x768xf32> to vector<2x8x768xbf16>
    %43 = vector.extract_strided_slice %38 {offsets = [0, 0, 1536], sizes = [2, 8, 768], strides = [1, 1, 1]} : vector<2x8x2304xf32> to vector<2x8x768xf32>
    "tpu.trace_start"() <{level = 10 : i32, message = "bqd,bkd->bqk"}> : () -> ()
    %cst_14 = arith.constant dense<0.000000e+00> : vector<2x8x8xf32>
    %44 = tpu.matmul %40, %42, %cst_14 {dimension_numbers = #tpu.dot_dimension_numbers<[2], [2], [1], [1], [0, 0, 0, 1, 1, 1], [0], [0]>} : vector<2x8x768xbf16>, vector<2x8x768xbf16>, vector<2x8x8xf32> -> vector<2x8x8xf32>
    "tpu.trace_stop"() : () -> ()
    %cst_15 = arith.constant dense<0xFF800000> : vector<2x8xf32>
    %45 = vector.multi_reduction <maximumf>, %44, %cst_15 [2] : vector<2x8x8xf32> to vector<2x8xf32>
    %46 = vector.shape_cast %45 : vector<2x8xf32> to vector<2x8x1xf32>
    %47 = vector.broadcast %46 : vector<2x8x1xf32> to vector<2x8x8xf32>
    %48 = arith.subf %44, %47 : vector<2x8x8xf32>
    %49 = math.exp %48 : vector<2x8x8xf32>
    %cst_16 = arith.constant dense<0.000000e+00> : vector<2x8xf32>
    %50 = vector.multi_reduction <add>, %49, %cst_16 [2] : vector<2x8x8xf32> to vector<2x8xf32>
    %51 = vector.shape_cast %50 : vector<2x8xf32> to vector<2x8x1xf32>
    %52 = tpu.reciprocal %51 {approx = true} : vector<2x8x1xf32> -> vector<2x8x1xf32>
    %53 = vector.broadcast %52 : vector<2x8x1xf32> to vector<2x8x8xf32>
    %54 = arith.mulf %49, %53 : vector<2x8x8xf32>
    %cst_17 = arith.constant dense<0.000000e+00> : vector<2x8xf32>
    %55 = vector.multi_reduction <add>, %54, %cst_17 [1] : vector<2x8x8xf32> to vector<2x8xf32>
    %cst_18 = arith.constant 8.000000e+00 : f32
    %56 = vector.broadcast %cst_18 : f32 to vector<2x8xf32>
    %57 = arith.divf %55, %56 : vector<2x8xf32>
    %58 = vector.shape_cast %57 : vector<2x8xf32> to vector<2x8x1xf32>
    %59 = vector.broadcast %58 : vector<2x8x1xf32> to vector<2x8x768xf32>
    %60 = arith.mulf %59, %43 : vector<2x8x768xf32>
    %cst_19 = arith.constant dense<0.000000e+00> : vector<2x768xf32>
    %61 = vector.multi_reduction <add>, %60, %cst_19 [1] : vector<2x8x768xf32> to vector<2x768xf32>
    %c0_20 = arith.constant 0 : index
    %c0_21 = arith.constant 0 : index
    %62 = vector.load %arg8[%c0_20, %c0_21] : memref<768x16xf32, #tpu.memory_space<vmem>>, vector<768x16xf32>
    %cst_22 = arith.constant dense<0.000000e+00> : vector<2x16xf32>
    %63 = tpu.matmul %61, %62, %cst_22 {dimension_numbers = #tpu.dot_dimension_numbers<[1], [0], [0], [1], [0, 0, 1, 1], [], []>} : vector<2x768xf32>, vector<768x16xf32>, vector<2x16xf32> -> vector<2x16xf32>
    %c0_23 = arith.constant 0 : index
    %c0_24 = arith.constant 0 : index
    %64 = vector.load %arg9[%c0_23, %c0_24] : memref<1x16xf32, #tpu.memory_space<vmem>>, vector<1x16xf32>
    %65 = vector.broadcast %64 : vector<1x16xf32> to vector<2x16xf32>
    %66 = arith.addf %63, %65 : vector<2x16xf32>
    %67 = math.tanh %66 : vector<2x16xf32>
    %c0_25 = arith.constant 0 : index
    %c0_26 = arith.constant 0 : index
    %68 = vector.load %arg10[%c0_25, %c0_26] : memref<16x128xf32, #tpu.memory_space<vmem>>, vector<16x128xf32>
    %cst_27 = arith.constant dense<0.000000e+00> : vector<2x128xf32>
    %69 = tpu.matmul %67, %68, %cst_27 {dimension_numbers = #tpu.dot_dimension_numbers<[1], [0], [0], [1], [0, 0, 1, 1], [], []>} : vector<2x16xf32>, vector<16x128xf32>, vector<2x128xf32> -> vector<2x128xf32>
    %c0_28 = arith.constant 0 : index
    %c0_29 = arith.constant 0 : index
    %70 = vector.load %arg11[%c0_28, %c0_29] : memref<1x128xf32, #tpu.memory_space<vmem>>, vector<1x128xf32>
    %71 = vector.broadcast %70 : vector<1x128xf32> to vector<2x128xf32>
    %72 = arith.addf %69, %71 : vector<2x128xf32>
    %c0_30 = arith.constant 0 : index
    %c0_31 = arith.constant 0 : index
    %73 = vector.load %arg12[%c0_30, %c0_31] : memref<2x128xf32, #tpu.memory_space<vmem>>, vector<2x128xf32>
    tpu.vector_store %arg12[%c0_30, %c0_31], %72 {strides = array<i32>} : memref<2x128xf32, #tpu.memory_space<vmem>>, vector<2x128xf32>,
    return
  }
  func.func @transform_0(%arg0: i32) -> (i32, i32) {
    %c0_i32 = arith.constant 0 : i32
    %c0_i32_0 = arith.constant 0 : i32
    return %arg0, %c0_i32 : i32, i32
  }
  func.func @transform_1(%arg0: i32) -> (i32, i32) {
    %c0_i32 = arith.constant 0 : i32
    %c0_i32_0 = arith.constant 0 : i32
    return %arg0, %c0_i32 : i32, i32
  }
  func.func @transform_2(%arg0: i32) -> (i32, i32) {
    %c0_i32 = arith.constant 0 : i32
    %c0_i32_0 = arith.constant 0 : i32
    %c0_i32_1 = arith.constant 0 : i32
    return %c0_i32, %c0_i32_0 : i32, i32
  }
  func.func @transform_3(%arg0: i32) -> (i32, i32) {
    %c0_i32 = arith.constant 0 : i32
    %c0_i32_0 = arith.constant 0 : i32
    %c0_i32_1 = arith.constant 0 : i32
    return %c0_i32, %c0_i32_0 : i32, i32
  }
  func.func @transform_4(%arg0: i32) -> (i32, i32) {
    %c0_i32 = arith.constant 0 : i32
    %c0_i32_0 = arith.constant 0 : i32
    %c0_i32_1 = arith.constant 0 : i32
    return %c0_i32, %c0_i32_0 : i32, i32
  }
  func.func @transform_5(%arg0: i32) -> (i32, i32) {
    %c0_i32 = arith.constant 0 : i32
    %c0_i32_0 = arith.constant 0 : i32
    %c0_i32_1 = arith.constant 0 : i32
    return %c0_i32, %c0_i32_0 : i32, i32
  }
  func.func @transform_6(%arg0: i32) -> (i32, i32) {
    %c0_i32 = arith.constant 0 : i32
    %c0_i32_0 = arith.constant 0 : i32
    %c0_i32_1 = arith.constant 0 : i32
    return %c0_i32, %c0_i32_0 : i32, i32
  }
  func.func @transform_7(%arg0: i32) -> (i32, i32) {
    %c0_i32 = arith.constant 0 : i32
    %c0_i32_0 = arith.constant 0 : i32
    %c0_i32_1 = arith.constant 0 : i32
    return %c0_i32, %c0_i32_0 : i32, i32
  }
  func.func @transform_8(%arg0: i32) -> (i32, i32) {
    %c0_i32 = arith.constant 0 : i32
    %c0_i32_0 = arith.constant 0 : i32
    %c0_i32_1 = arith.constant 0 : i32
    return %c0_i32, %c0_i32_0 : i32, i32
  }
  func.func @transform_9(%arg0: i32) -> (i32, i32) {
    %c0_i32 = arith.constant 0 : i32
    %c0_i32_0 = arith.constant 0 : i32
    %c0_i32_1 = arith.constant 0 : i32
    return %c0_i32, %c0_i32_0 : i32, i32
  }
  func.func @transform_10(%arg0: i32) -> (i32, i32) {
    %c0_i32 = arith.constant 0 : i32
    %c0_i32_0 = arith.constant 0 : i32
    %c0_i32_1 = arith.constant 0 : i32
    return %c0_i32, %c0_i32_0 : i32, i32
  }
  func.func @transform_11(%arg0: i32) -> (i32, i32) {
    %c0_i32 = arith.constant 0 : i32
    %c0_i32_0 = arith.constant 0 : i32
    return %arg0, %c0_i32 : i32, i32
  }
}

</mosaic_0001>

<llo_original>
// kernel: tpu_custom_call.1
$region0: #{tpu_custom_call.1}
  #allocation0 [shape = 'u32[]', space=smem, size = 0x4, offset = 0x4, fixed_abs, tag = 'smem constant byte address 0x4 - core index']
  #allocation1 [shape = 'u32[144,128]{1,0:T(1,128)}', space=vmem, size = 0x12000, scoped, tag = 'internal scratch']
  %s0 = inlined_call_operand.hbm [shape: bf16[16,2048], index: 0, kind: input, shape index: {}]
  %s1 = inlined_call_operand.vmem [shape: f32[16,4], index: 1, kind: input, shape index: {}]
  %s2 = inlined_call_operand.hbm [shape: bf16[2048,768], index: 2, kind: input, shape index: {}]
  %s3 = inlined_call_operand.hbm [shape: f32[4,768], index: 3, kind: input, shape index: {}]
  %s4 = inlined_call_operand.hbm [shape: f32[1,768], index: 4, kind: input, shape index: {}]
  %s5 = inlined_call_operand.hbm [shape: bf16[768,2304], index: 5, kind: input, shape index: {}]
  %s6 = inlined_call_operand.hbm [shape: f32[1,2304], index: 6, kind: input, shape index: {}]
  %s7 = inlined_call_operand.vmem [shape: f32[768,16], index: 7, kind: input, shape index: {}]
  %s8 = inlined_call_operand.hbm [shape: f32[1,16], index: 8, kind: input, shape index: {}]
  %s9 = inlined_call_operand.hbm [shape: f32[16,128], index: 9, kind: input, shape index: {}]
  %s10 = inlined_call_operand.hbm [shape: f32[1,128], index: 10, kind: input, shape index: {}]
  %s11 = inlined_call_operand.hbm [shape: f32[2,128], index: 11, kind: output, shape index: {}]
  %s12 = sld [smem:[#allocation0]]
  $region90: #{tpu_custom_call.1} parent=0
    _
  %s14 = ssub.s32 1, %s12
  %s15 = scalar_select 0, %s14, %s12
  $region1: #{tpu_custom_call.1} parent=0
    #allocation2 [shape = 'u8[65536]{0}', space=vmem, size = 0x10000, scoped, tag = 'input window, operand 0, single buffered']
    #allocation3 [shape = 's32[1]{0}', space=sflag, size = 0x4, scoped, tag = 'scoped memory for tpu_custom_call.1']
    #allocation4 [shape = 's32[1]{0}', space=sflag, size = 0x4, scoped, tag = 'scoped memory for tpu_custom_call.1']
    #allocation5 [shape = 'u8[3145728]{0}', space=vmem, size = 0x300000, scoped, tag = 'input window, operand 2, single buffered']
    #allocation6 [shape = 's32[1]{0}', space=sflag, size = 0x4, scoped, tag = 'scoped memory for tpu_custom_call.1']
    #allocation7 [shape = 'u8[12288]{0}', space=vmem, size = 0x3000, scoped, tag = 'input window, operand 3, single buffered']
    #allocation8 [shape = 'u8[3072]{0}', space=vmem, size = 0xc00, scoped, tag = 'input window, operand 4, single buffered']
    #allocation9 [shape = 's32[1]{0}', space=sflag, size = 0x4, scoped, tag = 'scoped memory for tpu_custom_call.1']
    #allocation10 [shape = 'u8[3538944]{0}', space=vmem, size = 0x360000, scoped, tag = 'input window, operand 5, single buffered']
    #allocation11 [shape = 'u8[9216]{0}', space=vmem, size = 0x2400, scoped, tag = 'input window, operand 6, single buffered']
    #allocation12 [shape = 's32[1]{0}', space=sflag, size = 0x4, scoped, tag = 'scoped memory for tpu_custom_call.1']
    #allocation13 [shape = 'u8[512]{0}', space=vmem, size = 0x400, scoped, tag = 'input window, operand 8, single buffered']
    #allocation14 [shape = 'u8[8192]{0}', space=vmem, size = 0x2000, scoped, tag = 'input window, operand 9, single buffered']
    #allocation15 [shape = 's32[1]{0}', space=sflag, size = 0x4, scoped, tag = 'scoped memory for tpu_custom_call.1']
    #allocation16 [shape = 'u8[512]{0}', space=vmem, size = 0x400, scoped, tag = 'input window, operand 10, single buffered']
    #allocation17 [shape = 'u8[1024]{0}', space=vmem, size = 0x400, scoped, tag = 'output window, operand 0, single buffered']
    %16 = vsyncpa [#allocation3], 0
    %17 = vsyncpa [#allocation6], 0
    %18 = vsyncpa [#allocation9], 0
    %19 = vsyncpa [#allocation12], 0
    %20 = vsyncpa [#allocation15], 0
    %21 = vsyncpa [#allocation4], 0
    // Predicated region
    $region2: #{tpu_custom_call.1} parent=1 // pred_check
      _
    $region3: #{tpu_custom_call.1} parent=1 // pred_check_branch
      %23 = sbr.rel (0) target = $region5
    $region4: #{tpu_custom_call.1} parent=1 // pred_region
      %s25 = ssub.s32 2048, 2048
      %26 = vsyncadd [#allocation3], %s25
      %s27 = sshll.u32 [#allocation2], 4
      %s28 = int_to_ptr.vmem [resolvable:$true] %s27
      %33 = dma.hbm_to_vmem [thread:$0]  %s0, 2048, %s28, [#allocation3], 1024, 1024, 64
    $region5: #{tpu_custom_call.1} parent=1 // pred_fallthru
      _
    // Predicated region
    $region6: #{tpu_custom_call.1} parent=1 // pred_check
      _
    $region7: #{tpu_custom_call.1} parent=1 // pred_check_branch
      %35 = sbr.rel (0) target = $region9
    $region8: #{tpu_custom_call.1} parent=1 // pred_region
      _
    $region9: #{tpu_custom_call.1} parent=1 // pred_fallthru
      _
    // Predicated region
    $region10: #{tpu_custom_call.1} parent=1 // pred_check
      _
    $region11: #{tpu_custom_call.1} parent=1 // pred_check_branch
      %37 = sbr.rel (0) target = $region13
    $region12: #{tpu_custom_call.1} parent=1 // pred_region
      %s39 = ssub.s32 98304, 98304
      %40 = vsyncadd [#allocation6], %s39
      %s41 = sshll.u32 [#allocation5], 4
      %s42 = int_to_ptr.vmem [resolvable:$true] %s41
      %47 = dma.hbm_to_vmem [thread:$0]  %s2, 98304, %s42, [#allocation6], 384, 384, 24
    $region13: #{tpu_custom_call.1} parent=1 // pred_fallthru
      _
    // Predicated region
    $region14: #{tpu_custom_call.1} parent=1 // pred_check
      _
    $region15: #{tpu_custom_call.1} parent=1 // pred_check_branch
      %49 = sbr.rel (0) target = $region17
    $region16: #{tpu_custom_call.1} parent=1 // pred_region
      %s51 = ssub.s32 384, 384
      %52 = vsyncadd [#allocation6], %s51
      %s54 = sshll.u32 [#allocation7], 4
      %s55 = int_to_ptr.vmem [resolvable:$true] %s54
      %57 = dma.hbm_to_vmem [thread:$0]  %s3, 384, %s55, [#allocation6]
    $region17: #{tpu_custom_call.1} parent=1 // pred_fallthru
      _
    // Predicated region
    $region18: #{tpu_custom_call.1} parent=1 // pred_check
      _
    $region19: #{tpu_custom_call.1} parent=1 // pred_check_branch
      %59 = sbr.rel (0) target = $region21
    $region20: #{tpu_custom_call.1} parent=1 // pred_region
      %s61 = ssub.s32 96, 96
      %62 = vsyncadd [#allocation9], %s61
      %s64 = sshll.u32 [#allocation8], 4
      %s65 = int_to_ptr.vmem [resolvable:$true] %s64
      %67 = dma.hbm_to_vmem [thread:$0]  %s4, 96, %s65, [#allocation9]
    $region21: #{tpu_custom_call.1} parent=1 // pred_fallthru
      _
    // Predicated region
    $region22: #{tpu_custom_call.1} parent=1 // pred_check
      _
    $region23: #{tpu_custom_call.1} parent=1 // pred_check_branch
      %69 = sbr.rel (0) target = $region25
    $region24: #{tpu_custom_call.1} parent=1 // pred_region
      %s71 = ssub.s32 110592, 110592
      %72 = vsyncadd [#allocation9], %s71
      %s73 = sshll.u32 [#allocation10], 4
      %s74 = int_to_ptr.vmem [resolvable:$true] %s73
      %79 = dma.hbm_to_vmem [thread:$0]  %s5, 110592, %s74, [#allocation9], 1152, 1152, 72
    $region25: #{tpu_custom_call.1} parent=1 // pred_fallthru
      _
    // Predicated region
    $region26: #{tpu_custom_call.1} parent=1 // pred_check
      _
    $region27: #{tpu_custom_call.1} parent=1 // pred_check_branch
      %81 = sbr.rel (0) target = $region29
    $region28: #{tpu_custom_call.1} parent=1 // pred_region
      %s83 = ssub.s32 288, 288
      %84 = vsyncadd [#allocation12], %s83
      %s86 = sshll.u32 [#allocation11], 4
      %s87 = int_to_ptr.vmem [resolvable:$true] %s86
      %89 = dma.hbm_to_vmem [thread:$0]  %s6, 288, %s87, [#allocation12]
    $region29: #{tpu_custom_call.1} parent=1 // pred_fallthru
      _
    // Predicated region
    $region30: #{tpu_custom_call.1} parent=1 // pred_check
      _
    $region31: #{tpu_custom_call.1} parent=1 // pred_check_branch
      %91 = sbr.rel (0) target = $region33
    $region32: #{tpu_custom_call.1} parent=1 // pred_region
      _
    $region33: #{tpu_custom_call.1} parent=1 // pred_fallthru
      _
    // Predicated region
    $region34: #{tpu_custom_call.1} parent=1 // pred_check
      _
    $region35: #{tpu_custom_call.1} parent=1 // pred_check_branch
      %93 = sbr.rel (0) target = $region37
    $region36: #{tpu_custom_call.1} parent=1 // pred_region
      %s95 = ssub.s32 16, 16
      %96 = vsyncadd [#allocation12], %s95
      %s98 = sshll.u32 [#allocation13], 4
      %s99 = int_to_ptr.vmem [resolvable:$true] %s98
      %101 = dma.hbm_to_vmem [thread:$0]  %s8, 16, %s99, [#allocation12]
    $region37: #{tpu_custom_call.1} parent=1 // pred_fallthru
      _
    // Predicated region
    $region38: #{tpu_custom_call.1} parent=1 // pred_check
      _
    $region39: #{tpu_custom_call.1} parent=1 // pred_check_branch
      %103 = sbr.rel (0) target = $region41
    $region40: #{tpu_custom_call.1} parent=1 // pred_region
      %s105 = ssub.s32 256, 256
      %106 = vsyncadd [#allocation15], %s105
      %s107 = sshll.u32 [#allocation14], 4
      %s108 = int_to_ptr.vmem [resolvable:$true] %s107
      %113 = dma.hbm_to_vmem [thread:$0]  %s9, 256, %s108, [#allocation15], 128, 128, 8
    $region41: #{tpu_custom_call.1} parent=1 // pred_fallthru
      _
    // Predicated region
    $region42: #{tpu_custom_call.1} parent=1 // pred_check
      _
    $region43: #{tpu_custom_call.1} parent=1 // pred_check_branch
      %115 = sbr.rel (0) target = $region45
    $region44: #{tpu_custom_call.1} parent=1 // pred_region
      %s117 = ssub.s32 16, 16
      %118 = vsyncadd [#allocation15], %s117
      %s120 = sshll.u32 [#allocation16], 4
      %s121 = int_to_ptr.vmem [resolvable:$true] %s120
      %123 = dma.hbm_to_vmem [thread:$0]  %s10, 16, %s121, [#allocation15]
    $region45: #{tpu_custom_call.1} parent=1 // pred_fallthru
      _
    // Predicated region
    $region46: #{tpu_custom_call.1} parent=1 // pred_check
      _
    $region47: #{tpu_custom_call.1} parent=1 // pred_check_branch
      %125 = sbr.rel (0) target = $region49
    $region48: #{tpu_custom_call.1} parent=1 // pred_region
      %126 = dma.done [#allocation3], 2048
    $region49: #{tpu_custom_call.1} parent=1 // pred_fallthru
      _
    // Predicated region
    $region50: #{tpu_custom_call.1} parent=1 // pred_check
      _
    $region51: #{tpu_custom_call.1} parent=1 // pred_check_branch
      %128 = sbr.rel (0) target = $region53
    $region52: #{tpu_custom_call.1} parent=1 // pred_region
      %129 = dma.done [#allocation6], 98304
    $region53: #{tpu_custom_call.1} parent=1 // pred_fallthru
      _
    // Predicated region
    $region54: #{tpu_custom_call.1} parent=1 // pred_check
      _
    $region55: #{tpu_custom_call.1} parent=1 // pred_check_branch
      %131 = sbr.rel (0) target = $region57
    $region56: #{tpu_custom_call.1} parent=1 // pred_region
      %132 = dma.done [#allocation6], 384
    $region57: #{tpu_custom_call.1} parent=1 // pred_fallthru
      _
    // Predicated region
    $region58: #{tpu_custom_call.1} parent=1 // pred_check
      _
    $region59: #{tpu_custom_call.1} parent=1 // pred_check_branch
      %134 = sbr.rel (0) target = $region61
    $region60: #{tpu_custom_call.1} parent=1 // pred_region
      %135 = dma.done [#allocation9], 96
    $region61: #{tpu_custom_call.1} parent=1 // pred_fallthru
      _
    // Predicated region
    $region62: #{tpu_custom_call.1} parent=1 // pred_check
      _
    $region63: #{tpu_custom_call.1} parent=1 // pred_check_branch
      %137 = sbr.rel (0) target = $region65
    $region64: #{tpu_custom_call.1} parent=1 // pred_region
      %138 = dma.done [#allocation9], 110592
    $region65: #{tpu_custom_call.1} parent=1 // pred_fallthru
      _
    // Predicated region
    $region66: #{tpu_custom_call.1} parent=1 // pred_check
      _
    $region67: #{tpu_custom_call.1} parent=1 // pred_check_branch
      %140 = sbr.rel (0) target = $region69
    $region68: #{tpu_custom_call.1} parent=1 // pred_region
      %141 = dma.done [#allocation12], 288
    $region69: #{tpu_custom_call.1} parent=1 // pred_fallthru
      _
    // Predicated region
    $region70: #{tpu_custom_call.1} parent=1 // pred_check
      _
    $region71: #{tpu_custom_call.1} parent=1 // pred_check_branch
      %143 = sbr.rel (0) target = $region73
    $region72: #{tpu_custom_call.1} parent=1 // pred_region
      %144 = dma.done [#allocation12], 16
    $region73: #{tpu_custom_call.1} parent=1 // pred_fallthru
      _
    // Predicated region
    $region74: #{tpu_custom_call.1} parent=1 // pred_check
      _
    $region75: #{tpu_custom_call.1} parent=1 // pred_check_branch
      %146 = sbr.rel (0) target = $region77
    $region76: #{tpu_custom_call.1} parent=1 // pred_region
      %147 = dma.done [#allocation15], 256
    $region77: #{tpu_custom_call.1} parent=1 // pred_fallthru
      _
    // Predicated region
    $region78: #{tpu_custom_call.1} parent=1 // pred_check
      _
    $region79: #{tpu_custom_call.1} parent=1 // pred_check_branch
      %149 = sbr.rel (0) target = $region81
    $region80: #{tpu_custom_call.1} parent=1 // pred_region
      %150 = dma.done [#allocation15], 16
    $region81: #{tpu_custom_call.1} parent=1 // pred_fallthru
      _
    %v152 = vld [vmem:[#allocation2] sm:$0xff]
    %v153 = vld [vmem:[#allocation2 + $0x8] sm:$0xff]
    %v154 = vld [vmem:[#allocation2 + $0x10] sm:$0xff]
    %v155 = vld [vmem:[#allocation2 + $0x18] sm:$0xff]
    %v156 = vld [vmem:[#allocation2 + $0x20] sm:$0xff]
    %v157 = vld [vmem:[#allocation2 + $0x28] sm:$0xff]
    %v158 = vld [vmem:[#allocation2 + $0x30] sm:$0xff]
    %v159 = vld [vmem:[#allocation2 + $0x38] sm:$0xff]
    %v160 = vld [vmem:[#allocation2 + $0x40] sm:$0xff]
    %v161 = vld [vmem:[#allocation2 + $0x48] sm:$0xff]
    %v162 = vld [vmem:[#allocation2 + $0x50] sm:$0xff]
    %v163 = vld [vmem:[#allocation2 + $0x58] sm:$0xff]
    %v164 = vld [vmem:[#allocation2 + $0x60] sm:$0xff]
    %v165 = vld [vmem:[#allocation2 + $0x68] sm:$0xff]
    %v166 = vld [vmem:[#allocation2 + $0x70] sm:$0xff]
    %v167 = vld [vmem:[#allocation2 + $0x78] sm:$0xff]
    %v168 = vld [vmem:[#allocation5] sm:$0xff]
    %v169 = vld [vmem:[#allocation5 + $0x8] sm:$0xff]
    %v170 = vld [vmem:[#allocation5 + $0x10] sm:$0xff]
    %v171 = vld [vmem:[#allocation5 + $0x18] sm:$0xff]
    %v172 = vld [vmem:[#allocation5 + $0x20] sm:$0xff]
    %v173 = vld [vmem:[#allocation5 + $0x28] sm:$0xff]
    %v174 = vld [vmem:[#allocation5 + $0x30] sm:$0xff]
    %v175 = vld [vmem:[#allocation5 + $0x38] sm:$0xff]
    %v176 = vld [vmem:[#allocation5 + $0x40] sm:$0xff]
    %v177 = vld [vmem:[#allocation5 + $0x48] sm:$0xff]
    %v178 = vld [vmem:[#allocation5 + $0x50] sm:$0xff]
    %v179 = vld [vmem:[#allocation5 + $0x58] sm:$0xff]
    %v180 = vld [vmem:[#allocation5 + $0x60] sm:$0xff]
    %v181 = vld [vmem:[#allocation5 + $0x68] sm:$0xff]
    %v182 = vld [vmem:[#allocation5 + $0x70] sm:$0xff]
    %v183 = vld [vmem:[#allocation5 + $0x78] sm:$0xff]
    %v184 = vld [vmem:[#allocation5 + $0x80] sm:$0xff]
    %v185 = vld [vmem:[#allocation5 + $0x88] sm:$0xff]
    %v186 = vld [vmem:[#allocation5 + $0x90] sm:$0xff]
    %v187 = vld [vmem:[#allocation5 + $0x98] sm:$0xff]
    %v188 = vld [vmem:[#allocation5 + $0xa0] sm:$0xff]
    %v189 = vld [vmem:[#allocation5 + $0xa8] sm:$0xff]
    %v190 = vld [vmem:[#allocation5 + $0xb0] sm:$0xff]
    %v191 = vld [vmem:[#allocation5 + $0xb8] sm:$0xff]
    %v192 = vld [vmem:[#allocation5 + $0xc0] sm:$0xff]
    %v193 = vld [vmem:[#allocation5 + $0xc8] sm:$0xff]
    %v194 = vld [vmem:[#allocation5 + $0xd0] sm:$0xff]
    %v195 = vld [vmem:[#allocation5 + $0xd8] sm:$0xff]
    %v196 = vld [vmem:[#allocation5 + $0xe0] sm:$0xff]
    %v197 = vld [vmem:[#allocation5 + $0xe8] sm:$0xff]
    %v198 = vld [vmem:[#allocation5 + $0xf0] sm:$0xff]
    %v199 = vld [vmem:[#allocation5 + $0xf8] sm:$0xff]
    %v200 = vld [vmem:[#allocation5 + $0x100] sm:$0xff]
    %v201 = vld [vmem:[#allocation5 + $0x108] sm:$0xff]
    %v202 = vld [vmem:[#allocation5 + $0x110] sm:$0xff]
    %v203 = vld [vmem:[#allocation5 + $0x118] sm:$0xff]
    %v204 = vld [vmem:[#allocation5 + $0x120] sm:$0xff]
    %v205 = vld [vmem:[#allocation5 + $0x128] sm:$0xff]
    %v206 = vld [vmem:[#allocation5 + $0x130] sm:$0xff]
    %v207 = vld [vmem:[#allocation5 + $0x138] sm:$0xff]
    %v208 = vld [vmem:[#allocation5 + $0x140] sm:$0xff]
    %v209 = vld [vmem:[#allocation5 + $0x148] sm:$0xff]
    %v210 = vld [vmem:[#allocation5 + $0x150] sm:$0xff]
    %v211 = vld [vmem:[#allocation5 + $0x158] sm:$0xff]
    %v212 = vld [vmem:[#allocation5 + $0x160] sm:$0xff]
    %v213 = vld [vmem:[#allocation5 + $0x168] sm:$0xff]
    %v214 = vld [vmem:[#allocation5 + $0x170] sm:$0xff]
    %v215 = vld [vmem:[#allocation5 + $0x178] sm:$0xff]
    %v216 = vld [vmem:[#allocation5 + $0x180] sm:$0xff]
    %v217 = vld [vmem:[#allocation5 + $0x188] sm:$0xff]
    %v218 = vld [vmem:[#allocation5 + $0x190] sm:$0xff]
    %v219 = vld [vmem:[#allocation5 + $0x198] sm:$0xff]
    %v220 = vld [vmem:[#allocation5 + $0x1a0] sm:$0xff]
    %v221 = vld [vmem:[#allocation5 + $0x1a8] sm:$0xff]
    %v222 = vld [vmem:[#allocation5 + $0x1b0] sm:$0xff]
    %v223 = vld [vmem:[#allocation5 + $0x1b8] sm:$0xff]
    %v224 = vld [vmem:[#allocation5 + $0x1c0] sm:$0xff]
    %v225 = vld [vmem:[#allocation5 + $0x1c8] sm:$0xff]
    %v226 = vld [vmem:[#allocation5 + $0x1d0] sm:$0xff]
    %v227 = vld [vmem:[#allocation5 + $0x1d8] sm:$0xff]
    %v228 = vld [vmem:[#allocation5 + $0x1e0] sm:$0xff]
    %v229 = vld [vmem:[#allocation5 + $0x1e8] sm:$0xff]
    %v230 = vld [vmem:[#allocation5 + $0x1f0] sm:$0xff]
    %v231 = vld [vmem:[#allocation5 + $0x1f8] sm:$0xff]
    %v232 = vld [vmem:[#allocation5 + $0x200] sm:$0xff]
    %v233 = vld [vmem:[#allocation5 + $0x208] sm:$0xff]
    %v234 = vld [vmem:[#allocation5 + $0x210] sm:$0xff]
    %v235 = vld [vmem:[#allocation5 + $0x218] sm:$0xff]
    %v236 = vld [vmem:[#allocation5 + $0x220] sm:$0xff]
    %v237 = vld [vmem:[#allocation5 + $0x228] sm:$0xff]
    %v238 = vld [vmem:[#allocation5 + $0x230] sm:$0xff]
    %v239 = vld [vmem:[#allocation5 + $0x238] sm:$0xff]
    %v240 = vld [vmem:[#allocation5 + $0x240] sm:$0xff]
    %v241 = vld [vmem:[#allocation5 + $0x248] sm:$0xff]
    %v242 = vld [vmem:[#allocation5 + $0x250] sm:$0xff]
    %v243 = vld [vmem:[#allocation5 + $0x258] sm:$0xff]
    %v244 = vld [vmem:[#allocation5 + $0x260] sm:$0xff]
    %v245 = vld [vmem:[#allocation5 + $0x268] sm:$0xff]
    %v246 = vld [vmem:[#allocation5 + $0x270] sm:$0xff]
    %v247 = vld [vmem:[#allocation5 + $0x278] sm:$0xff]
    %v248 = vld [vmem:[#allocation5 + $0x280] sm:$0xff]
    %v249 = vld [vmem:[#allocation5 + $0x288] sm:$0xff]
    %v250 = vld [vmem:[#allocation5 + $0x290] sm:$0xff]
    %v251 = vld [vmem:[#allocation5 + $0x298] sm:$0xff]
    %v252 = vld [vmem:[#allocation5 + $0x2a0] sm:$0xff]
    %v253 = vld [vmem:[#allocation5 + $0x2a8] sm:$0xff]
    %v254 = vld [vmem:[#allocation5 + $0x2b0] sm:$0xff]
    %v255 = vld [vmem:[#allocation5 + $0x2b8] sm:$0xff]
    %v256 = vld [vmem:[#allocation5 + $0x2c0] sm:$0xff]
    %v257 = vld [vmem:[#allocation5 + $0x2c8] sm:$0xff]
    %v258 = vld [vmem:[#allocation5 + $0x2d0] sm:$0xff]
    %v259 = vld [vmem:[#allocation5 + $0x2d8] sm:$0xff]
    %v260 = vld [vmem:[#allocation5 + $0x2e0] sm:$0xff]
    %v261 = vld [vmem:[#allocation5 + $0x2e8] sm:$0xff]
    %v262 = vld [vmem:[#allocation5 + $0x2f0] sm:$0xff]
    %v263 = vld [vmem:[#allocation5 + $0x2f8] sm:$0xff]
    %v264 = vld [vmem:[#allocation5 + $0x300] sm:$0xff]
    %v265 = vld [vmem:[#allocation5 + $0x308] sm:$0xff]
    %v266 = vld [vmem:[#allocation5 + $0x310] sm:$0xff]
    %v267 = vld [vmem:[#allocation5 + $0x318] sm:$0xff]
    %v268 = vld [vmem:[#allocation5 + $0x320] sm:$0xff]
    %v269 = vld [vmem:[#allocation5 + $0x328] sm:$0xff]
    %v270 = vld [vmem:[#allocation5 + $0x330] sm:$0xff]
    %v271 = vld [vmem:[#allocation5 + $0x338] sm:$0xff]
    %v272 = vld [vmem:[#allocation5 + $0x340] sm:$0xff]
    %v273 = vld [vmem:[#allocation5 + $0x348] sm:$0xff]
    %v274 = vld [vmem:[#allocation5 + $0x350] sm:$0xff]
    %v275 = vld [vmem:[#allocation5 + $0x358] sm:$0xff]
    %v276 = vld [vmem:[#allocation5 + $0x360] sm:$0xff]
    %v277 = vld [vmem:[#allocation5 + $0x368] sm:$0xff]
    %v278 = vld [vmem:[#allocation5 + $0x370] sm:$0xff]
    %v279 = vld [vmem:[#allocation5 + $0x378] sm:$0xff]
    %v280 = vld [vmem:[#allocation5 + $0x380] sm:$0xff]
    %v281 = vld [vmem:[#allocation5 + $0x388] sm:$0xff]
    %v282 = vld [vmem:[#allocation5 + $0x390] sm:$0xff]
    %v283 = vld [vmem:[#allocation5 + $0x398] sm:$0xff]
    %v284 = vld [vmem:[#allocation5 + $0x3a0] sm:$0xff]
    %v285 = vld [vmem:[#allocation5 + $0x3a8] sm:$0xff]
    %v286 = vld [vmem:[#allocation5 + $0x3b0] sm:$0xff]
    %v287 = vld [vmem:[#allocation5 + $0x3b8] sm:$0xff]
    %v288 = vld [vmem:[#allocation5 + $0x3c0] sm:$0xff]
    %v289 = vld [vmem:[#allocation5 + $0x3c8] sm:$0xff]
    %v290 = vld [vmem:[#allocation5 + $0x3d0] sm:$0xff]
    %v291 = vld [vmem:[#allocation5 + $0x3d8] sm:$0xff]
    %v292 = vld [vmem:[#allocation5 + $0x3e0] sm:$0xff]
    %v293 = vld [vmem:[#allocation5 + $0x3e8] sm:$0xff]
    %v294 = vld [vmem:[#allocation5 + $0x3f0] sm:$0xff]
    %v295 = vld [vmem:[#allocation5 + $0x3f8] sm:$0xff]
    %v296 = vld [vmem:[#allocation5 + $0x400] sm:$0xff]
    %v297 = vld [vmem:[#allocation5 + $0x408] sm:$0xff]
    %v298 = vld [vmem:[#allocation5 + $0x410] sm:$0xff]
    %v299 = vld [vmem:[#allocation5 + $0x418] sm:$0xff]
    %v300 = vld [vmem:[#allocation5 + $0x420] sm:$0xff]
    %v301 = vld [vmem:[#allocation5 + $0x428] sm:$0xff]
    %v302 = vld [vmem:[#allocation5 + $0x430] sm:$0xff]
    %v303 = vld [vmem:[#allocation5 + $0x438] sm:$0xff]
    %v304 = vld [vmem:[#allocation5 + $0x440] sm:$0xff]
    %v305 = vld [vmem:[#allocation5 + $0x448] sm:$0xff]
    %v306 = vld [vmem:[#allocation5 + $0x450] sm:$0xff]
    %v307 = vld [vmem:[#allocation5 + $0x458] sm:$0xff]
    %v308 = vld [vmem:[#allocation5 + $0x460] sm:$0xff]
    %v309 = vld [vmem:[#allocation5 + $0x468] sm:$0xff]
    %v310 = vld [vmem:[#allocation5 + $0x470] sm:$0xff]
    %v311 = vld [vmem:[#allocation5 + $0x478] sm:$0xff]
    %v312 = vld [vmem:[#allocation5 + $0x480] sm:$0xff]
    %v313 = vld [vmem:[#allocation5 + $0x488] sm:$0xff]
    %v314 = vld [vmem:[#allocation5 + $0x490] sm:$0xff]
    %v315 = vld [vmem:[#allocation5 + $0x498] sm:$0xff]
    %v316 = vld [vmem:[#allocation5 + $0x4a0] sm:$0xff]
    %v317 = vld [vmem:[#allocation5 + $0x4a8] sm:$0xff]
    %v318 = vld [vmem:[#allocation5 + $0x4b0] sm:$0xff]
    %v319 = vld [vmem:[#allocation5 + $0x4b8] sm:$0xff]
    %v320 = vld [vmem:[#allocation5 + $0x4c0] sm:$0xff]
    %v321 = vld [vmem:[#allocation5 + $0x4c8] sm:$0xff]
    %v322 = vld [vmem:[#allocation5 + $0x4d0] sm:$0xff]
    %v323 = vld [vmem:[#allocation5 + $0x4d8] sm:$0xff]
    %v324 = vld [vmem:[#allocation5 + $0x4e0] sm:$0xff]
    %v325 = vld [vmem:[#allocation5 + $0x4e8] sm:$0xff]
    %v326 = vld [vmem:[#allocation5 + $0x4f0] sm:$0xff]
    %v327 = vld [vmem:[#allocation5 + $0x4f8] sm:$0xff]
    %v328 = vld [vmem:[#allocation5 + $0x500] sm:$0xff]
    %v329 = vld [vmem:[#allocation5 + $0x508] sm:$0xff]
    %v330 = vld [vmem:[#allocation5 + $0x510] sm:$0xff]
    %v331 = vld [vmem:[#allocation5 + $0x518] sm:$0xff]
    %v332 = vld [vmem:[#allocation5 + $0x520] sm:$0xff]
    %v333 = vld [vmem:[#allocation5 + $0x528] sm:$0xff]
    %v334 = vld [vmem:[#allocation5 + $0x530] sm:$0xff]
    %v335 = vld [vmem:[#allocation5 + $0x538] sm:$0xff]
    %v336 = vld [vmem:[#allocation5 + $0x540] sm:$0xff]
    %v337 = vld [vmem:[#allocation5 + $0x548] sm:$0xff]
    %v338 = vld [vmem:[#allocation5 + $0x550] sm:$0xff]
    %v339 = vld [vmem:[#allocation5 + $0x558] sm:$0xff]
    %v340 = vld [vmem:[#allocation5 + $0x560] sm:$0xff]
    %v341 = vld [vmem:[#allocation5 + $0x568] sm:$0xff]
    %v342 = vld [vmem:[#allocation5 + $0x570] sm:$0xff]
    %v343 = vld [vmem:[#allocation5 + $0x578] sm:$0xff]
    %v344 = vld [vmem:[#allocation5 + $0x580] sm:$0xff]
    %v345 = vld [vmem:[#allocation5 + $0x588] sm:$0xff]
    %v346 = vld [vmem:[#allocation5 + $0x590] sm:$0xff]
    %v347 = vld [vmem:[#allocation5 + $0x598] sm:$0xff]
    %v348 = vld [vmem:[#allocation5 + $0x5a0] sm:$0xff]
    %v349 = vld [vmem:[#allocation5 + $0x5a8] sm:$0xff]
    %v350 = vld [vmem:[#allocation5 + $0x5b0] sm:$0xff]
    %v351 = vld [vmem:[#allocation5 + $0x5b8] sm:$0xff]
    %v352 = vld [vmem:[#allocation5 + $0x5c0] sm:$0xff]
    %v353 = vld [vmem:[#allocation5 + $0x5c8] sm:$0xff]
    %v354 = vld [vmem:[#allocation5 + $0x5d0] sm:$0xff]
    %v355 = vld [vmem:[#allocation5 + $0x5d8] sm:$0xff]
    %v356 = vld [vmem:[#allocation5 + $0x5e0] sm:$0xff]
    %v357 = vld [vmem:[#allocation5 + $0x5e8] sm:$0xff]
    %v358 = vld [vmem:[#allocation5 + $0x5f0] sm:$0xff]
    %v359 = vld [vmem:[#allocation5 + $0x5f8] sm:$0xff]
    %v360 = vld [vmem:[#allocation5 + $0x600] sm:$0xff]
    %v361 = vld [vmem:[#allocation5 + $0x608] sm:$0xff]
    %v362 = vld [vmem:[#allocation5 + $0x610] sm:$0xff]
    %v363 = vld [vmem:[#allocation5 + $0x618] sm:$0xff]
    %v364 = vld [vmem:[#allocation5 + $0x620] sm:$0xff]
    %v365 = vld [vmem:[#allocation5 + $0x628] sm:$0xff]
    %v366 = vld [vmem:[#allocation5 + $0x630] sm:$0xff]
    %v367 = vld [vmem:[#allocation5 + $0x638] sm:$0xff]
    %v368 = vld [vmem:[#allocation5 + $0x640] sm:$0xff]
    %v369 = vld [vmem:[#allocation5 + $0x648] sm:$0xff]
    %v370 = vld [vmem:[#allocation5 + $0x650] sm:$0xff]
    %v371 = vld [vmem:[#allocation5 + $0x658] sm:$0xff]
    %v372 = vld [vmem:[#allocation5 + $0x660] sm:$0xff]
    %v373 = vld [vmem:[#allocation5 + $0x668] sm:$0xff]
    %v374 = vld [vmem:[#allocation5 + $0x670] sm:$0xff]
    %v375 = vld [vmem:[#allocation5 + $0x678] sm:$0xff]
    %v376 = vld [vmem:[#allocation5 + $0x680] sm:$0xff]
    %v377 = vld [vmem:[#allocation5 + $0x688] sm:$0xff]
    %v378 = vld [vmem:[#allocation5 + $0x690] sm:$0xff]
    %v379 = vld [vmem:[#allocation5 + $0x698] sm:$0xff]
    %v380 = vld [vmem:[#allocation5 + $0x6a0] sm:$0xff]
    %v381 = vld [vmem:[#allocation5 + $0x6a8] sm:$0xff]
    %v382 = vld [vmem:[#allocation5 + $0x6b0] sm:$0xff]
    %v383 = vld [vmem:[#allocation5 + $0x6b8] sm:$0xff]
    %v384 = vld [vmem:[#allocation5 + $0x6c0] sm:$0xff]
    %v385 = vld [vmem:[#allocation5 + $0x6c8] sm:$0xff]
    %v386 = vld [vmem:[#allocation5 + $0x6d0] sm:$0xff]
    %v387 = vld [vmem:[#allocation5 + $0x6d8] sm:$0xff]
    %v388 = vld [vmem:[#allocation5 + $0x6e0] sm:$0xff]
    %v389 = vld [vmem:[#allocation5 + $0x6e8] sm:$0xff]
    %v390 = vld [vmem:[#allocation5 + $0x6f0] sm:$0xff]
    %v391 = vld [vmem:[#allocation5 + $0x6f8] sm:$0xff]
    %v392 = vld [vmem:[#allocation5 + $0x700] sm:$0xff]
    %v393 = vld [vmem:[#allocation5 + $0x708] sm:$0xff]
    %v394 = vld [vmem:[#allocation5 + $0x710] sm:$0xff]
    %v395 = vld [vmem:[#allocation5 + $0x718] sm:$0xff]
    %v396 = vld [vmem:[#allocation5 + $0x720] sm:$0xff]
    %v397 = vld [vmem:[#allocation5 + $0x728] sm:$0xff]
    %v398 = vld [vmem:[#allocation5 + $0x730] sm:$0xff]
    %v399 = vld [vmem:[#allocation5 + $0x738] sm:$0xff]
    %v400 = vld [vmem:[#allocation5 + $0x740] sm:$0xff]
    %v401 = vld [vmem:[#allocation5 + $0x748] sm:$0xff]
    %v402 = vld [vmem:[#allocation5 + $0x750] sm:$0xff]
    %v403 = vld [vmem:[#allocation5 + $0x758] sm:$0xff]
    %v404 = vld [vmem:[#allocation5 + $0x760] sm:$0xff]
    %v405 = vld [vmem:[#allocation5 + $0x768] sm:$0xff]
    %v406 = vld [vmem:[#allocation5 + $0x770] sm:$0xff]
    %v407 = vld [vmem:[#allocation5 + $0x778] sm:$0xff]
    %v408 = vld [vmem:[#allocation5 + $0x780] sm:$0xff]
    %v409 = vld [vmem:[#allocation5 + $0x788] sm:$0xff]
    %v410 = vld [vmem:[#allocation5 + $0x790] sm:$0xff]
    %v411 = vld [vmem:[#allocation5 + $0x798] sm:$0xff]
    %v412 = vld [vmem:[#allocation5 + $0x7a0] sm:$0xff]
    %v413 = vld [vmem:[#allocation5 + $0x7a8] sm:$0xff]
    %v414 = vld [vmem:[#allocation5 + $0x7b0] sm:$0xff]
    %v415 = vld [vmem:[#allocation5 + $0x7b8] sm:$0xff]
    %v416 = vld [vmem:[#allocation5 + $0x7c0] sm:$0xff]
    %v417 = vld [vmem:[#allocation5 + $0x7c8] sm:$0xff]
    %v418 = vld [vmem:[#allocation5 + $0x7d0] sm:$0xff]
    %v419 = vld [vmem:[#allocation5 + $0x7d8] sm:$0xff]
    %v420 = vld [vmem:[#allocation5 + $0x7e0] sm:$0xff]
    %v421 = vld [vmem:[#allocation5 + $0x7e8] sm:$0xff]
    %v422 = vld [vmem:[#allocation5 + $0x7f0] sm:$0xff]
    %v423 = vld [vmem:[#allocation5 + $0x7f8] sm:$0xff]
    %v424 = vld [vmem:[#allocation5 + $0x800] sm:$0xff]
    %v425 = vld [vmem:[#allocation5 + $0x808] sm:$0xff]
    %v426 = vld [vmem:[#allocation5 + $0x810] sm:$0xff]
    %v427 = vld [vmem:[#allocation5 + $0x818] sm:$0xff]
    %v428 = vld [vmem:[#allocation5 + $0x820] sm:$0xff]
    %v429 = vld [vmem:[#allocation5 + $0x828] sm:$0xff]
    %v430 = vld [vmem:[#allocation5 + $0x830] sm:$0xff]
    %v431 = vld [vmem:[#allocation5 + $0x838] sm:$0xff]
    %v432 = vld [vmem:[#allocation5 + $0x840] sm:$0xff]
    %v433 = vld [vmem:[#allocation5 + $0x848] sm:$0xff]
    %v434 = vld [vmem:[#allocation5 + $0x850] sm:$0xff]
    %v435 = vld [vmem:[#allocation5 + $0x858] sm:$0xff]
    %v436 = vld [vmem:[#allocation5 + $0x860] sm:$0xff]
    %v437 = vld [vmem:[#allocation5 + $0x868] sm:$0xff]
    %v438 = vld [vmem:[#allocation5 + $0x870] sm:$0xff]
    %v439 = vld [vmem:[#allocation5 + $0x878] sm:$0xff]
    %v440 = vld [vmem:[#allocation5 + $0x880] sm:$0xff]
    %v441 = vld [vmem:[#allocation5 + $0x888] sm:$0xff]
    %v442 = vld [vmem:[#allocation5 + $0x890] sm:$0xff]
    %v443 = vld [vmem:[#allocation5 + $0x898] sm:$0xff]
    %v444 = vld [vmem:[#allocation5 + $0x8a0] sm:$0xff]
    %v445 = vld [vmem:[#allocation5 + $0x8a8] sm:$0xff]
    %v446 = vld [vmem:[#allocation5 + $0x8b0] sm:$0xff]
    %v447 = vld [vmem:[#allocation5 + $0x8b8] sm:$0xff]
    %v448 = vld [vmem:[#allocation5 + $0x8c0] sm:$0xff]
    %v449 = vld [vmem:[#allocation5 + $0x8c8] sm:$0xff]
    %v450 = vld [vmem:[#allocation5 + $0x8d0] sm:$0xff]
    %v451 = vld [vmem:[#allocation5 + $0x8d8] sm:$0xff]
    %v452 = vld [vmem:[#allocation5 + $0x8e0] sm:$0xff]
    %v453 = vld [vmem:[#allocation5 + $0x8e8] sm:$0xff]
    %v454 = vld [vmem:[#allocation5 + $0x8f0] sm:$0xff]
    %v455 = vld [vmem:[#allocation5 + $0x8f8] sm:$0xff]
    %v456 = vld [vmem:[#allocation5 + $0x900] sm:$0xff]
    %v457 = vld [vmem:[#allocation5 + $0x908] sm:$0xff]
    %v458 = vld [vmem:[#allocation5 + $0x910] sm:$0xff]
    %v459 = vld [vmem:[#allocation5 + $0x918] sm:$0xff]
    %v460 = vld [vmem:[#allocation5 + $0x920] sm:$0xff]
    %v461 = vld [vmem:[#allocation5 + $0x928] sm:$0xff]
    %v462 = vld [vmem:[#allocation5 + $0x930] sm:$0xff]
    %v463 = vld [vmem:[#allocation5 + $0x938] sm:$0xff]
    %v464 = vld [vmem:[#allocation5 + $0x940] sm:$0xff]
    %v465 = vld [vmem:[#allocation5 + $0x948] sm:$0xff]
    %v466 = vld [vmem:[#allocation5 + $0x950] sm:$0xff]
    %v467 = vld [vmem:[#allocation5 + $0x958] sm:$0xff]
    %v468 = vld [vmem:[#allocation5 + $0x960] sm:$0xff]
    %v469 = vld [vmem:[#allocation5 + $0x968] sm:$0xff]
    %v470 = vld [vmem:[#allocation5 + $0x970] sm:$0xff]
    %v471 = vld [vmem:[#allocation5 + $0x978] sm:$0xff]
    %v472 = vld [vmem:[#allocation5 + $0x980] sm:$0xff]
    %v473 = vld [vmem:[#allocation5 + $0x988] sm:$0xff]
    %v474 = vld [vmem:[#allocation5 + $0x990] sm:$0xff]
    %v475 = vld [vmem:[#allocation5 + $0x998] sm:$0xff]
    %v476 = vld [vmem:[#allocation5 + $0x9a0] sm:$0xff]
    %v477 = vld [vmem:[#allocation5 + $0x9a8] sm:$0xff]
    %v478 = vld [vmem:[#allocation5 + $0x9b0] sm:$0xff]
    %v479 = vld [vmem:[#allocation5 + $0x9b8] sm:$0xff]
    %v480 = vld [vmem:[#allocation5 + $0x9c0] sm:$0xff]
    %v481 = vld [vmem:[#allocation5 + $0x9c8] sm:$0xff]
    %v482 = vld [vmem:[#allocation5 + $0x9d0] sm:$0xff]
    %v483 = vld [vmem:[#allocation5 + $0x9d8] sm:$0xff]
    %v484 = vld [vmem:[#allocation5 + $0x9e0] sm:$0xff]
    %v485 = vld [vmem:[#allocation5 + $0x9e8] sm:$0xff]
    %v486 = vld [vmem:[#allocation5 + $0x9f0] sm:$0xff]
    %v487 = vld [vmem:[#allocation5 + $0x9f8] sm:$0xff]
    %v488 = vld [vmem:[#allocation5 + $0xa00] sm:$0xff]
    %v489 = vld [vmem:[#allocation5 + $0xa08] sm:$0xff]
    %v490 = vld [vmem:[#allocation5 + $0xa10] sm:$0xff]
    %v491 = vld [vmem:[#allocation5 + $0xa18] sm:$0xff]
    %v492 = vld [vmem:[#allocation5 + $0xa20] sm:$0xff]
    %v493 = vld [vmem:[#allocation5 + $0xa28] sm:$0xff]
    %v494 = vld [vmem:[#allocation5 + $0xa30] sm:$0xff]
    %v495 = vld [vmem:[#allocation5 + $0xa38] sm:$0xff]
    %v496 = vld [vmem:[#allocation5 + $0xa40] sm:$0xff]
    %v497 = vld [vmem:[#allocation5 + $0xa48] sm:$0xff]
    %v498 = vld [vmem:[#allocation5 + $0xa50] sm:$0xff]
    %v499 = vld [vmem:[#allocation5 + $0xa58] sm:$0xff]
    %v500 = vld [vmem:[#allocation5 + $0xa60] sm:$0xff]
    %v501 = vld [vmem:[#allocation5 + $0xa68] sm:$0xff]
    %v502 = vld [vmem:[#allocation5 + $0xa70] sm:$0xff]
    %v503 = vld [vmem:[#allocation5 + $0xa78] sm:$0xff]
    %v504 = vld [vmem:[#allocation5 + $0xa80] sm:$0xff]
    %v505 = vld [vmem:[#allocation5 + $0xa88] sm:$0xff]
    %v506 = vld [vmem:[#allocation5 + $0xa90] sm:$0xff]
    %v507 = vld [vmem:[#allocation5 + $0xa98] sm:$0xff]
    %v508 = vld [vmem:[#allocation5 + $0xaa0] sm:$0xff]
    %v509 = vld [vmem:[#allocation5 + $0xaa8] sm:$0xff]
    %v510 = vld [vmem:[#allocation5 + $0xab0] sm:$0xff]
    %v511 = vld [vmem:[#allocation5 + $0xab8] sm:$0xff]
    %v512 = vld [vmem:[#allocation5 + $0xac0] sm:$0xff]
    %v513 = vld [vmem:[#allocation5 + $0xac8] sm:$0xff]
    %v514 = vld [vmem:[#allocation5 + $0xad0] sm:$0xff]
    %v515 = vld [vmem:[#allocation5 + $0xad8] sm:$0xff]
    %v516 = vld [vmem:[#allocation5 + $0xae0] sm:$0xff]
    %v517 = vld [vmem:[#allocation5 + $0xae8] sm:$0xff]
    %v518 = vld [vmem:[#allocation5 + $0xaf0] sm:$0xff]
    %v519 = vld [vmem:[#allocation5 + $0xaf8] sm:$0xff]
    %v520 = vld [vmem:[#allocation5 + $0xb00] sm:$0xff]
    %v521 = vld [vmem:[#allocation5 + $0xb08] sm:$0xff]
    %v522 = vld [vmem:[#allocation5 + $0xb10] sm:$0xff]
    %v523 = vld [vmem:[#allocation5 + $0xb18] sm:$0xff]
    %v524 = vld [vmem:[#allocation5 + $0xb20] sm:$0xff]
    %v525 = vld [vmem:[#allocation5 + $0xb28] sm:$0xff]
    %v526 = vld [vmem:[#allocation5 + $0xb30] sm:$0xff]
    %v527 = vld [vmem:[#allocation5 + $0xb38] sm:$0xff]
    %v528 = vld [vmem:[#allocation5 + $0xb40] sm:$0xff]
    %v529 = vld [vmem:[#allocation5 + $0xb48] sm:$0xff]
    %v530 = vld [vmem:[#allocation5 + $0xb50] sm:$0xff]
    %v531 = vld [vmem:[#allocation5 + $0xb58] sm:$0xff]
    %v532 = vld [vmem:[#allocation5 + $0xb60] sm:$0xff]
    %v533 = vld [vmem:[#allocation5 + $0xb68] sm:$0xff]
    %v534 = vld [vmem:[#allocation5 + $0xb70] sm:$0xff]
    %v535 = vld [vmem:[#allocation5 + $0xb78] sm:$0xff]
    %v536 = vld [vmem:[#allocation5 + $0xb80] sm:$0xff]
    %v537 = vld [vmem:[#allocation5 + $0xb88] sm:$0xff]
    %v538 = vld [vmem:[#allocation5 + $0xb90] sm:$0xff]
    %v539 = vld [vmem:[#allocation5 + $0xb98] sm:$0xff]
    %v540 = vld [vmem:[#allocation5 + $0xba0] sm:$0xff]
    %v541 = vld [vmem:[#allocation5 + $0xba8] sm:$0xff]
    %v542 = vld [vmem:[#allocation5 + $0xbb0] sm:$0xff]
    %v543 = vld [vmem:[#allocation5 + $0xbb8] sm:$0xff]
    %v544 = vld [vmem:[#allocation5 + $0xbc0] sm:$0xff]
    %v545 = vld [vmem:[#allocation5 + $0xbc8] sm:$0xff]
    %v546 = vld [vmem:[#allocation5 + $0xbd0] sm:$0xff]
    %v547 = vld [vmem:[#allocation5 + $0xbd8] sm:$0xff]
    %v548 = vld [vmem:[#allocation5 + $0xbe0] sm:$0xff]
    %v549 = vld [vmem:[#allocation5 + $0xbe8] sm:$0xff]
    %v550 = vld [vmem:[#allocation5 + $0xbf0] sm:$0xff]
    %v551 = vld [vmem:[#allocation5 + $0xbf8] sm:$0xff]
    %v552 = vld [vmem:[#allocation5 + $0xc00] sm:$0xff]
    %v553 = vld [vmem:[#allocation5 + $0xc08] sm:$0xff]
    %v554 = vld [vmem:[#allocation5 + $0xc10] sm:$0xff]
    %v555 = vld [vmem:[#allocation5 + $0xc18] sm:$0xff]
    %v556 = vld [vmem:[#allocation5 + $0xc20] sm:$0xff]
    %v557 = vld [vmem:[#allocation5 + $0xc28] sm:$0xff]
    %v558 = vld [vmem:[#allocation5 + $0xc30] sm:$0xff]
    %v559 = vld [vmem:[#allocation5 + $0xc38] sm:$0xff]
    %v560 = vld [vmem:[#allocation5 + $0xc40] sm:$0xff]
    %v561 = vld [vmem:[#allocation5 + $0xc48] sm:$0xff]
    %v562 = vld [vmem:[#allocation5 + $0xc50] sm:$0xff]
    %v563 = vld [vmem:[#allocation5 + $0xc58] sm:$0xff]
    %v564 = vld [vmem:[#allocation5 + $0xc60] sm:$0xff]
    %v565 = vld [vmem:[#allocation5 + $0xc68] sm:$0xff]
    %v566 = vld [vmem:[#allocation5 + $0xc70] sm:$0xff]
    %v567 = vld [vmem:[#allocation5 + $0xc78] sm:$0xff]
    %v568 = vld [vmem:[#allocation5 + $0xc80] sm:$0xff]
    %v569 = vld [vmem:[#allocation5 + $0xc88] sm:$0xff]
    %v570 = vld [vmem:[#allocation5 + $0xc90] sm:$0xff]
    %v571 = vld [vmem:[#allocation5 + $0xc98] sm:$0xff]
    %v572 = vld [vmem:[#allocation5 + $0xca0] sm:$0xff]
    %v573 = vld [vmem:[#allocation5 + $0xca8] sm:$0xff]
    %v574 = vld [vmem:[#allocation5 + $0xcb0] sm:$0xff]
    %v575 = vld [vmem:[#allocation5 + $0xcb8] sm:$0xff]
    %v576 = vld [vmem:[#allocation5 + $0xcc0] sm:$0xff]
    %v577 = vld [vmem:[#allocation5 + $0xcc8] sm:$0xff]
    %v578 = vld [vmem:[#allocation5 + $0xcd0] sm:$0xff]
    %v579 = vld [vmem:[#allocation5 + $0xcd8] sm:$0xff]
    %v580 = vld [vmem:[#allocation5 + $0xce0] sm:$0xff]
    %v581 = vld [vmem:[#allocation5 + $0xce8] sm:$0xff]
    %v582 = vld [vmem:[#allocation5 + $0xcf0] sm:$0xff]
    %v583 = vld [vmem:[#allocation5 + $0xcf8] sm:$0xff]
    %v584 = vld [vmem:[#allocation5 + $0xd00] sm:$0xff]
    %v585 = vld [vmem:[#allocation5 + $0xd08] sm:$0xff]
    %v586 = vld [vmem:[#allocation5 + $0xd10] sm:$0xff]
    %v587 = vld [vmem:[#allocation5 + $0xd18] sm:$0xff]
    %v588 = vld [vmem:[#allocation5 + $0xd20] sm:$0xff]
    %v589 = vld [vmem:[#allocation5 + $0xd28] sm:$0xff]
    %v590 = vld [vmem:[#allocation5 + $0xd30] sm:$0xff]
    %v591 = vld [vmem:[#allocation5 + $0xd38] sm:$0xff]
    %v592 = vld [vmem:[#allocation5 + $0xd40] sm:$0xff]
    %v593 = vld [vmem:[#allocation5 + $0xd48] sm:$0xff]
    %v594 = vld [vmem:[#allocation5 + $0xd50] sm:$0xff]
    %v595 = vld [vmem:[#allocation5 + $0xd58] sm:$0xff]
    %v596 = vld [vmem:[#allocation5 + $0xd60] sm:$0xff]
    %v597 = vld [vmem:[#allocation5 + $0xd68] sm:$0xff]
    %v598 = vld [vmem:[#allocation5 + $0xd70] sm:$0xff]
    %v599 = vld [vmem:[#allocation5 + $0xd78] sm:$0xff]
    %v600 = vld [vmem:[#allocation5 + $0xd80] sm:$0xff]
    %v601 = vld [vmem:[#allocation5 + $0xd88] sm:$0xff]
    %v602 = vld [vmem:[#allocation5 + $0xd90] sm:$0xff]
    %v603 = vld [vmem:[#allocation5 + $0xd98] sm:$0xff]
    %v604 = vld [vmem:[#allocation5 + $0xda0] sm:$0xff]
    %v605 = vld [vmem:[#allocation5 + $0xda8] sm:$0xff]
    %v606 = vld [vmem:[#allocation5 + $0xdb0] sm:$0xff]
    %v607 = vld [vmem:[#allocation5 + $0xdb8] sm:$0xff]
    %v608 = vld [vmem:[#allocation5 + $0xdc0] sm:$0xff]
    %v609 = vld [vmem:[#allocation5 + $0xdc8] sm:$0xff]
    %v610 = vld [vmem:[#allocation5 + $0xdd0] sm:$0xff]
    %v611 = vld [vmem:[#allocation5 + $0xdd8] sm:$0xff]
    %v612 = vld [vmem:[#allocation5 + $0xde0] sm:$0xff]
    %v613 = vld [vmem:[#allocation5 + $0xde8] sm:$0xff]
    %v614 = vld [vmem:[#allocation5 + $0xdf0] sm:$0xff]
    %v615 = vld [vmem:[#allocation5 + $0xdf8] sm:$0xff]
    %v616 = vld [vmem:[#allocation5 + $0xe00] sm:$0xff]
    %v617 = vld [vmem:[#allocation5 + $0xe08] sm:$0xff]
    %v618 = vld [vmem:[#allocation5 + $0xe10] sm:$0xff]
    %v619 = vld [vmem:[#allocation5 + $0xe18] sm:$0xff]
    %v620 = vld [vmem:[#allocation5 + $0xe20] sm:$0xff]
    %v621 = vld [vmem:[#allocation5 + $0xe28] sm:$0xff]
    %v622 = vld [vmem:[#allocation5 + $0xe30] sm:$0xff]
    %v623 = vld [vmem:[#allocation5 + $0xe38] sm:$0xff]
    %v624 = vld [vmem:[#allocation5 + $0xe40] sm:$0xff]
    %v625 = vld [vmem:[#allocation5 + $0xe48] sm:$0xff]
    %v626 = vld [vmem:[#allocation5 + $0xe50] sm:$0xff]
    %v627 = vld [vmem:[#allocation5 + $0xe58] sm:$0xff]
    %v628 = vld [vmem:[#allocation5 + $0xe60] sm:$0xff]
    %v629 = vld [vmem:[#allocation5 + $0xe68] sm:$0xff]
    %v630 = vld [vmem:[#allocation5 + $0xe70] sm:$0xff]
    %v631 = vld [vmem:[#allocation5 + $0xe78] sm:$0xff]
    %v632 = vld [vmem:[#allocation5 + $0xe80] sm:$0xff]
    %v633 = vld [vmem:[#allocation5 + $0xe88] sm:$0xff]
    %v634 = vld [vmem:[#allocation5 + $0xe90] sm:$0xff]
    %v635 = vld [vmem:[#allocation5 + $0xe98] sm:$0xff]
    %v636 = vld [vmem:[#allocation5 + $0xea0] sm:$0xff]
    %v637 = vld [vmem:[#allocation5 + $0xea8] sm:$0xff]
    %v638 = vld [vmem:[#allocation5 + $0xeb0] sm:$0xff]
    %v639 = vld [vmem:[#allocation5 + $0xeb8] sm:$0xff]
    %v640 = vld [vmem:[#allocation5 + $0xec0] sm:$0xff]
    %v641 = vld [vmem:[#allocation5 + $0xec8] sm:$0xff]
    %v642 = vld [vmem:[#allocation5 + $0xed0] sm:$0xff]
    %v643 = vld [vmem:[#allocation5 + $0xed8] sm:$0xff]
    %v644 = vld [vmem:[#allocation5 + $0xee0] sm:$0xff]
    %v645 = vld [vmem:[#allocation5 + $0xee8] sm:$0xff]
    %v646 = vld [vmem:[#allocation5 + $0xef0] sm:$0xff]
    %v647 = vld [vmem:[#allocation5 + $0xef8] sm:$0xff]
    %v648 = vld [vmem:[#allocation5 + $0xf00] sm:$0xff]
    %v649 = vld [vmem:[#allocation5 + $0xf08] sm:$0xff]
    %v650 = vld [vmem:[#allocation5 + $0xf10] sm:$0xff]
    %v651 = vld [vmem:[#allocation5 + $0xf18] sm:$0xff]
    %v652 = vld [vmem:[#allocation5 + $0xf20] sm:$0xff]
    %v653 = vld [vmem:[#allocation5 + $0xf28] sm:$0xff]
    %v654 = vld [vmem:[#allocation5 + $0xf30] sm:$0xff]
    %v655 = vld [vmem:[#allocation5 + $0xf38] sm:$0xff]
    %v656 = vld [vmem:[#allocation5 + $0xf40] sm:$0xff]
    %v657 = vld [vmem:[#allocation5 + $0xf48] sm:$0xff]
    %v658 = vld [vmem:[#allocation5 + $0xf50] sm:$0xff]
    %v659 = vld [vmem:[#allocation5 + $0xf58] sm:$0xff]
    %v660 = vld [vmem:[#allocation5 + $0xf60] sm:$0xff]
    %v661 = vld [vmem:[#allocation5 + $0xf68] sm:$0xff]
    %v662 = vld [vmem:[#allocation5 + $0xf70] sm:$0xff]
    %v663 = vld [vmem:[#allocation5 + $0xf78] sm:$0xff]
    %v664 = vld [vmem:[#allocation5 + $0xf80] sm:$0xff]
    %v665 = vld [vmem:[#allocation5 + $0xf88] sm:$0xff]
    %v666 = vld [vmem:[#allocation5 + $0xf90] sm:$0xff]
    %v667 = vld [vmem:[#allocation5 + $0xf98] sm:$0xff]
    %v668 = vld [vmem:[#allocation5 + $0xfa0] sm:$0xff]
    %v669 = vld [vmem:[#allocation5 + $0xfa8] sm:$0xff]
    %v670 = vld [vmem:[#allocation5 + $0xfb0] sm:$0xff]
    %v671 = vld [vmem:[#allocation5 + $0xfb8] sm:$0xff]
    %v672 = vld [vmem:[#allocation5 + $0xfc0] sm:$0xff]
    %v673 = vld [vmem:[#allocation5 + $0xfc8] sm:$0xff]
    %v674 = vld [vmem:[#allocation5 + $0xfd0] sm:$0xff]
    %v675 = vld [vmem:[#allocation5 + $0xfd8] sm:$0xff]
    %v676 = vld [vmem:[#allocation5 + $0xfe0] sm:$0xff]
    %v677 = vld [vmem:[#allocation5 + $0xfe8] sm:$0xff]
    %v678 = vld [vmem:[#allocation5 + $0xff0] sm:$0xff]
    %v679 = vld [vmem:[#allocation5 + $0xff8] sm:$0xff]
    %v680 = vld [vmem:[#allocation5 + $0x1000] sm:$0xff]
    %v681 = vld [vmem:[#allocation5 + $0x1008] sm:$0xff]
    %v682 = vld [vmem:[#allocation5 + $0x1010] sm:$0xff]
    %v683 = vld [vmem:[#allocation5 + $0x1018] sm:$0xff]
    %v684 = vld [vmem:[#allocation5 + $0x1020] sm:$0xff]
    %v685 = vld [vmem:[#allocation5 + $0x1028] sm:$0xff]
    %v686 = vld [vmem:[#allocation5 + $0x1030] sm:$0xff]
    %v687 = vld [vmem:[#allocation5 + $0x1038] sm:$0xff]
    %v688 = vld [vmem:[#allocation5 + $0x1040] sm:$0xff]
    %v689 = vld [vmem:[#allocation5 + $0x1048] sm:$0xff]
    %v690 = vld [vmem:[#allocation5 + $0x1050] sm:$0xff]
    %v691 = vld [vmem:[#allocation5 + $0x1058] sm:$0xff]
    %v692 = vld [vmem:[#allocation5 + $0x1060] sm:$0xff]
    %v693 = vld [vmem:[#allocation5 + $0x1068] sm:$0xff]
    %v694 = vld [vmem:[#allocation5 + $0x1070] sm:$0xff]
    %v695 = vld [vmem:[#allocation5 + $0x1078] sm:$0xff]
    %v696 = vld [vmem:[#allocation5 + $0x1080] sm:$0xff]
    %v697 = vld [vmem:[#allocation5 + $0x1088] sm:$0xff]
    %v698 = vld [vmem:[#allocation5 + $0x1090] sm:$0xff]
    %v699 = vld [vmem:[#allocation5 + $0x1098] sm:$0xff]
    %v700 = vld [vmem:[#allocation5 + $0x10a0] sm:$0xff]
    %v701 = vld [vmem:[#allocation5 + $0x10a8] sm:$0xff]
    %v702 = vld [vmem:[#allocation5 + $0x10b0] sm:$0xff]
    %v703 = vld [vmem:[#allocation5 + $0x10b8] sm:$0xff]
    %v704 = vld [vmem:[#allocation5 + $0x10c0] sm:$0xff]
    %v705 = vld [vmem:[#allocation5 + $0x10c8] sm:$0xff]
    %v706 = vld [vmem:[#allocation5 + $0x10d0] sm:$0xff]
    %v707 = vld [vmem:[#allocation5 + $0x10d8] sm:$0xff]
    %v708 = vld [vmem:[#allocation5 + $0x10e0] sm:$0xff]
    %v709 = vld [vmem:[#allocation5 + $0x10e8] sm:$0xff]
    %v710 = vld [vmem:[#allocation5 + $0x10f0] sm:$0xff]
    %v711 = vld [vmem:[#allocation5 + $0x10f8] sm:$0xff]
    %v712 = vld [vmem:[#allocation5 + $0x1100] sm:$0xff]
    %v713 = vld [vmem:[#allocation5 + $0x1108] sm:$0xff]
    %v714 = vld [vmem:[#allocation5 + $0x1110] sm:$0xff]
    %v715 = vld [vmem:[#allocation5 + $0x1118] sm:$0xff]
    %v716 = vld [vmem:[#allocation5 + $0x1120] sm:$0xff]
    %v717 = vld [vmem:[#allocation5 + $0x1128] sm:$0xff]
    %v718 = vld [vmem:[#allocation5 + $0x1130] sm:$0xff]
    %v719 = vld [vmem:[#allocation5 + $0x1138] sm:$0xff]
    %v720 = vld [vmem:[#allocation5 + $0x1140] sm:$0xff]
    %v721 = vld [vmem:[#allocation5 + $0x1148] sm:$0xff]
    %v722 = vld [vmem:[#allocation5 + $0x1150] sm:$0xff]
    %v723 = vld [vmem:[#allocation5 + $0x1158] sm:$0xff]
    %v724 = vld [vmem:[#allocation5 + $0x1160] sm:$0xff]
    %v725 = vld [vmem:[#allocation5 + $0x1168] sm:$0xff]
    %v726 = vld [vmem:[#allocation5 + $0x1170] sm:$0xff]
    %v727 = vld [vmem:[#allocation5 + $0x1178] sm:$0xff]
    %v728 = vld [vmem:[#allocation5 + $0x1180] sm:$0xff]
    %v729 = vld [vmem:[#allocation5 + $0x1188] sm:$0xff]
    %v730 = vld [vmem:[#allocation5 + $0x1190] sm:$0xff]
    %v731 = vld [vmem:[#allocation5 + $0x1198] sm:$0xff]
    %v732 = vld [vmem:[#allocation5 + $0x11a0] sm:$0xff]
    %v733 = vld [vmem:[#allocation5 + $0x11a8] sm:$0xff]
    %v734 = vld [vmem:[#allocation5 + $0x11b0] sm:$0xff]
    %v735 = vld [vmem:[#allocation5 + $0x11b8] sm:$0xff]
    %v736 = vld [vmem:[#allocation5 + $0x11c0] sm:$0xff]
    %v737 = vld [vmem:[#allocation5 + $0x11c8] sm:$0xff]
    %v738 = vld [vmem:[#allocation5 + $0x11d0] sm:$0xff]
    %v739 = vld [vmem:[#allocation5 + $0x11d8] sm:$0xff]
    %v740 = vld [vmem:[#allocation5 + $0x11e0] sm:$0xff]
    %v741 = vld [vmem:[#allocation5 + $0x11e8] sm:$0xff]
    %v742 = vld [vmem:[#allocation5 + $0x11f0] sm:$0xff]
    %v743 = vld [vmem:[#allocation5 + $0x11f8] sm:$0xff]
    %v744 = vld [vmem:[#allocation5 + $0x1200] sm:$0xff]
    %v745 = vld [vmem:[#allocation5 + $0x1208] sm:$0xff]
    %v746 = vld [vmem:[#allocation5 + $0x1210] sm:$0xff]
    %v747 = vld [vmem:[#allocation5 + $0x1218] sm:$0xff]
    %v748 = vld [vmem:[#allocation5 + $0x1220] sm:$0xff]
    %v749 = vld [vmem:[#allocation5 + $0x1228] sm:$0xff]
    %v750 = vld [vmem:[#allocation5 + $0x1230] sm:$0xff]
    %v751 = vld [vmem:[#allocation5 + $0x1238] sm:$0xff]
    %v752 = vld [vmem:[#allocation5 + $0x1240] sm:$0xff]
    %v753 = vld [vmem:[#allocation5 + $0x1248] sm:$0xff]
    %v754 = vld [vmem:[#allocation5 + $0x1250] sm:$0xff]
    %v755 = vld [vmem:[#allocation5 + $0x1258] sm:$0xff]
    %v756 = vld [vmem:[#allocation5 + $0x1260] sm:$0xff]
    %v757 = vld [vmem:[#allocation5 + $0x1268] sm:$0xff]
    %v758 = vld [vmem:[#allocation5 + $0x1270] sm:$0xff]
    %v759 = vld [vmem:[#allocation5 + $0x1278] sm:$0xff]
    %v760 = vld [vmem:[#allocation5 + $0x1280] sm:$0xff]
    %v761 = vld [vmem:[#allocation5 + $0x1288] sm:$0xff]
    %v762 = vld [vmem:[#allocation5 + $0x1290] sm:$0xff]
    %v763 = vld [vmem:[#allocation5 + $0x1298] sm:$0xff]
    %v764 = vld [vmem:[#allocation5 + $0x12a0] sm:$0xff]
    %v765 = vld [vmem:[#allocation5 + $0x12a8] sm:$0xff]
    %v766 = vld [vmem:[#allocation5 + $0x12b0] sm:$0xff]
    %v767 = vld [vmem:[#allocation5 + $0x12b8] sm:$0xff]
    %v768 = vld [vmem:[#allocation5 + $0x12c0] sm:$0xff]
    %v769 = vld [vmem:[#allocation5 + $0x12c8] sm:$0xff]
    %v770 = vld [vmem:[#allocation5 + $0x12d0] sm:$0xff]
    %v771 = vld [vmem:[#allocation5 + $0x12d8] sm:$0xff]
    %v772 = vld [vmem:[#allocation5 + $0x12e0] sm:$0xff]
    %v773 = vld [vmem:[#allocation5 + $0x12e8] sm:$0xff]
    %v774 = vld [vmem:[#allocation5 + $0x12f0] sm:$0xff]
    %v775 = vld [vmem:[#allocation5 + $0x12f8] sm:$0xff]
    %v776 = vld [vmem:[#allocation5 + $0x1300] sm:$0xff]
    %v777 = vld [vmem:[#allocation5 + $0x1308] sm:$0xff]
    %v778 = vld [vmem:[#allocation5 + $0x1310] sm:$0xff]
    %v779 = vld [vmem:[#allocation5 + $0x1318] sm:$0xff]
    %v780 = vld [vmem:[#allocation5 + $0x1320] sm:$0xff]
    %v781 = vld [vmem:[#allocation5 + $0x1328] sm:$0xff]
    %v782 = vld [vmem:[#allocation5 + $0x1330] sm:$0xff]
    %v783 = vld [vmem:[#allocation5 + $0x1338] sm:$0xff]
    %v784 = vld [vmem:[#allocation5 + $0x1340] sm:$0xff]
    %v785 = vld [vmem:[#allocation5 + $0x1348] sm:$0xff]
    %v786 = vld [vmem:[#allocation5 + $0x1350] sm:$0xff]
    %v787 = vld [vmem:[#allocation5 + $0x1358] sm:$0xff]
    %v788 = vld [vmem:[#allocation5 + $0x1360] sm:$0xff]
    %v789 = vld [vmem:[#allocation5 + $0x1368] sm:$0xff]
    %v790 = vld [vmem:[#allocation5 + $0x1370] sm:$0xff]
    %v791 = vld [vmem:[#allocation5 + $0x1378] sm:$0xff]
    %v792 = vld [vmem:[#allocation5 + $0x1380] sm:$0xff]
    %v793 = vld [vmem:[#allocation5 + $0x1388] sm:$0xff]
    %v794 = vld [vmem:[#allocation5 + $0x1390] sm:$0xff]
    %v795 = vld [vmem:[#allocation5 + $0x1398] sm:$0xff]
    %v796 = vld [vmem:[#allocation5 + $0x13a0] sm:$0xff]
    %v797 = vld [vmem:[#allocation5 + $0x13a8] sm:$0xff]
    %v798 = vld [vmem:[#allocation5 + $0x13b0] sm:$0xff]
    %v799 = vld [vmem:[#allocation5 + $0x13b8] sm:$0xff]
    %v800 = vld [vmem:[#allocation5 + $0x13c0] sm:$0xff]
    %v801 = vld [vmem:[#allocation5 + $0x13c8] sm:$0xff]
    %v802 = vld [vmem:[#allocation5 + $0x13d0] sm:$0xff]
    %v803 = vld [vmem:[#allocation5 + $0x13d8] sm:$0xff]
    %v804 = vld [vmem:[#allocation5 + $0x13e0] sm:$0xff]
    %v805 = vld [vmem:[#allocation5 + $0x13e8] sm:$0xff]
    %v806 = vld [vmem:[#allocation5 + $0x13f0] sm:$0xff]
    %v807 = vld [vmem:[#allocation5 + $0x13f8] sm:$0xff]
    %v808 = vld [vmem:[#allocation5 + $0x1400] sm:$0xff]
    %v809 = vld [vmem:[#allocation5 + $0x1408] sm:$0xff]
    %v810 = vld [vmem:[#allocation5 + $0x1410] sm:$0xff]
    %v811 = vld [vmem:[#allocation5 + $0x1418] sm:$0xff]
    %v812 = vld [vmem:[#allocation5 + $0x1420] sm:$0xff]
    %v813 = vld [vmem:[#allocation5 + $0x1428] sm:$0xff]
    %v814 = vld [vmem:[#allocation5 + $0x1430] sm:$0xff]
    %v815 = vld [vmem:[#allocation5 + $0x1438] sm:$0xff]
    %v816 = vld [vmem:[#allocation5 + $0x1440] sm:$0xff]
    %v817 = vld [vmem:[#allocation5 + $0x1448] sm:$0xff]
    %v818 = vld [vmem:[#allocation5 + $0x1450] sm:$0xff]
    %v819 = vld [vmem:[#allocation5 + $0x1458] sm:$0xff]
    %v820 = vld [vmem:[#allocation5 + $0x1460] sm:$0xff]
    %v821 = vld [vmem:[#allocation5 + $0x1468] sm:$0xff]
    %v822 = vld [vmem:[#allocation5 + $0x1470] sm:$0xff]
    %v823 = vld [vmem:[#allocation5 + $0x1478] sm:$0xff]
    %v824 = vld [vmem:[#allocation5 + $0x1480] sm:$0xff]
    %v825 = vld [vmem:[#allocation5 + $0x1488] sm:$0xff]
    %v826 = vld [vmem:[#allocation5 + $0x1490] sm:$0xff]
    %v827 = vld [vmem:[#allocation5 + $0x1498] sm:$0xff]
    %v828 = vld [vmem:[#allocation5 + $0x14a0] sm:$0xff]
    %v829 = vld [vmem:[#allocation5 + $0x14a8] sm:$0xff]
    %v830 = vld [vmem:[#allocation5 + $0x14b0] sm:$0xff]
    %v831 = vld [vmem:[#allocation5 + $0x14b8] sm:$0xff]
    %v832 = vld [vmem:[#allocation5 + $0x14c0] sm:$0xff]
    %v833 = vld [vmem:[#allocation5 + $0x14c8] sm:$0xff]
    %v834 = vld [vmem:[#allocation5 + $0x14d0] sm:$0xff]
    %v835 = vld [vmem:[#allocation5 + $0x14d8] sm:$0xff]
    %v836 = vld [vmem:[#allocation5 + $0x14e0] sm:$0xff]
    %v837 = vld [vmem:[#allocation5 + $0x14e8] sm:$0xff]
    %v838 = vld [vmem:[#allocation5 + $0x14f0] sm:$0xff]
    %v839 = vld [vmem:[#allocation5 + $0x14f8] sm:$0xff]
    %v840 = vld [vmem:[#allocation5 + $0x1500] sm:$0xff]
    %v841 = vld [vmem:[#allocation5 + $0x1508] sm:$0xff]
    %v842 = vld [vmem:[#allocation5 + $0x1510] sm:$0xff]
    %v843 = vld [vmem:[#allocation5 + $0x1518] sm:$0xff]
    %v844 = vld [vmem:[#allocation5 + $0x1520] sm:$0xff]
    %v845 = vld [vmem:[#allocation5 + $0x1528] sm:$0xff]
    %v846 = vld [vmem:[#allocation5 + $0x1530] sm:$0xff]
    %v847 = vld [vmem:[#allocation5 + $0x1538] sm:$0xff]
    %v848 = vld [vmem:[#allocation5 + $0x1540] sm:$0xff]
    %v849 = vld [vmem:[#allocation5 + $0x1548] sm:$0xff]
    %v850 = vld [vmem:[#allocation5 + $0x1550] sm:$0xff]
    %v851 = vld [vmem:[#allocation5 + $0x1558] sm:$0xff]
    %v852 = vld [vmem:[#allocation5 + $0x1560] sm:$0xff]
    %v853 = vld [vmem:[#allocation5 + $0x1568] sm:$0xff]
    %v854 = vld [vmem:[#allocation5 + $0x1570] sm:$0xff]
    %v855 = vld [vmem:[#allocation5 + $0x1578] sm:$0xff]
    %v856 = vld [vmem:[#allocation5 + $0x1580] sm:$0xff]
    %v857 = vld [vmem:[#allocation5 + $0x1588] sm:$0xff]
    %v858 = vld [vmem:[#allocation5 + $0x1590] sm:$0xff]
    %v859 = vld [vmem:[#allocation5 + $0x1598] sm:$0xff]
    %v860 = vld [vmem:[#allocation5 + $0x15a0] sm:$0xff]
    %v861 = vld [vmem:[#allocation5 + $0x15a8] sm:$0xff]
    %v862 = vld [vmem:[#allocation5 + $0x15b0] sm:$0xff]
    %v863 = vld [vmem:[#allocation5 + $0x15b8] sm:$0xff]
    %v864 = vld [vmem:[#allocation5 + $0x15c0] sm:$0xff]
    %v865 = vld [vmem:[#allocation5 + $0x15c8] sm:$0xff]
    %v866 = vld [vmem:[#allocation5 + $0x15d0] sm:$0xff]
    %v867 = vld [vmem:[#allocation5 + $0x15d8] sm:$0xff]
    %v868 = vld [vmem:[#allocation5 + $0x15e0] sm:$0xff]
    %v869 = vld [vmem:[#allocation5 + $0x15e8] sm:$0xff]
    %v870 = vld [vmem:[#allocation5 + $0x15f0] sm:$0xff]
    %v871 = vld [vmem:[#allocation5 + $0x15f8] sm:$0xff]
    %v872 = vld [vmem:[#allocation5 + $0x1600] sm:$0xff]
    %v873 = vld [vmem:[#allocation5 + $0x1608] sm:$0xff]
    %v874 = vld [vmem:[#allocation5 + $0x1610] sm:$0xff]
    %v875 = vld [vmem:[#allocation5 + $0x1618] sm:$0xff]
    %v876 = vld [vmem:[#allocation5 + $0x1620] sm:$0xff]
    %v877 = vld [vmem:[#allocation5 + $0x1628] sm:$0xff]
    %v878 = vld [vmem:[#allocation5 + $0x1630] sm:$0xff]
    %v879 = vld [vmem:[#allocation5 + $0x1638] sm:$0xff]
    %v880 = vld [vmem:[#allocation5 + $0x1640] sm:$0xff]
    %v881 = vld [vmem:[#allocation5 + $0x1648] sm:$0xff]
    %v882 = vld [vmem:[#allocation5 + $0x1650] sm:$0xff]
    %v883 = vld [vmem:[#allocation5 + $0x1658] sm:$0xff]
    %v884 = vld [vmem:[#allocation5 + $0x1660] sm:$0xff]
    %v885 = vld [vmem:[#allocation5 + $0x1668] sm:$0xff]
    %v886 = vld [vmem:[#allocation5 + $0x1670] sm:$0xff]
    %v887 = vld [vmem:[#allocation5 + $0x1678] sm:$0xff]
    %v888 = vld [vmem:[#allocation5 + $0x1680] sm:$0xff]
    %v889 = vld [vmem:[#allocation5 + $0x1688] sm:$0xff]
    %v890 = vld [vmem:[#allocation5 + $0x1690] sm:$0xff]
    %v891 = vld [vmem:[#allocation5 + $0x1698] sm:$0xff]
    %v892 = vld [vmem:[#allocation5 + $0x16a0] sm:$0xff]
    %v893 = vld [vmem:[#allocation5 + $0x16a8] sm:$0xff]
    %v894 = vld [vmem:[#allocation5 + $0x16b0] sm:$0xff]
    %v895 = vld [vmem:[#allocation5 + $0x16b8] sm:$0xff]
    %v896 = vld [vmem:[#allocation5 + $0x16c0] sm:$0xff]
    %v897 = vld [vmem:[#allocation5 + $0x16c8] sm:$0xff]
    %v898 = vld [vmem:[#allocation5 + $0x16d0] sm:$0xff]
    %v899 = vld [vmem:[#allocation5 + $0x16d8] sm:$0xff]
    %v900 = vld [vmem:[#allocation5 + $0x16e0] sm:$0xff]
    %v901 = vld [vmem:[#allocation5 + $0x16e8] sm:$0xff]
    %v902 = vld [vmem:[#allocation5 + $0x16f0] sm:$0xff]
    %v903 = vld [vmem:[#allocation5 + $0x16f8] sm:$0xff]
    %v904 = vld [vmem:[#allocation5 + $0x1700] sm:$0xff]
    %v905 = vld [vmem:[#allocation5 + $0x1708] sm:$0xff]
    %v906 = vld [vmem:[#allocation5 + $0x1710] sm:$0xff]
    %v907 = vld [vmem:[#allocation5 + $0x1718] sm:$0xff]
    %v908 = vld [vmem:[#allocation5 + $0x1720] sm:$0xff]
    %v909 = vld [vmem:[#allocation5 + $0x1728] sm:$0xff]
    %v910 = vld [vmem:[#allocation5 + $0x1730] sm:$0xff]
    %v911 = vld [vmem:[#allocation5 + $0x1738] sm:$0xff]
    %v912 = vld [vmem:[#allocation5 + $0x1740] sm:$0xff]
    %v913 = vld [vmem:[#allocation5 + $0x1748] sm:$0xff]
    %v914 = vld [vmem:[#allocation5 + $0x1750] sm:$0xff]
    %v915 = vld [vmem:[#allocation5 + $0x1758] sm:$0xff]
    %v916 = vld [vmem:[#allocation5 + $0x1760] sm:$0xff]
    %v917 = vld [vmem:[#allocation5 + $0x1768] sm:$0xff]
    %v918 = vld [vmem:[#allocation5 + $0x1770] sm:$0xff]
    %v919 = vld [vmem:[#allocation5 + $0x1778] sm:$0xff]
    %v920 = vld [vmem:[#allocation5 + $0x1780] sm:$0xff]
    %v921 = vld [vmem:[#allocation5 + $0x1788] sm:$0xff]
    %v922 = vld [vmem:[#allocation5 + $0x1790] sm:$0xff]
    %v923 = vld [vmem:[#allocation5 + $0x1798] sm:$0xff]
    %v924 = vld [vmem:[#allocation5 + $0x17a0] sm:$0xff]
    %v925 = vld [vmem:[#allocation5 + $0x17a8] sm:$0xff]
    %v926 = vld [vmem:[#allocation5 + $0x17b0] sm:$0xff]
    %v927 = vld [vmem:[#allocation5 + $0x17b8] sm:$0xff]
    %v928 = vld [vmem:[#allocation5 + $0x17c0] sm:$0xff]
    %v929 = vld [vmem:[#allocation5 + $0x17c8] sm:$0xff]
    %v930 = vld [vmem:[#allocation5 + $0x17d0] sm:$0xff]
    %v931 = vld [vmem:[#allocation5 + $0x17d8] sm:$0xff]
    %v932 = vld [vmem:[#allocation5 + $0x17e0] sm:$0xff]
    %v933 = vld [vmem:[#allocation5 + $0x17e8] sm:$0xff]
    %v934 = vld [vmem:[#allocation5 + $0x17f0] sm:$0xff]
    %v935 = vld [vmem:[#allocation5 + $0x17f8] sm:$0xff]
    %v936 = vld [vmem:[#allocation8] sm:$0x3f]
    %v938 = vlaneseq
    %v939 = vshrl.u32 %v938, 7
    %v940 = vsub.s32 0, %v939
    %v941 = vrot.slane %v936, %v940
    %v942 = vlaneseq
    %v943 = vshrl.u32 %v942, 7
    %v944 = vsub.s32 1, %v943
    %v945 = vrot.slane %v936, %v944
    %v946 = vlaneseq
    %v947 = vshrl.u32 %v946, 7
    %v948 = vsub.s32 2, %v947
    %v949 = vrot.slane %v936, %v948
    %v950 = vlaneseq
    %v951 = vshrl.u32 %v950, 7
    %v952 = vsub.s32 3, %v951
    %v953 = vrot.slane %v936, %v952
    %v954 = vlaneseq
    %v955 = vshrl.u32 %v954, 7
    %v956 = vsub.s32 4, %v955
    %v957 = vrot.slane %v936, %v956
    %v958 = vlaneseq
    %v959 = vshrl.u32 %v958, 7
    %v960 = vsub.s32 5, %v959
    %v961 = vrot.slane %v936, %v960
    %v984 = vunpack.c.l.b16 %v152
    %v985 = vunpack.c.h.b16 %v152
    %v986 = vunpack.c.l.b16 %v153
    %v987 = vunpack.c.h.b16 %v153
    %v988 = vunpack.c.l.b16 %v154
    %v989 = vunpack.c.h.b16 %v154
    %v990 = vunpack.c.l.b16 %v155
    %v991 = vunpack.c.h.b16 %v155
    %v992 = vunpack.c.l.b16 %v156
    %v993 = vunpack.c.h.b16 %v156
    %v994 = vunpack.c.l.b16 %v157
    %v995 = vunpack.c.h.b16 %v157
    %v996 = vunpack.c.l.b16 %v158
    %v997 = vunpack.c.h.b16 %v158
    %v998 = vunpack.c.l.b16 %v159
    %v999 = vunpack.c.h.b16 %v159
    %v1000 = vunpack.c.l.b16 %v160
    %v1001 = vunpack.c.h.b16 %v160
    %v1002 = vunpack.c.l.b16 %v161
    %v1003 = vunpack.c.h.b16 %v161
    %v1004 = vunpack.c.l.b16 %v162
    %v1005 = vunpack.c.h.b16 %v162
    %v1006 = vunpack.c.l.b16 %v163
    %v1007 = vunpack.c.h.b16 %v163
    %v1008 = vunpack.c.l.b16 %v164
    %v1009 = vunpack.c.h.b16 %v164
    %v1010 = vunpack.c.l.b16 %v165
    %v1011 = vunpack.c.h.b16 %v165
    %v1012 = vunpack.c.l.b16 %v166
    %v1013 = vunpack.c.h.b16 %v166
    %v1014 = vunpack.c.l.b16 %v167
    %v1015 = vunpack.c.h.b16 %v167
    %v1016 = vpack.c.b16 %v1000, %v984
    %v1017 = vpack.c.b16 %v1001, %v985
    %v1018 = vpack.c.b16 %v1002, %v986
    %v1019 = vpack.c.b16 %v1003, %v987
    %v1020 = vpack.c.b16 %v1004, %v988
    %v1021 = vpack.c.b16 %v1005, %v989
    %v1022 = vpack.c.b16 %v1006, %v990
    %v1023 = vpack.c.b16 %v1007, %v991
    %v1024 = vpack.c.b16 %v1008, %v992
    %v1025 = vpack.c.b16 %v1009, %v993
    %v1026 = vpack.c.b16 %v1010, %v994
    %v1027 = vpack.c.b16 %v1011, %v995
    %v1028 = vpack.c.b16 %v1012, %v996
    %v1029 = vpack.c.b16 %v1013, %v997
    %v1030 = vpack.c.b16 %v1014, %v998
    %v1031 = vpack.c.b16 %v1015, %v999
    %v1816 = vunpack.c.l.b16 %v168
    %v1817 = vunpack.c.h.b16 %v168
    %v1818 = vunpack.c.l.b16 %v169
    %v1819 = vunpack.c.h.b16 %v169
    %v1820 = vunpack.c.l.b16 %v170
    %v1821 = vunpack.c.h.b16 %v170
    %v1822 = vunpack.c.l.b16 %v171
    %v1823 = vunpack.c.h.b16 %v171
    %v1824 = vunpack.c.l.b16 %v172
    %v1825 = vunpack.c.h.b16 %v172
    %v1826 = vunpack.c.l.b16 %v173
    %v1827 = vunpack.c.h.b16 %v173
    %v1828 = vunpack.c.l.b16 %v174
    %v1829 = vunpack.c.h.b16 %v174
    %v1830 = vunpack.c.l.b16 %v175
    %v1831 = vunpack.c.h.b16 %v175
    %v1832 = vunpack.c.l.b16 %v176
    %v1833 = vunpack.c.h.b16 %v176
    %v1834 = vunpack.c.l.b16 %v177
    %v1835 = vunpack.c.h.b16 %v177
    %v1836 = vunpack.c.l.b16 %v178
    %v1837 = vunpack.c.h.b16 %v178
    %v1838 = vunpack.c.l.b16 %v179
    %v1839 = vunpack.c.h.b16 %v179
    %v1840 = vunpack.c.l.b16 %v180
    %v1841 = vunpack.c.h.b16 %v180
    %v1842 = vunpack.c.l.b16 %v181
    %v1843 = vunpack.c.h.b16 %v181
    %v1844 = vunpack.c.l.b16 %v182
    %v1845 = vunpack.c.h.b16 %v182
    %v1846 = vunpack.c.l.b16 %v183
    %v1847 = vunpack.c.h.b16 %v183
    %v1848 = vunpack.c.l.b16 %v184
    %v1849 = vunpack.c.h.b16 %v184
    %v1850 = vunpack.c.l.b16 %v185
    %v1851 = vunpack.c.h.b16 %v185
    %v1852 = vunpack.c.l.b16 %v186
    %v1853 = vunpack.c.h.b16 %v186
    %v1854 = vunpack.c.l.b16 %v187
    %v1855 = vunpack.c.h.b16 %v187
    %v1856 = vunpack.c.l.b16 %v188
    %v1857 = vunpack.c.h.b16 %v188
    %v1858 = vunpack.c.l.b16 %v189
    %v1859 = vunpack.c.h.b16 %v189
    %v1860 = vunpack.c.l.b16 %v190
    %v1861 = vunpack.c.h.b16 %v190
    %v1862 = vunpack.c.l.b16 %v191
    %v1863 = vunpack.c.h.b16 %v191
    %v1864 = vunpack.c.l.b16 %v192
    %v1865 = vunpack.c.h.b16 %v192
    %v1866 = vunpack.c.l.b16 %v193
    %v1867 = vunpack.c.h.b16 %v193
    %v1868 = vunpack.c.l.b16 %v194
    %v1869 = vunpack.c.h.b16 %v194
    %v1870 = vunpack.c.l.b16 %v195
    %v1871 = vunpack.c.h.b16 %v195
    %v1872 = vunpack.c.l.b16 %v196
    %v1873 = vunpack.c.h.b16 %v196
    %v1874 = vunpack.c.l.b16 %v197
    %v1875 = vunpack.c.h.b16 %v197
    %v1876 = vunpack.c.l.b16 %v198
    %v1877 = vunpack.c.h.b16 %v198
    %v1878 = vunpack.c.l.b16 %v199
    %v1879 = vunpack.c.h.b16 %v199
    %v1880 = vunpack.c.l.b16 %v200
    %v1881 = vunpack.c.h.b16 %v200
    %v1882 = vunpack.c.l.b16 %v201
    %v1883 = vunpack.c.h.b16 %v201
    %v1884 = vunpack.c.l.b16 %v202
    %v1885 = vunpack.c.h.b16 %v202
    %v1886 = vunpack.c.l.b16 %v203
    %v1887 = vunpack.c.h.b16 %v203
    %v1888 = vunpack.c.l.b16 %v204
    %v1889 = vunpack.c.h.b16 %v204
    %v1890 = vunpack.c.l.b16 %v205
    %v1891 = vunpack.c.h.b16 %v205
    %v1892 = vunpack.c.l.b16 %v206
    %v1893 = vunpack.c.h.b16 %v206
    %v1894 = vunpack.c.l.b16 %v207
    %v1895 = vunpack.c.h.b16 %v207
    %v1896 = vunpack.c.l.b16 %v208
    %v1897 = vunpack.c.h.b16 %v208
    %v1898 = vunpack.c.l.b16 %v209
    %v1899 = vunpack.c.h.b16 %v209
    %v1900 = vunpack.c.l.b16 %v210
    %v1901 = vunpack.c.h.b16 %v210
    %v1902 = vunpack.c.l.b16 %v211
    %v1903 = vunpack.c.h.b16 %v211
    %v1904 = vunpack.c.l.b16 %v212
    %v1905 = vunpack.c.h.b16 %v212
    %v1906 = vunpack.c.l.b16 %v213
    %v1907 = vunpack.c.h.b16 %v213
    %v1908 = vunpack.c.l.b16 %v214
    %v1909 = vunpack.c.h.b16 %v214
    %v1910 = vunpack.c.l.b16 %v215
    %v1911 = vunpack.c.h.b16 %v215
    %v1912 = vunpack.c.l.b16 %v216
    %v1913 = vunpack.c.h.b16 %v216
    %v1914 = vunpack.c.l.b16 %v217
    %v1915 = vunpack.c.h.b16 %v217
    %v1916 = vunpack.c.l.b16 %v218
    %v1917 = vunpack.c.h.b16 %v218
    %v1918 = vunpack.c.l.b16 %v219
    %v1919 = vunpack.c.h.b16 %v219
    %v1920 = vunpack.c.l.b16 %v220
    %v1921 = vunpack.c.h.b16 %v220
    %v1922 = vunpack.c.l.b16 %v221
    %v1923 = vunpack.c.h.b16 %v221
    %v1924 = vunpack.c.l.b16 %v222
    %v1925 = vunpack.c.h.b16 %v222
    %v1926 = vunpack.c.l.b16 %v223
    %v1927 = vunpack.c.h.b16 %v223
    %v1928 = vunpack.c.l.b16 %v224
    %v1929 = vunpack.c.h.b16 %v224
    %v1930 = vunpack.c.l.b16 %v225
    %v1931 = vunpack.c.h.b16 %v225
    %v1932 = vunpack.c.l.b16 %v226
    %v1933 = vunpack.c.h.b16 %v226
    %v1934 = vunpack.c.l.b16 %v227
    %v1935 = vunpack.c.h.b16 %v227
    %v1936 = vunpack.c.l.b16 %v228
    %v1937 = vunpack.c.h.b16 %v228
    %v1938 = vunpack.c.l.b16 %v229
    %v1939 = vunpack.c.h.b16 %v229
    %v1940 = vunpack.c.l.b16 %v230
    %v1941 = vunpack.c.h.b16 %v230
    %v1942 = vunpack.c.l.b16 %v231
    %v1943 = vunpack.c.h.b16 %v231
    %v1944 = vunpack.c.l.b16 %v232
    %v1945 = vunpack.c.h.b16 %v232
    %v1946 = vunpack.c.l.b16 %v233
    %v1947 = vunpack.c.h.b16 %v233
    %v1948 = vunpack.c.l.b16 %v234
    %v1949 = vunpack.c.h.b16 %v234
    %v1950 = vunpack.c.l.b16 %v235
    %v1951 = vunpack.c.h.b16 %v235
    %v1952 = vunpack.c.l.b16 %v236
    %v1953 = vunpack.c.h.b16 %v236
    %v1954 = vunpack.c.l.b16 %v237
    %v1955 = vunpack.c.h.b16 %v237
    %v1956 = vunpack.c.l.b16 %v238
    %v1957 = vunpack.c.h.b16 %v238
    %v1958 = vunpack.c.l.b16 %v239
    %v1959 = vunpack.c.h.b16 %v239
    %v1960 = vunpack.c.l.b16 %v240
    %v1961 = vunpack.c.h.b16 %v240
    %v1962 = vunpack.c.l.b16 %v241
    %v1963 = vunpack.c.h.b16 %v241
    %v1964 = vunpack.c.l.b16 %v242
    %v1965 = vunpack.c.h.b16 %v242
    %v1966 = vunpack.c.l.b16 %v243
    %v1967 = vunpack.c.h.b16 %v243
    %v1968 = vunpack.c.l.b16 %v244
    %v1969 = vunpack.c.h.b16 %v244
    %v1970 = vunpack.c.l.b16 %v245
    %v1971 = vunpack.c.h.b16 %v245
    %v1972 = vunpack.c.l.b16 %v246
    %v1973 = vunpack.c.h.b16 %v246
    %v1974 = vunpack.c.l.b16 %v247
    %v1975 = vunpack.c.h.b16 %v247
    %v1976 = vunpack.c.l.b16 %v248
    %v1977 = vunpack.c.h.b16 %v248
    %v1978 = vunpack.c.l.b16 %v249
    %v1979 = vunpack.c.h.b16 %v249
    %v1980 = vunpack.c.l.b16 %v250
    %v1981 = vunpack.c.h.b16 %v250
    %v1982 = vunpack.c.l.b16 %v251
    %v1983 = vunpack.c.h.b16 %v251
    %v1984 = vunpack.c.l.b16 %v252
    %v1985 = vunpack.c.h.b16 %v252
    %v1986 = vunpack.c.l.b16 %v253
    %v1987 = vunpack.c.h.b16 %v253
    %v1988 = vunpack.c.l.b16 %v254
    %v1989 = vunpack.c.h.b16 %v254
    %v1990 = vunpack.c.l.b16 %v255
    %v1991 = vunpack.c.h.b16 %v255
    %v1992 = vunpack.c.l.b16 %v256
    %v1993 = vunpack.c.h.b16 %v256
    %v1994 = vunpack.c.l.b16 %v257
    %v1995 = vunpack.c.h.b16 %v257
    %v1996 = vunpack.c.l.b16 %v258
    %v1997 = vunpack.c.h.b16 %v258
    %v1998 = vunpack.c.l.b16 %v259
    %v1999 = vunpack.c.h.b16 %v259
    %v2000 = vunpack.c.l.b16 %v260
    %v2001 = vunpack.c.h.b16 %v260
    %v2002 = vunpack.c.l.b16 %v261
    %v2003 = vunpack.c.h.b16 %v261
    %v2004 = vunpack.c.l.b16 %v262
    %v2005 = vunpack.c.h.b16 %v262
    %v2006 = vunpack.c.l.b16 %v263
    %v2007 = vunpack.c.h.b16 %v263
    %v2008 = vunpack.c.l.b16 %v264
    %v2009 = vunpack.c.h.b16 %v264
    %v2010 = vunpack.c.l.b16 %v265
    %v2011 = vunpack.c.h.b16 %v265
    %v2012 = vunpack.c.l.b16 %v266
    %v2013 = vunpack.c.h.b16 %v266
    %v2014 = vunpack.c.l.b16 %v267
    %v2015 = vunpack.c.h.b16 %v267
    %v2016 = vunpack.c.l.b16 %v268
    %v2017 = vunpack.c.h.b16 %v268
    %v2018 = vunpack.c.l.b16 %v269
    %v2019 = vunpack.c.h.b16 %v269
    %v2020 = vunpack.c.l.b16 %v270
    %v2021 = vunpack.c.h.b16 %v270
    %v2022 = vunpack.c.l.b16 %v271
    %v2023 = vunpack.c.h.b16 %v271
    %v2024 = vunpack.c.l.b16 %v272
    %v2025 = vunpack.c.h.b16 %v272
    %v2026 = vunpack.c.l.b16 %v273
    %v2027 = vunpack.c.h.b16 %v273
    %v2028 = vunpack.c.l.b16 %v274
    %v2029 = vunpack.c.h.b16 %v274
    %v2030 = vunpack.c.l.b16 %v275
    %v2031 = vunpack.c.h.b16 %v275
    %v2032 = vunpack.c.l.b16 %v276
    %v2033 = vunpack.c.h.b16 %v276
    %v2034 = vunpack.c.l.b16 %v277
    %v2035 = vunpack.c.h.b16 %v277
    %v2036 = vunpack.c.l.b16 %v278
    %v2037 = vunpack.c.h.b16 %v278
    %v2038 = vunpack.c.l.b16 %v279
    %v2039 = vunpack.c.h.b16 %v279
    %v2040 = vunpack.c.l.b16 %v280
    %v2041 = vunpack.c.h.b16 %v280
    %v2042 = vunpack.c.l.b16 %v281
    %v2043 = vunpack.c.h.b16 %v281
    %v2044 = vunpack.c.l.b16 %v282
    %v2045 = vunpack.c.h.b16 %v282
    %v2046 = vunpack.c.l.b16 %v283
    %v2047 = vunpack.c.h.b16 %v283
    %v2048 = vunpack.c.l.b16 %v284
    %v2049 = vunpack.c.h.b16 %v284
    %v2050 = vunpack.c.l.b16 %v285
    %v2051 = vunpack.c.h.b16 %v285
    %v2052 = vunpack.c.l.b16 %v286
    %v2053 = vunpack.c.h.b16 %v286
    %v2054 = vunpack.c.l.b16 %v287
    %v2055 = vunpack.c.h.b16 %v287
    %v2056 = vunpack.c.l.b16 %v288
    %v2057 = vunpack.c.h.b16 %v288
    %v2058 = vunpack.c.l.b16 %v289
    %v2059 = vunpack.c.h.b16 %v289
    %v2060 = vunpack.c.l.b16 %v290
    %v2061 = vunpack.c.h.b16 %v290
    %v2062 = vunpack.c.l.b16 %v291
    %v2063 = vunpack.c.h.b16 %v291
    %v2064 = vunpack.c.l.b16 %v292
    %v2065 = vunpack.c.h.b16 %v292
    %v2066 = vunpack.c.l.b16 %v293
    %v2067 = vunpack.c.h.b16 %v293
    %v2068 = vunpack.c.l.b16 %v294
    %v2069 = vunpack.c.h.b16 %v294
    %v2070 = vunpack.c.l.b16 %v295
    %v2071 = vunpack.c.h.b16 %v295
    %v2072 = vunpack.c.l.b16 %v296
    %v2073 = vunpack.c.h.b16 %v296
    %v2074 = vunpack.c.l.b16 %v297
    %v2075 = vunpack.c.h.b16 %v297
    %v2076 = vunpack.c.l.b16 %v298
    %v2077 = vunpack.c.h.b16 %v298
    %v2078 = vunpack.c.l.b16 %v299
    %v2079 = vunpack.c.h.b16 %v299
    %v2080 = vunpack.c.l.b16 %v300
    %v2081 = vunpack.c.h.b16 %v300
    %v2082 = vunpack.c.l.b16 %v301
    %v2083 = vunpack.c.h.b16 %v301
    %v2084 = vunpack.c.l.b16 %v302
    %v2085 = vunpack.c.h.b16 %v302
    %v2086 = vunpack.c.l.b16 %v303
    %v2087 = vunpack.c.h.b16 %v303
    %v2088 = vunpack.c.l.b16 %v304
    %v2089 = vunpack.c.h.b16 %v304
    %v2090 = vunpack.c.l.b16 %v305
    %v2091 = vunpack.c.h.b16 %v305
    %v2092 = vunpack.c.l.b16 %v306
    %v2093 = vunpack.c.h.b16 %v306
    %v2094 = vunpack.c.l.b16 %v307
    %v2095 = vunpack.c.h.b16 %v307
    %v2096 = vunpack.c.l.b16 %v308
    %v2097 = vunpack.c.h.b16 %v308
    %v2098 = vunpack.c.l.b16 %v309
    %v2099 = vunpack.c.h.b16 %v309
    %v2100 = vunpack.c.l.b16 %v310
    %v2101 = vunpack.c.h.b16 %v310
    %v2102 = vunpack.c.l.b16 %v311
    %v2103 = vunpack.c.h.b16 %v311
    %v2104 = vunpack.c.l.b16 %v312
    %v2105 = vunpack.c.h.b16 %v312
    %v2106 = vunpack.c.l.b16 %v313
    %v2107 = vunpack.c.h.b16 %v313
    %v2108 = vunpack.c.l.b16 %v314
    %v2109 = vunpack.c.h.b16 %v314
    %v2110 = vunpack.c.l.b16 %v315
    %v2111 = vunpack.c.h.b16 %v315
    %v2112 = vunpack.c.l.b16 %v316
    %v2113 = vunpack.c.h.b16 %v316
    %v2114 = vunpack.c.l.b16 %v317
    %v2115 = vunpack.c.h.b16 %v317
    %v2116 = vunpack.c.l.b16 %v318
    %v2117 = vunpack.c.h.b16 %v318
    %v2118 = vunpack.c.l.b16 %v319
    %v2119 = vunpack.c.h.b16 %v319
    %v2120 = vunpack.c.l.b16 %v320
    %v2121 = vunpack.c.h.b16 %v320
    %v2122 = vunpack.c.l.b16 %v321
    %v2123 = vunpack.c.h.b16 %v321
    %v2124 = vunpack.c.l.b16 %v322
    %v2125 = vunpack.c.h.b16 %v322
    %v2126 = vunpack.c.l.b16 %v323
    %v2127 = vunpack.c.h.b16 %v323
    %v2128 = vunpack.c.l.b16 %v324
    %v2129 = vunpack.c.h.b16 %v324
    %v2130 = vunpack.c.l.b16 %v325
    %v2131 = vunpack.c.h.b16 %v325
    %v2132 = vunpack.c.l.b16 %v326
    %v2133 = vunpack.c.h.b16 %v326
    %v2134 = vunpack.c.l.b16 %v327
    %v2135 = vunpack.c.h.b16 %v327
    %v2136 = vunpack.c.l.b16 %v328
    %v2137 = vunpack.c.h.b16 %v328
    %v2138 = vunpack.c.l.b16 %v329
    %v2139 = vunpack.c.h.b16 %v329
    %v2140 = vunpack.c.l.b16 %v330
    %v2141 = vunpack.c.h.b16 %v330
    %v2142 = vunpack.c.l.b16 %v331
    %v2143 = vunpack.c.h.b16 %v331
    %v2144 = vunpack.c.l.b16 %v332
    %v2145 = vunpack.c.h.b16 %v332
    %v2146 = vunpack.c.l.b16 %v333
    %v2147 = vunpack.c.h.b16 %v333
    %v2148 = vunpack.c.l.b16 %v334
    %v2149 = vunpack.c.h.b16 %v334
    %v2150 = vunpack.c.l.b16 %v335
    %v2151 = vunpack.c.h.b16 %v335
    %v2152 = vunpack.c.l.b16 %v336
    %v2153 = vunpack.c.h.b16 %v336
    %v2154 = vunpack.c.l.b16 %v337
    %v2155 = vunpack.c.h.b16 %v337
    %v2156 = vunpack.c.l.b16 %v338
    %v2157 = vunpack.c.h.b16 %v338
    %v2158 = vunpack.c.l.b16 %v339
    %v2159 = vunpack.c.h.b16 %v339
    %v2160 = vunpack.c.l.b16 %v340
    %v2161 = vunpack.c.h.b16 %v340
    %v2162 = vunpack.c.l.b16 %v341
    %v2163 = vunpack.c.h.b16 %v341
    %v2164 = vunpack.c.l.b16 %v342
    %v2165 = vunpack.c.h.b16 %v342
    %v2166 = vunpack.c.l.b16 %v343
    %v2167 = vunpack.c.h.b16 %v343
    %v2168 = vunpack.c.l.b16 %v344
    %v2169 = vunpack.c.h.b16 %v344
    %v2170 = vunpack.c.l.b16 %v345
    %v2171 = vunpack.c.h.b16 %v345
    %v2172 = vunpack.c.l.b16 %v346
    %v2173 = vunpack.c.h.b16 %v346
    %v2174 = vunpack.c.l.b16 %v347
    %v2175 = vunpack.c.h.b16 %v347
    %v2176 = vunpack.c.l.b16 %v348
    %v2177 = vunpack.c.h.b16 %v348
    %v2178 = vunpack.c.l.b16 %v349
    %v2179 = vunpack.c.h.b16 %v349
    %v2180 = vunpack.c.l.b16 %v350
    %v2181 = vunpack.c.h.b16 %v350
    %v2182 = vunpack.c.l.b16 %v351
    %v2183 = vunpack.c.h.b16 %v351
    %v2184 = vunpack.c.l.b16 %v352
    %v2185 = vunpack.c.h.b16 %v352
    %v2186 = vunpack.c.l.b16 %v353
    %v2187 = vunpack.c.h.b16 %v353
    %v2188 = vunpack.c.l.b16 %v354
    %v2189 = vunpack.c.h.b16 %v354
    %v2190 = vunpack.c.l.b16 %v355
    %v2191 = vunpack.c.h.b16 %v355
    %v2192 = vunpack.c.l.b16 %v356
    %v2193 = vunpack.c.h.b16 %v356
    %v2194 = vunpack.c.l.b16 %v357
    %v2195 = vunpack.c.h.b16 %v357
    %v2196 = vunpack.c.l.b16 %v358
    %v2197 = vunpack.c.h.b16 %v358
    %v2198 = vunpack.c.l.b16 %v359
    %v2199 = vunpack.c.h.b16 %v359
    %v2200 = vunpack.c.l.b16 %v360
    %v2201 = vunpack.c.h.b16 %v360
    %v2202 = vunpack.c.l.b16 %v361
    %v2203 = vunpack.c.h.b16 %v361
    %v2204 = vunpack.c.l.b16 %v362
    %v2205 = vunpack.c.h.b16 %v362
    %v2206 = vunpack.c.l.b16 %v363
    %v2207 = vunpack.c.h.b16 %v363
    %v2208 = vunpack.c.l.b16 %v364
    %v2209 = vunpack.c.h.b16 %v364
    %v2210 = vunpack.c.l.b16 %v365
    %v2211 = vunpack.c.h.b16 %v365
    %v2212 = vunpack.c.l.b16 %v366
    %v2213 = vunpack.c.h.b16 %v366
    %v2214 = vunpack.c.l.b16 %v367
    %v2215 = vunpack.c.h.b16 %v367
    %v2216 = vunpack.c.l.b16 %v368
    %v2217 = vunpack.c.h.b16 %v368
    %v2218 = vunpack.c.l.b16 %v369
    %v2219 = vunpack.c.h.b16 %v369
    %v2220 = vunpack.c.l.b16 %v370
    %v2221 = vunpack.c.h.b16 %v370
    %v2222 = vunpack.c.l.b16 %v371
    %v2223 = vunpack.c.h.b16 %v371
    %v2224 = vunpack.c.l.b16 %v372
    %v2225 = vunpack.c.h.b16 %v372
    %v2226 = vunpack.c.l.b16 %v373
    %v2227 = vunpack.c.h.b16 %v373
    %v2228 = vunpack.c.l.b16 %v374
    %v2229 = vunpack.c.h.b16 %v374
    %v2230 = vunpack.c.l.b16 %v375
    %v2231 = vunpack.c.h.b16 %v375
    %v2232 = vunpack.c.l.b16 %v376
    %v2233 = vunpack.c.h.b16 %v376
    %v2234 = vunpack.c.l.b16 %v377
    %v2235 = vunpack.c.h.b16 %v377
    %v2236 = vunpack.c.l.b16 %v378
    %v2237 = vunpack.c.h.b16 %v378
    %v2238 = vunpack.c.l.b16 %v379
    %v2239 = vunpack.c.h.b16 %v379
    %v2240 = vunpack.c.l.b16 %v380
    %v2241 = vunpack.c.h.b16 %v380
    %v2242 = vunpack.c.l.b16 %v381
    %v2243 = vunpack.c.h.b16 %v381
    %v2244 = vunpack.c.l.b16 %v382
    %v2245 = vunpack.c.h.b16 %v382
    %v2246 = vunpack.c.l.b16 %v383
    %v2247 = vunpack.c.h.b16 %v383
    %v2248 = vunpack.c.l.b16 %v384
    %v2249 = vunpack.c.h.b16 %v384
    %v2250 = vunpack.c.l.b16 %v385
    %v2251 = vunpack.c.h.b16 %v385
    %v2252 = vunpack.c.l.b16 %v386
    %v2253 = vunpack.c.h.b16 %v386
    %v2254 = vunpack.c.l.b16 %v387
    %v2255 = vunpack.c.h.b16 %v387
    %v2256 = vunpack.c.l.b16 %v388
    %v2257 = vunpack.c.h.b16 %v388
    %v2258 = vunpack.c.l.b16 %v389
    %v2259 = vunpack.c.h.b16 %v389
    %v2260 = vunpack.c.l.b16 %v390
    %v2261 = vunpack.c.h.b16 %v390
    %v2262 = vunpack.c.l.b16 %v391
    %v2263 = vunpack.c.h.b16 %v391
    %v2264 = vunpack.c.l.b16 %v392
    %v2265 = vunpack.c.h.b16 %v392
    %v2266 = vunpack.c.l.b16 %v393
    %v2267 = vunpack.c.h.b16 %v393
    %v2268 = vunpack.c.l.b16 %v394
    %v2269 = vunpack.c.h.b16 %v394
    %v2270 = vunpack.c.l.b16 %v395
    %v2271 = vunpack.c.h.b16 %v395
    %v2272 = vunpack.c.l.b16 %v396
    %v2273 = vunpack.c.h.b16 %v396
    %v2274 = vunpack.c.l.b16 %v397
    %v2275 = vunpack.c.h.b16 %v397
    %v2276 = vunpack.c.l.b16 %v398
    %v2277 = vunpack.c.h.b16 %v398
    %v2278 = vunpack.c.l.b16 %v399
    %v2279 = vunpack.c.h.b16 %v399
    %v2280 = vunpack.c.l.b16 %v400
    %v2281 = vunpack.c.h.b16 %v400
    %v2282 = vunpack.c.l.b16 %v401
    %v2283 = vunpack.c.h.b16 %v401
    %v2284 = vunpack.c.l.b16 %v402
    %v2285 = vunpack.c.h.b16 %v402
    %v2286 = vunpack.c.l.b16 %v403
    %v2287 = vunpack.c.h.b16 %v403
    %v2288 = vunpack.c.l.b16 %v404
    %v2289 = vunpack.c.h.b16 %v404
    %v2290 = vunpack.c.l.b16 %v405
    %v2291 = vunpack.c.h.b16 %v405
    %v2292 = vunpack.c.l.b16 %v406
    %v2293 = vunpack.c.h.b16 %v406
    %v2294 = vunpack.c.l.b16 %v407
    %v2295 = vunpack.c.h.b16 %v407
    %v2296 = vunpack.c.l.b16 %v408
    %v2297 = vunpack.c.h.b16 %v408
    %v2298 = vunpack.c.l.b16 %v409
    %v2299 = vunpack.c.h.b16 %v409
    %v2300 = vunpack.c.l.b16 %v410
    %v2301 = vunpack.c.h.b16 %v410
    %v2302 = vunpack.c.l.b16 %v411
    %v2303 = vunpack.c.h.b16 %v411
    %v2304 = vunpack.c.l.b16 %v412
    %v2305 = vunpack.c.h.b16 %v412
    %v2306 = vunpack.c.l.b16 %v413
    %v2307 = vunpack.c.h.b16 %v413
    %v2308 = vunpack.c.l.b16 %v414
    %v2309 = vunpack.c.h.b16 %v414
    %v2310 = vunpack.c.l.b16 %v415
    %v2311 = vunpack.c.h.b16 %v415
    %v2312 = vunpack.c.l.b16 %v416
    %v2313 = vunpack.c.h.b16 %v416
    %v2314 = vunpack.c.l.b16 %v417
    %v2315 = vunpack.c.h.b16 %v417
    %v2316 = vunpack.c.l.b16 %v418
    %v2317 = vunpack.c.h.b16 %v418
    %v2318 = vunpack.c.l.b16 %v419
    %v2319 = vunpack.c.h.b16 %v419
    %v2320 = vunpack.c.l.b16 %v420
    %v2321 = vunpack.c.h.b16 %v420
    %v2322 = vunpack.c.l.b16 %v421
    %v2323 = vunpack.c.h.b16 %v421
    %v2324 = vunpack.c.l.b16 %v422
    %v2325 = vunpack.c.h.b16 %v422
    %v2326 = vunpack.c.l.b16 %v423
    %v2327 = vunpack.c.h.b16 %v423
    %v2328 = vunpack.c.l.b16 %v424
    %v2329 = vunpack.c.h.b16 %v424
    %v2330 = vunpack.c.l.b16 %v425
    %v2331 = vunpack.c.h.b16 %v425
    %v2332 = vunpack.c.l.b16 %v426
    %v2333 = vunpack.c.h.b16 %v426
    %v2334 = vunpack.c.l.b16 %v427
    %v2335 = vunpack.c.h.b16 %v427
    %v2336 = vunpack.c.l.b16 %v428
    %v2337 = vunpack.c.h.b16 %v428
    %v2338 = vunpack.c.l.b16 %v429
    %v2339 = vunpack.c.h.b16 %v429
    %v2340 = vunpack.c.l.b16 %v430
    %v2341 = vunpack.c.h.b16 %v430
    %v2342 = vunpack.c.l.b16 %v431
    %v2343 = vunpack.c.h.b16 %v431
    %v2344 = vunpack.c.l.b16 %v432
    %v2345 = vunpack.c.h.b16 %v432
    %v2346 = vunpack.c.l.b16 %v433
    %v2347 = vunpack.c.h.b16 %v433
    %v2348 = vunpack.c.l.b16 %v434
    %v2349 = vunpack.c.h.b16 %v434
    %v2350 = vunpack.c.l.b16 %v435
    %v2351 = vunpack.c.h.b16 %v435
    %v2352 = vunpack.c.l.b16 %v436
    %v2353 = vunpack.c.h.b16 %v436
    %v2354 = vunpack.c.l.b16 %v437
    %v2355 = vunpack.c.h.b16 %v437
    %v2356 = vunpack.c.l.b16 %v438
    %v2357 = vunpack.c.h.b16 %v438
    %v2358 = vunpack.c.l.b16 %v439
    %v2359 = vunpack.c.h.b16 %v439
    %v2360 = vunpack.c.l.b16 %v440
    %v2361 = vunpack.c.h.b16 %v440
    %v2362 = vunpack.c.l.b16 %v441
    %v2363 = vunpack.c.h.b16 %v441
    %v2364 = vunpack.c.l.b16 %v442
    %v2365 = vunpack.c.h.b16 %v442
    %v2366 = vunpack.c.l.b16 %v443
    %v2367 = vunpack.c.h.b16 %v443
    %v2368 = vunpack.c.l.b16 %v444
    %v2369 = vunpack.c.h.b16 %v444
    %v2370 = vunpack.c.l.b16 %v445
    %v2371 = vunpack.c.h.b16 %v445
    %v2372 = vunpack.c.l.b16 %v446
    %v2373 = vunpack.c.h.b16 %v446
    %v2374 = vunpack.c.l.b16 %v447
    %v2375 = vunpack.c.h.b16 %v447
    %v2376 = vunpack.c.l.b16 %v448
    %v2377 = vunpack.c.h.b16 %v448
    %v2378 = vunpack.c.l.b16 %v449
    %v2379 = vunpack.c.h.b16 %v449
    %v2380 = vunpack.c.l.b16 %v450
    %v2381 = vunpack.c.h.b16 %v450
    %v2382 = vunpack.c.l.b16 %v451
    %v2383 = vunpack.c.h.b16 %v451
    %v2384 = vunpack.c.l.b16 %v452
    %v2385 = vunpack.c.h.b16 %v452
    %v2386 = vunpack.c.l.b16 %v453
    %v2387 = vunpack.c.h.b16 %v453
    %v2388 = vunpack.c.l.b16 %v454
    %v2389 = vunpack.c.h.b16 %v454
    %v2390 = vunpack.c.l.b16 %v455
    %v2391 = vunpack.c.h.b16 %v455
    %v2392 = vunpack.c.l.b16 %v456
    %v2393 = vunpack.c.h.b16 %v456
    %v2394 = vunpack.c.l.b16 %v457
    %v2395 = vunpack.c.h.b16 %v457
    %v2396 = vunpack.c.l.b16 %v458
    %v2397 = vunpack.c.h.b16 %v458
    %v2398 = vunpack.c.l.b16 %v459
    %v2399 = vunpack.c.h.b16 %v459
    %v2400 = vunpack.c.l.b16 %v460
    %v2401 = vunpack.c.h.b16 %v460
    %v2402 = vunpack.c.l.b16 %v461
    %v2403 = vunpack.c.h.b16 %v461
    %v2404 = vunpack.c.l.b16 %v462
    %v2405 = vunpack.c.h.b16 %v462
    %v2406 = vunpack.c.l.b16 %v463
    %v2407 = vunpack.c.h.b16 %v463
    %v2408 = vunpack.c.l.b16 %v464
    %v2409 = vunpack.c.h.b16 %v464
    %v2410 = vunpack.c.l.b16 %v465
    %v2411 = vunpack.c.h.b16 %v465
    %v2412 = vunpack.c.l.b16 %v466
    %v2413 = vunpack.c.h.b16 %v466
    %v2414 = vunpack.c.l.b16 %v467
    %v2415 = vunpack.c.h.b16 %v467
    %v2416 = vunpack.c.l.b16 %v468
    %v2417 = vunpack.c.h.b16 %v468
    %v2418 = vunpack.c.l.b16 %v469
    %v2419 = vunpack.c.h.b16 %v469
    %v2420 = vunpack.c.l.b16 %v470
    %v2421 = vunpack.c.h.b16 %v470
    %v2422 = vunpack.c.l.b16 %v471
    %v2423 = vunpack.c.h.b16 %v471
    %v2424 = vunpack.c.l.b16 %v472
    %v2425 = vunpack.c.h.b16 %v472
    %v2426 = vunpack.c.l.b16 %v473
    %v2427 = vunpack.c.h.b16 %v473
    %v2428 = vunpack.c.l.b16 %v474
    %v2429 = vunpack.c.h.b16 %v474
    %v2430 = vunpack.c.l.b16 %v475
    %v2431 = vunpack.c.h.b16 %v475
    %v2432 = vunpack.c.l.b16 %v476
    %v2433 = vunpack.c.h.b16 %v476
    %v2434 = vunpack.c.l.b16 %v477
    %v2435 = vunpack.c.h.b16 %v477
    %v2436 = vunpack.c.l.b16 %v478
    %v2437 = vunpack.c.h.b16 %v478
    %v2438 = vunpack.c.l.b16 %v479
    %v2439 = vunpack.c.h.b16 %v479
    %v2440 = vunpack.c.l.b16 %v480
    %v2441 = vunpack.c.h.b16 %v480
    %v2442 = vunpack.c.l.b16 %v481
    %v2443 = vunpack.c.h.b16 %v481
    %v2444 = vunpack.c.l.b16 %v482
    %v2445 = vunpack.c.h.b16 %v482
    %v2446 = vunpack.c.l.b16 %v483
    %v2447 = vunpack.c.h.b16 %v483
    %v2448 = vunpack.c.l.b16 %v484
    %v2449 = vunpack.c.h.b16 %v484
    %v2450 = vunpack.c.l.b16 %v485
    %v2451 = vunpack.c.h.b16 %v485
    %v2452 = vunpack.c.l.b16 %v486
    %v2453 = vunpack.c.h.b16 %v486
    %v2454 = vunpack.c.l.b16 %v487
    %v2455 = vunpack.c.h.b16 %v487
    %v2456 = vunpack.c.l.b16 %v488
    %v2457 = vunpack.c.h.b16 %v488
    %v2458 = vunpack.c.l.b16 %v489
    %v2459 = vunpack.c.h.b16 %v489
    %v2460 = vunpack.c.l.b16 %v490
    %v2461 = vunpack.c.h.b16 %v490
    %v2462 = vunpack.c.l.b16 %v491
    %v2463 = vunpack.c.h.b16 %v491
    %v2464 = vunpack.c.l.b16 %v492
    %v2465 = vunpack.c.h.b16 %v492
    %v2466 = vunpack.c.l.b16 %v493
    %v2467 = vunpack.c.h.b16 %v493
    %v2468 = vunpack.c.l.b16 %v494
    %v2469 = vunpack.c.h.b16 %v494
    %v2470 = vunpack.c.l.b16 %v495
    %v2471 = vunpack.c.h.b16 %v495
    %v2472 = vunpack.c.l.b16 %v496
    %v2473 = vunpack.c.h.b16 %v496
    %v2474 = vunpack.c.l.b16 %v497
    %v2475 = vunpack.c.h.b16 %v497
    %v2476 = vunpack.c.l.b16 %v498
    %v2477 = vunpack.c.h.b16 %v498
    %v2478 = vunpack.c.l.b16 %v499
    %v2479 = vunpack.c.h.b16 %v499
    %v2480 = vunpack.c.l.b16 %v500
    %v2481 = vunpack.c.h.b16 %v500
    %v2482 = vunpack.c.l.b16 %v501
    %v2483 = vunpack.c.h.b16 %v501
    %v2484 = vunpack.c.l.b16 %v502
    %v2485 = vunpack.c.h.b16 %v502
    %v2486 = vunpack.c.l.b16 %v503
    %v2487 = vunpack.c.h.b16 %v503
    %v2488 = vunpack.c.l.b16 %v504
    %v2489 = vunpack.c.h.b16 %v504
    %v2490 = vunpack.c.l.b16 %v505
    %v2491 = vunpack.c.h.b16 %v505
    %v2492 = vunpack.c.l.b16 %v506
    %v2493 = vunpack.c.h.b16 %v506
    %v2494 = vunpack.c.l.b16 %v507
    %v2495 = vunpack.c.h.b16 %v507
    %v2496 = vunpack.c.l.b16 %v508
    %v2497 = vunpack.c.h.b16 %v508
    %v2498 = vunpack.c.l.b16 %v509
    %v2499 = vunpack.c.h.b16 %v509
    %v2500 = vunpack.c.l.b16 %v510
    %v2501 = vunpack.c.h.b16 %v510
    %v2502 = vunpack.c.l.b16 %v511
    %v2503 = vunpack.c.h.b16 %v511
    %v2504 = vunpack.c.l.b16 %v512
    %v2505 = vunpack.c.h.b16 %v512
    %v2506 = vunpack.c.l.b16 %v513
    %v2507 = vunpack.c.h.b16 %v513
    %v2508 = vunpack.c.l.b16 %v514
    %v2509 = vunpack.c.h.b16 %v514
    %v2510 = vunpack.c.l.b16 %v515
    %v2511 = vunpack.c.h.b16 %v515
    %v2512 = vunpack.c.l.b16 %v516
    %v2513 = vunpack.c.h.b16 %v516
    %v2514 = vunpack.c.l.b16 %v517
    %v2515 = vunpack.c.h.b16 %v517
    %v2516 = vunpack.c.l.b16 %v518
    %v2517 = vunpack.c.h.b16 %v518
    %v2518 = vunpack.c.l.b16 %v519
    %v2519 = vunpack.c.h.b16 %v519
    %v2520 = vunpack.c.l.b16 %v520
    %v2521 = vunpack.c.h.b16 %v520
    %v2522 = vunpack.c.l.b16 %v521
    %v2523 = vunpack.c.h.b16 %v521
    %v2524 = vunpack.c.l.b16 %v522
    %v2525 = vunpack.c.h.b16 %v522
    %v2526 = vunpack.c.l.b16 %v523
    %v2527 = vunpack.c.h.b16 %v523
    %v2528 = vunpack.c.l.b16 %v524
    %v2529 = vunpack.c.h.b16 %v524
    %v2530 = vunpack.c.l.b16 %v525
    %v2531 = vunpack.c.h.b16 %v525
    %v2532 = vunpack.c.l.b16 %v526
    %v2533 = vunpack.c.h.b16 %v526
    %v2534 = vunpack.c.l.b16 %v527
    %v2535 = vunpack.c.h.b16 %v527
    %v2536 = vunpack.c.l.b16 %v528
    %v2537 = vunpack.c.h.b16 %v528
    %v2538 = vunpack.c.l.b16 %v529
    %v2539 = vunpack.c.h.b16 %v529
    %v2540 = vunpack.c.l.b16 %v530
    %v2541 = vunpack.c.h.b16 %v530
    %v2542 = vunpack.c.l.b16 %v531
    %v2543 = vunpack.c.h.b16 %v531
    %v2544 = vunpack.c.l.b16 %v532
    %v2545 = vunpack.c.h.b16 %v532
    %v2546 = vunpack.c.l.b16 %v533
    %v2547 = vunpack.c.h.b16 %v533
    %v2548 = vunpack.c.l.b16 %v534
    %v2549 = vunpack.c.h.b16 %v534
    %v2550 = vunpack.c.l.b16 %v535
    %v2551 = vunpack.c.h.b16 %v535
    %v2552 = vunpack.c.l.b16 %v536
    %v2553 = vunpack.c.h.b16 %v536
    %v2554 = vunpack.c.l.b16 %v537
    %v2555 = vunpack.c.h.b16 %v537
    %v2556 = vunpack.c.l.b16 %v538
    %v2557 = vunpack.c.h.b16 %v538
    %v2558 = vunpack.c.l.b16 %v539
    %v2559 = vunpack.c.h.b16 %v539
    %v2560 = vunpack.c.l.b16 %v540
    %v2561 = vunpack.c.h.b16 %v540
    %v2562 = vunpack.c.l.b16 %v541
    %v2563 = vunpack.c.h.b16 %v541
    %v2564 = vunpack.c.l.b16 %v542
    %v2565 = vunpack.c.h.b16 %v542
    %v2566 = vunpack.c.l.b16 %v543
    %v2567 = vunpack.c.h.b16 %v543
    %v2568 = vunpack.c.l.b16 %v544
    %v2569 = vunpack.c.h.b16 %v544
    %v2570 = vunpack.c.l.b16 %v545
    %v2571 = vunpack.c.h.b16 %v545
    %v2572 = vunpack.c.l.b16 %v546
    %v2573 = vunpack.c.h.b16 %v546
    %v2574 = vunpack.c.l.b16 %v547
    %v2575 = vunpack.c.h.b16 %v547
    %v2576 = vunpack.c.l.b16 %v548
    %v2577 = vunpack.c.h.b16 %v548
    %v2578 = vunpack.c.l.b16 %v549
    %v2579 = vunpack.c.h.b16 %v549
    %v2580 = vunpack.c.l.b16 %v550
    %v2581 = vunpack.c.h.b16 %v550
    %v2582 = vunpack.c.l.b16 %v551
    %v2583 = vunpack.c.h.b16 %v551
    %v2584 = vunpack.c.l.b16 %v552
    %v2585 = vunpack.c.h.b16 %v552
    %v2586 = vunpack.c.l.b16 %v553
    %v2587 = vunpack.c.h.b16 %v553
    %v2588 = vunpack.c.l.b16 %v554
    %v2589 = vunpack.c.h.b16 %v554
    %v2590 = vunpack.c.l.b16 %v555
    %v2591 = vunpack.c.h.b16 %v555
    %v2592 = vunpack.c.l.b16 %v556
    %v2593 = vunpack.c.h.b16 %v556
    %v2594 = vunpack.c.l.b16 %v557
    %v2595 = vunpack.c.h.b16 %v557
    %v2596 = vunpack.c.l.b16 %v558
    %v2597 = vunpack.c.h.b16 %v558
    %v2598 = vunpack.c.l.b16 %v559
    %v2599 = vunpack.c.h.b16 %v559
    %v2600 = vunpack.c.l.b16 %v560
    %v2601 = vunpack.c.h.b16 %v560
    %v2602 = vunpack.c.l.b16 %v561
    %v2603 = vunpack.c.h.b16 %v561
    %v2604 = vunpack.c.l.b16 %v562
    %v2605 = vunpack.c.h.b16 %v562
    %v2606 = vunpack.c.l.b16 %v563
    %v2607 = vunpack.c.h.b16 %v563
    %v2608 = vunpack.c.l.b16 %v564
    %v2609 = vunpack.c.h.b16 %v564
    %v2610 = vunpack.c.l.b16 %v565
    %v2611 = vunpack.c.h.b16 %v565
    %v2612 = vunpack.c.l.b16 %v566
    %v2613 = vunpack.c.h.b16 %v566
    %v2614 = vunpack.c.l.b16 %v567
    %v2615 = vunpack.c.h.b16 %v567
    %v2616 = vunpack.c.l.b16 %v568
    %v2617 = vunpack.c.h.b16 %v568
    %v2618 = vunpack.c.l.b16 %v569
    %v2619 = vunpack.c.h.b16 %v569
    %v2620 = vunpack.c.l.b16 %v570
    %v2621 = vunpack.c.h.b16 %v570
    %v2622 = vunpack.c.l.b16 %v571
    %v2623 = vunpack.c.h.b16 %v571
    %v2624 = vunpack.c.l.b16 %v572
    %v2625 = vunpack.c.h.b16 %v572
    %v2626 = vunpack.c.l.b16 %v573
    %v2627 = vunpack.c.h.b16 %v573
    %v2628 = vunpack.c.l.b16 %v574
    %v2629 = vunpack.c.h.b16 %v574
    %v2630 = vunpack.c.l.b16 %v575
    %v2631 = vunpack.c.h.b16 %v575
    %v2632 = vunpack.c.l.b16 %v576
    %v2633 = vunpack.c.h.b16 %v576
    %v2634 = vunpack.c.l.b16 %v577
    %v2635 = vunpack.c.h.b16 %v577
    %v2636 = vunpack.c.l.b16 %v578
    %v2637 = vunpack.c.h.b16 %v578
    %v2638 = vunpack.c.l.b16 %v579
    %v2639 = vunpack.c.h.b16 %v579
    %v2640 = vunpack.c.l.b16 %v580
    %v2641 = vunpack.c.h.b16 %v580
    %v2642 = vunpack.c.l.b16 %v581
    %v2643 = vunpack.c.h.b16 %v581
    %v2644 = vunpack.c.l.b16 %v582
    %v2645 = vunpack.c.h.b16 %v582
    %v2646 = vunpack.c.l.b16 %v583
    %v2647 = vunpack.c.h.b16 %v583
    %v2648 = vunpack.c.l.b16 %v584
    %v2649 = vunpack.c.h.b16 %v584
    %v2650 = vunpack.c.l.b16 %v585
    %v2651 = vunpack.c.h.b16 %v585
    %v2652 = vunpack.c.l.b16 %v586
    %v2653 = vunpack.c.h.b16 %v586
    %v2654 = vunpack.c.l.b16 %v587
    %v2655 = vunpack.c.h.b16 %v587
    %v2656 = vunpack.c.l.b16 %v588
    %v2657 = vunpack.c.h.b16 %v588
    %v2658 = vunpack.c.l.b16 %v589
    %v2659 = vunpack.c.h.b16 %v589
    %v2660 = vunpack.c.l.b16 %v590
    %v2661 = vunpack.c.h.b16 %v590
    %v2662 = vunpack.c.l.b16 %v591
    %v2663 = vunpack.c.h.b16 %v591
    %v2664 = vunpack.c.l.b16 %v592
    %v2665 = vunpack.c.h.b16 %v592
    %v2666 = vunpack.c.l.b16 %v593
    %v2667 = vunpack.c.h.b16 %v593
    %v2668 = vunpack.c.l.b16 %v594
    %v2669 = vunpack.c.h.b16 %v594
    %v2670 = vunpack.c.l.b16 %v595
    %v2671 = vunpack.c.h.b16 %v595
    %v2672 = vunpack.c.l.b16 %v596
    %v2673 = vunpack.c.h.b16 %v596
    %v2674 = vunpack.c.l.b16 %v597
    %v2675 = vunpack.c.h.b16 %v597
    %v2676 = vunpack.c.l.b16 %v598
    %v2677 = vunpack.c.h.b16 %v598
    %v2678 = vunpack.c.l.b16 %v599
    %v2679 = vunpack.c.h.b16 %v599
    %v2680 = vunpack.c.l.b16 %v600
    %v2681 = vunpack.c.h.b16 %v600
    %v2682 = vunpack.c.l.b16 %v601
    %v2683 = vunpack.c.h.b16 %v601
    %v2684 = vunpack.c.l.b16 %v602
    %v2685 = vunpack.c.h.b16 %v602
    %v2686 = vunpack.c.l.b16 %v603
    %v2687 = vunpack.c.h.b16 %v603
    %v2688 = vunpack.c.l.b16 %v604
    %v2689 = vunpack.c.h.b16 %v604
    %v2690 = vunpack.c.l.b16 %v605
    %v2691 = vunpack.c.h.b16 %v605
    %v2692 = vunpack.c.l.b16 %v606
    %v2693 = vunpack.c.h.b16 %v606
    %v2694 = vunpack.c.l.b16 %v607
    %v2695 = vunpack.c.h.b16 %v607
    %v2696 = vunpack.c.l.b16 %v608
    %v2697 = vunpack.c.h.b16 %v608
    %v2698 = vunpack.c.l.b16 %v609
    %v2699 = vunpack.c.h.b16 %v609
    %v2700 = vunpack.c.l.b16 %v610
    %v2701 = vunpack.c.h.b16 %v610
    %v2702 = vunpack.c.l.b16 %v611
    %v2703 = vunpack.c.h.b16 %v611
    %v2704 = vunpack.c.l.b16 %v612
    %v2705 = vunpack.c.h.b16 %v612
    %v2706 = vunpack.c.l.b16 %v613
    %v2707 = vunpack.c.h.b16 %v613
    %v2708 = vunpack.c.l.b16 %v614
    %v2709 = vunpack.c.h.b16 %v614
    %v2710 = vunpack.c.l.b16 %v615
    %v2711 = vunpack.c.h.b16 %v615
    %v2712 = vunpack.c.l.b16 %v616
    %v2713 = vunpack.c.h.b16 %v616
    %v2714 = vunpack.c.l.b16 %v617
    %v2715 = vunpack.c.h.b16 %v617
    %v2716 = vunpack.c.l.b16 %v618
    %v2717 = vunpack.c.h.b16 %v618
    %v2718 = vunpack.c.l.b16 %v619
    %v2719 = vunpack.c.h.b16 %v619
    %v2720 = vunpack.c.l.b16 %v620
    %v2721 = vunpack.c.h.b16 %v620
    %v2722 = vunpack.c.l.b16 %v621
    %v2723 = vunpack.c.h.b16 %v621
    %v2724 = vunpack.c.l.b16 %v622
    %v2725 = vunpack.c.h.b16 %v622
    %v2726 = vunpack.c.l.b16 %v623
    %v2727 = vunpack.c.h.b16 %v623
    %v2728 = vunpack.c.l.b16 %v624
    %v2729 = vunpack.c.h.b16 %v624
    %v2730 = vunpack.c.l.b16 %v625
    %v2731 = vunpack.c.h.b16 %v625
    %v2732 = vunpack.c.l.b16 %v626
    %v2733 = vunpack.c.h.b16 %v626
    %v2734 = vunpack.c.l.b16 %v627
    %v2735 = vunpack.c.h.b16 %v627
    %v2736 = vunpack.c.l.b16 %v628
    %v2737 = vunpack.c.h.b16 %v628
    %v2738 = vunpack.c.l.b16 %v629
    %v2739 = vunpack.c.h.b16 %v629
    %v2740 = vunpack.c.l.b16 %v630
    %v2741 = vunpack.c.h.b16 %v630
    %v2742 = vunpack.c.l.b16 %v631
    %v2743 = vunpack.c.h.b16 %v631
    %v2744 = vunpack.c.l.b16 %v632
    %v2745 = vunpack.c.h.b16 %v632
    %v2746 = vunpack.c.l.b16 %v633
    %v2747 = vunpack.c.h.b16 %v633
    %v2748 = vunpack.c.l.b16 %v634
    %v2749 = vunpack.c.h.b16 %v634
    %v2750 = vunpack.c.l.b16 %v635
    %v2751 = vunpack.c.h.b16 %v635
    %v2752 = vunpack.c.l.b16 %v636
    %v2753 = vunpack.c.h.b16 %v636
    %v2754 = vunpack.c.l.b16 %v637
    %v2755 = vunpack.c.h.b16 %v637
    %v2756 = vunpack.c.l.b16 %v638
    %v2757 = vunpack.c.h.b16 %v638
    %v2758 = vunpack.c.l.b16 %v639
    %v2759 = vunpack.c.h.b16 %v639
    %v2760 = vunpack.c.l.b16 %v640
    %v2761 = vunpack.c.h.b16 %v640
    %v2762 = vunpack.c.l.b16 %v641
    %v2763 = vunpack.c.h.b16 %v641
    %v2764 = vunpack.c.l.b16 %v642
    %v2765 = vunpack.c.h.b16 %v642
    %v2766 = vunpack.c.l.b16 %v643
    %v2767 = vunpack.c.h.b16 %v643
    %v2768 = vunpack.c.l.b16 %v644
    %v2769 = vunpack.c.h.b16 %v644
    %v2770 = vunpack.c.l.b16 %v645
    %v2771 = vunpack.c.h.b16 %v645
    %v2772 = vunpack.c.l.b16 %v646
    %v2773 = vunpack.c.h.b16 %v646
    %v2774 = vunpack.c.l.b16 %v647
    %v2775 = vunpack.c.h.b16 %v647
    %v2776 = vunpack.c.l.b16 %v648
    %v2777 = vunpack.c.h.b16 %v648
    %v2778 = vunpack.c.l.b16 %v649
    %v2779 = vunpack.c.h.b16 %v649
    %v2780 = vunpack.c.l.b16 %v650
    %v2781 = vunpack.c.h.b16 %v650
    %v2782 = vunpack.c.l.b16 %v651
    %v2783 = vunpack.c.h.b16 %v651
    %v2784 = vunpack.c.l.b16 %v652
    %v2785 = vunpack.c.h.b16 %v652
    %v2786 = vunpack.c.l.b16 %v653
    %v2787 = vunpack.c.h.b16 %v653
    %v2788 = vunpack.c.l.b16 %v654
    %v2789 = vunpack.c.h.b16 %v654
    %v2790 = vunpack.c.l.b16 %v655
    %v2791 = vunpack.c.h.b16 %v655
    %v2792 = vunpack.c.l.b16 %v656
    %v2793 = vunpack.c.h.b16 %v656
    %v2794 = vunpack.c.l.b16 %v657
    %v2795 = vunpack.c.h.b16 %v657
    %v2796 = vunpack.c.l.b16 %v658
    %v2797 = vunpack.c.h.b16 %v658
    %v2798 = vunpack.c.l.b16 %v659
    %v2799 = vunpack.c.h.b16 %v659
    %v2800 = vunpack.c.l.b16 %v660
    %v2801 = vunpack.c.h.b16 %v660
    %v2802 = vunpack.c.l.b16 %v661
    %v2803 = vunpack.c.h.b16 %v661
    %v2804 = vunpack.c.l.b16 %v662
    %v2805 = vunpack.c.h.b16 %v662
    %v2806 = vunpack.c.l.b16 %v663
    %v2807 = vunpack.c.h.b16 %v663
    %v2808 = vunpack.c.l.b16 %v664
    %v2809 = vunpack.c.h.b16 %v664
    %v2810 = vunpack.c.l.b16 %v665
    %v2811 = vunpack.c.h.b16 %v665
    %v2812 = vunpack.c.l.b16 %v666
    %v2813 = vunpack.c.h.b16 %v666
    %v2814 = vunpack.c.l.b16 %v667
    %v2815 = vunpack.c.h.b16 %v667
    %v2816 = vunpack.c.l.b16 %v668
    %v2817 = vunpack.c.h.b16 %v668
    %v2818 = vunpack.c.l.b16 %v669
    %v2819 = vunpack.c.h.b16 %v669
    %v2820 = vunpack.c.l.b16 %v670
    %v2821 = vunpack.c.h.b16 %v670
    %v2822 = vunpack.c.l.b16 %v671
    %v2823 = vunpack.c.h.b16 %v671
    %v2824 = vunpack.c.l.b16 %v672
    %v2825 = vunpack.c.h.b16 %v672
    %v2826 = vunpack.c.l.b16 %v673
    %v2827 = vunpack.c.h.b16 %v673
    %v2828 = vunpack.c.l.b16 %v674
    %v2829 = vunpack.c.h.b16 %v674
    %v2830 = vunpack.c.l.b16 %v675
    %v2831 = vunpack.c.h.b16 %v675
    %v2832 = vunpack.c.l.b16 %v676
    %v2833 = vunpack.c.h.b16 %v676
    %v2834 = vunpack.c.l.b16 %v677
    %v2835 = vunpack.c.h.b16 %v677
    %v2836 = vunpack.c.l.b16 %v678
    %v2837 = vunpack.c.h.b16 %v678
    %v2838 = vunpack.c.l.b16 %v679
    %v2839 = vunpack.c.h.b16 %v679
    %v2840 = vunpack.c.l.b16 %v680
    %v2841 = vunpack.c.h.b16 %v680
    %v2842 = vunpack.c.l.b16 %v681
    %v2843 = vunpack.c.h.b16 %v681
    %v2844 = vunpack.c.l.b16 %v682
    %v2845 = vunpack.c.h.b16 %v682
    %v2846 = vunpack.c.l.b16 %v683
    %v2847 = vunpack.c.h.b16 %v683
    %v2848 = vunpack.c.l.b16 %v684
    %v2849 = vunpack.c.h.b16 %v684
    %v2850 = vunpack.c.l.b16 %v685
    %v2851 = vunpack.c.h.b16 %v685
    %v2852 = vunpack.c.l.b16 %v686
    %v2853 = vunpack.c.h.b16 %v686
    %v2854 = vunpack.c.l.b16 %v687
    %v2855 = vunpack.c.h.b16 %v687
    %v2856 = vunpack.c.l.b16 %v688
    %v2857 = vunpack.c.h.b16 %v688
    %v2858 = vunpack.c.l.b16 %v689
    %v2859 = vunpack.c.h.b16 %v689
    %v2860 = vunpack.c.l.b16 %v690
    %v2861 = vunpack.c.h.b16 %v690
    %v2862 = vunpack.c.l.b16 %v691
    %v2863 = vunpack.c.h.b16 %v691
    %v2864 = vunpack.c.l.b16 %v692
    %v2865 = vunpack.c.h.b16 %v692
    %v2866 = vunpack.c.l.b16 %v693
    %v2867 = vunpack.c.h.b16 %v693
    %v2868 = vunpack.c.l.b16 %v694
    %v2869 = vunpack.c.h.b16 %v694
    %v2870 = vunpack.c.l.b16 %v695
    %v2871 = vunpack.c.h.b16 %v695
    %v2872 = vunpack.c.l.b16 %v696
    %v2873 = vunpack.c.h.b16 %v696
    %v2874 = vunpack.c.l.b16 %v697
    %v2875 = vunpack.c.h.b16 %v697
    %v2876 = vunpack.c.l.b16 %v698
    %v2877 = vunpack.c.h.b16 %v698
    %v2878 = vunpack.c.l.b16 %v699
    %v2879 = vunpack.c.h.b16 %v699
    %v2880 = vunpack.c.l.b16 %v700
    %v2881 = vunpack.c.h.b16 %v700
    %v2882 = vunpack.c.l.b16 %v701
    %v2883 = vunpack.c.h.b16 %v701
    %v2884 = vunpack.c.l.b16 %v702
    %v2885 = vunpack.c.h.b16 %v702
    %v2886 = vunpack.c.l.b16 %v703
    %v2887 = vunpack.c.h.b16 %v703
    %v2888 = vunpack.c.l.b16 %v704
    %v2889 = vunpack.c.h.b16 %v704
    %v2890 = vunpack.c.l.b16 %v705
    %v2891 = vunpack.c.h.b16 %v705
    %v2892 = vunpack.c.l.b16 %v706
    %v2893 = vunpack.c.h.b16 %v706
    %v2894 = vunpack.c.l.b16 %v707
    %v2895 = vunpack.c.h.b16 %v707
    %v2896 = vunpack.c.l.b16 %v708
    %v2897 = vunpack.c.h.b16 %v708
    %v2898 = vunpack.c.l.b16 %v709
    %v2899 = vunpack.c.h.b16 %v709
    %v2900 = vunpack.c.l.b16 %v710
    %v2901 = vunpack.c.h.b16 %v710
    %v2902 = vunpack.c.l.b16 %v711
    %v2903 = vunpack.c.h.b16 %v711
    %v2904 = vunpack.c.l.b16 %v712
    %v2905 = vunpack.c.h.b16 %v712
    %v2906 = vunpack.c.l.b16 %v713
    %v2907 = vunpack.c.h.b16 %v713
    %v2908 = vunpack.c.l.b16 %v714
    %v2909 = vunpack.c.h.b16 %v714
    %v2910 = vunpack.c.l.b16 %v715
    %v2911 = vunpack.c.h.b16 %v715
    %v2912 = vunpack.c.l.b16 %v716
    %v2913 = vunpack.c.h.b16 %v716
    %v2914 = vunpack.c.l.b16 %v717
    %v2915 = vunpack.c.h.b16 %v717
    %v2916 = vunpack.c.l.b16 %v718
    %v2917 = vunpack.c.h.b16 %v718
    %v2918 = vunpack.c.l.b16 %v719
    %v2919 = vunpack.c.h.b16 %v719
    %v2920 = vunpack.c.l.b16 %v720
    %v2921 = vunpack.c.h.b16 %v720
    %v2922 = vunpack.c.l.b16 %v721
    %v2923 = vunpack.c.h.b16 %v721
    %v2924 = vunpack.c.l.b16 %v722
    %v2925 = vunpack.c.h.b16 %v722
    %v2926 = vunpack.c.l.b16 %v723
    %v2927 = vunpack.c.h.b16 %v723
    %v2928 = vunpack.c.l.b16 %v724
    %v2929 = vunpack.c.h.b16 %v724
    %v2930 = vunpack.c.l.b16 %v725
    %v2931 = vunpack.c.h.b16 %v725
    %v2932 = vunpack.c.l.b16 %v726
    %v2933 = vunpack.c.h.b16 %v726
    %v2934 = vunpack.c.l.b16 %v727
    %v2935 = vunpack.c.h.b16 %v727
    %v2936 = vunpack.c.l.b16 %v728
    %v2937 = vunpack.c.h.b16 %v728
    %v2938 = vunpack.c.l.b16 %v729
    %v2939 = vunpack.c.h.b16 %v729
    %v2940 = vunpack.c.l.b16 %v730
    %v2941 = vunpack.c.h.b16 %v730
    %v2942 = vunpack.c.l.b16 %v731
    %v2943 = vunpack.c.h.b16 %v731
    %v2944 = vunpack.c.l.b16 %v732
    %v2945 = vunpack.c.h.b16 %v732
    %v2946 = vunpack.c.l.b16 %v733
    %v2947 = vunpack.c.h.b16 %v733
    %v2948 = vunpack.c.l.b16 %v734
    %v2949 = vunpack.c.h.b16 %v734
    %v2950 = vunpack.c.l.b16 %v735
    %v2951 = vunpack.c.h.b16 %v735
    %v2952 = vunpack.c.l.b16 %v736
    %v2953 = vunpack.c.h.b16 %v736
    %v2954 = vunpack.c.l.b16 %v737
    %v2955 = vunpack.c.h.b16 %v737
    %v2956 = vunpack.c.l.b16 %v738
    %v2957 = vunpack.c.h.b16 %v738
    %v2958 = vunpack.c.l.b16 %v739
    %v2959 = vunpack.c.h.b16 %v739
    %v2960 = vunpack.c.l.b16 %v740
    %v2961 = vunpack.c.h.b16 %v740
    %v2962 = vunpack.c.l.b16 %v741
    %v2963 = vunpack.c.h.b16 %v741
    %v2964 = vunpack.c.l.b16 %v742
    %v2965 = vunpack.c.h.b16 %v742
    %v2966 = vunpack.c.l.b16 %v743
    %v2967 = vunpack.c.h.b16 %v743
    %v2968 = vunpack.c.l.b16 %v744
    %v2969 = vunpack.c.h.b16 %v744
    %v2970 = vunpack.c.l.b16 %v745
    %v2971 = vunpack.c.h.b16 %v745
    %v2972 = vunpack.c.l.b16 %v746
    %v2973 = vunpack.c.h.b16 %v746
    %v2974 = vunpack.c.l.b16 %v747
    %v2975 = vunpack.c.h.b16 %v747
    %v2976 = vunpack.c.l.b16 %v748
    %v2977 = vunpack.c.h.b16 %v748
    %v2978 = vunpack.c.l.b16 %v749
    %v2979 = vunpack.c.h.b16 %v749
    %v2980 = vunpack.c.l.b16 %v750
    %v2981 = vunpack.c.h.b16 %v750
    %v2982 = vunpack.c.l.b16 %v751
    %v2983 = vunpack.c.h.b16 %v751
    %v2984 = vunpack.c.l.b16 %v752
    %v2985 = vunpack.c.h.b16 %v752
    %v2986 = vunpack.c.l.b16 %v753
    %v2987 = vunpack.c.h.b16 %v753
    %v2988 = vunpack.c.l.b16 %v754
    %v2989 = vunpack.c.h.b16 %v754
    %v2990 = vunpack.c.l.b16 %v755
    %v2991 = vunpack.c.h.b16 %v755
    %v2992 = vunpack.c.l.b16 %v756
    %v2993 = vunpack.c.h.b16 %v756
    %v2994 = vunpack.c.l.b16 %v757
    %v2995 = vunpack.c.h.b16 %v757
    %v2996 = vunpack.c.l.b16 %v758
    %v2997 = vunpack.c.h.b16 %v758
    %v2998 = vunpack.c.l.b16 %v759
    %v2999 = vunpack.c.h.b16 %v759
    %v3000 = vunpack.c.l.b16 %v760
    %v3001 = vunpack.c.h.b16 %v760
    %v3002 = vunpack.c.l.b16 %v761
    %v3003 = vunpack.c.h.b16 %v761
    %v3004 = vunpack.c.l.b16 %v762
    %v3005 = vunpack.c.h.b16 %v762
    %v3006 = vunpack.c.l.b16 %v763
    %v3007 = vunpack.c.h.b16 %v763
    %v3008 = vunpack.c.l.b16 %v764
    %v3009 = vunpack.c.h.b16 %v764
    %v3010 = vunpack.c.l.b16 %v765
    %v3011 = vunpack.c.h.b16 %v765
    %v3012 = vunpack.c.l.b16 %v766
    %v3013 = vunpack.c.h.b16 %v766
    %v3014 = vunpack.c.l.b16 %v767
    %v3015 = vunpack.c.h.b16 %v767
    %v3016 = vunpack.c.l.b16 %v768
    %v3017 = vunpack.c.h.b16 %v768
    %v3018 = vunpack.c.l.b16 %v769
    %v3019 = vunpack.c.h.b16 %v769
    %v3020 = vunpack.c.l.b16 %v770
    %v3021 = vunpack.c.h.b16 %v770
    %v3022 = vunpack.c.l.b16 %v771
    %v3023 = vunpack.c.h.b16 %v771
    %v3024 = vunpack.c.l.b16 %v772
    %v3025 = vunpack.c.h.b16 %v772
    %v3026 = vunpack.c.l.b16 %v773
    %v3027 = vunpack.c.h.b16 %v773
    %v3028 = vunpack.c.l.b16 %v774
    %v3029 = vunpack.c.h.b16 %v774
    %v3030 = vunpack.c.l.b16 %v775
    %v3031 = vunpack.c.h.b16 %v775
    %v3032 = vunpack.c.l.b16 %v776
    %v3033 = vunpack.c.h.b16 %v776
    %v3034 = vunpack.c.l.b16 %v777
    %v3035 = vunpack.c.h.b16 %v777
    %v3036 = vunpack.c.l.b16 %v778
    %v3037 = vunpack.c.h.b16 %v778
    %v3038 = vunpack.c.l.b16 %v779
    %v3039 = vunpack.c.h.b16 %v779
    %v3040 = vunpack.c.l.b16 %v780
    %v3041 = vunpack.c.h.b16 %v780
    %v3042 = vunpack.c.l.b16 %v781
    %v3043 = vunpack.c.h.b16 %v781
    %v3044 = vunpack.c.l.b16 %v782
    %v3045 = vunpack.c.h.b16 %v782
    %v3046 = vunpack.c.l.b16 %v783
    %v3047 = vunpack.c.h.b16 %v783
    %v3048 = vunpack.c.l.b16 %v784
    %v3049 = vunpack.c.h.b16 %v784
    %v3050 = vunpack.c.l.b16 %v785
    %v3051 = vunpack.c.h.b16 %v785
    %v3052 = vunpack.c.l.b16 %v786
    %v3053 = vunpack.c.h.b16 %v786
    %v3054 = vunpack.c.l.b16 %v787
    %v3055 = vunpack.c.h.b16 %v787
    %v3056 = vunpack.c.l.b16 %v788
    %v3057 = vunpack.c.h.b16 %v788
    %v3058 = vunpack.c.l.b16 %v789
    %v3059 = vunpack.c.h.b16 %v789
    %v3060 = vunpack.c.l.b16 %v790
    %v3061 = vunpack.c.h.b16 %v790
    %v3062 = vunpack.c.l.b16 %v791
    %v3063 = vunpack.c.h.b16 %v791
    %v3064 = vunpack.c.l.b16 %v792
    %v3065 = vunpack.c.h.b16 %v792
    %v3066 = vunpack.c.l.b16 %v793
    %v3067 = vunpack.c.h.b16 %v793
    %v3068 = vunpack.c.l.b16 %v794
    %v3069 = vunpack.c.h.b16 %v794
    %v3070 = vunpack.c.l.b16 %v795
    %v3071 = vunpack.c.h.b16 %v795
    %v3072 = vunpack.c.l.b16 %v796
    %v3073 = vunpack.c.h.b16 %v796
    %v3074 = vunpack.c.l.b16 %v797
    %v3075 = vunpack.c.h.b16 %v797
    %v3076 = vunpack.c.l.b16 %v798
    %v3077 = vunpack.c.h.b16 %v798
    %v3078 = vunpack.c.l.b16 %v799
    %v3079 = vunpack.c.h.b16 %v799
    %v3080 = vunpack.c.l.b16 %v800
    %v3081 = vunpack.c.h.b16 %v800
    %v3082 = vunpack.c.l.b16 %v801
    %v3083 = vunpack.c.h.b16 %v801
    %v3084 = vunpack.c.l.b16 %v802
    %v3085 = vunpack.c.h.b16 %v802
    %v3086 = vunpack.c.l.b16 %v803
    %v3087 = vunpack.c.h.b16 %v803
    %v3088 = vunpack.c.l.b16 %v804
    %v3089 = vunpack.c.h.b16 %v804
    %v3090 = vunpack.c.l.b16 %v805
    %v3091 = vunpack.c.h.b16 %v805
    %v3092 = vunpack.c.l.b16 %v806
    %v3093 = vunpack.c.h.b16 %v806
    %v3094 = vunpack.c.l.b16 %v807
    %v3095 = vunpack.c.h.b16 %v807
    %v3096 = vunpack.c.l.b16 %v808
    %v3097 = vunpack.c.h.b16 %v808
    %v3098 = vunpack.c.l.b16 %v809
    %v3099 = vunpack.c.h.b16 %v809
    %v3100 = vunpack.c.l.b16 %v810
    %v3101 = vunpack.c.h.b16 %v810
    %v3102 = vunpack.c.l.b16 %v811
    %v3103 = vunpack.c.h.b16 %v811
    %v3104 = vunpack.c.l.b16 %v812
    %v3105 = vunpack.c.h.b16 %v812
    %v3106 = vunpack.c.l.b16 %v813
    %v3107 = vunpack.c.h.b16 %v813
    %v3108 = vunpack.c.l.b16 %v814
    %v3109 = vunpack.c.h.b16 %v814
    %v3110 = vunpack.c.l.b16 %v815
    %v3111 = vunpack.c.h.b16 %v815
    %v3112 = vunpack.c.l.b16 %v816
    %v3113 = vunpack.c.h.b16 %v816
    %v3114 = vunpack.c.l.b16 %v817
    %v3115 = vunpack.c.h.b16 %v817
    %v3116 = vunpack.c.l.b16 %v818
    %v3117 = vunpack.c.h.b16 %v818
    %v3118 = vunpack.c.l.b16 %v819
    %v3119 = vunpack.c.h.b16 %v819
    %v3120 = vunpack.c.l.b16 %v820
    %v3121 = vunpack.c.h.b16 %v820
    %v3122 = vunpack.c.l.b16 %v821
    %v3123 = vunpack.c.h.b16 %v821
    %v3124 = vunpack.c.l.b16 %v822
    %v3125 = vunpack.c.h.b16 %v822
    %v3126 = vunpack.c.l.b16 %v823
    %v3127 = vunpack.c.h.b16 %v823
    %v3128 = vunpack.c.l.b16 %v824
    %v3129 = vunpack.c.h.b16 %v824
    %v3130 = vunpack.c.l.b16 %v825
    %v3131 = vunpack.c.h.b16 %v825
    %v3132 = vunpack.c.l.b16 %v826
    %v3133 = vunpack.c.h.b16 %v826
    %v3134 = vunpack.c.l.b16 %v827
    %v3135 = vunpack.c.h.b16 %v827
    %v3136 = vunpack.c.l.b16 %v828
    %v3137 = vunpack.c.h.b16 %v828
    %v3138 = vunpack.c.l.b16 %v829
    %v3139 = vunpack.c.h.b16 %v829
    %v3140 = vunpack.c.l.b16 %v830
    %v3141 = vunpack.c.h.b16 %v830
    %v3142 = vunpack.c.l.b16 %v831
    %v3143 = vunpack.c.h.b16 %v831
    %v3144 = vunpack.c.l.b16 %v832
    %v3145 = vunpack.c.h.b16 %v832
    %v3146 = vunpack.c.l.b16 %v833
    %v3147 = vunpack.c.h.b16 %v833
    %v3148 = vunpack.c.l.b16 %v834
    %v3149 = vunpack.c.h.b16 %v834
    %v3150 = vunpack.c.l.b16 %v835
    %v3151 = vunpack.c.h.b16 %v835
    %v3152 = vunpack.c.l.b16 %v836
    %v3153 = vunpack.c.h.b16 %v836
    %v3154 = vunpack.c.l.b16 %v837
    %v3155 = vunpack.c.h.b16 %v837
    %v3156 = vunpack.c.l.b16 %v838
    %v3157 = vunpack.c.h.b16 %v838
    %v3158 = vunpack.c.l.b16 %v839
    %v3159 = vunpack.c.h.b16 %v839
    %v3160 = vunpack.c.l.b16 %v840
    %v3161 = vunpack.c.h.b16 %v840
    %v3162 = vunpack.c.l.b16 %v841
    %v3163 = vunpack.c.h.b16 %v841
    %v3164 = vunpack.c.l.b16 %v842
    %v3165 = vunpack.c.h.b16 %v842
    %v3166 = vunpack.c.l.b16 %v843
    %v3167 = vunpack.c.h.b16 %v843
    %v3168 = vunpack.c.l.b16 %v844
    %v3169 = vunpack.c.h.b16 %v844
    %v3170 = vunpack.c.l.b16 %v845
    %v3171 = vunpack.c.h.b16 %v845
    %v3172 = vunpack.c.l.b16 %v846
    %v3173 = vunpack.c.h.b16 %v846
    %v3174 = vunpack.c.l.b16 %v847
    %v3175 = vunpack.c.h.b16 %v847
    %v3176 = vunpack.c.l.b16 %v848
    %v3177 = vunpack.c.h.b16 %v848
    %v3178 = vunpack.c.l.b16 %v849
    %v3179 = vunpack.c.h.b16 %v849
    %v3180 = vunpack.c.l.b16 %v850
    %v3181 = vunpack.c.h.b16 %v850
    %v3182 = vunpack.c.l.b16 %v851
    %v3183 = vunpack.c.h.b16 %v851
    %v3184 = vunpack.c.l.b16 %v852
    %v3185 = vunpack.c.h.b16 %v852
    %v3186 = vunpack.c.l.b16 %v853
    %v3187 = vunpack.c.h.b16 %v853
    %v3188 = vunpack.c.l.b16 %v854
    %v3189 = vunpack.c.h.b16 %v854
    %v3190 = vunpack.c.l.b16 %v855
    %v3191 = vunpack.c.h.b16 %v855
    %v3192 = vunpack.c.l.b16 %v856
    %v3193 = vunpack.c.h.b16 %v856
    %v3194 = vunpack.c.l.b16 %v857
    %v3195 = vunpack.c.h.b16 %v857
    %v3196 = vunpack.c.l.b16 %v858
    %v3197 = vunpack.c.h.b16 %v858
    %v3198 = vunpack.c.l.b16 %v859
    %v3199 = vunpack.c.h.b16 %v859
    %v3200 = vunpack.c.l.b16 %v860
    %v3201 = vunpack.c.h.b16 %v860
    %v3202 = vunpack.c.l.b16 %v861
    %v3203 = vunpack.c.h.b16 %v861
    %v3204 = vunpack.c.l.b16 %v862
    %v3205 = vunpack.c.h.b16 %v862
    %v3206 = vunpack.c.l.b16 %v863
    %v3207 = vunpack.c.h.b16 %v863
    %v3208 = vunpack.c.l.b16 %v864
    %v3209 = vunpack.c.h.b16 %v864
    %v3210 = vunpack.c.l.b16 %v865
    %v3211 = vunpack.c.h.b16 %v865
    %v3212 = vunpack.c.l.b16 %v866
    %v3213 = vunpack.c.h.b16 %v866
    %v3214 = vunpack.c.l.b16 %v867
    %v3215 = vunpack.c.h.b16 %v867
    %v3216 = vunpack.c.l.b16 %v868
    %v3217 = vunpack.c.h.b16 %v868
    %v3218 = vunpack.c.l.b16 %v869
    %v3219 = vunpack.c.h.b16 %v869
    %v3220 = vunpack.c.l.b16 %v870
    %v3221 = vunpack.c.h.b16 %v870
    %v3222 = vunpack.c.l.b16 %v871
    %v3223 = vunpack.c.h.b16 %v871
    %v3224 = vunpack.c.l.b16 %v872
    %v3225 = vunpack.c.h.b16 %v872
    %v3226 = vunpack.c.l.b16 %v873
    %v3227 = vunpack.c.h.b16 %v873
    %v3228 = vunpack.c.l.b16 %v874
    %v3229 = vunpack.c.h.b16 %v874
    %v3230 = vunpack.c.l.b16 %v875
    %v3231 = vunpack.c.h.b16 %v875
    %v3232 = vunpack.c.l.b16 %v876
    %v3233 = vunpack.c.h.b16 %v876
    %v3234 = vunpack.c.l.b16 %v877
    %v3235 = vunpack.c.h.b16 %v877
    %v3236 = vunpack.c.l.b16 %v878
    %v3237 = vunpack.c.h.b16 %v878
    %v3238 = vunpack.c.l.b16 %v879
    %v3239 = vunpack.c.h.b16 %v879
    %v3240 = vunpack.c.l.b16 %v880
    %v3241 = vunpack.c.h.b16 %v880
    %v3242 = vunpack.c.l.b16 %v881
    %v3243 = vunpack.c.h.b16 %v881
    %v3244 = vunpack.c.l.b16 %v882
    %v3245 = vunpack.c.h.b16 %v882
    %v3246 = vunpack.c.l.b16 %v883
    %v3247 = vunpack.c.h.b16 %v883
    %v3248 = vunpack.c.l.b16 %v884
    %v3249 = vunpack.c.h.b16 %v884
    %v3250 = vunpack.c.l.b16 %v885
    %v3251 = vunpack.c.h.b16 %v885
    %v3252 = vunpack.c.l.b16 %v886
    %v3253 = vunpack.c.h.b16 %v886
    %v3254 = vunpack.c.l.b16 %v887
    %v3255 = vunpack.c.h.b16 %v887
    %v3256 = vunpack.c.l.b16 %v888
    %v3257 = vunpack.c.h.b16 %v888
    %v3258 = vunpack.c.l.b16 %v889
    %v3259 = vunpack.c.h.b16 %v889
    %v3260 = vunpack.c.l.b16 %v890
    %v3261 = vunpack.c.h.b16 %v890
    %v3262 = vunpack.c.l.b16 %v891
    %v3263 = vunpack.c.h.b16 %v891
    %v3264 = vunpack.c.l.b16 %v892
    %v3265 = vunpack.c.h.b16 %v892
    %v3266 = vunpack.c.l.b16 %v893
    %v3267 = vunpack.c.h.b16 %v893
    %v3268 = vunpack.c.l.b16 %v894
    %v3269 = vunpack.c.h.b16 %v894
    %v3270 = vunpack.c.l.b16 %v895
    %v3271 = vunpack.c.h.b16 %v895
    %v3272 = vunpack.c.l.b16 %v896
    %v3273 = vunpack.c.h.b16 %v896
    %v3274 = vunpack.c.l.b16 %v897
    %v3275 = vunpack.c.h.b16 %v897
    %v3276 = vunpack.c.l.b16 %v898
    %v3277 = vunpack.c.h.b16 %v898
    %v3278 = vunpack.c.l.b16 %v899
    %v3279 = vunpack.c.h.b16 %v899
    %v3280 = vunpack.c.l.b16 %v900
    %v3281 = vunpack.c.h.b16 %v900
    %v3282 = vunpack.c.l.b16 %v901
    %v3283 = vunpack.c.h.b16 %v901
    %v3284 = vunpack.c.l.b16 %v902
    %v3285 = vunpack.c.h.b16 %v902
    %v3286 = vunpack.c.l.b16 %v903
    %v3287 = vunpack.c.h.b16 %v903
    %v3288 = vunpack.c.l.b16 %v904
    %v3289 = vunpack.c.h.b16 %v904
    %v3290 = vunpack.c.l.b16 %v905
    %v3291 = vunpack.c.h.b16 %v905
    %v3292 = vunpack.c.l.b16 %v906
    %v3293 = vunpack.c.h.b16 %v906
    %v3294 = vunpack.c.l.b16 %v907
    %v3295 = vunpack.c.h.b16 %v907
    %v3296 = vunpack.c.l.b16 %v908
    %v3297 = vunpack.c.h.b16 %v908
    %v3298 = vunpack.c.l.b16 %v909
    %v3299 = vunpack.c.h.b16 %v909
    %v3300 = vunpack.c.l.b16 %v910
    %v3301 = vunpack.c.h.b16 %v910
    %v3302 = vunpack.c.l.b16 %v911
    %v3303 = vunpack.c.h.b16 %v911
    %v3304 = vunpack.c.l.b16 %v912
    %v3305 = vunpack.c.h.b16 %v912
    %v3306 = vunpack.c.l.b16 %v913
    %v3307 = vunpack.c.h.b16 %v913
    %v3308 = vunpack.c.l.b16 %v914
    %v3309 = vunpack.c.h.b16 %v914
    %v3310 = vunpack.c.l.b16 %v915
    %v3311 = vunpack.c.h.b16 %v915
    %v3312 = vunpack.c.l.b16 %v916
    %v3313 = vunpack.c.h.b16 %v916
    %v3314 = vunpack.c.l.b16 %v917
    %v3315 = vunpack.c.h.b16 %v917
    %v3316 = vunpack.c.l.b16 %v918
    %v3317 = vunpack.c.h.b16 %v918
    %v3318 = vunpack.c.l.b16 %v919
    %v3319 = vunpack.c.h.b16 %v919
    %v3320 = vunpack.c.l.b16 %v920
    %v3321 = vunpack.c.h.b16 %v920
    %v3322 = vunpack.c.l.b16 %v921
    %v3323 = vunpack.c.h.b16 %v921
    %v3324 = vunpack.c.l.b16 %v922
    %v3325 = vunpack.c.h.b16 %v922
    %v3326 = vunpack.c.l.b16 %v923
    %v3327 = vunpack.c.h.b16 %v923
    %v3328 = vunpack.c.l.b16 %v924
    %v3329 = vunpack.c.h.b16 %v924
    %v3330 = vunpack.c.l.b16 %v925
    %v3331 = vunpack.c.h.b16 %v925
    %v3332 = vunpack.c.l.b16 %v926
    %v3333 = vunpack.c.h.b16 %v926
    %v3334 = vunpack.c.l.b16 %v927
    %v3335 = vunpack.c.h.b16 %v927
    %v3336 = vunpack.c.l.b16 %v928
    %v3337 = vunpack.c.h.b16 %v928
    %v3338 = vunpack.c.l.b16 %v929
    %v3339 = vunpack.c.h.b16 %v929
    %v3340 = vunpack.c.l.b16 %v930
    %v3341 = vunpack.c.h.b16 %v930
    %v3342 = vunpack.c.l.b16 %v931
    %v3343 = vunpack.c.h.b16 %v931
    %v3344 = vunpack.c.l.b16 %v932
    %v3345 = vunpack.c.h.b16 %v932
    %v3346 = vunpack.c.l.b16 %v933
    %v3347 = vunpack.c.h.b16 %v933
    %v3348 = vunpack.c.l.b16 %v934
    %v3349 = vunpack.c.h.b16 %v934
    %v3350 = vunpack.c.l.b16 %v935
    %v3351 = vunpack.c.h.b16 %v935
    %v3352 = vpack.c.b16 %v1822, %v1816
    %v3353 = vpack.c.b16 %v1823, %v1817
    %v3354 = vpack.c.b16 %v1824, %v1818
    %v3355 = vpack.c.b16 %v1825, %v1819
    %v3356 = vpack.c.b16 %v1826, %v1820
    %v3357 = vpack.c.b16 %v1827, %v1821
    %v3358 = vpack.c.b16 %v1834, %v1828
    %v3359 = vpack.c.b16 %v1835, %v1829
    %v3360 = vpack.c.b16 %v1836, %v1830
    %v3361 = vpack.c.b16 %v1837, %v1831
    %v3362 = vpack.c.b16 %v1838, %v1832
    %v3363 = vpack.c.b16 %v1839, %v1833
    %v3364 = vpack.c.b16 %v1846, %v1840
    %v3365 = vpack.c.b16 %v1847, %v1841
    %v3366 = vpack.c.b16 %v1848, %v1842
    %v3367 = vpack.c.b16 %v1849, %v1843
    %v3368 = vpack.c.b16 %v1850, %v1844
    %v3369 = vpack.c.b16 %v1851, %v1845
    %v3370 = vpack.c.b16 %v1858, %v1852
    %v3371 = vpack.c.b16 %v1859, %v1853
    %v3372 = vpack.c.b16 %v1860, %v1854
    %v3373 = vpack.c.b16 %v1861, %v1855
    %v3374 = vpack.c.b16 %v1862, %v1856
    %v3375 = vpack.c.b16 %v1863, %v1857
    %v3376 = vpack.c.b16 %v1870, %v1864
    %v3377 = vpack.c.b16 %v1871, %v1865
    %v3378 = vpack.c.b16 %v1872, %v1866
    %v3379 = vpack.c.b16 %v1873, %v1867
    %v3380 = vpack.c.b16 %v1874, %v1868
    %v3381 = vpack.c.b16 %v1875, %v1869
    %v3382 = vpack.c.b16 %v1882, %v1876
    %v3383 = vpack.c.b16 %v1883, %v1877
    %v3384 = vpack.c.b16 %v1884, %v1878
    %v3385 = vpack.c.b16 %v1885, %v1879
    %v3386 = vpack.c.b16 %v1886, %v1880
    %v3387 = vpack.c.b16 %v1887, %v1881
    %v3388 = vpack.c.b16 %v1894, %v1888
    %v3389 = vpack.c.b16 %v1895, %v1889
    %v3390 = vpack.c.b16 %v1896, %v1890
    %v3391 = vpack.c.b16 %v1897, %v1891
    %v3392 = vpack.c.b16 %v1898, %v1892
    %v3393 = vpack.c.b16 %v1899, %v1893
    %v3394 = vpack.c.b16 %v1906, %v1900
    %v3395 = vpack.c.b16 %v1907, %v1901
    %v3396 = vpack.c.b16 %v1908, %v1902
    %v3397 = vpack.c.b16 %v1909, %v1903
    %v3398 = vpack.c.b16 %v1910, %v1904
    %v3399 = vpack.c.b16 %v1911, %v1905
    %v3400 = vpack.c.b16 %v1918, %v1912
    %v3401 = vpack.c.b16 %v1919, %v1913
    %v3402 = vpack.c.b16 %v1920, %v1914
    %v3403 = vpack.c.b16 %v1921, %v1915
    %v3404 = vpack.c.b16 %v1922, %v1916
    %v3405 = vpack.c.b16 %v1923, %v1917
    %v3406 = vpack.c.b16 %v1930, %v1924
    %v3407 = vpack.c.b16 %v1931, %v1925
    %v3408 = vpack.c.b16 %v1932, %v1926
    %v3409 = vpack.c.b16 %v1933, %v1927
    %v3410 = vpack.c.b16 %v1934, %v1928
    %v3411 = vpack.c.b16 %v1935, %v1929
    %v3412 = vpack.c.b16 %v1942, %v1936
    %v3413 = vpack.c.b16 %v1943, %v1937
    %v3414 = vpack.c.b16 %v1944, %v1938
    %v3415 = vpack.c.b16 %v1945, %v1939
    %v3416 = vpack.c.b16 %v1946, %v1940
    %v3417 = vpack.c.b16 %v1947, %v1941
    %v3418 = vpack.c.b16 %v1954, %v1948
    %v3419 = vpack.c.b16 %v1955, %v1949
    %v3420 = vpack.c.b16 %v1956, %v1950
    %v3421 = vpack.c.b16 %v1957, %v1951
    %v3422 = vpack.c.b16 %v1958, %v1952
    %v3423 = vpack.c.b16 %v1959, %v1953
    %v3424 = vpack.c.b16 %v1966, %v1960
    %v3425 = vpack.c.b16 %v1967, %v1961
    %v3426 = vpack.c.b16 %v1968, %v1962
    %v3427 = vpack.c.b16 %v1969, %v1963
    %v3428 = vpack.c.b16 %v1970, %v1964
    %v3429 = vpack.c.b16 %v1971, %v1965
    %v3430 = vpack.c.b16 %v1978, %v1972
    %v3431 = vpack.c.b16 %v1979, %v1973
    %v3432 = vpack.c.b16 %v1980, %v1974
    %v3433 = vpack.c.b16 %v1981, %v1975
    %v3434 = vpack.c.b16 %v1982, %v1976
    %v3435 = vpack.c.b16 %v1983, %v1977
    %v3436 = vpack.c.b16 %v1990, %v1984
    %v3437 = vpack.c.b16 %v1991, %v1985
    %v3438 = vpack.c.b16 %v1992, %v1986
    %v3439 = vpack.c.b16 %v1993, %v1987
    %v3440 = vpack.c.b16 %v1994, %v1988
    %v3441 = vpack.c.b16 %v1995, %v1989
    %v3442 = vpack.c.b16 %v2002, %v1996
    %v3443 = vpack.c.b16 %v2003, %v1997
    %v3444 = vpack.c.b16 %v2004, %v1998
    %v3445 = vpack.c.b16 %v2005, %v1999
    %v3446 = vpack.c.b16 %v2006, %v2000
    %v3447 = vpack.c.b16 %v2007, %v2001
    %v3448 = vpack.c.b16 %v2014, %v2008
    %v3449 = vpack.c.b16 %v2015, %v2009
    %v3450 = vpack.c.b16 %v2016, %v2010
    %v3451 = vpack.c.b16 %v2017, %v2011
    %v3452 = vpack.c.b16 %v2018, %v2012
    %v3453 = vpack.c.b16 %v2019, %v2013
    %v3454 = vpack.c.b16 %v2026, %v2020
    %v3455 = vpack.c.b16 %v2027, %v2021
    %v3456 = vpack.c.b16 %v2028, %v2022
    %v3457 = vpack.c.b16 %v2029, %v2023
    %v3458 = vpack.c.b16 %v2030, %v2024
    %v3459 = vpack.c.b16 %v2031, %v2025
    %v3460 = vpack.c.b16 %v2038, %v2032
    %v3461 = vpack.c.b16 %v2039, %v2033
    %v3462 = vpack.c.b16 %v2040, %v2034
    %v3463 = vpack.c.b16 %v2041, %v2035
    %v3464 = vpack.c.b16 %v2042, %v2036
    %v3465 = vpack.c.b16 %v2043, %v2037
    %v3466 = vpack.c.b16 %v2050, %v2044
    %v3467 = vpack.c.b16 %v2051, %v2045
    %v3468 = vpack.c.b16 %v2052, %v2046
    %v3469 = vpack.c.b16 %v2053, %v2047
    %v3470 = vpack.c.b16 %v2054, %v2048
    %v3471 = vpack.c.b16 %v2055, %v2049
    %v3472 = vpack.c.b16 %v2062, %v2056
    %v3473 = vpack.c.b16 %v2063, %v2057
    %v3474 = vpack.c.b16 %v2064, %v2058
    %v3475 = vpack.c.b16 %v2065, %v2059
    %v3476 = vpack.c.b16 %v2066, %v2060
    %v3477 = vpack.c.b16 %v2067, %v2061
    %v3478 = vpack.c.b16 %v2074, %v2068
    %v3479 = vpack.c.b16 %v2075, %v2069
    %v3480 = vpack.c.b16 %v2076, %v2070
    %v3481 = vpack.c.b16 %v2077, %v2071
    %v3482 = vpack.c.b16 %v2078, %v2072
    %v3483 = vpack.c.b16 %v2079, %v2073
    %v3484 = vpack.c.b16 %v2086, %v2080
    %v3485 = vpack.c.b16 %v2087, %v2081
    %v3486 = vpack.c.b16 %v2088, %v2082
    %v3487 = vpack.c.b16 %v2089, %v2083
    %v3488 = vpack.c.b16 %v2090, %v2084
    %v3489 = vpack.c.b16 %v2091, %v2085
    %v3490 = vpack.c.b16 %v2098, %v2092
    %v3491 = vpack.c.b16 %v2099, %v2093
    %v3492 = vpack.c.b16 %v2100, %v2094
    %v3493 = vpack.c.b16 %v2101, %v2095
    %v3494 = vpack.c.b16 %v2102, %v2096
    %v3495 = vpack.c.b16 %v2103, %v2097
    %v3496 = vpack.c.b16 %v2110, %v2104
    %v3497 = vpack.c.b16 %v2111, %v2105
    %v3498 = vpack.c.b16 %v2112, %v2106
    %v3499 = vpack.c.b16 %v2113, %v2107
    %v3500 = vpack.c.b16 %v2114, %v2108
    %v3501 = vpack.c.b16 %v2115, %v2109
    %v3502 = vpack.c.b16 %v2122, %v2116
    %v3503 = vpack.c.b16 %v2123, %v2117
    %v3504 = vpack.c.b16 %v2124, %v2118
    %v3505 = vpack.c.b16 %v2125, %v2119
    %v3506 = vpack.c.b16 %v2126, %v2120
    %v3507 = vpack.c.b16 %v2127, %v2121
    %v3508 = vpack.c.b16 %v2134, %v2128
    %v3509 = vpack.c.b16 %v2135, %v2129
    %v3510 = vpack.c.b16 %v2136, %v2130
    %v3511 = vpack.c.b16 %v2137, %v2131
    %v3512 = vpack.c.b16 %v2138, %v2132
    %v3513 = vpack.c.b16 %v2139, %v2133
    %v3514 = vpack.c.b16 %v2146, %v2140
    %v3515 = vpack.c.b16 %v2147, %v2141
    %v3516 = vpack.c.b16 %v2148, %v2142
    %v3517 = vpack.c.b16 %v2149, %v2143
    %v3518 = vpack.c.b16 %v2150, %v2144
    %v3519 = vpack.c.b16 %v2151, %v2145
    %v3520 = vpack.c.b16 %v2158, %v2152
    %v3521 = vpack.c.b16 %v2159, %v2153
    %v3522 = vpack.c.b16 %v2160, %v2154
    %v3523 = vpack.c.b16 %v2161, %v2155
    %v3524 = vpack.c.b16 %v2162, %v2156
    %v3525 = vpack.c.b16 %v2163, %v2157
    %v3526 = vpack.c.b16 %v2170, %v2164
    %v3527 = vpack.c.b16 %v2171, %v2165
    %v3528 = vpack.c.b16 %v2172, %v2166
    %v3529 = vpack.c.b16 %v2173, %v2167
    %v3530 = vpack.c.b16 %v2174, %v2168
    %v3531 = vpack.c.b16 %v2175, %v2169
    %v3532 = vpack.c.b16 %v2182, %v2176
    %v3533 = vpack.c.b16 %v2183, %v2177
    %v3534 = vpack.c.b16 %v2184, %v2178
    %v3535 = vpack.c.b16 %v2185, %v2179
    %v3536 = vpack.c.b16 %v2186, %v2180
    %v3537 = vpack.c.b16 %v2187, %v2181
    %v3538 = vpack.c.b16 %v2194, %v2188
    %v3539 = vpack.c.b16 %v2195, %v2189
    %v3540 = vpack.c.b16 %v2196, %v2190
    %v3541 = vpack.c.b16 %v2197, %v2191
    %v3542 = vpack.c.b16 %v2198, %v2192
    %v3543 = vpack.c.b16 %v2199, %v2193
    %v3544 = vpack.c.b16 %v2206, %v2200
    %v3545 = vpack.c.b16 %v2207, %v2201
    %v3546 = vpack.c.b16 %v2208, %v2202
    %v3547 = vpack.c.b16 %v2209, %v2203
    %v3548 = vpack.c.b16 %v2210, %v2204
    %v3549 = vpack.c.b16 %v2211, %v2205
    %v3550 = vpack.c.b16 %v2218, %v2212
    %v3551 = vpack.c.b16 %v2219, %v2213
    %v3552 = vpack.c.b16 %v2220, %v2214
    %v3553 = vpack.c.b16 %v2221, %v2215
    %v3554 = vpack.c.b16 %v2222, %v2216
    %v3555 = vpack.c.b16 %v2223, %v2217
    %v3556 = vpack.c.b16 %v2230, %v2224
    %v3557 = vpack.c.b16 %v2231, %v2225
    %v3558 = vpack.c.b16 %v2232, %v2226
    %v3559 = vpack.c.b16 %v2233, %v2227
    %v3560 = vpack.c.b16 %v2234, %v2228
    %v3561 = vpack.c.b16 %v2235, %v2229
    %v3562 = vpack.c.b16 %v2242, %v2236
    %v3563 = vpack.c.b16 %v2243, %v2237
    %v3564 = vpack.c.b16 %v2244, %v2238
    %v3565 = vpack.c.b16 %v2245, %v2239
    %v3566 = vpack.c.b16 %v2246, %v2240
    %v3567 = vpack.c.b16 %v2247, %v2241
    %v3568 = vpack.c.b16 %v2254, %v2248
    %v3569 = vpack.c.b16 %v2255, %v2249
    %v3570 = vpack.c.b16 %v2256, %v2250
    %v3571 = vpack.c.b16 %v2257, %v2251
    %v3572 = vpack.c.b16 %v2258, %v2252
    %v3573 = vpack.c.b16 %v2259, %v2253
    %v3574 = vpack.c.b16 %v2266, %v2260
    %v3575 = vpack.c.b16 %v2267, %v2261
    %v3576 = vpack.c.b16 %v2268, %v2262
    %v3577 = vpack.c.b16 %v2269, %v2263
    %v3578 = vpack.c.b16 %v2270, %v2264
    %v3579 = vpack.c.b16 %v2271, %v2265
    %v3580 = vpack.c.b16 %v2278, %v2272
    %v3581 = vpack.c.b16 %v2279, %v2273
    %v3582 = vpack.c.b16 %v2280, %v2274
    %v3583 = vpack.c.b16 %v2281, %v2275
    %v3584 = vpack.c.b16 %v2282, %v2276
    %v3585 = vpack.c.b16 %v2283, %v2277
    %v3586 = vpack.c.b16 %v2290, %v2284
    %v3587 = vpack.c.b16 %v2291, %v2285
    %v3588 = vpack.c.b16 %v2292, %v2286
    %v3589 = vpack.c.b16 %v2293, %v2287
    %v3590 = vpack.c.b16 %v2294, %v2288
    %v3591 = vpack.c.b16 %v2295, %v2289
    %v3592 = vpack.c.b16 %v2302, %v2296
    %v3593 = vpack.c.b16 %v2303, %v2297
    %v3594 = vpack.c.b16 %v2304, %v2298
    %v3595 = vpack.c.b16 %v2305, %v2299
    %v3596 = vpack.c.b16 %v2306, %v2300
    %v3597 = vpack.c.b16 %v2307, %v2301
    %v3598 = vpack.c.b16 %v2314, %v2308
    %v3599 = vpack.c.b16 %v2315, %v2309
    %v3600 = vpack.c.b16 %v2316, %v2310
    %v3601 = vpack.c.b16 %v2317, %v2311
    %v3602 = vpack.c.b16 %v2318, %v2312
    %v3603 = vpack.c.b16 %v2319, %v2313
    %v3604 = vpack.c.b16 %v2326, %v2320
    %v3605 = vpack.c.b16 %v2327, %v2321
    %v3606 = vpack.c.b16 %v2328, %v2322
    %v3607 = vpack.c.b16 %v2329, %v2323
    %v3608 = vpack.c.b16 %v2330, %v2324
    %v3609 = vpack.c.b16 %v2331, %v2325
    %v3610 = vpack.c.b16 %v2338, %v2332
    %v3611 = vpack.c.b16 %v2339, %v2333
    %v3612 = vpack.c.b16 %v2340, %v2334
    %v3613 = vpack.c.b16 %v2341, %v2335
    %v3614 = vpack.c.b16 %v2342, %v2336
    %v3615 = vpack.c.b16 %v2343, %v2337
    %v3616 = vpack.c.b16 %v2350, %v2344
    %v3617 = vpack.c.b16 %v2351, %v2345
    %v3618 = vpack.c.b16 %v2352, %v2346
    %v3619 = vpack.c.b16 %v2353, %v2347
    %v3620 = vpack.c.b16 %v2354, %v2348
    %v3621 = vpack.c.b16 %v2355, %v2349
    %v3622 = vpack.c.b16 %v2362, %v2356
    %v3623 = vpack.c.b16 %v2363, %v2357
    %v3624 = vpack.c.b16 %v2364, %v2358
    %v3625 = vpack.c.b16 %v2365, %v2359
    %v3626 = vpack.c.b16 %v2366, %v2360
    %v3627 = vpack.c.b16 %v2367, %v2361
    %v3628 = vpack.c.b16 %v2374, %v2368
    %v3629 = vpack.c.b16 %v2375, %v2369
    %v3630 = vpack.c.b16 %v2376, %v2370
    %v3631 = vpack.c.b16 %v2377, %v2371
    %v3632 = vpack.c.b16 %v2378, %v2372
    %v3633 = vpack.c.b16 %v2379, %v2373
    %v3634 = vpack.c.b16 %v2386, %v2380
    %v3635 = vpack.c.b16 %v2387, %v2381
    %v3636 = vpack.c.b16 %v2388, %v2382
    %v3637 = vpack.c.b16 %v2389, %v2383
    %v3638 = vpack.c.b16 %v2390, %v2384
    %v3639 = vpack.c.b16 %v2391, %v2385
    %v3640 = vpack.c.b16 %v2398, %v2392
    %v3641 = vpack.c.b16 %v2399, %v2393
    %v3642 = vpack.c.b16 %v2400, %v2394
    %v3643 = vpack.c.b16 %v2401, %v2395
    %v3644 = vpack.c.b16 %v2402, %v2396
    %v3645 = vpack.c.b16 %v2403, %v2397
    %v3646 = vpack.c.b16 %v2410, %v2404
    %v3647 = vpack.c.b16 %v2411, %v2405
    %v3648 = vpack.c.b16 %v2412, %v2406
    %v3649 = vpack.c.b16 %v2413, %v2407
    %v3650 = vpack.c.b16 %v2414, %v2408
    %v3651 = vpack.c.b16 %v2415, %v2409
    %v3652 = vpack.c.b16 %v2422, %v2416
    %v3653 = vpack.c.b16 %v2423, %v2417
    %v3654 = vpack.c.b16 %v2424, %v2418
    %v3655 = vpack.c.b16 %v2425, %v2419
    %v3656 = vpack.c.b16 %v2426, %v2420
    %v3657 = vpack.c.b16 %v2427, %v2421
    %v3658 = vpack.c.b16 %v2434, %v2428
    %v3659 = vpack.c.b16 %v2435, %v2429
    %v3660 = vpack.c.b16 %v2436, %v2430
    %v3661 = vpack.c.b16 %v2437, %v2431
    %v3662 = vpack.c.b16 %v2438, %v2432
    %v3663 = vpack.c.b16 %v2439, %v2433
    %v3664 = vpack.c.b16 %v2446, %v2440
    %v3665 = vpack.c.b16 %v2447, %v2441
    %v3666 = vpack.c.b16 %v2448, %v2442
    %v3667 = vpack.c.b16 %v2449, %v2443
    %v3668 = vpack.c.b16 %v2450, %v2444
    %v3669 = vpack.c.b16 %v2451, %v2445
    %v3670 = vpack.c.b16 %v2458, %v2452
    %v3671 = vpack.c.b16 %v2459, %v2453
    %v3672 = vpack.c.b16 %v2460, %v2454
    %v3673 = vpack.c.b16 %v2461, %v2455
    %v3674 = vpack.c.b16 %v2462, %v2456
    %v3675 = vpack.c.b16 %v2463, %v2457
    %v3676 = vpack.c.b16 %v2470, %v2464
    %v3677 = vpack.c.b16 %v2471, %v2465
    %v3678 = vpack.c.b16 %v2472, %v2466
    %v3679 = vpack.c.b16 %v2473, %v2467
    %v3680 = vpack.c.b16 %v2474, %v2468
    %v3681 = vpack.c.b16 %v2475, %v2469
    %v3682 = vpack.c.b16 %v2482, %v2476
    %v3683 = vpack.c.b16 %v2483, %v2477
    %v3684 = vpack.c.b16 %v2484, %v2478
    %v3685 = vpack.c.b16 %v2485, %v2479
    %v3686 = vpack.c.b16 %v2486, %v2480
    %v3687 = vpack.c.b16 %v2487, %v2481
    %v3688 = vpack.c.b16 %v2494, %v2488
    %v3689 = vpack.c.b16 %v2495, %v2489
    %v3690 = vpack.c.b16 %v2496, %v2490
    %v3691 = vpack.c.b16 %v2497, %v2491
    %v3692 = vpack.c.b16 %v2498, %v2492
    %v3693 = vpack.c.b16 %v2499, %v2493
    %v3694 = vpack.c.b16 %v2506, %v2500
    %v3695 = vpack.c.b16 %v2507, %v2501
    %v3696 = vpack.c.b16 %v2508, %v2502
    %v3697 = vpack.c.b16 %v2509, %v2503
    %v3698 = vpack.c.b16 %v2510, %v2504
    %v3699 = vpack.c.b16 %v2511, %v2505
    %v3700 = vpack.c.b16 %v2518, %v2512
    %v3701 = vpack.c.b16 %v2519, %v2513
    %v3702 = vpack.c.b16 %v2520, %v2514
    %v3703 = vpack.c.b16 %v2521, %v2515
    %v3704 = vpack.c.b16 %v2522, %v2516
    %v3705 = vpack.c.b16 %v2523, %v2517
    %v3706 = vpack.c.b16 %v2530, %v2524
    %v3707 = vpack.c.b16 %v2531, %v2525
    %v3708 = vpack.c.b16 %v2532, %v2526
    %v3709 = vpack.c.b16 %v2533, %v2527
    %v3710 = vpack.c.b16 %v2534, %v2528
    %v3711 = vpack.c.b16 %v2535, %v2529
    %v3712 = vpack.c.b16 %v2542, %v2536
    %v3713 = vpack.c.b16 %v2543, %v2537
    %v3714 = vpack.c.b16 %v2544, %v2538
    %v3715 = vpack.c.b16 %v2545, %v2539
    %v3716 = vpack.c.b16 %v2546, %v2540
    %v3717 = vpack.c.b16 %v2547, %v2541
    %v3718 = vpack.c.b16 %v2554, %v2548
    %v3719 = vpack.c.b16 %v2555, %v2549
    %v3720 = vpack.c.b16 %v2556, %v2550
    %v3721 = vpack.c.b16 %v2557, %v2551
    %v3722 = vpack.c.b16 %v2558, %v2552
    %v3723 = vpack.c.b16 %v2559, %v2553
    %v3724 = vpack.c.b16 %v2566, %v2560
    %v3725 = vpack.c.b16 %v2567, %v2561
    %v3726 = vpack.c.b16 %v2568, %v2562
    %v3727 = vpack.c.b16 %v2569, %v2563
    %v3728 = vpack.c.b16 %v2570, %v2564
    %v3729 = vpack.c.b16 %v2571, %v2565
    %v3730 = vpack.c.b16 %v2578, %v2572
    %v3731 = vpack.c.b16 %v2579, %v2573
    %v3732 = vpack.c.b16 %v2580, %v2574
    %v3733 = vpack.c.b16 %v2581, %v2575
    %v3734 = vpack.c.b16 %v2582, %v2576
    %v3735 = vpack.c.b16 %v2583, %v2577
    %v3736 = vpack.c.b16 %v2590, %v2584
    %v3737 = vpack.c.b16 %v2591, %v2585
    %v3738 = vpack.c.b16 %v2592, %v2586
    %v3739 = vpack.c.b16 %v2593, %v2587
    %v3740 = vpack.c.b16 %v2594, %v2588
    %v3741 = vpack.c.b16 %v2595, %v2589
    %v3742 = vpack.c.b16 %v2602, %v2596
    %v3743 = vpack.c.b16 %v2603, %v2597
    %v3744 = vpack.c.b16 %v2604, %v2598
    %v3745 = vpack.c.b16 %v2605, %v2599
    %v3746 = vpack.c.b16 %v2606, %v2600
    %v3747 = vpack.c.b16 %v2607, %v2601
    %v3748 = vpack.c.b16 %v2614, %v2608
    %v3749 = vpack.c.b16 %v2615, %v2609
    %v3750 = vpack.c.b16 %v2616, %v2610
    %v3751 = vpack.c.b16 %v2617, %v2611
    %v3752 = vpack.c.b16 %v2618, %v2612
    %v3753 = vpack.c.b16 %v2619, %v2613
    %v3754 = vpack.c.b16 %v2626, %v2620
    %v3755 = vpack.c.b16 %v2627, %v2621
    %v3756 = vpack.c.b16 %v2628, %v2622
    %v3757 = vpack.c.b16 %v2629, %v2623
    %v3758 = vpack.c.b16 %v2630, %v2624
    %v3759 = vpack.c.b16 %v2631, %v2625
    %v3760 = vpack.c.b16 %v2638, %v2632
    %v3761 = vpack.c.b16 %v2639, %v2633
    %v3762 = vpack.c.b16 %v2640, %v2634
    %v3763 = vpack.c.b16 %v2641, %v2635
    %v3764 = vpack.c.b16 %v2642, %v2636
    %v3765 = vpack.c.b16 %v2643, %v2637
    %v3766 = vpack.c.b16 %v2650, %v2644
    %v3767 = vpack.c.b16 %v2651, %v2645
    %v3768 = vpack.c.b16 %v2652, %v2646
    %v3769 = vpack.c.b16 %v2653, %v2647
    %v3770 = vpack.c.b16 %v2654, %v2648
    %v3771 = vpack.c.b16 %v2655, %v2649
    %v3772 = vpack.c.b16 %v2662, %v2656
    %v3773 = vpack.c.b16 %v2663, %v2657
    %v3774 = vpack.c.b16 %v2664, %v2658
    %v3775 = vpack.c.b16 %v2665, %v2659
    %v3776 = vpack.c.b16 %v2666, %v2660
    %v3777 = vpack.c.b16 %v2667, %v2661
    %v3778 = vpack.c.b16 %v2674, %v2668
    %v3779 = vpack.c.b16 %v2675, %v2669
    %v3780 = vpack.c.b16 %v2676, %v2670
    %v3781 = vpack.c.b16 %v2677, %v2671
    %v3782 = vpack.c.b16 %v2678, %v2672
    %v3783 = vpack.c.b16 %v2679, %v2673
    %v3784 = vpack.c.b16 %v2686, %v2680
    %v3785 = vpack.c.b16 %v2687, %v2681
    %v3786 = vpack.c.b16 %v2688, %v2682
    %v3787 = vpack.c.b16 %v2689, %v2683
    %v3788 = vpack.c.b16 %v2690, %v2684
    %v3789 = vpack.c.b16 %v2691, %v2685
    %v3790 = vpack.c.b16 %v2698, %v2692
    %v3791 = vpack.c.b16 %v2699, %v2693
    %v3792 = vpack.c.b16 %v2700, %v2694
    %v3793 = vpack.c.b16 %v2701, %v2695
    %v3794 = vpack.c.b16 %v2702, %v2696
    %v3795 = vpack.c.b16 %v2703, %v2697
    %v3796 = vpack.c.b16 %v2710, %v2704
    %v3797 = vpack.c.b16 %v2711, %v2705
    %v3798 = vpack.c.b16 %v2712, %v2706
    %v3799 = vpack.c.b16 %v2713, %v2707
    %v3800 = vpack.c.b16 %v2714, %v2708
    %v3801 = vpack.c.b16 %v2715, %v2709
    %v3802 = vpack.c.b16 %v2722, %v2716
    %v3803 = vpack.c.b16 %v2723, %v2717
    %v3804 = vpack.c.b16 %v2724, %v2718
    %v3805 = vpack.c.b16 %v2725, %v2719
    %v3806 = vpack.c.b16 %v2726, %v2720
    %v3807 = vpack.c.b16 %v2727, %v2721
    %v3808 = vpack.c.b16 %v2734, %v2728
    %v3809 = vpack.c.b16 %v2735, %v2729
    %v3810 = vpack.c.b16 %v2736, %v2730
    %v3811 = vpack.c.b16 %v2737, %v2731
    %v3812 = vpack.c.b16 %v2738, %v2732
    %v3813 = vpack.c.b16 %v2739, %v2733
    %v3814 = vpack.c.b16 %v2746, %v2740
    %v3815 = vpack.c.b16 %v2747, %v2741
    %v3816 = vpack.c.b16 %v2748, %v2742
    %v3817 = vpack.c.b16 %v2749, %v2743
    %v3818 = vpack.c.b16 %v2750, %v2744
    %v3819 = vpack.c.b16 %v2751, %v2745
    %v3820 = vpack.c.b16 %v2758, %v2752
    %v3821 = vpack.c.b16 %v2759, %v2753
    %v3822 = vpack.c.b16 %v2760, %v2754
    %v3823 = vpack.c.b16 %v2761, %v2755
    %v3824 = vpack.c.b16 %v2762, %v2756
    %v3825 = vpack.c.b16 %v2763, %v2757
    %v3826 = vpack.c.b16 %v2770, %v2764
    %v3827 = vpack.c.b16 %v2771, %v2765
    %v3828 = vpack.c.b16 %v2772, %v2766
    %v3829 = vpack.c.b16 %v2773, %v2767
    %v3830 = vpack.c.b16 %v2774, %v2768
    %v3831 = vpack.c.b16 %v2775, %v2769
    %v3832 = vpack.c.b16 %v2782, %v2776
    %v3833 = vpack.c.b16 %v2783, %v2777
    %v3834 = vpack.c.b16 %v2784, %v2778
    %v3835 = vpack.c.b16 %v2785, %v2779
    %v3836 = vpack.c.b16 %v2786, %v2780
    %v3837 = vpack.c.b16 %v2787, %v2781
    %v3838 = vpack.c.b16 %v2794, %v2788
    %v3839 = vpack.c.b16 %v2795, %v2789
    %v3840 = vpack.c.b16 %v2796, %v2790
    %v3841 = vpack.c.b16 %v2797, %v2791
    %v3842 = vpack.c.b16 %v2798, %v2792
    %v3843 = vpack.c.b16 %v2799, %v2793
    %v3844 = vpack.c.b16 %v2806, %v2800
    %v3845 = vpack.c.b16 %v2807, %v2801
    %v3846 = vpack.c.b16 %v2808, %v2802
    %v3847 = vpack.c.b16 %v2809, %v2803
    %v3848 = vpack.c.b16 %v2810, %v2804
    %v3849 = vpack.c.b16 %v2811, %v2805
    %v3850 = vpack.c.b16 %v2818, %v2812
    %v3851 = vpack.c.b16 %v2819, %v2813
    %v3852 = vpack.c.b16 %v2820, %v2814
    %v3853 = vpack.c.b16 %v2821, %v2815
    %v3854 = vpack.c.b16 %v2822, %v2816
    %v3855 = vpack.c.b16 %v2823, %v2817
    %v3856 = vpack.c.b16 %v2830, %v2824
    %v3857 = vpack.c.b16 %v2831, %v2825
    %v3858 = vpack.c.b16 %v2832, %v2826
    %v3859 = vpack.c.b16 %v2833, %v2827
    %v3860 = vpack.c.b16 %v2834, %v2828
    %v3861 = vpack.c.b16 %v2835, %v2829
    %v3862 = vpack.c.b16 %v2842, %v2836
    %v3863 = vpack.c.b16 %v2843, %v2837
    %v3864 = vpack.c.b16 %v2844, %v2838
    %v3865 = vpack.c.b16 %v2845, %v2839
    %v3866 = vpack.c.b16 %v2846, %v2840
    %v3867 = vpack.c.b16 %v2847, %v2841
    %v3868 = vpack.c.b16 %v2854, %v2848
    %v3869 = vpack.c.b16 %v2855, %v2849
    %v3870 = vpack.c.b16 %v2856, %v2850
    %v3871 = vpack.c.b16 %v2857, %v2851
    %v3872 = vpack.c.b16 %v2858, %v2852
    %v3873 = vpack.c.b16 %v2859, %v2853
    %v3874 = vpack.c.b16 %v2866, %v2860
    %v3875 = vpack.c.b16 %v2867, %v2861
    %v3876 = vpack.c.b16 %v2868, %v2862
    %v3877 = vpack.c.b16 %v2869, %v2863
    %v3878 = vpack.c.b16 %v2870, %v2864
    %v3879 = vpack.c.b16 %v2871, %v2865
    %v3880 = vpack.c.b16 %v2878, %v2872
    %v3881 = vpack.c.b16 %v2879, %v2873
    %v3882 = vpack.c.b16 %v2880, %v2874
    %v3883 = vpack.c.b16 %v2881, %v2875
    %v3884 = vpack.c.b16 %v2882, %v2876
    %v3885 = vpack.c.b16 %v2883, %v2877
    %v3886 = vpack.c.b16 %v2890, %v2884
    %v3887 = vpack.c.b16 %v2891, %v2885
    %v3888 = vpack.c.b16 %v2892, %v2886
    %v3889 = vpack.c.b16 %v2893, %v2887
    %v3890 = vpack.c.b16 %v2894, %v2888
    %v3891 = vpack.c.b16 %v2895, %v2889
    %v3892 = vpack.c.b16 %v2902, %v2896
    %v3893 = vpack.c.b16 %v2903, %v2897
    %v3894 = vpack.c.b16 %v2904, %v2898
    %v3895 = vpack.c.b16 %v2905, %v2899
    %v3896 = vpack.c.b16 %v2906, %v2900
    %v3897 = vpack.c.b16 %v2907, %v2901
    %v3898 = vpack.c.b16 %v2914, %v2908
    %v3899 = vpack.c.b16 %v2915, %v2909
    %v3900 = vpack.c.b16 %v2916, %v2910
    %v3901 = vpack.c.b16 %v2917, %v2911
    %v3902 = vpack.c.b16 %v2918, %v2912
    %v3903 = vpack.c.b16 %v2919, %v2913
    %v3904 = vpack.c.b16 %v2926, %v2920
    %v3905 = vpack.c.b16 %v2927, %v2921
    %v3906 = vpack.c.b16 %v2928, %v2922
    %v3907 = vpack.c.b16 %v2929, %v2923
    %v3908 = vpack.c.b16 %v2930, %v2924
    %v3909 = vpack.c.b16 %v2931, %v2925
    %v3910 = vpack.c.b16 %v2938, %v2932
    %v3911 = vpack.c.b16 %v2939, %v2933
    %v3912 = vpack.c.b16 %v2940, %v2934
    %v3913 = vpack.c.b16 %v2941, %v2935
    %v3914 = vpack.c.b16 %v2942, %v2936
    %v3915 = vpack.c.b16 %v2943, %v2937
    %v3916 = vpack.c.b16 %v2950, %v2944
    %v3917 = vpack.c.b16 %v2951, %v2945
    %v3918 = vpack.c.b16 %v2952, %v2946
    %v3919 = vpack.c.b16 %v2953, %v2947
    %v3920 = vpack.c.b16 %v2954, %v2948
    %v3921 = vpack.c.b16 %v2955, %v2949
    %v3922 = vpack.c.b16 %v2962, %v2956
    %v3923 = vpack.c.b16 %v2963, %v2957
    %v3924 = vpack.c.b16 %v2964, %v2958
    %v3925 = vpack.c.b16 %v2965, %v2959
    %v3926 = vpack.c.b16 %v2966, %v2960
    %v3927 = vpack.c.b16 %v2967, %v2961
    %v3928 = vpack.c.b16 %v2974, %v2968
    %v3929 = vpack.c.b16 %v2975, %v2969
    %v3930 = vpack.c.b16 %v2976, %v2970
    %v3931 = vpack.c.b16 %v2977, %v2971
    %v3932 = vpack.c.b16 %v2978, %v2972
    %v3933 = vpack.c.b16 %v2979, %v2973
    %v3934 = vpack.c.b16 %v2986, %v2980
    %v3935 = vpack.c.b16 %v2987, %v2981
    %v3936 = vpack.c.b16 %v2988, %v2982
    %v3937 = vpack.c.b16 %v2989, %v2983
    %v3938 = vpack.c.b16 %v2990, %v2984
    %v3939 = vpack.c.b16 %v2991, %v2985
    %v3940 = vpack.c.b16 %v2998, %v2992
    %v3941 = vpack.c.b16 %v2999, %v2993
    %v3942 = vpack.c.b16 %v3000, %v2994
    %v3943 = vpack.c.b16 %v3001, %v2995
    %v3944 = vpack.c.b16 %v3002, %v2996
    %v3945 = vpack.c.b16 %v3003, %v2997
    %v3946 = vpack.c.b16 %v3010, %v3004
    %v3947 = vpack.c.b16 %v3011, %v3005
    %v3948 = vpack.c.b16 %v3012, %v3006
    %v3949 = vpack.c.b16 %v3013, %v3007
    %v3950 = vpack.c.b16 %v3014, %v3008
    %v3951 = vpack.c.b16 %v3015, %v3009
    %v3952 = vpack.c.b16 %v3022, %v3016
    %v3953 = vpack.c.b16 %v3023, %v3017
    %v3954 = vpack.c.b16 %v3024, %v3018
    %v3955 = vpack.c.b16 %v3025, %v3019
    %v3956 = vpack.c.b16 %v3026, %v3020
    %v3957 = vpack.c.b16 %v3027, %v3021
    %v3958 = vpack.c.b16 %v3034, %v3028
    %v3959 = vpack.c.b16 %v3035, %v3029
    %v3960 = vpack.c.b16 %v3036, %v3030
    %v3961 = vpack.c.b16 %v3037, %v3031
    %v3962 = vpack.c.b16 %v3038, %v3032
    %v3963 = vpack.c.b16 %v3039, %v3033
    %v3964 = vpack.c.b16 %v3046, %v3040
    %v3965 = vpack.c.b16 %v3047, %v3041
    %v3966 = vpack.c.b16 %v3048, %v3042
    %v3967 = vpack.c.b16 %v3049, %v3043
    %v3968 = vpack.c.b16 %v3050, %v3044
    %v3969 = vpack.c.b16 %v3051, %v3045
    %v3970 = vpack.c.b16 %v3058, %v3052
    %v3971 = vpack.c.b16 %v3059, %v3053
    %v3972 = vpack.c.b16 %v3060, %v3054
    %v3973 = vpack.c.b16 %v3061, %v3055
    %v3974 = vpack.c.b16 %v3062, %v3056
    %v3975 = vpack.c.b16 %v3063, %v3057
    %v3976 = vpack.c.b16 %v3070, %v3064
    %v3977 = vpack.c.b16 %v3071, %v3065
    %v3978 = vpack.c.b16 %v3072, %v3066
    %v3979 = vpack.c.b16 %v3073, %v3067
    %v3980 = vpack.c.b16 %v3074, %v3068
    %v3981 = vpack.c.b16 %v3075, %v3069
    %v3982 = vpack.c.b16 %v3082, %v3076
    %v3983 = vpack.c.b16 %v3083, %v3077
    %v3984 = vpack.c.b16 %v3084, %v3078
    %v3985 = vpack.c.b16 %v3085, %v3079
    %v3986 = vpack.c.b16 %v3086, %v3080
    %v3987 = vpack.c.b16 %v3087, %v3081
    %v3988 = vpack.c.b16 %v3094, %v3088
    %v3989 = vpack.c.b16 %v3095, %v3089
    %v3990 = vpack.c.b16 %v3096, %v3090
    %v3991 = vpack.c.b16 %v3097, %v3091
    %v3992 = vpack.c.b16 %v3098, %v3092
    %v3993 = vpack.c.b16 %v3099, %v3093
    %v3994 = vpack.c.b16 %v3106, %v3100
    %v3995 = vpack.c.b16 %v3107, %v3101
    %v3996 = vpack.c.b16 %v3108, %v3102
    %v3997 = vpack.c.b16 %v3109, %v3103
    %v3998 = vpack.c.b16 %v3110, %v3104
    %v3999 = vpack.c.b16 %v3111, %v3105
    %v4000 = vpack.c.b16 %v3118, %v3112
    %v4001 = vpack.c.b16 %v3119, %v3113
    %v4002 = vpack.c.b16 %v3120, %v3114
    %v4003 = vpack.c.b16 %v3121, %v3115
    %v4004 = vpack.c.b16 %v3122, %v3116
    %v4005 = vpack.c.b16 %v3123, %v3117
    %v4006 = vpack.c.b16 %v3130, %v3124
    %v4007 = vpack.c.b16 %v3131, %v3125
    %v4008 = vpack.c.b16 %v3132, %v3126
    %v4009 = vpack.c.b16 %v3133, %v3127
    %v4010 = vpack.c.b16 %v3134, %v3128
    %v4011 = vpack.c.b16 %v3135, %v3129
    %v4012 = vpack.c.b16 %v3142, %v3136
    %v4013 = vpack.c.b16 %v3143, %v3137
    %v4014 = vpack.c.b16 %v3144, %v3138
    %v4015 = vpack.c.b16 %v3145, %v3139
    %v4016 = vpack.c.b16 %v3146, %v3140
    %v4017 = vpack.c.b16 %v3147, %v3141
    %v4018 = vpack.c.b16 %v3154, %v3148
    %v4019 = vpack.c.b16 %v3155, %v3149
    %v4020 = vpack.c.b16 %v3156, %v3150
    %v4021 = vpack.c.b16 %v3157, %v3151
    %v4022 = vpack.c.b16 %v3158, %v3152
    %v4023 = vpack.c.b16 %v3159, %v3153
    %v4024 = vpack.c.b16 %v3166, %v3160
    %v4025 = vpack.c.b16 %v3167, %v3161
    %v4026 = vpack.c.b16 %v3168, %v3162
    %v4027 = vpack.c.b16 %v3169, %v3163
    %v4028 = vpack.c.b16 %v3170, %v3164
    %v4029 = vpack.c.b16 %v3171, %v3165
    %v4030 = vpack.c.b16 %v3178, %v3172
    %v4031 = vpack.c.b16 %v3179, %v3173
    %v4032 = vpack.c.b16 %v3180, %v3174
    %v4033 = vpack.c.b16 %v3181, %v3175
    %v4034 = vpack.c.b16 %v3182, %v3176
    %v4035 = vpack.c.b16 %v3183, %v3177
    %v4036 = vpack.c.b16 %v3190, %v3184
    %v4037 = vpack.c.b16 %v3191, %v3185
    %v4038 = vpack.c.b16 %v3192, %v3186
    %v4039 = vpack.c.b16 %v3193, %v3187
    %v4040 = vpack.c.b16 %v3194, %v3188
    %v4041 = vpack.c.b16 %v3195, %v3189
    %v4042 = vpack.c.b16 %v3202, %v3196
    %v4043 = vpack.c.b16 %v3203, %v3197
    %v4044 = vpack.c.b16 %v3204, %v3198
    %v4045 = vpack.c.b16 %v3205, %v3199
    %v4046 = vpack.c.b16 %v3206, %v3200
    %v4047 = vpack.c.b16 %v3207, %v3201
    %v4048 = vpack.c.b16 %v3214, %v3208
    %v4049 = vpack.c.b16 %v3215, %v3209
    %v4050 = vpack.c.b16 %v3216, %v3210
    %v4051 = vpack.c.b16 %v3217, %v3211
    %v4052 = vpack.c.b16 %v3218, %v3212
    %v4053 = vpack.c.b16 %v3219, %v3213
    %v4054 = vpack.c.b16 %v3226, %v3220
    %v4055 = vpack.c.b16 %v3227, %v3221
    %v4056 = vpack.c.b16 %v3228, %v3222
    %v4057 = vpack.c.b16 %v3229, %v3223
    %v4058 = vpack.c.b16 %v3230, %v3224
    %v4059 = vpack.c.b16 %v3231, %v3225
    %v4060 = vpack.c.b16 %v3238, %v3232
    %v4061 = vpack.c.b16 %v3239, %v3233
    %v4062 = vpack.c.b16 %v3240, %v3234
    %v4063 = vpack.c.b16 %v3241, %v3235
    %v4064 = vpack.c.b16 %v3242, %v3236
    %v4065 = vpack.c.b16 %v3243, %v3237
    %v4066 = vpack.c.b16 %v3250, %v3244
    %v4067 = vpack.c.b16 %v3251, %v3245
    %v4068 = vpack.c.b16 %v3252, %v3246
    %v4069 = vpack.c.b16 %v3253, %v3247
    %v4070 = vpack.c.b16 %v3254, %v3248
    %v4071 = vpack.c.b16 %v3255, %v3249
    %v4072 = vpack.c.b16 %v3262, %v3256
    %v4073 = vpack.c.b16 %v3263, %v3257
    %v4074 = vpack.c.b16 %v3264, %v3258
    %v4075 = vpack.c.b16 %v3265, %v3259
    %v4076 = vpack.c.b16 %v3266, %v3260
    %v4077 = vpack.c.b16 %v3267, %v3261
    %v4078 = vpack.c.b16 %v3274, %v3268
    %v4079 = vpack.c.b16 %v3275, %v3269
    %v4080 = vpack.c.b16 %v3276, %v3270
    %v4081 = vpack.c.b16 %v3277, %v3271
    %v4082 = vpack.c.b16 %v3278, %v3272
    %v4083 = vpack.c.b16 %v3279, %v3273
    %v4084 = vpack.c.b16 %v3286, %v3280
    %v4085 = vpack.c.b16 %v3287, %v3281
    %v4086 = vpack.c.b16 %v3288, %v3282
    %v4087 = vpack.c.b16 %v3289, %v3283
    %v4088 = vpack.c.b16 %v3290, %v3284
    %v4089 = vpack.c.b16 %v3291, %v3285
    %v4090 = vpack.c.b16 %v3298, %v3292
    %v4091 = vpack.c.b16 %v3299, %v3293
    %v4092 = vpack.c.b16 %v3300, %v3294
    %v4093 = vpack.c.b16 %v3301, %v3295
    %v4094 = vpack.c.b16 %v3302, %v3296
    %v4095 = vpack.c.b16 %v3303, %v3297
    %v4096 = vpack.c.b16 %v3310, %v3304
    %v4097 = vpack.c.b16 %v3311, %v3305
    %v4098 = vpack.c.b16 %v3312, %v3306
    %v4099 = vpack.c.b16 %v3313, %v3307
    %v4100 = vpack.c.b16 %v3314, %v3308
    %v4101 = vpack.c.b16 %v3315, %v3309
    %v4102 = vpack.c.b16 %v3322, %v3316
    %v4103 = vpack.c.b16 %v3323, %v3317
    %v4104 = vpack.c.b16 %v3324, %v3318
    %v4105 = vpack.c.b16 %v3325, %v3319
    %v4106 = vpack.c.b16 %v3326, %v3320
    %v4107 = vpack.c.b16 %v3327, %v3321
    %v4108 = vpack.c.b16 %v3334, %v3328
    %v4109 = vpack.c.b16 %v3335, %v3329
    %v4110 = vpack.c.b16 %v3336, %v3330
    %v4111 = vpack.c.b16 %v3337, %v3331
    %v4112 = vpack.c.b16 %v3338, %v3332
    %v4113 = vpack.c.b16 %v3339, %v3333
    %v4114 = vpack.c.b16 %v3346, %v3340
    %v4115 = vpack.c.b16 %v3347, %v3341
    %v4116 = vpack.c.b16 %v3348, %v3342
    %v4117 = vpack.c.b16 %v3349, %v3343
    %v4118 = vpack.c.b16 %v3350, %v3344
    %v4119 = vpack.c.b16 %v3351, %v3345
    %4888 = vmatprep.subr.bf16.mxu0 %v3395
    %4889 = vmatpush1.bf16.msra.mxu0 %v3394
    %4890 = vmatprep.subr.bf16.mxu0 %v3389
    %4891 = vmatpush1.bf16.msra.mxu0 %v3388
    %4892 = vmatprep.subr.bf16.mxu0 %v3383
    %4893 = vmatpush1.bf16.msra.mxu0 %v3382
    %4894 = vmatprep.subr.bf16.mxu0 %v3377
    %4895 = vmatpush1.bf16.msra.mxu0 %v3376
    %4896 = vmatprep.subr.bf16.mxu0 %v3371
    %4897 = vmatpush1.bf16.msra.mxu0 %v3370
    %4898 = vmatprep.subr.bf16.mxu0 %v3365
    %4899 = vmatpush1.bf16.msra.mxu0 %v3364
    %4900 = vmatprep.subr.bf16.mxu0 %v3359
    %4901 = vmatpush1.bf16.msra.mxu0 %v3358
    %4902 = vmatprep.subr.bf16.mxu0 %v3353
    %4903 = vmatpush1.bf16.msra.mxu0 %v3352
    %4904 = vmatprep.subr.bf16.mxu0 %v3443
    %4905 = vmatpush2.bf16.msra.mxu0 %v3442
    %4906 = vmatprep.subr.bf16.mxu0 %v3437
    %4907 = vmatpush2.bf16.msra.mxu0 %v3436
    %4908 = vmatprep.subr.bf16.mxu0 %v3431
    %4909 = vmatpush2.bf16.msra.mxu0 %v3430
    %4910 = vmatprep.subr.bf16.mxu0 %v3425
    %4911 = vmatpush2.bf16.msra.mxu0 %v3424
    %4912 = vmatprep.subr.bf16.mxu0 %v3419
    %4913 = vmatpush2.bf16.msra.mxu0 %v3418
    %4914 = vmatprep.subr.bf16.mxu0 %v3413
    %4915 = vmatpush2.bf16.msra.mxu0 %v3412
    %4916 = vmatprep.subr.bf16.mxu0 %v3407
    %4917 = vmatpush2.bf16.msra.mxu0 %v3406
    %4918 = vmatprep.subr.bf16.mxu0 %v3401
    %4919 = vmatpush2.bf16.msra.mxu0 %v3400
    %4920 = vmatprep.mubr.bf16.mxu0 %v1017
    %4921 = vmatmul.mubr.bf16.gmra.mxu0 %v1016
    %v4922 = vpop.f32.mrf.mxu0
    %v4923 = vadd.f32 %v941, %v4922
    %v4924 = vpop.f32.mrf.mxu0
    %v4925 = vadd.f32 %v945, %v4924
    %v4926 = vpop.f32.mrf.mxu0
    %v4927 = vadd.f32 %v941, %v4926
    %v4928 = vpop.f32.mrf.mxu0
    %v4929 = vadd.f32 %v945, %v4928
    %4930 = vdwg.mxu0
    %4931 = vmatprep.subr.bf16.mxu0 %v3491
    %4932 = vmatpush1.bf16.msra.mxu0 %v3490
    %4933 = vmatprep.subr.bf16.mxu0 %v3485
    %4934 = vmatpush1.bf16.msra.mxu0 %v3484
    %4935 = vmatprep.subr.bf16.mxu0 %v3479
    %4936 = vmatpush1.bf16.msra.mxu0 %v3478
    %4937 = vmatprep.subr.bf16.mxu0 %v3473
    %4938 = vmatpush1.bf16.msra.mxu0 %v3472
    %4939 = vmatprep.subr.bf16.mxu0 %v3467
    %4940 = vmatpush1.bf16.msra.mxu0 %v3466
    %4941 = vmatprep.subr.bf16.mxu0 %v3461
    %4942 = vmatpush1.bf16.msra.mxu0 %v3460
    %4943 = vmatprep.subr.bf16.mxu0 %v3455
    %4944 = vmatpush1.bf16.msra.mxu0 %v3454
    %4945 = vmatprep.subr.bf16.mxu0 %v3449
    %4946 = vmatpush1.bf16.msra.mxu0 %v3448
    %4947 = vmatprep.subr.bf16.mxu0 %v3539
    %4948 = vmatpush2.bf16.msra.mxu0 %v3538
    %4949 = vmatprep.subr.bf16.mxu0 %v3533
    %4950 = vmatpush2.bf16.msra.mxu0 %v3532
    %4951 = vmatprep.subr.bf16.mxu0 %v3527
    %4952 = vmatpush2.bf16.msra.mxu0 %v3526
    %4953 = vmatprep.subr.bf16.mxu0 %v3521
    %4954 = vmatpush2.bf16.msra.mxu0 %v3520
    %4955 = vmatprep.subr.bf16.mxu0 %v3515
    %4956 = vmatpush2.bf16.msra.mxu0 %v3514
    %4957 = vmatprep.subr.bf16.mxu0 %v3509
    %4958 = vmatpush2.bf16.msra.mxu0 %v3508
    %4959 = vmatprep.subr.bf16.mxu0 %v3503
    %4960 = vmatpush2.bf16.msra.mxu0 %v3502
    %4961 = vmatprep.subr.bf16.mxu0 %v3497
    %4962 = vmatpush2.bf16.msra.mxu0 %v3496
    %4963 = vmatprep.mubr.bf16.mxu0 %v1019
    %4964 = vmatmul.mubr.bf16.gmra.mxu0 %v1018
    %v4965 = vpop.f32.mrf.mxu0
    %v4966 = vadd.f32 %v4923, %v4965
    %v4967 = vpop.f32.mrf.mxu0
    %v4968 = vadd.f32 %v4925, %v4967
    %v4969 = vpop.f32.mrf.mxu0
    %v4970 = vadd.f32 %v4927, %v4969
    %v4971 = vpop.f32.mrf.mxu0
    %v4972 = vadd.f32 %v4929, %v4971
    %4973 = vdwg.mxu0
    %4974 = vmatprep.subr.bf16.mxu0 %v3587
    %4975 = vmatpush1.bf16.msra.mxu0 %v3586
    %4976 = vmatprep.subr.bf16.mxu0 %v3581
    %4977 = vmatpush1.bf16.msra.mxu0 %v3580
    %4978 = vmatprep.subr.bf16.mxu0 %v3575
    %4979 = vmatpush1.bf16.msra.mxu0 %v3574
    %4980 = vmatprep.subr.bf16.mxu0 %v3569
    %4981 = vmatpush1.bf16.msra.mxu0 %v3568
    %4982 = vmatprep.subr.bf16.mxu0 %v3563
    %4983 = vmatpush1.bf16.msra.mxu0 %v3562
    %4984 = vmatprep.subr.bf16.mxu0 %v3557
    %4985 = vmatpush1.bf16.msra.mxu0 %v3556
    %4986 = vmatprep.subr.bf16.mxu0 %v3551
    %4987 = vmatpush1.bf16.msra.mxu0 %v3550
    %4988 = vmatprep.subr.bf16.mxu0 %v3545
    %4989 = vmatpush1.bf16.msra.mxu0 %v3544
    %4990 = vmatprep.subr.bf16.mxu0 %v3635
    %4991 = vmatpush2.bf16.msra.mxu0 %v3634
    %4992 = vmatprep.subr.bf16.mxu0 %v3629
    %4993 = vmatpush2.bf16.msra.mxu0 %v3628
    %4994 = vmatprep.subr.bf16.mxu0 %v3623
    %4995 = vmatpush2.bf16.msra.mxu0 %v3622
    %4996 = vmatprep.subr.bf16.mxu0 %v3617
    %4997 = vmatpush2.bf16.msra.mxu0 %v3616
    %4998 = vmatprep.subr.bf16.mxu0 %v3611
    %4999 = vmatpush2.bf16.msra.mxu0 %v3610
    %5000 = vmatprep.subr.bf16.mxu0 %v3605
    %5001 = vmatpush2.bf16.msra.mxu0 %v3604
    %5002 = vmatprep.subr.bf16.mxu0 %v3599
    %5003 = vmatpush2.bf16.msra.mxu0 %v3598
    %5004 = vmatprep.subr.bf16.mxu0 %v3593
    %5005 = vmatpush2.bf16.msra.mxu0 %v3592
    %5006 = vmatprep.mubr.bf16.mxu0 %v1021
    %5007 = vmatmul.mubr.bf16.gmra.mxu0 %v1020
    %v5008 = vpop.f32.mrf.mxu0
    %v5009 = vadd.f32 %v4966, %v5008
    %v5010 = vpop.f32.mrf.mxu0
    %v5011 = vadd.f32 %v4968, %v5010
    %v5012 = vpop.f32.mrf.mxu0
    %v5013 = vadd.f32 %v4970, %v5012
    %v5014 = vpop.f32.mrf.mxu0
    %v5015 = vadd.f32 %v4972, %v5014
    %5016 = vdwg.mxu0
    %5017 = vmatprep.subr.bf16.mxu0 %v3683
    %5018 = vmatpush1.bf16.msra.mxu0 %v3682
    %5019 = vmatprep.subr.bf16.mxu0 %v3677
    %5020 = vmatpush1.bf16.msra.mxu0 %v3676
    %5021 = vmatprep.subr.bf16.mxu0 %v3671
    %5022 = vmatpush1.bf16.msra.mxu0 %v3670
    %5023 = vmatprep.subr.bf16.mxu0 %v3665
    %5024 = vmatpush1.bf16.msra.mxu0 %v3664
    %5025 = vmatprep.subr.bf16.mxu0 %v3659
    %5026 = vmatpush1.bf16.msra.mxu0 %v3658
    %5027 = vmatprep.subr.bf16.mxu0 %v3653
    %5028 = vmatpush1.bf16.msra.mxu0 %v3652
    %5029 = vmatprep.subr.bf16.mxu0 %v3647
    %5030 = vmatpush1.bf16.msra.mxu0 %v3646
    %5031 = vmatprep.subr.bf16.mxu0 %v3641
    %5032 = vmatpush1.bf16.msra.mxu0 %v3640
    %5033 = vmatprep.subr.bf16.mxu0 %v3731
    %5034 = vmatpush2.bf16.msra.mxu0 %v3730
    %5035 = vmatprep.subr.bf16.mxu0 %v3725
    %5036 = vmatpush2.bf16.msra.mxu0 %v3724
    %5037 = vmatprep.subr.bf16.mxu0 %v3719
    %5038 = vmatpush2.bf16.msra.mxu0 %v3718
    %5039 = vmatprep.subr.bf16.mxu0 %v3713
    %5040 = vmatpush2.bf16.msra.mxu0 %v3712
    %5041 = vmatprep.subr.bf16.mxu0 %v3707
    %5042 = vmatpush2.bf16.msra.mxu0 %v3706
    %5043 = vmatprep.subr.bf16.mxu0 %v3701
    %5044 = vmatpush2.bf16.msra.mxu0 %v3700
    %5045 = vmatprep.subr.bf16.mxu0 %v3695
    %5046 = vmatpush2.bf16.msra.mxu0 %v3694
    %5047 = vmatprep.subr.bf16.mxu0 %v3689
    %5048 = vmatpush2.bf16.msra.mxu0 %v3688
    %5049 = vmatprep.mubr.bf16.mxu0 %v1023
    %5050 = vmatmul.mubr.bf16.gmra.mxu0 %v1022
    %v5051 = vpop.f32.mrf.mxu0
    %v5052 = vadd.f32 %v5009, %v5051
    %v5053 = vpop.f32.mrf.mxu0
    %v5054 = vadd.f32 %v5011, %v5053
    %v5055 = vpop.f32.mrf.mxu0
    %v5056 = vadd.f32 %v5013, %v5055
    %v5057 = vpop.f32.mrf.mxu0
    %v5058 = vadd.f32 %v5015, %v5057
    %5059 = vdwg.mxu0
    %5060 = vmatprep.subr.bf16.mxu0 %v3779
    %5061 = vmatpush1.bf16.msra.mxu0 %v3778
    %5062 = vmatprep.subr.bf16.mxu0 %v3773
    %5063 = vmatpush1.bf16.msra.mxu0 %v3772
    %5064 = vmatprep.subr.bf16.mxu0 %v3767
    %5065 = vmatpush1.bf16.msra.mxu0 %v3766
    %5066 = vmatprep.subr.bf16.mxu0 %v3761
    %5067 = vmatpush1.bf16.msra.mxu0 %v3760
    %5068 = vmatprep.subr.bf16.mxu0 %v3755
    %5069 = vmatpush1.bf16.msra.mxu0 %v3754
    %5070 = vmatprep.subr.bf16.mxu0 %v3749
    %5071 = vmatpush1.bf16.msra.mxu0 %v3748
    %5072 = vmatprep.subr.bf16.mxu0 %v3743
    %5073 = vmatpush1.bf16.msra.mxu0 %v3742
    %5074 = vmatprep.subr.bf16.mxu0 %v3737
    %5075 = vmatpush1.bf16.msra.mxu0 %v3736
    %5076 = vmatprep.subr.bf16.mxu0 %v3827
    %5077 = vmatpush2.bf16.msra.mxu0 %v3826
    %5078 = vmatprep.subr.bf16.mxu0 %v3821
    %5079 = vmatpush2.bf16.msra.mxu0 %v3820
    %5080 = vmatprep.subr.bf16.mxu0 %v3815
    %5081 = vmatpush2.bf16.msra.mxu0 %v3814
    %5082 = vmatprep.subr.bf16.mxu0 %v3809
    %5083 = vmatpush2.bf16.msra.mxu0 %v3808
    %5084 = vmatprep.subr.bf16.mxu0 %v3803
    %5085 = vmatpush2.bf16.msra.mxu0 %v3802
    %5086 = vmatprep.subr.bf16.mxu0 %v3797
    %5087 = vmatpush2.bf16.msra.mxu0 %v3796
    %5088 = vmatprep.subr.bf16.mxu0 %v3791
    %5089 = vmatpush2.bf16.msra.mxu0 %v3790
    %5090 = vmatprep.subr.bf16.mxu0 %v3785
    %5091 = vmatpush2.bf16.msra.mxu0 %v3784
    %5092 = vmatprep.mubr.bf16.mxu0 %v1025
    %5093 = vmatmul.mubr.bf16.gmra.mxu0 %v1024
    %v5094 = vpop.f32.mrf.mxu0
    %v5095 = vadd.f32 %v5052, %v5094
    %v5096 = vpop.f32.mrf.mxu0
    %v5097 = vadd.f32 %v5054, %v5096
    %v5098 = vpop.f32.mrf.mxu0
    %v5099 = vadd.f32 %v5056, %v5098
    %v5100 = vpop.f32.mrf.mxu0
    %v5101 = vadd.f32 %v5058, %v5100
    %5102 = vdwg.mxu0
    %5103 = vmatprep.subr.bf16.mxu0 %v3875
    %5104 = vmatpush1.bf16.msra.mxu0 %v3874
    %5105 = vmatprep.subr.bf16.mxu0 %v3869
    %5106 = vmatpush1.bf16.msra.mxu0 %v3868
    %5107 = vmatprep.subr.bf16.mxu0 %v3863
    %5108 = vmatpush1.bf16.msra.mxu0 %v3862
    %5109 = vmatprep.subr.bf16.mxu0 %v3857
    %5110 = vmatpush1.bf16.msra.mxu0 %v3856
    %5111 = vmatprep.subr.bf16.mxu0 %v3851
    %5112 = vmatpush1.bf16.msra.mxu0 %v3850
    %5113 = vmatprep.subr.bf16.mxu0 %v3845
    %5114 = vmatpush1.bf16.msra.mxu0 %v3844
    %5115 = vmatprep.subr.bf16.mxu0 %v3839
    %5116 = vmatpush1.bf16.msra.mxu0 %v3838
    %5117 = vmatprep.subr.bf16.mxu0 %v3833
    %5118 = vmatpush1.bf16.msra.mxu0 %v3832
    %5119 = vmatprep.subr.bf16.mxu0 %v3923
    %5120 = vmatpush2.bf16.msra.mxu0 %v3922
    %5121 = vmatprep.subr.bf16.mxu0 %v3917
    %5122 = vmatpush2.bf16.msra.mxu0 %v3916
    %5123 = vmatprep.subr.bf16.mxu0 %v3911
    %5124 = vmatpush2.bf16.msra.mxu0 %v3910
    %5125 = vmatprep.subr.bf16.mxu0 %v3905
    %5126 = vmatpush2.bf16.msra.mxu0 %v3904
    %5127 = vmatprep.subr.bf16.mxu0 %v3899
    %5128 = vmatpush2.bf16.msra.mxu0 %v3898
    %5129 = vmatprep.subr.bf16.mxu0 %v3893
    %5130 = vmatpush2.bf16.msra.mxu0 %v3892
    %5131 = vmatprep.subr.bf16.mxu0 %v3887
    %5132 = vmatpush2.bf16.msra.mxu0 %v3886
    %5133 = vmatprep.subr.bf16.mxu0 %v3881
    %5134 = vmatpush2.bf16.msra.mxu0 %v3880
    %5135 = vmatprep.mubr.bf16.mxu0 %v1027
    %5136 = vmatmul.mubr.bf16.gmra.mxu0 %v1026
    %v5137 = vpop.f32.mrf.mxu0
    %v5138 = vadd.f32 %v5095, %v5137
    %v5139 = vpop.f32.mrf.mxu0
    %v5140 = vadd.f32 %v5097, %v5139
    %v5141 = vpop.f32.mrf.mxu0
    %v5142 = vadd.f32 %v5099, %v5141
    %v5143 = vpop.f32.mrf.mxu0
    %v5144 = vadd.f32 %v5101, %v5143
    %5145 = vdwg.mxu0
    %5146 = vmatprep.subr.bf16.mxu0 %v3971
    %5147 = vmatpush1.bf16.msra.mxu0 %v3970
    %5148 = vmatprep.subr.bf16.mxu0 %v3965
    %5149 = vmatpush1.bf16.msra.mxu0 %v3964
    %5150 = vmatprep.subr.bf16.mxu0 %v3959
    %5151 = vmatpush1.bf16.msra.mxu0 %v3958
    %5152 = vmatprep.subr.bf16.mxu0 %v3953
    %5153 = vmatpush1.bf16.msra.mxu0 %v3952
    %5154 = vmatprep.subr.bf16.mxu0 %v3947
    %5155 = vmatpush1.bf16.msra.mxu0 %v3946
    %5156 = vmatprep.subr.bf16.mxu0 %v3941
    %5157 = vmatpush1.bf16.msra.mxu0 %v3940
    %5158 = vmatprep.subr.bf16.mxu0 %v3935
    %5159 = vmatpush1.bf16.msra.mxu0 %v3934
    %5160 = vmatprep.subr.bf16.mxu0 %v3929
    %5161 = vmatpush1.bf16.msra.mxu0 %v3928
    %5162 = vmatprep.subr.bf16.mxu0 %v4019
    %5163 = vmatpush2.bf16.msra.mxu0 %v4018
    %5164 = vmatprep.subr.bf16.mxu0 %v4013
    %5165 = vmatpush2.bf16.msra.mxu0 %v4012
    %5166 = vmatprep.subr.bf16.mxu0 %v4007
    %5167 = vmatpush2.bf16.msra.mxu0 %v4006
    %5168 = vmatprep.subr.bf16.mxu0 %v4001
    %5169 = vmatpush2.bf16.msra.mxu0 %v4000
    %5170 = vmatprep.subr.bf16.mxu0 %v3995
    %5171 = vmatpush2.bf16.msra.mxu0 %v3994
    %5172 = vmatprep.subr.bf16.mxu0 %v3989
    %5173 = vmatpush2.bf16.msra.mxu0 %v3988
    %5174 = vmatprep.subr.bf16.mxu0 %v3983
    %5175 = vmatpush2.bf16.msra.mxu0 %v3982
    %5176 = vmatprep.subr.bf16.mxu0 %v3977
    %5177 = vmatpush2.bf16.msra.mxu0 %v3976
    %5178 = vmatprep.mubr.bf16.mxu0 %v1029
    %5179 = vmatmul.mubr.bf16.gmra.mxu0 %v1028
    %v5180 = vpop.f32.mrf.mxu0
    %v5181 = vadd.f32 %v5138, %v5180
    %v5182 = vpop.f32.mrf.mxu0
    %v5183 = vadd.f32 %v5140, %v5182
    %v5184 = vpop.f32.mrf.mxu0
    %v5185 = vadd.f32 %v5142, %v5184
    %v5186 = vpop.f32.mrf.mxu0
    %v5187 = vadd.f32 %v5144, %v5186
    %5188 = vdwg.mxu0
    %5189 = vmatprep.subr.bf16.mxu0 %v4067
    %5190 = vmatpush1.bf16.msra.mxu0 %v4066
    %5191 = vmatprep.subr.bf16.mxu0 %v4061
    %5192 = vmatpush1.bf16.msra.mxu0 %v4060
    %5193 = vmatprep.subr.bf16.mxu0 %v4055
    %5194 = vmatpush1.bf16.msra.mxu0 %v4054
    %5195 = vmatprep.subr.bf16.mxu0 %v4049
    %5196 = vmatpush1.bf16.msra.mxu0 %v4048
    %5197 = vmatprep.subr.bf16.mxu0 %v4043
    %5198 = vmatpush1.bf16.msra.mxu0 %v4042
    %5199 = vmatprep.subr.bf16.mxu0 %v4037
    %5200 = vmatpush1.bf16.msra.mxu0 %v4036
    %5201 = vmatprep.subr.bf16.mxu0 %v4031
    %5202 = vmatpush1.bf16.msra.mxu0 %v4030
    %5203 = vmatprep.subr.bf16.mxu0 %v4025
    %5204 = vmatpush1.bf16.msra.mxu0 %v4024
    %5205 = vmatprep.subr.bf16.mxu0 %v4115
    %5206 = vmatpush2.bf16.msra.mxu0 %v4114
    %5207 = vmatprep.subr.bf16.mxu0 %v4109
    %5208 = vmatpush2.bf16.msra.mxu0 %v4108
    %5209 = vmatprep.subr.bf16.mxu0 %v4103
    %5210 = vmatpush2.bf16.msra.mxu0 %v4102
    %5211 = vmatprep.subr.bf16.mxu0 %v4097
    %5212 = vmatpush2.bf16.msra.mxu0 %v4096
    %5213 = vmatprep.subr.bf16.mxu0 %v4091
    %5214 = vmatpush2.bf16.msra.mxu0 %v4090
    %5215 = vmatprep.subr.bf16.mxu0 %v4085
    %5216 = vmatpush2.bf16.msra.mxu0 %v4084
    %5217 = vmatprep.subr.bf16.mxu0 %v4079
    %5218 = vmatpush2.bf16.msra.mxu0 %v4078
    %5219 = vmatprep.subr.bf16.mxu0 %v4073
    %5220 = vmatpush2.bf16.msra.mxu0 %v4072
    %5221 = vmatprep.mubr.bf16.mxu0 %v1031
    %5222 = vmatmul.mubr.bf16.gmra.mxu0 %v1030
    %v5223 = vpop.f32.mrf.mxu0
    %v5224 = vadd.f32 %v5181, %v5223
    %v5225 = vpop.f32.mrf.mxu0
    %v5226 = vadd.f32 %v5183, %v5225
    %v5227 = vpop.f32.mrf.mxu0
    %v5228 = vadd.f32 %v5185, %v5227
    %v5229 = vpop.f32.mrf.mxu0
    %v5230 = vadd.f32 %v5187, %v5229
    %5231 = vdwg.mxu0
    %5232 = vmatprep.subr.bf16.mxu0 %v3397
    %5233 = vmatpush1.bf16.msra.mxu0 %v3396
    %5234 = vmatprep.subr.bf16.mxu0 %v3391
    %5235 = vmatpush1.bf16.msra.mxu0 %v3390
    %5236 = vmatprep.subr.bf16.mxu0 %v3385
    %5237 = vmatpush1.bf16.msra.mxu0 %v3384
    %5238 = vmatprep.subr.bf16.mxu0 %v3379
    %5239 = vmatpush1.bf16.msra.mxu0 %v3378
    %5240 = vmatprep.subr.bf16.mxu0 %v3373
    %5241 = vmatpush1.bf16.msra.mxu0 %v3372
    %5242 = vmatprep.subr.bf16.mxu0 %v3367
    %5243 = vmatpush1.bf16.msra.mxu0 %v3366
    %5244 = vmatprep.subr.bf16.mxu0 %v3361
    %5245 = vmatpush1.bf16.msra.mxu0 %v3360
    %5246 = vmatprep.subr.bf16.mxu0 %v3355
    %5247 = vmatpush1.bf16.msra.mxu0 %v3354
    %5248 = vmatprep.subr.bf16.mxu0 %v3445
    %5249 = vmatpush2.bf16.msra.mxu0 %v3444
    %5250 = vmatprep.subr.bf16.mxu0 %v3439
    %5251 = vmatpush2.bf16.msra.mxu0 %v3438
    %5252 = vmatprep.subr.bf16.mxu0 %v3433
    %5253 = vmatpush2.bf16.msra.mxu0 %v3432
    %5254 = vmatprep.subr.bf16.mxu0 %v3427
    %5255 = vmatpush2.bf16.msra.mxu0 %v3426
    %5256 = vmatprep.subr.bf16.mxu0 %v3421
    %5257 = vmatpush2.bf16.msra.mxu0 %v3420
    %5258 = vmatprep.subr.bf16.mxu0 %v3415
    %5259 = vmatpush2.bf16.msra.mxu0 %v3414
    %5260 = vmatprep.subr.bf16.mxu0 %v3409
    %5261 = vmatpush2.bf16.msra.mxu0 %v3408
    %5262 = vmatprep.subr.bf16.mxu0 %v3403
    %5263 = vmatpush2.bf16.msra.mxu0 %v3402
    %5264 = vmatprep.mubr.bf16.mxu0 %v1017
    %5265 = vmatmul.mubr.bf16.gmra.mxu0 %v1016
    %v5266 = vpop.f32.mrf.mxu0
    %v5267 = vadd.f32 %v949, %v5266
    %v5268 = vpop.f32.mrf.mxu0
    %v5269 = vadd.f32 %v953, %v5268
    %v5270 = vpop.f32.mrf.mxu0
    %v5271 = vadd.f32 %v949, %v5270
    %v5272 = vpop.f32.mrf.mxu0
    %v5273 = vadd.f32 %v953, %v5272
    %5274 = vdwg.mxu0
    %5275 = vmatprep.subr.bf16.mxu0 %v3493
    %5276 = vmatpush1.bf16.msra.mxu0 %v3492
    %5277 = vmatprep.subr.bf16.mxu0 %v3487
    %5278 = vmatpush1.bf16.msra.mxu0 %v3486
    %5279 = vmatprep.subr.bf16.mxu0 %v3481
    %5280 = vmatpush1.bf16.msra.mxu0 %v3480
    %5281 = vmatprep.subr.bf16.mxu0 %v3475
    %5282 = vmatpush1.bf16.msra.mxu0 %v3474
    %5283 = vmatprep.subr.bf16.mxu0 %v3469
    %5284 = vmatpush1.bf16.msra.mxu0 %v3468
    %5285 = vmatprep.subr.bf16.mxu0 %v3463
    %5286 = vmatpush1.bf16.msra.mxu0 %v3462
    %5287 = vmatprep.subr.bf16.mxu0 %v3457
    %5288 = vmatpush1.bf16.msra.mxu0 %v3456
    %5289 = vmatprep.subr.bf16.mxu0 %v3451
    %5290 = vmatpush1.bf16.msra.mxu0 %v3450
    %5291 = vmatprep.subr.bf16.mxu0 %v3541
    %5292 = vmatpush2.bf16.msra.mxu0 %v3540
    %5293 = vmatprep.subr.bf16.mxu0 %v3535
    %5294 = vmatpush2.bf16.msra.mxu0 %v3534
    %5295 = vmatprep.subr.bf16.mxu0 %v3529
    %5296 = vmatpush2.bf16.msra.mxu0 %v3528
    %5297 = vmatprep.subr.bf16.mxu0 %v3523
    %5298 = vmatpush2.bf16.msra.mxu0 %v3522
    %5299 = vmatprep.subr.bf16.mxu0 %v3517
    %5300 = vmatpush2.bf16.msra.mxu0 %v3516
    %5301 = vmatprep.subr.bf16.mxu0 %v3511
    %5302 = vmatpush2.bf16.msra.mxu0 %v3510
    %5303 = vmatprep.subr.bf16.mxu0 %v3505
    %5304 = vmatpush2.bf16.msra.mxu0 %v3504
    %5305 = vmatprep.subr.bf16.mxu0 %v3499
    %5306 = vmatpush2.bf16.msra.mxu0 %v3498
    %5307 = vmatprep.mubr.bf16.mxu0 %v1019
    %5308 = vmatmul.mubr.bf16.gmra.mxu0 %v1018
    %v5309 = vpop.f32.mrf.mxu0
    %v5310 = vadd.f32 %v5267, %v5309
    %v5311 = vpop.f32.mrf.mxu0
    %v5312 = vadd.f32 %v5269, %v5311
    %v5313 = vpop.f32.mrf.mxu0
    %v5314 = vadd.f32 %v5271, %v5313
    %v5315 = vpop.f32.mrf.mxu0
    %v5316 = vadd.f32 %v5273, %v5315
    %5317 = vdwg.mxu0
    %5318 = vmatprep.subr.bf16.mxu0 %v3589
    %5319 = vmatpush1.bf16.msra.mxu0 %v3588
    %5320 = vmatprep.subr.bf16.mxu0 %v3583
    %5321 = vmatpush1.bf16.msra.mxu0 %v3582
    %5322 = vmatprep.subr.bf16.mxu0 %v3577
    %5323 = vmatpush1.bf16.msra.mxu0 %v3576
    %5324 = vmatprep.subr.bf16.mxu0 %v3571
    %5325 = vmatpush1.bf16.msra.mxu0 %v3570
    %5326 = vmatprep.subr.bf16.mxu0 %v3565
    %5327 = vmatpush1.bf16.msra.mxu0 %v3564
    %5328 = vmatprep.subr.bf16.mxu0 %v3559
    %5329 = vmatpush1.bf16.msra.mxu0 %v3558
    %5330 = vmatprep.subr.bf16.mxu0 %v3553
    %5331 = vmatpush1.bf16.msra.mxu0 %v3552
    %5332 = vmatprep.subr.bf16.mxu0 %v3547
    %5333 = vmatpush1.bf16.msra.mxu0 %v3546
    %5334 = vmatprep.subr.bf16.mxu0 %v3637
    %5335 = vmatpush2.bf16.msra.mxu0 %v3636
    %5336 = vmatprep.subr.bf16.mxu0 %v3631
    %5337 = vmatpush2.bf16.msra.mxu0 %v3630
    %5338 = vmatprep.subr.bf16.mxu0 %v3625
    %5339 = vmatpush2.bf16.msra.mxu0 %v3624
    %5340 = vmatprep.subr.bf16.mxu0 %v3619
    %5341 = vmatpush2.bf16.msra.mxu0 %v3618
    %5342 = vmatprep.subr.bf16.mxu0 %v3613
    %5343 = vmatpush2.bf16.msra.mxu0 %v3612
    %5344 = vmatprep.subr.bf16.mxu0 %v3607
    %5345 = vmatpush2.bf16.msra.mxu0 %v3606
    %5346 = vmatprep.subr.bf16.mxu0 %v3601
    %5347 = vmatpush2.bf16.msra.mxu0 %v3600
    %5348 = vmatprep.subr.bf16.mxu0 %v3595
    %5349 = vmatpush2.bf16.msra.mxu0 %v3594
    %5350 = vmatprep.mubr.bf16.mxu0 %v1021
    %5351 = vmatmul.mubr.bf16.gmra.mxu0 %v1020
    %v5352 = vpop.f32.mrf.mxu0
    %v5353 = vadd.f32 %v5310, %v5352
    %v5354 = vpop.f32.mrf.mxu0
    %v5355 = vadd.f32 %v5312, %v5354
    %v5356 = vpop.f32.mrf.mxu0
    %v5357 = vadd.f32 %v5314, %v5356
    %v5358 = vpop.f32.mrf.mxu0
    %v5359 = vadd.f32 %v5316, %v5358
    %5360 = vdwg.mxu0
    %5361 = vmatprep.subr.bf16.mxu0 %v3685
    %5362 = vmatpush1.bf16.msra.mxu0 %v3684
    %5363 = vmatprep.subr.bf16.mxu0 %v3679
    %5364 = vmatpush1.bf16.msra.mxu0 %v3678
    %5365 = vmatprep.subr.bf16.mxu0 %v3673
    %5366 = vmatpush1.bf16.msra.mxu0 %v3672
    %5367 = vmatprep.subr.bf16.mxu0 %v3667
    %5368 = vmatpush1.bf16.msra.mxu0 %v3666
    %5369 = vmatprep.subr.bf16.mxu0 %v3661
    %5370 = vmatpush1.bf16.msra.mxu0 %v3660
    %5371 = vmatprep.subr.bf16.mxu0 %v3655
    %5372 = vmatpush1.bf16.msra.mxu0 %v3654
    %5373 = vmatprep.subr.bf16.mxu0 %v3649
    %5374 = vmatpush1.bf16.msra.mxu0 %v3648
    %5375 = vmatprep.subr.bf16.mxu0 %v3643
    %5376 = vmatpush1.bf16.msra.mxu0 %v3642
    %5377 = vmatprep.subr.bf16.mxu0 %v3733
    %5378 = vmatpush2.bf16.msra.mxu0 %v3732
    %5379 = vmatprep.subr.bf16.mxu0 %v3727
    %5380 = vmatpush2.bf16.msra.mxu0 %v3726
    %5381 = vmatprep.subr.bf16.mxu0 %v3721
    %5382 = vmatpush2.bf16.msra.mxu0 %v3720
    %5383 = vmatprep.subr.bf16.mxu0 %v3715
    %5384 = vmatpush2.bf16.msra.mxu0 %v3714
    %5385 = vmatprep.subr.bf16.mxu0 %v3709
    %5386 = vmatpush2.bf16.msra.mxu0 %v3708
    %5387 = vmatprep.subr.bf16.mxu0 %v3703
    %5388 = vmatpush2.bf16.msra.mxu0 %v3702
    %5389 = vmatprep.subr.bf16.mxu0 %v3697
    %5390 = vmatpush2.bf16.msra.mxu0 %v3696
    %5391 = vmatprep.subr.bf16.mxu0 %v3691
    %5392 = vmatpush2.bf16.msra.mxu0 %v3690
    %5393 = vmatprep.mubr.bf16.mxu0 %v1023
    %5394 = vmatmul.mubr.bf16.gmra.mxu0 %v1022
    %v5395 = vpop.f32.mrf.mxu0
    %v5396 = vadd.f32 %v5353, %v5395
    %v5397 = vpop.f32.mrf.mxu0
    %v5398 = vadd.f32 %v5355, %v5397
    %v5399 = vpop.f32.mrf.mxu0
    %v5400 = vadd.f32 %v5357, %v5399
    %v5401 = vpop.f32.mrf.mxu0
    %v5402 = vadd.f32 %v5359, %v5401
    %5403 = vdwg.mxu0
    %5404 = vmatprep.subr.bf16.mxu0 %v3781
    %5405 = vmatpush1.bf16.msra.mxu0 %v3780
    %5406 = vmatprep.subr.bf16.mxu0 %v3775
    %5407 = vmatpush1.bf16.msra.mxu0 %v3774
    %5408 = vmatprep.subr.bf16.mxu0 %v3769
    %5409 = vmatpush1.bf16.msra.mxu0 %v3768
    %5410 = vmatprep.subr.bf16.mxu0 %v3763
    %5411 = vmatpush1.bf16.msra.mxu0 %v3762
    %5412 = vmatprep.subr.bf16.mxu0 %v3757
    %5413 = vmatpush1.bf16.msra.mxu0 %v3756
    %5414 = vmatprep.subr.bf16.mxu0 %v3751
    %5415 = vmatpush1.bf16.msra.mxu0 %v3750
    %5416 = vmatprep.subr.bf16.mxu0 %v3745
    %5417 = vmatpush1.bf16.msra.mxu0 %v3744
    %5418 = vmatprep.subr.bf16.mxu0 %v3739
    %5419 = vmatpush1.bf16.msra.mxu0 %v3738
    %5420 = vmatprep.subr.bf16.mxu0 %v3829
    %5421 = vmatpush2.bf16.msra.mxu0 %v3828
    %5422 = vmatprep.subr.bf16.mxu0 %v3823
    %5423 = vmatpush2.bf16.msra.mxu0 %v3822
    %5424 = vmatprep.subr.bf16.mxu0 %v3817
    %5425 = vmatpush2.bf16.msra.mxu0 %v3816
    %5426 = vmatprep.subr.bf16.mxu0 %v3811
    %5427 = vmatpush2.bf16.msra.mxu0 %v3810
    %5428 = vmatprep.subr.bf16.mxu0 %v3805
    %5429 = vmatpush2.bf16.msra.mxu0 %v3804
    %5430 = vmatprep.subr.bf16.mxu0 %v3799
    %5431 = vmatpush2.bf16.msra.mxu0 %v3798
    %5432 = vmatprep.subr.bf16.mxu0 %v3793
    %5433 = vmatpush2.bf16.msra.mxu0 %v3792
    %5434 = vmatprep.subr.bf16.mxu0 %v3787
    %5435 = vmatpush2.bf16.msra.mxu0 %v3786
    %5436 = vmatprep.mubr.bf16.mxu0 %v1025
    %5437 = vmatmul.mubr.bf16.gmra.mxu0 %v1024
    %v5438 = vpop.f32.mrf.mxu0
    %v5439 = vadd.f32 %v5396, %v5438
    %v5440 = vpop.f32.mrf.mxu0
    %v5441 = vadd.f32 %v5398, %v5440
    %v5442 = vpop.f32.mrf.mxu0
    %v5443 = vadd.f32 %v5400, %v5442
    %v5444 = vpop.f32.mrf.mxu0
    %v5445 = vadd.f32 %v5402, %v5444
    %5446 = vdwg.mxu0
    %5447 = vmatprep.subr.bf16.mxu0 %v3877
    %5448 = vmatpush1.bf16.msra.mxu0 %v3876
    %5449 = vmatprep.subr.bf16.mxu0 %v3871
    %5450 = vmatpush1.bf16.msra.mxu0 %v3870
    %5451 = vmatprep.subr.bf16.mxu0 %v3865
    %5452 = vmatpush1.bf16.msra.mxu0 %v3864
    %5453 = vmatprep.subr.bf16.mxu0 %v3859
    %5454 = vmatpush1.bf16.msra.mxu0 %v3858
    %5455 = vmatprep.subr.bf16.mxu0 %v3853
    %5456 = vmatpush1.bf16.msra.mxu0 %v3852
    %5457 = vmatprep.subr.bf16.mxu0 %v3847
    %5458 = vmatpush1.bf16.msra.mxu0 %v3846
    %5459 = vmatprep.subr.bf16.mxu0 %v3841
    %5460 = vmatpush1.bf16.msra.mxu0 %v3840
    %5461 = vmatprep.subr.bf16.mxu0 %v3835
    %5462 = vmatpush1.bf16.msra.mxu0 %v3834
    %5463 = vmatprep.subr.bf16.mxu0 %v3925
    %5464 = vmatpush2.bf16.msra.mxu0 %v3924
    %5465 = vmatprep.subr.bf16.mxu0 %v3919
    %5466 = vmatpush2.bf16.msra.mxu0 %v3918
    %5467 = vmatprep.subr.bf16.mxu0 %v3913
    %5468 = vmatpush2.bf16.msra.mxu0 %v3912
    %5469 = vmatprep.subr.bf16.mxu0 %v3907
    %5470 = vmatpush2.bf16.msra.mxu0 %v3906
    %5471 = vmatprep.subr.bf16.mxu0 %v3901
    %5472 = vmatpush2.bf16.msra.mxu0 %v3900
    %5473 = vmatprep.subr.bf16.mxu0 %v3895
    %5474 = vmatpush2.bf16.msra.mxu0 %v3894
    %5475 = vmatprep.subr.bf16.mxu0 %v3889
    %5476 = vmatpush2.bf16.msra.mxu0 %v3888
    %5477 = vmatprep.subr.bf16.mxu0 %v3883
    %5478 = vmatpush2.bf16.msra.mxu0 %v3882
    %5479 = vmatprep.mubr.bf16.mxu0 %v1027
    %5480 = vmatmul.mubr.bf16.gmra.mxu0 %v1026
    %v5481 = vpop.f32.mrf.mxu0
    %v5482 = vadd.f32 %v5439, %v5481
    %v5483 = vpop.f32.mrf.mxu0
    %v5484 = vadd.f32 %v5441, %v5483
    %v5485 = vpop.f32.mrf.mxu0
    %v5486 = vadd.f32 %v5443, %v5485
    %v5487 = vpop.f32.mrf.mxu0
    %v5488 = vadd.f32 %v5445, %v5487
    %5489 = vdwg.mxu0
    %5490 = vmatprep.subr.bf16.mxu0 %v3973
    %5491 = vmatpush1.bf16.msra.mxu0 %v3972
    %5492 = vmatprep.subr.bf16.mxu0 %v3967
    %5493 = vmatpush1.bf16.msra.mxu0 %v3966
    %5494 = vmatprep.subr.bf16.mxu0 %v3961
    %5495 = vmatpush1.bf16.msra.mxu0 %v3960
    %5496 = vmatprep.subr.bf16.mxu0 %v3955
    %5497 = vmatpush1.bf16.msra.mxu0 %v3954
    %5498 = vmatprep.subr.bf16.mxu0 %v3949
    %5499 = vmatpush1.bf16.msra.mxu0 %v3948
    %5500 = vmatprep.subr.bf16.mxu0 %v3943
    %5501 = vmatpush1.bf16.msra.mxu0 %v3942
    %5502 = vmatprep.subr.bf16.mxu0 %v3937
    %5503 = vmatpush1.bf16.msra.mxu0 %v3936
    %5504 = vmatprep.subr.bf16.mxu0 %v3931
    %5505 = vmatpush1.bf16.msra.mxu0 %v3930
    %5506 = vmatprep.subr.bf16.mxu0 %v4021
    %5507 = vmatpush2.bf16.msra.mxu0 %v4020
    %5508 = vmatprep.subr.bf16.mxu0 %v4015
    %5509 = vmatpush2.bf16.msra.mxu0 %v4014
    %5510 = vmatprep.subr.bf16.mxu0 %v4009
    %5511 = vmatpush2.bf16.msra.mxu0 %v4008
    %5512 = vmatprep.subr.bf16.mxu0 %v4003
    %5513 = vmatpush2.bf16.msra.mxu0 %v4002
    %5514 = vmatprep.subr.bf16.mxu0 %v3997
    %5515 = vmatpush2.bf16.msra.mxu0 %v3996
    %5516 = vmatprep.subr.bf16.mxu0 %v3991
    %5517 = vmatpush2.bf16.msra.mxu0 %v3990
    %5518 = vmatprep.subr.bf16.mxu0 %v3985
    %5519 = vmatpush2.bf16.msra.mxu0 %v3984
    %5520 = vmatprep.subr.bf16.mxu0 %v3979
    %5521 = vmatpush2.bf16.msra.mxu0 %v3978
    %5522 = vmatprep.mubr.bf16.mxu0 %v1029
    %5523 = vmatmul.mubr.bf16.gmra.mxu0 %v1028
    %v5524 = vpop.f32.mrf.mxu0
    %v5525 = vadd.f32 %v5482, %v5524
    %v5526 = vpop.f32.mrf.mxu0
    %v5527 = vadd.f32 %v5484, %v5526
    %v5528 = vpop.f32.mrf.mxu0
    %v5529 = vadd.f32 %v5486, %v5528
    %v5530 = vpop.f32.mrf.mxu0
    %v5531 = vadd.f32 %v5488, %v5530
    %5532 = vdwg.mxu0
    %5533 = vmatprep.subr.bf16.mxu0 %v4069
    %5534 = vmatpush1.bf16.msra.mxu0 %v4068
    %5535 = vmatprep.subr.bf16.mxu0 %v4063
    %5536 = vmatpush1.bf16.msra.mxu0 %v4062
    %5537 = vmatprep.subr.bf16.mxu0 %v4057
    %5538 = vmatpush1.bf16.msra.mxu0 %v4056
    %5539 = vmatprep.subr.bf16.mxu0 %v4051
    %5540 = vmatpush1.bf16.msra.mxu0 %v4050
    %5541 = vmatprep.subr.bf16.mxu0 %v4045
    %5542 = vmatpush1.bf16.msra.mxu0 %v4044
    %5543 = vmatprep.subr.bf16.mxu0 %v4039
    %5544 = vmatpush1.bf16.msra.mxu0 %v4038
    %5545 = vmatprep.subr.bf16.mxu0 %v4033
    %5546 = vmatpush1.bf16.msra.mxu0 %v4032
    %5547 = vmatprep.subr.bf16.mxu0 %v4027
    %5548 = vmatpush1.bf16.msra.mxu0 %v4026
    %5549 = vmatprep.subr.bf16.mxu0 %v4117
    %5550 = vmatpush2.bf16.msra.mxu0 %v4116
    %5551 = vmatprep.subr.bf16.mxu0 %v4111
    %5552 = vmatpush2.bf16.msra.mxu0 %v4110
    %5553 = vmatprep.subr.bf16.mxu0 %v4105
    %5554 = vmatpush2.bf16.msra.mxu0 %v4104
    %5555 = vmatprep.subr.bf16.mxu0 %v4099
    %5556 = vmatpush2.bf16.msra.mxu0 %v4098
    %5557 = vmatprep.subr.bf16.mxu0 %v4093
    %5558 = vmatpush2.bf16.msra.mxu0 %v4092
    %5559 = vmatprep.subr.bf16.mxu0 %v4087
    %5560 = vmatpush2.bf16.msra.mxu0 %v4086
    %5561 = vmatprep.subr.bf16.mxu0 %v4081
    %5562 = vmatpush2.bf16.msra.mxu0 %v4080
    %5563 = vmatprep.subr.bf16.mxu0 %v4075
    %5564 = vmatpush2.bf16.msra.mxu0 %v4074
    %5565 = vmatprep.mubr.bf16.mxu0 %v1031
    %5566 = vmatmul.mubr.bf16.gmra.mxu0 %v1030
    %v5567 = vpop.f32.mrf.mxu0
    %v5568 = vadd.f32 %v5525, %v5567
    %v5569 = vpop.f32.mrf.mxu0
    %v5570 = vadd.f32 %v5527, %v5569
    %v5571 = vpop.f32.mrf.mxu0
    %v5572 = vadd.f32 %v5529, %v5571
    %v5573 = vpop.f32.mrf.mxu0
    %v5574 = vadd.f32 %v5531, %v5573
    %5575 = vdwg.mxu0
    %5576 = vmatprep.subr.bf16.mxu0 %v3399
    %5577 = vmatpush1.bf16.msra.mxu0 %v3398
    %5578 = vmatprep.subr.bf16.mxu0 %v3393
    %5579 = vmatpush1.bf16.msra.mxu0 %v3392
    %5580 = vmatprep.subr.bf16.mxu0 %v3387
    %5581 = vmatpush1.bf16.msra.mxu0 %v3386
    %5582 = vmatprep.subr.bf16.mxu0 %v3381
    %5583 = vmatpush1.bf16.msra.mxu0 %v3380
    %5584 = vmatprep.subr.bf16.mxu0 %v3375
    %5585 = vmatpush1.bf16.msra.mxu0 %v3374
    %5586 = vmatprep.subr.bf16.mxu0 %v3369
    %5587 = vmatpush1.bf16.msra.mxu0 %v3368
    %5588 = vmatprep.subr.bf16.mxu0 %v3363
    %5589 = vmatpush1.bf16.msra.mxu0 %v3362
    %5590 = vmatprep.subr.bf16.mxu0 %v3357
    %5591 = vmatpush1.bf16.msra.mxu0 %v3356
    %5592 = vmatprep.subr.bf16.mxu0 %v3447
    %5593 = vmatpush2.bf16.msra.mxu0 %v3446
    %5594 = vmatprep.subr.bf16.mxu0 %v3441
    %5595 = vmatpush2.bf16.msra.mxu0 %v3440
    %5596 = vmatprep.subr.bf16.mxu0 %v3435
    %5597 = vmatpush2.bf16.msra.mxu0 %v3434
    %5598 = vmatprep.subr.bf16.mxu0 %v3429
    %5599 = vmatpush2.bf16.msra.mxu0 %v3428
    %5600 = vmatprep.subr.bf16.mxu0 %v3423
    %5601 = vmatpush2.bf16.msra.mxu0 %v3422
    %5602 = vmatprep.subr.bf16.mxu0 %v3417
    %5603 = vmatpush2.bf16.msra.mxu0 %v3416
    %5604 = vmatprep.subr.bf16.mxu0 %v3411
    %5605 = vmatpush2.bf16.msra.mxu0 %v3410
    %5606 = vmatprep.subr.bf16.mxu0 %v3405
    %5607 = vmatpush2.bf16.msra.mxu0 %v3404
    %5608 = vmatprep.mubr.bf16.mxu0 %v1017
    %5609 = vmatmul.mubr.bf16.gmra.mxu0 %v1016
    %v5610 = vpop.f32.mrf.mxu0
    %v5611 = vadd.f32 %v957, %v5610
    %v5612 = vpop.f32.mrf.mxu0
    %v5613 = vadd.f32 %v961, %v5612
    %v5614 = vpop.f32.mrf.mxu0
    %v5615 = vadd.f32 %v957, %v5614
    %v5616 = vpop.f32.mrf.mxu0
    %v5617 = vadd.f32 %v961, %v5616
    %5618 = vdwg.mxu0
    %5619 = vmatprep.subr.bf16.mxu0 %v3495
    %5620 = vmatpush1.bf16.msra.mxu0 %v3494
    %5621 = vmatprep.subr.bf16.mxu0 %v3489
    %5622 = vmatpush1.bf16.msra.mxu0 %v3488
    %5623 = vmatprep.subr.bf16.mxu0 %v3483
    %5624 = vmatpush1.bf16.msra.mxu0 %v3482
    %5625 = vmatprep.subr.bf16.mxu0 %v3477
    %5626 = vmatpush1.bf16.msra.mxu0 %v3476
    %5627 = vmatprep.subr.bf16.mxu0 %v3471
    %5628 = vmatpush1.bf16.msra.mxu0 %v3470
    %5629 = vmatprep.subr.bf16.mxu0 %v3465
    %5630 = vmatpush1.bf16.msra.mxu0 %v3464
    %5631 = vmatprep.subr.bf16.mxu0 %v3459
    %5632 = vmatpush1.bf16.msra.mxu0 %v3458
    %5633 = vmatprep.subr.bf16.mxu0 %v3453
    %5634 = vmatpush1.bf16.msra.mxu0 %v3452
    %5635 = vmatprep.subr.bf16.mxu0 %v3543
    %5636 = vmatpush2.bf16.msra.mxu0 %v3542
    %5637 = vmatprep.subr.bf16.mxu0 %v3537
    %5638 = vmatpush2.bf16.msra.mxu0 %v3536
    %5639 = vmatprep.subr.bf16.mxu0 %v3531
    %5640 = vmatpush2.bf16.msra.mxu0 %v3530
    %5641 = vmatprep.subr.bf16.mxu0 %v3525
    %5642 = vmatpush2.bf16.msra.mxu0 %v3524
    %5643 = vmatprep.subr.bf16.mxu0 %v3519
    %5644 = vmatpush2.bf16.msra.mxu0 %v3518
    %5645 = vmatprep.subr.bf16.mxu0 %v3513
    %5646 = vmatpush2.bf16.msra.mxu0 %v3512
    %5647 = vmatprep.subr.bf16.mxu0 %v3507
    %5648 = vmatpush2.bf16.msra.mxu0 %v3506
    %5649 = vmatprep.subr.bf16.mxu0 %v3501
    %5650 = vmatpush2.bf16.msra.mxu0 %v3500
    %5651 = vmatprep.mubr.bf16.mxu0 %v1019
    %5652 = vmatmul.mubr.bf16.gmra.mxu0 %v1018
    %v5653 = vpop.f32.mrf.mxu0
    %v5654 = vadd.f32 %v5611, %v5653
    %v5655 = vpop.f32.mrf.mxu0
    %v5656 = vadd.f32 %v5613, %v5655
    %v5657 = vpop.f32.mrf.mxu0
    %v5658 = vadd.f32 %v5615, %v5657
    %v5659 = vpop.f32.mrf.mxu0
    %v5660 = vadd.f32 %v5617, %v5659
    %5661 = vdwg.mxu0
    %5662 = vmatprep.subr.bf16.mxu0 %v3591
    %5663 = vmatpush1.bf16.msra.mxu0 %v3590
    %5664 = vmatprep.subr.bf16.mxu0 %v3585
    %5665 = vmatpush1.bf16.msra.mxu0 %v3584
    %5666 = vmatprep.subr.bf16.mxu0 %v3579
    %5667 = vmatpush1.bf16.msra.mxu0 %v3578
    %5668 = vmatprep.subr.bf16.mxu0 %v3573
    %5669 = vmatpush1.bf16.msra.mxu0 %v3572
    %5670 = vmatprep.subr.bf16.mxu0 %v3567
    %5671 = vmatpush1.bf16.msra.mxu0 %v3566
    %5672 = vmatprep.subr.bf16.mxu0 %v3561
    %5673 = vmatpush1.bf16.msra.mxu0 %v3560
    %5674 = vmatprep.subr.bf16.mxu0 %v3555
    %5675 = vmatpush1.bf16.msra.mxu0 %v3554
    %5676 = vmatprep.subr.bf16.mxu0 %v3549
    %5677 = vmatpush1.bf16.msra.mxu0 %v3548
    %5678 = vmatprep.subr.bf16.mxu0 %v3639
    %5679 = vmatpush2.bf16.msra.mxu0 %v3638
    %5680 = vmatprep.subr.bf16.mxu0 %v3633
    %5681 = vmatpush2.bf16.msra.mxu0 %v3632
    %5682 = vmatprep.subr.bf16.mxu0 %v3627
    %5683 = vmatpush2.bf16.msra.mxu0 %v3626
    %5684 = vmatprep.subr.bf16.mxu0 %v3621
    %5685 = vmatpush2.bf16.msra.mxu0 %v3620
    %5686 = vmatprep.subr.bf16.mxu0 %v3615
    %5687 = vmatpush2.bf16.msra.mxu0 %v3614
    %5688 = vmatprep.subr.bf16.mxu0 %v3609
    %5689 = vmatpush2.bf16.msra.mxu0 %v3608
    %5690 = vmatprep.subr.bf16.mxu0 %v3603
    %5691 = vmatpush2.bf16.msra.mxu0 %v3602
    %5692 = vmatprep.subr.bf16.mxu0 %v3597
    %5693 = vmatpush2.bf16.msra.mxu0 %v3596
    %5694 = vmatprep.mubr.bf16.mxu0 %v1021
    %5695 = vmatmul.mubr.bf16.gmra.mxu0 %v1020
    %v5696 = vpop.f32.mrf.mxu0
    %v5697 = vadd.f32 %v5654, %v5696
    %v5698 = vpop.f32.mrf.mxu0
    %v5699 = vadd.f32 %v5656, %v5698
    %v5700 = vpop.f32.mrf.mxu0
    %v5701 = vadd.f32 %v5658, %v5700
    %v5702 = vpop.f32.mrf.mxu0
    %v5703 = vadd.f32 %v5660, %v5702
    %5704 = vdwg.mxu0
    %5705 = vmatprep.subr.bf16.mxu0 %v3687
    %5706 = vmatpush1.bf16.msra.mxu0 %v3686
    %5707 = vmatprep.subr.bf16.mxu0 %v3681
    %5708 = vmatpush1.bf16.msra.mxu0 %v3680
    %5709 = vmatprep.subr.bf16.mxu0 %v3675
    %5710 = vmatpush1.bf16.msra.mxu0 %v3674
    %5711 = vmatprep.subr.bf16.mxu0 %v3669
    %5712 = vmatpush1.bf16.msra.mxu0 %v3668
    %5713 = vmatprep.subr.bf16.mxu0 %v3663
    %5714 = vmatpush1.bf16.msra.mxu0 %v3662
    %5715 = vmatprep.subr.bf16.mxu0 %v3657
    %5716 = vmatpush1.bf16.msra.mxu0 %v3656
    %5717 = vmatprep.subr.bf16.mxu0 %v3651
    %5718 = vmatpush1.bf16.msra.mxu0 %v3650
    %5719 = vmatprep.subr.bf16.mxu0 %v3645
    %5720 = vmatpush1.bf16.msra.mxu0 %v3644
    %5721 = vmatprep.subr.bf16.mxu0 %v3735
    %5722 = vmatpush2.bf16.msra.mxu0 %v3734
    %5723 = vmatprep.subr.bf16.mxu0 %v3729
    %5724 = vmatpush2.bf16.msra.mxu0 %v3728
    %5725 = vmatprep.subr.bf16.mxu0 %v3723
    %5726 = vmatpush2.bf16.msra.mxu0 %v3722
    %5727 = vmatprep.subr.bf16.mxu0 %v3717
    %5728 = vmatpush2.bf16.msra.mxu0 %v3716
    %5729 = vmatprep.subr.bf16.mxu0 %v3711
    %5730 = vmatpush2.bf16.msra.mxu0 %v3710
    %5731 = vmatprep.subr.bf16.mxu0 %v3705
    %5732 = vmatpush2.bf16.msra.mxu0 %v3704
    %5733 = vmatprep.subr.bf16.mxu0 %v3699
    %5734 = vmatpush2.bf16.msra.mxu0 %v3698
    %5735 = vmatprep.subr.bf16.mxu0 %v3693
    %5736 = vmatpush2.bf16.msra.mxu0 %v3692
    %5737 = vmatprep.mubr.bf16.mxu0 %v1023
    %5738 = vmatmul.mubr.bf16.gmra.mxu0 %v1022
    %v5739 = vpop.f32.mrf.mxu0
    %v5740 = vadd.f32 %v5697, %v5739
    %v5741 = vpop.f32.mrf.mxu0
    %v5742 = vadd.f32 %v5699, %v5741
    %v5743 = vpop.f32.mrf.mxu0
    %v5744 = vadd.f32 %v5701, %v5743
    %v5745 = vpop.f32.mrf.mxu0
    %v5746 = vadd.f32 %v5703, %v5745
    %5747 = vdwg.mxu0
    %5748 = vmatprep.subr.bf16.mxu0 %v3783
    %5749 = vmatpush1.bf16.msra.mxu0 %v3782
    %5750 = vmatprep.subr.bf16.mxu0 %v3777
    %5751 = vmatpush1.bf16.msra.mxu0 %v3776
    %5752 = vmatprep.subr.bf16.mxu0 %v3771
    %5753 = vmatpush1.bf16.msra.mxu0 %v3770
    %5754 = vmatprep.subr.bf16.mxu0 %v3765
    %5755 = vmatpush1.bf16.msra.mxu0 %v3764
    %5756 = vmatprep.subr.bf16.mxu0 %v3759
    %5757 = vmatpush1.bf16.msra.mxu0 %v3758
    %5758 = vmatprep.subr.bf16.mxu0 %v3753
    %5759 = vmatpush1.bf16.msra.mxu0 %v3752
    %5760 = vmatprep.subr.bf16.mxu0 %v3747
    %5761 = vmatpush1.bf16.msra.mxu0 %v3746
    %5762 = vmatprep.subr.bf16.mxu0 %v3741
    %5763 = vmatpush1.bf16.msra.mxu0 %v3740
    %5764 = vmatprep.subr.bf16.mxu0 %v3831
    %5765 = vmatpush2.bf16.msra.mxu0 %v3830
    %5766 = vmatprep.subr.bf16.mxu0 %v3825
    %5767 = vmatpush2.bf16.msra.mxu0 %v3824
    %5768 = vmatprep.subr.bf16.mxu0 %v3819
    %5769 = vmatpush2.bf16.msra.mxu0 %v3818
    %5770 = vmatprep.subr.bf16.mxu0 %v3813
    %5771 = vmatpush2.bf16.msra.mxu0 %v3812
    %5772 = vmatprep.subr.bf16.mxu0 %v3807
    %5773 = vmatpush2.bf16.msra.mxu0 %v3806
    %5774 = vmatprep.subr.bf16.mxu0 %v3801
    %5775 = vmatpush2.bf16.msra.mxu0 %v3800
    %5776 = vmatprep.subr.bf16.mxu0 %v3795
    %5777 = vmatpush2.bf16.msra.mxu0 %v3794
    %5778 = vmatprep.subr.bf16.mxu0 %v3789
    %5779 = vmatpush2.bf16.msra.mxu0 %v3788
    %5780 = vmatprep.mubr.bf16.mxu0 %v1025
    %5781 = vmatmul.mubr.bf16.gmra.mxu0 %v1024
    %v5782 = vpop.f32.mrf.mxu0
    %v5783 = vadd.f32 %v5740, %v5782
    %v5784 = vpop.f32.mrf.mxu0
    %v5785 = vadd.f32 %v5742, %v5784
    %v5786 = vpop.f32.mrf.mxu0
    %v5787 = vadd.f32 %v5744, %v5786
    %v5788 = vpop.f32.mrf.mxu0
    %v5789 = vadd.f32 %v5746, %v5788
    %5790 = vdwg.mxu0
    %5791 = vmatprep.subr.bf16.mxu0 %v3879
    %5792 = vmatpush1.bf16.msra.mxu0 %v3878
    %5793 = vmatprep.subr.bf16.mxu0 %v3873
    %5794 = vmatpush1.bf16.msra.mxu0 %v3872
    %5795 = vmatprep.subr.bf16.mxu0 %v3867
    %5796 = vmatpush1.bf16.msra.mxu0 %v3866
    %5797 = vmatprep.subr.bf16.mxu0 %v3861
    %5798 = vmatpush1.bf16.msra.mxu0 %v3860
    %5799 = vmatprep.subr.bf16.mxu0 %v3855
    %5800 = vmatpush1.bf16.msra.mxu0 %v3854
    %5801 = vmatprep.subr.bf16.mxu0 %v3849
    %5802 = vmatpush1.bf16.msra.mxu0 %v3848
    %5803 = vmatprep.subr.bf16.mxu0 %v3843
    %5804 = vmatpush1.bf16.msra.mxu0 %v3842
    %5805 = vmatprep.subr.bf16.mxu0 %v3837
    %5806 = vmatpush1.bf16.msra.mxu0 %v3836
    %5807 = vmatprep.subr.bf16.mxu0 %v3927
    %5808 = vmatpush2.bf16.msra.mxu0 %v3926
    %5809 = vmatprep.subr.bf16.mxu0 %v3921
    %5810 = vmatpush2.bf16.msra.mxu0 %v3920
    %5811 = vmatprep.subr.bf16.mxu0 %v3915
    %5812 = vmatpush2.bf16.msra.mxu0 %v3914
    %5813 = vmatprep.subr.bf16.mxu0 %v3909
    %5814 = vmatpush2.bf16.msra.mxu0 %v3908
    %5815 = vmatprep.subr.bf16.mxu0 %v3903
    %5816 = vmatpush2.bf16.msra.mxu0 %v3902
    %5817 = vmatprep.subr.bf16.mxu0 %v3897
    %5818 = vmatpush2.bf16.msra.mxu0 %v3896
    %5819 = vmatprep.subr.bf16.mxu0 %v3891
    %5820 = vmatpush2.bf16.msra.mxu0 %v3890
    %5821 = vmatprep.subr.bf16.mxu0 %v3885
    %5822 = vmatpush2.bf16.msra.mxu0 %v3884
    %5823 = vmatprep.mubr.bf16.mxu0 %v1027
    %5824 = vmatmul.mubr.bf16.gmra.mxu0 %v1026
    %v5825 = vpop.f32.mrf.mxu0
    %v5826 = vadd.f32 %v5783, %v5825
    %v5827 = vpop.f32.mrf.mxu0
    %v5828 = vadd.f32 %v5785, %v5827
    %v5829 = vpop.f32.mrf.mxu0
    %v5830 = vadd.f32 %v5787, %v5829
    %v5831 = vpop.f32.mrf.mxu0
    %v5832 = vadd.f32 %v5789, %v5831
    %5833 = vdwg.mxu0
    %5834 = vmatprep.subr.bf16.mxu0 %v3975
    %5835 = vmatpush1.bf16.msra.mxu0 %v3974
    %5836 = vmatprep.subr.bf16.mxu0 %v3969
    %5837 = vmatpush1.bf16.msra.mxu0 %v3968
    %5838 = vmatprep.subr.bf16.mxu0 %v3963
    %5839 = vmatpush1.bf16.msra.mxu0 %v3962
    %5840 = vmatprep.subr.bf16.mxu0 %v3957
    %5841 = vmatpush1.bf16.msra.mxu0 %v3956
    %5842 = vmatprep.subr.bf16.mxu0 %v3951
    %5843 = vmatpush1.bf16.msra.mxu0 %v3950
    %5844 = vmatprep.subr.bf16.mxu0 %v3945
    %5845 = vmatpush1.bf16.msra.mxu0 %v3944
    %5846 = vmatprep.subr.bf16.mxu0 %v3939
    %5847 = vmatpush1.bf16.msra.mxu0 %v3938
    %5848 = vmatprep.subr.bf16.mxu0 %v3933
    %5849 = vmatpush1.bf16.msra.mxu0 %v3932
    %5850 = vmatprep.subr.bf16.mxu0 %v4023
    %5851 = vmatpush2.bf16.msra.mxu0 %v4022
    %5852 = vmatprep.subr.bf16.mxu0 %v4017
    %5853 = vmatpush2.bf16.msra.mxu0 %v4016
    %5854 = vmatprep.subr.bf16.mxu0 %v4011
    %5855 = vmatpush2.bf16.msra.mxu0 %v4010
    %5856 = vmatprep.subr.bf16.mxu0 %v4005
    %5857 = vmatpush2.bf16.msra.mxu0 %v4004
    %5858 = vmatprep.subr.bf16.mxu0 %v3999
    %5859 = vmatpush2.bf16.msra.mxu0 %v3998
    %5860 = vmatprep.subr.bf16.mxu0 %v3993
    %5861 = vmatpush2.bf16.msra.mxu0 %v3992
    %5862 = vmatprep.subr.bf16.mxu0 %v3987
    %5863 = vmatpush2.bf16.msra.mxu0 %v3986
    %5864 = vmatprep.subr.bf16.mxu0 %v3981
    %5865 = vmatpush2.bf16.msra.mxu0 %v3980
    %5866 = vmatprep.mubr.bf16.mxu0 %v1029
    %5867 = vmatmul.mubr.bf16.gmra.mxu0 %v1028
    %v5868 = vpop.f32.mrf.mxu0
    %v5869 = vadd.f32 %v5826, %v5868
    %v5870 = vpop.f32.mrf.mxu0
    %v5871 = vadd.f32 %v5828, %v5870
    %v5872 = vpop.f32.mrf.mxu0
    %v5873 = vadd.f32 %v5830, %v5872
    %v5874 = vpop.f32.mrf.mxu0
    %v5875 = vadd.f32 %v5832, %v5874
    %5876 = vdwg.mxu0
    %5877 = vmatprep.subr.bf16.mxu0 %v4071
    %5878 = vmatpush1.bf16.msra.mxu0 %v4070
    %5879 = vmatprep.subr.bf16.mxu0 %v4065
    %5880 = vmatpush1.bf16.msra.mxu0 %v4064
    %5881 = vmatprep.subr.bf16.mxu0 %v4059
    %5882 = vmatpush1.bf16.msra.mxu0 %v4058
    %5883 = vmatprep.subr.bf16.mxu0 %v4053
    %5884 = vmatpush1.bf16.msra.mxu0 %v4052
    %5885 = vmatprep.subr.bf16.mxu0 %v4047
    %5886 = vmatpush1.bf16.msra.mxu0 %v4046
    %5887 = vmatprep.subr.bf16.mxu0 %v4041
    %5888 = vmatpush1.bf16.msra.mxu0 %v4040
    %5889 = vmatprep.subr.bf16.mxu0 %v4035
    %5890 = vmatpush1.bf16.msra.mxu0 %v4034
    %5891 = vmatprep.subr.bf16.mxu0 %v4029
    %5892 = vmatpush1.bf16.msra.mxu0 %v4028
    %5893 = vmatprep.subr.bf16.mxu0 %v4119
    %5894 = vmatpush2.bf16.msra.mxu0 %v4118
    %5895 = vmatprep.subr.bf16.mxu0 %v4113
    %5896 = vmatpush2.bf16.msra.mxu0 %v4112
    %5897 = vmatprep.subr.bf16.mxu0 %v4107
    %5898 = vmatpush2.bf16.msra.mxu0 %v4106
    %5899 = vmatprep.subr.bf16.mxu0 %v4101
    %5900 = vmatpush2.bf16.msra.mxu0 %v4100
    %5901 = vmatprep.subr.bf16.mxu0 %v4095
    %5902 = vmatpush2.bf16.msra.mxu0 %v4094
    %5903 = vmatprep.subr.bf16.mxu0 %v4089
    %5904 = vmatpush2.bf16.msra.mxu0 %v4088
    %5905 = vmatprep.subr.bf16.mxu0 %v4083
    %5906 = vmatpush2.bf16.msra.mxu0 %v4082
    %5907 = vmatprep.subr.bf16.mxu0 %v4077
    %5908 = vmatpush2.bf16.msra.mxu0 %v4076
    %5909 = vmatprep.mubr.bf16.mxu0 %v1031
    %5910 = vmatmul.mubr.bf16.gmra.mxu0 %v1030
    %v5911 = vpop.f32.mrf.mxu0
    %v5912 = vadd.f32 %v5869, %v5911
    %v5913 = vpop.f32.mrf.mxu0
    %v5914 = vadd.f32 %v5871, %v5913
    %v5915 = vpop.f32.mrf.mxu0
    %v5916 = vadd.f32 %v5873, %v5915
    %v5917 = vpop.f32.mrf.mxu0
    %v5918 = vadd.f32 %v5875, %v5917
    %5919 = vdwg.mxu0
    %v5920 = vld [vmem:[%s1] sm:$0xff]
    %v5921 = vld [vmem:[%s1 + $0x8] sm:$0xff]
    %v5922 = vld [vmem:[#allocation7] sm:$0xff]
    %v5923 = vld [vmem:[#allocation7 + $0x8] sm:$0xff]
    %v5924 = vld [vmem:[#allocation7 + $0x10] sm:$0xff]
    %5926 = vset.pattern.permute.xlu0 0
    %5927 = vperm.xlu0 %5926, %v5920
    %v5928 = vpop.permute.xlu0 %5927
    %5931 = vset.pattern.permute.xlu0 0
    %5932 = vperm.xlu0 %5931, %v5921
    %v5933 = vpop.permute.xlu0 %5932
    %v5938 = vlaneseq
    %v5939 = vshrl.u32 %v5938, 7
    %v5940 = vsub.s32 0, %v5939
    %v5941 = vrot.slane %v5922, %v5940
    %v5942 = vlaneseq
    %v5943 = vshrl.u32 %v5942, 7
    %v5944 = vsub.s32 4, %v5943
    %v5945 = vrot.slane %v5922, %v5944
    %v5946 = vlaneseq
    %v5947 = vshrl.u32 %v5946, 7
    %v5948 = vsub.s32 0, %v5947
    %v5949 = vrot.slane %v5923, %v5948
    %v5950 = vlaneseq
    %v5951 = vshrl.u32 %v5950, 7
    %v5952 = vsub.s32 4, %v5951
    %v5953 = vrot.slane %v5923, %v5952
    %v5954 = vlaneseq
    %v5955 = vshrl.u32 %v5954, 7
    %v5956 = vsub.s32 0, %v5955
    %v5957 = vrot.slane %v5924, %v5956
    %v5958 = vlaneseq
    %v5959 = vshrl.u32 %v5958, 7
    %v5960 = vsub.s32 4, %v5959
    %v5961 = vrot.slane %v5924, %v5960
    %v5968 = vlaneseq
    %v5969 = vshrl.u32 %v5968, 7
    %v5970 = vsub.s32 0, %v5969
    %v5971 = vrot.slane %v5941, %v5970
    %v5972 = vlaneseq
    %v5973 = vshrl.u32 %v5972, 7
    %v5974 = vsub.s32 0, %v5973
    %v5975 = vrot.slane %v5945, %v5974
    %v5976 = vlaneseq
    %v5977 = vshrl.u32 %v5976, 7
    %v5978 = vsub.s32 0, %v5977
    %v5979 = vrot.slane %v5949, %v5978
    %v5980 = vlaneseq
    %v5981 = vshrl.u32 %v5980, 7
    %v5982 = vsub.s32 0, %v5981
    %v5983 = vrot.slane %v5953, %v5982
    %v5984 = vlaneseq
    %v5985 = vshrl.u32 %v5984, 7
    %v5986 = vsub.s32 0, %v5985
    %v5987 = vrot.slane %v5957, %v5986
    %v5988 = vlaneseq
    %v5989 = vshrl.u32 %v5988, 7
    %v5990 = vsub.s32 0, %v5989
    %v5991 = vrot.slane %v5961, %v5990
    %v5992 = vmul.f32 %v5928, %v5971
    %v5993 = vmul.f32 %v5928, %v5975
    %v5994 = vmul.f32 %v5928, %v5979
    %v5995 = vmul.f32 %v5928, %v5983
    %v5996 = vmul.f32 %v5928, %v5987
    %v5997 = vmul.f32 %v5928, %v5991
    %v5998 = vmul.f32 %v5933, %v5971
    %v5999 = vmul.f32 %v5933, %v5975
    %v6000 = vmul.f32 %v5933, %v5979
    %v6001 = vmul.f32 %v5933, %v5983
    %v6002 = vmul.f32 %v5933, %v5987
    %v6003 = vmul.f32 %v5933, %v5991
    %v6004 = vadd.f32 %v5224, %v5992
    %v6005 = vadd.f32 %v5226, %v5993
    %v6006 = vadd.f32 %v5568, %v5994
    %v6007 = vadd.f32 %v5570, %v5995
    %v6008 = vadd.f32 %v5912, %v5996
    %v6009 = vadd.f32 %v5914, %v5997
    %v6010 = vadd.f32 %v5228, %v5998
    %v6011 = vadd.f32 %v5230, %v5999
    %v6012 = vadd.f32 %v5572, %v6000
    %v6013 = vadd.f32 %v5574, %v6001
    %v6014 = vadd.f32 %v5916, %v6002
    %v6015 = vadd.f32 %v5918, %v6003
    %6016 = vset.pattern.permute.xlu0 1
    %6017 = vperm.xlu0 %6016, %v5920
    %v6018 = vpop.permute.xlu0 %6017
    %6020 = vset.pattern.permute.xlu0 1
    %6021 = vperm.xlu0 %6020, %v5921
    %v6022 = vpop.permute.xlu0 %6021
    %v6024 = vlaneseq
    %v6025 = vshrl.u32 %v6024, 7
    %v6026 = vsub.s32 1, %v6025
    %v6027 = vrot.slane %v5922, %v6026
    %v6028 = vlaneseq
    %v6029 = vshrl.u32 %v6028, 7
    %v6030 = vsub.s32 5, %v6029
    %v6031 = vrot.slane %v5922, %v6030
    %v6032 = vlaneseq
    %v6033 = vshrl.u32 %v6032, 7
    %v6034 = vsub.s32 1, %v6033
    %v6035 = vrot.slane %v5923, %v6034
    %v6036 = vlaneseq
    %v6037 = vshrl.u32 %v6036, 7
    %v6038 = vsub.s32 5, %v6037
    %v6039 = vrot.slane %v5923, %v6038
    %v6040 = vlaneseq
    %v6041 = vshrl.u32 %v6040, 7
    %v6042 = vsub.s32 1, %v6041
    %v6043 = vrot.slane %v5924, %v6042
    %v6044 = vlaneseq
    %v6045 = vshrl.u32 %v6044, 7
    %v6046 = vsub.s32 5, %v6045
    %v6047 = vrot.slane %v5924, %v6046
    %v6054 = vlaneseq
    %v6055 = vshrl.u32 %v6054, 7
    %v6056 = vsub.s32 1, %v6055
    %v6057 = vrot.slane %v6027, %v6056
    %v6058 = vlaneseq
    %v6059 = vshrl.u32 %v6058, 7
    %v6060 = vsub.s32 1, %v6059
    %v6061 = vrot.slane %v6031, %v6060
    %v6062 = vlaneseq
    %v6063 = vshrl.u32 %v6062, 7
    %v6064 = vsub.s32 1, %v6063
    %v6065 = vrot.slane %v6035, %v6064
    %v6066 = vlaneseq
    %v6067 = vshrl.u32 %v6066, 7
    %v6068 = vsub.s32 1, %v6067
    %v6069 = vrot.slane %v6039, %v6068
    %v6070 = vlaneseq
    %v6071 = vshrl.u32 %v6070, 7
    %v6072 = vsub.s32 1, %v6071
    %v6073 = vrot.slane %v6043, %v6072
    %v6074 = vlaneseq
    %v6075 = vshrl.u32 %v6074, 7
    %v6076 = vsub.s32 1, %v6075
    %v6077 = vrot.slane %v6047, %v6076
    %v6078 = vmul.f32 %v6018, %v6057
    %v6079 = vmul.f32 %v6018, %v6061
    %v6080 = vmul.f32 %v6018, %v6065
    %v6081 = vmul.f32 %v6018, %v6069
    %v6082 = vmul.f32 %v6018, %v6073
    %v6083 = vmul.f32 %v6018, %v6077
    %v6084 = vmul.f32 %v6022, %v6057
    %v6085 = vmul.f32 %v6022, %v6061
    %v6086 = vmul.f32 %v6022, %v6065
    %v6087 = vmul.f32 %v6022, %v6069
    %v6088 = vmul.f32 %v6022, %v6073
    %v6089 = vmul.f32 %v6022, %v6077
    %v6090 = vadd.f32 %v6004, %v6078
    %v6091 = vadd.f32 %v6005, %v6079
    %v6092 = vadd.f32 %v6006, %v6080
    %v6093 = vadd.f32 %v6007, %v6081
    %v6094 = vadd.f32 %v6008, %v6082
    %v6095 = vadd.f32 %v6009, %v6083
    %v6096 = vadd.f32 %v6010, %v6084
    %v6097 = vadd.f32 %v6011, %v6085
    %v6098 = vadd.f32 %v6012, %v6086
    %v6099 = vadd.f32 %v6013, %v6087
    %v6100 = vadd.f32 %v6014, %v6088
    %v6101 = vadd.f32 %v6015, %v6089
    %6102 = vset.pattern.permute.xlu0 2
    %6103 = vperm.xlu0 %6102, %v5920
    %v6104 = vpop.permute.xlu0 %6103
    %6106 = vset.pattern.permute.xlu0 2
    %6107 = vperm.xlu0 %6106, %v5921
    %v6108 = vpop.permute.xlu0 %6107
    %v6110 = vlaneseq
    %v6111 = vshrl.u32 %v6110, 7
    %v6112 = vsub.s32 2, %v6111
    %v6113 = vrot.slane %v5922, %v6112
    %v6114 = vlaneseq
    %v6115 = vshrl.u32 %v6114, 7
    %v6116 = vsub.s32 6, %v6115
    %v6117 = vrot.slane %v5922, %v6116
    %v6118 = vlaneseq
    %v6119 = vshrl.u32 %v6118, 7
    %v6120 = vsub.s32 2, %v6119
    %v6121 = vrot.slane %v5923, %v6120
    %v6122 = vlaneseq
    %v6123 = vshrl.u32 %v6122, 7
    %v6124 = vsub.s32 6, %v6123
    %v6125 = vrot.slane %v5923, %v6124
    %v6126 = vlaneseq
    %v6127 = vshrl.u32 %v6126, 7
    %v6128 = vsub.s32 2, %v6127
    %v6129 = vrot.slane %v5924, %v6128
    %v6130 = vlaneseq
    %v6131 = vshrl.u32 %v6130, 7
    %v6132 = vsub.s32 6, %v6131
    %v6133 = vrot.slane %v5924, %v6132
    %v6140 = vlaneseq
    %v6141 = vshrl.u32 %v6140, 7
    %v6142 = vsub.s32 2, %v6141
    %v6143 = vrot.slane %v6113, %v6142
    %v6144 = vlaneseq
    %v6145 = vshrl.u32 %v6144, 7
    %v6146 = vsub.s32 2, %v6145
    %v6147 = vrot.slane %v6117, %v6146
    %v6148 = vlaneseq
    %v6149 = vshrl.u32 %v6148, 7
    %v6150 = vsub.s32 2, %v6149
    %v6151 = vrot.slane %v6121, %v6150
    %v6152 = vlaneseq
    %v6153 = vshrl.u32 %v6152, 7
    %v6154 = vsub.s32 2, %v6153
    %v6155 = vrot.slane %v6125, %v6154
    %v6156 = vlaneseq
    %v6157 = vshrl.u32 %v6156, 7
    %v6158 = vsub.s32 2, %v6157
    %v6159 = vrot.slane %v6129, %v6158
    %v6160 = vlaneseq
    %v6161 = vshrl.u32 %v6160, 7
    %v6162 = vsub.s32 2, %v6161
    %v6163 = vrot.slane %v6133, %v6162
    %v6164 = vmul.f32 %v6104, %v6143
    %v6165 = vmul.f32 %v6104, %v6147
    %v6166 = vmul.f32 %v6104, %v6151
    %v6167 = vmul.f32 %v6104, %v6155
    %v6168 = vmul.f32 %v6104, %v6159
    %v6169 = vmul.f32 %v6104, %v6163
    %v6170 = vmul.f32 %v6108, %v6143
    %v6171 = vmul.f32 %v6108, %v6147
    %v6172 = vmul.f32 %v6108, %v6151
    %v6173 = vmul.f32 %v6108, %v6155
    %v6174 = vmul.f32 %v6108, %v6159
    %v6175 = vmul.f32 %v6108, %v6163
    %v6176 = vadd.f32 %v6090, %v6164
    %v6177 = vadd.f32 %v6091, %v6165
    %v6178 = vadd.f32 %v6092, %v6166
    %v6179 = vadd.f32 %v6093, %v6167
    %v6180 = vadd.f32 %v6094, %v6168
    %v6181 = vadd.f32 %v6095, %v6169
    %v6182 = vadd.f32 %v6096, %v6170
    %v6183 = vadd.f32 %v6097, %v6171
    %v6184 = vadd.f32 %v6098, %v6172
    %v6185 = vadd.f32 %v6099, %v6173
    %v6186 = vadd.f32 %v6100, %v6174
    %v6187 = vadd.f32 %v6101, %v6175
    %6188 = vset.pattern.permute.xlu0 3
    %6189 = vperm.xlu0 %6188, %v5920
    %v6190 = vpop.permute.xlu0 %6189
    %6192 = vset.pattern.permute.xlu0 3
    %6193 = vperm.xlu0 %6192, %v5921
    %v6194 = vpop.permute.xlu0 %6193
    %v6196 = vlaneseq
    %v6197 = vshrl.u32 %v6196, 7
    %v6198 = vsub.s32 3, %v6197
    %v6199 = vrot.slane %v5922, %v6198
    %v6200 = vlaneseq
    %v6201 = vshrl.u32 %v6200, 7
    %v6202 = vsub.s32 7, %v6201
    %v6203 = vrot.slane %v5922, %v6202
    %v6204 = vlaneseq
    %v6205 = vshrl.u32 %v6204, 7
    %v6206 = vsub.s32 3, %v6205
    %v6207 = vrot.slane %v5923, %v6206
    %v6208 = vlaneseq
    %v6209 = vshrl.u32 %v6208, 7
    %v6210 = vsub.s32 7, %v6209
    %v6211 = vrot.slane %v5923, %v6210
    %v6212 = vlaneseq
    %v6213 = vshrl.u32 %v6212, 7
    %v6214 = vsub.s32 3, %v6213
    %v6215 = vrot.slane %v5924, %v6214
    %v6216 = vlaneseq
    %v6217 = vshrl.u32 %v6216, 7
    %v6218 = vsub.s32 7, %v6217
    %v6219 = vrot.slane %v5924, %v6218
    %v6226 = vlaneseq
    %v6227 = vshrl.u32 %v6226, 7
    %v6228 = vsub.s32 3, %v6227
    %v6229 = vrot.slane %v6199, %v6228
    %v6230 = vlaneseq
    %v6231 = vshrl.u32 %v6230, 7
    %v6232 = vsub.s32 3, %v6231
    %v6233 = vrot.slane %v6203, %v6232
    %v6234 = vlaneseq
    %v6235 = vshrl.u32 %v6234, 7
    %v6236 = vsub.s32 3, %v6235
    %v6237 = vrot.slane %v6207, %v6236
    %v6238 = vlaneseq
    %v6239 = vshrl.u32 %v6238, 7
    %v6240 = vsub.s32 3, %v6239
    %v6241 = vrot.slane %v6211, %v6240
    %v6242 = vlaneseq
    %v6243 = vshrl.u32 %v6242, 7
    %v6244 = vsub.s32 3, %v6243
    %v6245 = vrot.slane %v6215, %v6244
    %v6246 = vlaneseq
    %v6247 = vshrl.u32 %v6246, 7
    %v6248 = vsub.s32 3, %v6247
    %v6249 = vrot.slane %v6219, %v6248
    %v6250 = vmul.f32 %v6190, %v6229
    %v6251 = vmul.f32 %v6190, %v6233
    %v6252 = vmul.f32 %v6190, %v6237
    %v6253 = vmul.f32 %v6190, %v6241
    %v6254 = vmul.f32 %v6190, %v6245
    %v6255 = vmul.f32 %v6190, %v6249
    %v6256 = vmul.f32 %v6194, %v6229
    %v6257 = vmul.f32 %v6194, %v6233
    %v6258 = vmul.f32 %v6194, %v6237
    %v6259 = vmul.f32 %v6194, %v6241
    %v6260 = vmul.f32 %v6194, %v6245
    %v6261 = vmul.f32 %v6194, %v6249
    %v6262 = vadd.f32 %v6176, %v6250
    %v6263 = vadd.f32 %v6177, %v6251
    %v6264 = vadd.f32 %v6178, %v6252
    %v6265 = vadd.f32 %v6179, %v6253
    %v6266 = vadd.f32 %v6180, %v6254
    %v6267 = vadd.f32 %v6181, %v6255
    %v6268 = vadd.f32 %v6182, %v6256
    %v6269 = vadd.f32 %v6183, %v6257
    %v6270 = vadd.f32 %v6184, %v6258
    %v6271 = vadd.f32 %v6185, %v6259
    %v6272 = vadd.f32 %v6186, %v6260
    %v6273 = vadd.f32 %v6187, %v6261
    %v6274 = vpack.c.bf16 %v6268, %v6262
    %v6275 = vpack.c.bf16 %v6269, %v6263
    %v6276 = vpack.c.bf16 %v6270, %v6264
    %v6277 = vpack.c.bf16 %v6271, %v6265
    %v6278 = vpack.c.bf16 %v6272, %v6266
    %v6279 = vpack.c.bf16 %v6273, %v6267
    %v6280 = vld [vmem:[#allocation10] sm:$0xff]
    %v6281 = vld [vmem:[#allocation10 + $0x8] sm:$0xff]
    %v6282 = vld [vmem:[#allocation10 + $0x10] sm:$0xff]
    %v6283 = vld [vmem:[#allocation10 + $0x18] sm:$0xff]
    %v6284 = vld [vmem:[#allocation10 + $0x20] sm:$0xff]
    %v6285 = vld [vmem:[#allocation10 + $0x28] sm:$0xff]
    %v6286 = vld [vmem:[#allocation10 + $0x30] sm:$0xff]
    %v6287 = vld [vmem:[#allocation10 + $0x38] sm:$0xff]
    %v6288 = vld [vmem:[#allocation10 + $0x40] sm:$0xff]
    %v6289 = vld [vmem:[#allocation10 + $0x48] sm:$0xff]
    %v6290 = vld [vmem:[#allocation10 + $0x50] sm:$0xff]
    %v6291 = vld [vmem:[#allocation10 + $0x58] sm:$0xff]
    %v6292 = vld [vmem:[#allocation10 + $0x60] sm:$0xff]
    %v6293 = vld [vmem:[#allocation10 + $0x68] sm:$0xff]
    %v6294 = vld [vmem:[#allocation10 + $0x70] sm:$0xff]
    %v6295 = vld [vmem:[#allocation10 + $0x78] sm:$0xff]
    %v6296 = vld [vmem:[#allocation10 + $0x80] sm:$0xff]
    %v6297 = vld [vmem:[#allocation10 + $0x88] sm:$0xff]
    %v6298 = vld [vmem:[#allocation10 + $0x90] sm:$0xff]
    %v6299 = vld [vmem:[#allocation10 + $0x98] sm:$0xff]
    %v6300 = vld [vmem:[#allocation10 + $0xa0] sm:$0xff]
    %v6301 = vld [vmem:[#allocation10 + $0xa8] sm:$0xff]
    %v6302 = vld [vmem:[#allocation10 + $0xb0] sm:$0xff]
    %v6303 = vld [vmem:[#allocation10 + $0xb8] sm:$0xff]
    %v6304 = vld [vmem:[#allocation10 + $0xc0] sm:$0xff]
    %v6305 = vld [vmem:[#allocation10 + $0xc8] sm:$0xff]
    %v6306 = vld [vmem:[#allocation10 + $0xd0] sm:$0xff]
    %v6307 = vld [vmem:[#allocation10 + $0xd8] sm:$0xff]
    %v6308 = vld [vmem:[#allocation10 + $0xe0] sm:$0xff]
    %v6309 = vld [vmem:[#allocation10 + $0xe8] sm:$0xff]
    %v6310 = vld [vmem:[#allocation10 + $0xf0] sm:$0xff]
    %v6311 = vld [vmem:[#allocation10 + $0xf8] sm:$0xff]
    %v6312 = vld [vmem:[#allocation10 + $0x100] sm:$0xff]
    %v6313 = vld [vmem:[#allocation10 + $0x108] sm:$0xff]
    %v6314 = vld [vmem:[#allocation10 + $0x110] sm:$0xff]
    %v6315 = vld [vmem:[#allocation10 + $0x118] sm:$0xff]
    %v6316 = vld [vmem:[#allocation10 + $0x120] sm:$0xff]
    %v6317 = vld [vmem:[#allocation10 + $0x128] sm:$0xff]
    %v6318 = vld [vmem:[#allocation10 + $0x130] sm:$0xff]
    %v6319 = vld [vmem:[#allocation10 + $0x138] sm:$0xff]
    %v6320 = vld [vmem:[#allocation10 + $0x140] sm:$0xff]
    %v6321 = vld [vmem:[#allocation10 + $0x148] sm:$0xff]
    %v6322 = vld [vmem:[#allocation10 + $0x150] sm:$0xff]
    %v6323 = vld [vmem:[#allocation10 + $0x158] sm:$0xff]
    %v6324 = vld [vmem:[#allocation10 + $0x160] sm:$0xff]
    %v6325 = vld [vmem:[#allocation10 + $0x168] sm:$0xff]
    %v6326 = vld [vmem:[#allocation10 + $0x170] sm:$0xff]
    %v6327 = vld [vmem:[#allocation10 + $0x178] sm:$0xff]
    %v6328 = vld [vmem:[#allocation10 + $0x180] sm:$0xff]
    %v6329 = vld [vmem:[#allocation10 + $0x188] sm:$0xff]
    %v6330 = vld [vmem:[#allocation10 + $0x190] sm:$0xff]
    %v6331 = vld [vmem:[#allocation10 + $0x198] sm:$0xff]
    %v6332 = vld [vmem:[#allocation10 + $0x1a0] sm:$0xff]
    %v6333 = vld [vmem:[#allocation10 + $0x1a8] sm:$0xff]
    %v6334 = vld [vmem:[#allocation10 + $0x1b0] sm:$0xff]
    %v6335 = vld [vmem:[#allocation10 + $0x1b8] sm:$0xff]
    %v6336 = vld [vmem:[#allocation10 + $0x1c0] sm:$0xff]
    %v6337 = vld [vmem:[#allocation10 + $0x1c8] sm:$0xff]
    %v6338 = vld [vmem:[#allocation10 + $0x1d0] sm:$0xff]
    %v6339 = vld [vmem:[#allocation10 + $0x1d8] sm:$0xff]
    %v6340 = vld [vmem:[#allocation10 + $0x1e0] sm:$0xff]
    %v6341 = vld [vmem:[#allocation10 + $0x1e8] sm:$0xff]
    %v6342 = vld [vmem:[#allocation10 + $0x1f0] sm:$0xff]
    %v6343 = vld [vmem:[#allocation10 + $0x1f8] sm:$0xff]
    %v6344 = vld [vmem:[#allocation10 + $0x200] sm:$0xff]
    %v6345 = vld [vmem:[#allocation10 + $0x208] sm:$0xff]
    %v6346 = vld [vmem:[#allocation10 + $0x210] sm:$0xff]
    %v6347 = vld [vmem:[#allocation10 + $0x218] sm:$0xff]
    %v6348 = vld [vmem:[#allocation10 + $0x220] sm:$0xff]
    %v6349 = vld [vmem:[#allocation10 + $0x228] sm:$0xff]
    %v6350 = vld [vmem:[#allocation10 + $0x230] sm:$0xff]
    %v6351 = vld [vmem:[#allocation10 + $0x238] sm:$0xff]
    %v6352 = vld [vmem:[#allocation10 + $0x240] sm:$0xff]
    %v6353 = vld [vmem:[#allocation10 + $0x248] sm:$0xff]
    %v6354 = vld [vmem:[#allocation10 + $0x250] sm:$0xff]
    %v6355 = vld [vmem:[#allocation10 + $0x258] sm:$0xff]
    %v6356 = vld [vmem:[#allocation10 + $0x260] sm:$0xff]
    %v6357 = vld [vmem:[#allocation10 + $0x268] sm:$0xff]
    %v6358 = vld [vmem:[#allocation10 + $0x270] sm:$0xff]
    %v6359 = vld [vmem:[#allocation10 + $0x278] sm:$0xff]
    %v6360 = vld [vmem:[#allocation10 + $0x280] sm:$0xff]
    %v6361 = vld [vmem:[#allocation10 + $0x288] sm:$0xff]
    %v6362 = vld [vmem:[#allocation10 + $0x290] sm:$0xff]
    %v6363 = vld [vmem:[#allocation10 + $0x298] sm:$0xff]
    %v6364 = vld [vmem:[#allocation10 + $0x2a0] sm:$0xff]
    %v6365 = vld [vmem:[#allocation10 + $0x2a8] sm:$0xff]
    %v6366 = vld [vmem:[#allocation10 + $0x2b0] sm:$0xff]
    %v6367 = vld [vmem:[#allocation10 + $0x2b8] sm:$0xff]
    %v6368 = vld [vmem:[#allocation10 + $0x2c0] sm:$0xff]
    %v6369 = vld [vmem:[#allocation10 + $0x2c8] sm:$0xff]
    %v6370 = vld [vmem:[#allocation10 + $0x2d0] sm:$0xff]
    %v6371 = vld [vmem:[#allocation10 + $0x2d8] sm:$0xff]
    %v6372 = vld [vmem:[#allocation10 + $0x2e0] sm:$0xff]
    %v6373 = vld [vmem:[#allocation10 + $0x2e8] sm:$0xff]
    %v6374 = vld [vmem:[#allocation10 + $0x2f0] sm:$0xff]
    %v6375 = vld [vmem:[#allocation10 + $0x2f8] sm:$0xff]
    %v6376 = vld [vmem:[#allocation10 + $0x300] sm:$0xff]
    %v6377 = vld [vmem:[#allocation10 + $0x308] sm:$0xff]
    %v6378 = vld [vmem:[#allocation10 + $0x310] sm:$0xff]
    %v6379 = vld [vmem:[#allocation10 + $0x318] sm:$0xff]
    %v6380 = vld [vmem:[#allocation10 + $0x320] sm:$0xff]
    %v6381 = vld [vmem:[#allocation10 + $0x328] sm:$0xff]
    %v6382 = vld [vmem:[#allocation10 + $0x330] sm:$0xff]
    %v6383 = vld [vmem:[#allocation10 + $0x338] sm:$0xff]
    %v6384 = vld [vmem:[#allocation10 + $0x340] sm:$0xff]
    %v6385 = vld [vmem:[#allocation10 + $0x348] sm:$0xff]
    %v6386 = vld [vmem:[#allocation10 + $0x350] sm:$0xff]
    %v6387 = vld [vmem:[#allocation10 + $0x358] sm:$0xff]
    %v6388 = vld [vmem:[#allocation10 + $0x360] sm:$0xff]
    %v6389 = vld [vmem:[#allocation10 + $0x368] sm:$0xff]
    %v6390 = vld [vmem:[#allocation10 + $0x370] sm:$0xff]
    %v6391 = vld [vmem:[#allocation10 + $0x378] sm:$0xff]
    %v6392 = vld [vmem:[#allocation10 + $0x380] sm:$0xff]
    %v6393 = vld [vmem:[#allocation10 + $0x388] sm:$0xff]
    %v6394 = vld [vmem:[#allocation10 + $0x390] sm:$0xff]
    %v6395 = vld [vmem:[#allocation10 + $0x398] sm:$0xff]
    %v6396 = vld [vmem:[#allocation10 + $0x3a0] sm:$0xff]
    %v6397 = vld [vmem:[#allocation10 + $0x3a8] sm:$0xff]
    %v6398 = vld [vmem:[#allocation10 + $0x3b0] sm:$0xff]
    %v6399 = vld [vmem:[#allocation10 + $0x3b8] sm:$0xff]
    %v6400 = vld [vmem:[#allocation10 + $0x3c0] sm:$0xff]
    %v6401 = vld [vmem:[#allocation10 + $0x3c8] sm:$0xff]
    %v6402 = vld [vmem:[#allocation10 + $0x3d0] sm:$0xff]
    %v6403 = vld [vmem:[#allocation10 + $0x3d8] sm:$0xff]
    %v6404 = vld [vmem:[#allocation10 + $0x3e0] sm:$0xff]
    %v6405 = vld [vmem:[#allocation10 + $0x3e8] sm:$0xff]
    %v6406 = vld [vmem:[#allocation10 + $0x3f0] sm:$0xff]
    %v6407 = vld [vmem:[#allocation10 + $0x3f8] sm:$0xff]
    %v6408 = vld [vmem:[#allocation10 + $0x400] sm:$0xff]
    %v6409 = vld [vmem:[#allocation10 + $0x408] sm:$0xff]
    %v6410 = vld [vmem:[#allocation10 + $0x410] sm:$0xff]
    %v6411 = vld [vmem:[#allocation10 + $0x418] sm:$0xff]
    %v6412 = vld [vmem:[#allocation10 + $0x420] sm:$0xff]
    %v6413 = vld [vmem:[#allocation10 + $0x428] sm:$0xff]
    %v6414 = vld [vmem:[#allocation10 + $0x430] sm:$0xff]
    %v6415 = vld [vmem:[#allocation10 + $0x438] sm:$0xff]
    %v6416 = vld [vmem:[#allocation10 + $0x440] sm:$0xff]
    %v6417 = vld [vmem:[#allocation10 + $0x448] sm:$0xff]
    %v6418 = vld [vmem:[#allocation10 + $0x450] sm:$0xff]
    %v6419 = vld [vmem:[#allocation10 + $0x458] sm:$0xff]
    %v6420 = vld [vmem:[#allocation10 + $0x460] sm:$0xff]
    %v6421 = vld [vmem:[#allocation10 + $0x468] sm:$0xff]
    %v6422 = vld [vmem:[#allocation10 + $0x470] sm:$0xff]
    %v6423 = vld [vmem:[#allocation10 + $0x478] sm:$0xff]
    %v6424 = vld [vmem:[#allocation10 + $0x480] sm:$0xff]
    %v6425 = vld [vmem:[#allocation10 + $0x488] sm:$0xff]
    %v6426 = vld [vmem:[#allocation10 + $0x490] sm:$0xff]
    %v6427 = vld [vmem:[#allocation10 + $0x498] sm:$0xff]
    %v6428 = vld [vmem:[#allocation10 + $0x4a0] sm:$0xff]
    %v6429 = vld [vmem:[#allocation10 + $0x4a8] sm:$0xff]
    %v6430 = vld [vmem:[#allocation10 + $0x4b0] sm:$0xff]
    %v6431 = vld [vmem:[#allocation10 + $0x4b8] sm:$0xff]
    %v6432 = vld [vmem:[#allocation10 + $0x4c0] sm:$0xff]
    %v6433 = vld [vmem:[#allocation10 + $0x4c8] sm:$0xff]
    %v6434 = vld [vmem:[#allocation10 + $0x4d0] sm:$0xff]
    %v6435 = vld [vmem:[#allocation10 + $0x4d8] sm:$0xff]
    %v6436 = vld [vmem:[#allocation10 + $0x4e0] sm:$0xff]
    %v6437 = vld [vmem:[#allocation10 + $0x4e8] sm:$0xff]
    %v6438 = vld [vmem:[#allocation10 + $0x4f0] sm:$0xff]
    %v6439 = vld [vmem:[#allocation10 + $0x4f8] sm:$0xff]
    %v6440 = vld [vmem:[#allocation10 + $0x500] sm:$0xff]
    %v6441 = vld [vmem:[#allocation10 + $0x508] sm:$0xff]
    %v6442 = vld [vmem:[#allocation10 + $0x510] sm:$0xff]
    %v6443 = vld [vmem:[#allocation10 + $0x518] sm:$0xff]
    %v6444 = vld [vmem:[#allocation10 + $0x520] sm:$0xff]
    %v6445 = vld [vmem:[#allocation10 + $0x528] sm:$0xff]
    %v6446 = vld [vmem:[#allocation10 + $0x530] sm:$0xff]
    %v6447 = vld [vmem:[#allocation10 + $0x538] sm:$0xff]
    %v6448 = vld [vmem:[#allocation10 + $0x540] sm:$0xff]
    %v6449 = vld [vmem:[#allocation10 + $0x548] sm:$0xff]
    %v6450 = vld [vmem:[#allocation10 + $0x550] sm:$0xff]
    %v6451 = vld [vmem:[#allocation10 + $0x558] sm:$0xff]
    %v6452 = vld [vmem:[#allocation10 + $0x560] sm:$0xff]
    %v6453 = vld [vmem:[#allocation10 + $0x568] sm:$0xff]
    %v6454 = vld [vmem:[#allocation10 + $0x570] sm:$0xff]
    %v6455 = vld [vmem:[#allocation10 + $0x578] sm:$0xff]
    %v6456 = vld [vmem:[#allocation10 + $0x580] sm:$0xff]
    %v6457 = vld [vmem:[#allocation10 + $0x588] sm:$0xff]
    %v6458 = vld [vmem:[#allocation10 + $0x590] sm:$0xff]
    %v6459 = vld [vmem:[#allocation10 + $0x598] sm:$0xff]
    %v6460 = vld [vmem:[#allocation10 + $0x5a0] sm:$0xff]
    %v6461 = vld [vmem:[#allocation10 + $0x5a8] sm:$0xff]
    %v6462 = vld [vmem:[#allocation10 + $0x5b0] sm:$0xff]
    %v6463 = vld [vmem:[#allocation10 + $0x5b8] sm:$0xff]
    %v6464 = vld [vmem:[#allocation10 + $0x5c0] sm:$0xff]
    %v6465 = vld [vmem:[#allocation10 + $0x5c8] sm:$0xff]
    %v6466 = vld [vmem:[#allocation10 + $0x5d0] sm:$0xff]
    %v6467 = vld [vmem:[#allocation10 + $0x5d8] sm:$0xff]
    %v6468 = vld [vmem:[#allocation10 + $0x5e0] sm:$0xff]
    %v6469 = vld [vmem:[#allocation10 + $0x5e8] sm:$0xff]
    %v6470 = vld [vmem:[#allocation10 + $0x5f0] sm:$0xff]
    %v6471 = vld [vmem:[#allocation10 + $0x5f8] sm:$0xff]
    %v6472 = vld [vmem:[#allocation10 + $0x600] sm:$0xff]
    %v6473 = vld [vmem:[#allocation10 + $0x608] sm:$0xff]
    %v6474 = vld [vmem:[#allocation10 + $0x610] sm:$0xff]
    %v6475 = vld [vmem:[#allocation10 + $0x618] sm:$0xff]
    %v6476 = vld [vmem:[#allocation10 + $0x620] sm:$0xff]
    %v6477 = vld [vmem:[#allocation10 + $0x628] sm:$0xff]
    %v6478 = vld [vmem:[#allocation10 + $0x630] sm:$0xff]
    %v6479 = vld [vmem:[#allocation10 + $0x638] sm:$0xff]
    %v6480 = vld [vmem:[#allocation10 + $0x640] sm:$0xff]
    %v6481 = vld [vmem:[#allocation10 + $0x648] sm:$0xff]
    %v6482 = vld [vmem:[#allocation10 + $0x650] sm:$0xff]
    %v6483 = vld [vmem:[#allocation10 + $0x658] sm:$0xff]
    %v6484 = vld [vmem:[#allocation10 + $0x660] sm:$0xff]
    %v6485 = vld [vmem:[#allocation10 + $0x668] sm:$0xff]
    %v6486 = vld [vmem:[#allocation10 + $0x670] sm:$0xff]
    %v6487 = vld [vmem:[#allocation10 + $0x678] sm:$0xff]
    %v6488 = vld [vmem:[#allocation10 + $0x680] sm:$0xff]
    %v6489 = vld [vmem:[#allocation10 + $0x688] sm:$0xff]
    %v6490 = vld [vmem:[#allocation10 + $0x690] sm:$0xff]
    %v6491 = vld [vmem:[#allocation10 + $0x698] sm:$0xff]
    %v6492 = vld [vmem:[#allocation10 + $0x6a0] sm:$0xff]
    %v6493 = vld [vmem:[#allocation10 + $0x6a8] sm:$0xff]
    %v6494 = vld [vmem:[#allocation10 + $0x6b0] sm:$0xff]
    %v6495 = vld [vmem:[#allocation10 + $0x6b8] sm:$0xff]
    %v6496 = vld [vmem:[#allocation10 + $0x6c0] sm:$0xff]
    %v6497 = vld [vmem:[#allocation10 + $0x6c8] sm:$0xff]
    %v6498 = vld [vmem:[#allocation10 + $0x6d0] sm:$0xff]
    %v6499 = vld [vmem:[#allocation10 + $0x6d8] sm:$0xff]
    %v6500 = vld [vmem:[#allocation10 + $0x6e0] sm:$0xff]
    %v6501 = vld [vmem:[#allocation10 + $0x6e8] sm:$0xff]
    %v6502 = vld [vmem:[#allocation10 + $0x6f0] sm:$0xff]
    %v6503 = vld [vmem:[#allocation10 + $0x6f8] sm:$0xff]
    %v6504 = vld [vmem:[#allocation10 + $0x700] sm:$0xff]
    %v6505 = vld [vmem:[#allocation10 + $0x708] sm:$0xff]
    %v6506 = vld [vmem:[#allocation10 + $0x710] sm:$0xff]
    %v6507 = vld [vmem:[#allocation10 + $0x718] sm:$0xff]
    %v6508 = vld [vmem:[#allocation10 + $0x720] sm:$0xff]
    %v6509 = vld [vmem:[#allocation10 + $0x728] sm:$0xff]
    %v6510 = vld [vmem:[#allocation10 + $0x730] sm:$0xff]
    %v6511 = vld [vmem:[#allocation10 + $0x738] sm:$0xff]
    %v6512 = vld [vmem:[#allocation10 + $0x740] sm:$0xff]
    %v6513 = vld [vmem:[#allocation10 + $0x748] sm:$0xff]
    %v6514 = vld [vmem:[#allocation10 + $0x750] sm:$0xff]
    %v6515 = vld [vmem:[#allocation10 + $0x758] sm:$0xff]
    %v6516 = vld [vmem:[#allocation10 + $0x760] sm:$0xff]
    %v6517 = vld [vmem:[#allocation10 + $0x768] sm:$0xff]
    %v6518 = vld [vmem:[#allocation10 + $0x770] sm:$0xff]
    %v6519 = vld [vmem:[#allocation10 + $0x778] sm:$0xff]
    %v6520 = vld [vmem:[#allocation10 + $0x780] sm:$0xff]
    %v6521 = vld [vmem:[#allocation10 + $0x788] sm:$0xff]
    %v6522 = vld [vmem:[#allocation10 + $0x790] sm:$0xff]
    %v6523 = vld [vmem:[#allocation10 + $0x798] sm:$0xff]
    %v6524 = vld [vmem:[#allocation10 + $0x7a0] sm:$0xff]
    %v6525 = vld [vmem:[#allocation10 + $0x7a8] sm:$0xff]
    %v6526 = vld [vmem:[#allocation10 + $0x7b0] sm:$0xff]
    %v6527 = vld [vmem:[#allocation10 + $0x7b8] sm:$0xff]
    %v6528 = vld [vmem:[#allocation10 + $0x7c0] sm:$0xff]
    %v6529 = vld [vmem:[#allocation10 + $0x7c8] sm:$0xff]
    %v6530 = vld [vmem:[#allocation10 + $0x7d0] sm:$0xff]
    %v6531 = vld [vmem:[#allocation10 + $0x7d8] sm:$0xff]
    %v6532 = vld [vmem:[#allocation10 + $0x7e0] sm:$0xff]
    %v6533 = vld [vmem:[#allocation10 + $0x7e8] sm:$0xff]
    %v6534 = vld [vmem:[#allocation10 + $0x7f0] sm:$0xff]
    %v6535 = vld [vmem:[#allocation10 + $0x7f8] sm:$0xff]
    %v6536 = vld [vmem:[#allocation10 + $0x800] sm:$0xff]
    %v6537 = vld [vmem:[#allocation10 + $0x808] sm:$0xff]
    %v6538 = vld [vmem:[#allocation10 + $0x810] sm:$0xff]
    %v6539 = vld [vmem:[#allocation10 + $0x818] sm:$0xff]
    %v6540 = vld [vmem:[#allocation10 + $0x820] sm:$0xff]
    %v6541 = vld [vmem:[#allocation10 + $0x828] sm:$0xff]
    %v6542 = vld [vmem:[#allocation10 + $0x830] sm:$0xff]
    %v6543 = vld [vmem:[#allocation10 + $0x838] sm:$0xff]
    %v6544 = vld [vmem:[#allocation10 + $0x840] sm:$0xff]
    %v6545 = vld [vmem:[#allocation10 + $0x848] sm:$0xff]
    %v6546 = vld [vmem:[#allocation10 + $0x850] sm:$0xff]
    %v6547 = vld [vmem:[#allocation10 + $0x858] sm:$0xff]
    %v6548 = vld [vmem:[#allocation10 + $0x860] sm:$0xff]
    %v6549 = vld [vmem:[#allocation10 + $0x868] sm:$0xff]
    %v6550 = vld [vmem:[#allocation10 + $0x870] sm:$0xff]
    %v6551 = vld [vmem:[#allocation10 + $0x878] sm:$0xff]
    %v6552 = vld [vmem:[#allocation10 + $0x880] sm:$0xff]
    %v6553 = vld [vmem:[#allocation10 + $0x888] sm:$0xff]
    %v6554 = vld [vmem:[#allocation10 + $0x890] sm:$0xff]
    %v6555 = vld [vmem:[#allocation10 + $0x898] sm:$0xff]
    %v6556 = vld [vmem:[#allocation10 + $0x8a0] sm:$0xff]
    %v6557 = vld [vmem:[#allocation10 + $0x8a8] sm:$0xff]
    %v6558 = vld [vmem:[#allocation10 + $0x8b0] sm:$0xff]
    %v6559 = vld [vmem:[#allocation10 + $0x8b8] sm:$0xff]
    %v6560 = vld [vmem:[#allocation10 + $0x8c0] sm:$0xff]
    %v6561 = vld [vmem:[#allocation10 + $0x8c8] sm:$0xff]
    %v6562 = vld [vmem:[#allocation10 + $0x8d0] sm:$0xff]
    %v6563 = vld [vmem:[#allocation10 + $0x8d8] sm:$0xff]
    %v6564 = vld [vmem:[#allocation10 + $0x8e0] sm:$0xff]
    %v6565 = vld [vmem:[#allocation10 + $0x8e8] sm:$0xff]
    %v6566 = vld [vmem:[#allocation10 + $0x8f0] sm:$0xff]
    %v6567 = vld [vmem:[#allocation10 + $0x8f8] sm:$0xff]
    %v6568 = vld [vmem:[#allocation10 + $0x900] sm:$0xff]
    %v6569 = vld [vmem:[#allocation10 + $0x908] sm:$0xff]
    %v6570 = vld [vmem:[#allocation10 + $0x910] sm:$0xff]
    %v6571 = vld [vmem:[#allocation10 + $0x918] sm:$0xff]
    %v6572 = vld [vmem:[#allocation10 + $0x920] sm:$0xff]
    %v6573 = vld [vmem:[#allocation10 + $0x928] sm:$0xff]
    %v6574 = vld [vmem:[#allocation10 + $0x930] sm:$0xff]
    %v6575 = vld [vmem:[#allocation10 + $0x938] sm:$0xff]
    %v6576 = vld [vmem:[#allocation10 + $0x940] sm:$0xff]
    %v6577 = vld [vmem:[#allocation10 + $0x948] sm:$0xff]
    %v6578 = vld [vmem:[#allocation10 + $0x950] sm:$0xff]
    %v6579 = vld [vmem:[#allocation10 + $0x958] sm:$0xff]
    %v6580 = vld [vmem:[#allocation10 + $0x960] sm:$0xff]
    %v6581 = vld [vmem:[#allocation10 + $0x968] sm:$0xff]
    %v6582 = vld [vmem:[#allocation10 + $0x970] sm:$0xff]
    %v6583 = vld [vmem:[#allocation10 + $0x978] sm:$0xff]
    %v6584 = vld [vmem:[#allocation10 + $0x980] sm:$0xff]
    %v6585 = vld [vmem:[#allocation10 + $0x988] sm:$0xff]
    %v6586 = vld [vmem:[#allocation10 + $0x990] sm:$0xff]
    %v6587 = vld [vmem:[#allocation10 + $0x998] sm:$0xff]
    %v6588 = vld [vmem:[#allocation10 + $0x9a0] sm:$0xff]
    %v6589 = vld [vmem:[#allocation10 + $0x9a8] sm:$0xff]
    %v6590 = vld [vmem:[#allocation10 + $0x9b0] sm:$0xff]
    %v6591 = vld [vmem:[#allocation10 + $0x9b8] sm:$0xff]
    %v6592 = vld [vmem:[#allocation10 + $0x9c0] sm:$0xff]
    %v6593 = vld [vmem:[#allocation10 + $0x9c8] sm:$0xff]
    %v6594 = vld [vmem:[#allocation10 + $0x9d0] sm:$0xff]
    %v6595 = vld [vmem:[#allocation10 + $0x9d8] sm:$0xff]
    %v6596 = vld [vmem:[#allocation10 + $0x9e0] sm:$0xff]
    %v6597 = vld [vmem:[#allocation10 + $0x9e8] sm:$0xff]
    %v6598 = vld [vmem:[#allocation10 + $0x9f0] sm:$0xff]
    %v6599 = vld [vmem:[#allocation10 + $0x9f8] sm:$0xff]
    %v6600 = vld [vmem:[#allocation10 + $0xa00] sm:$0xff]
    %v6601 = vld [vmem:[#allocation10 + $0xa08] sm:$0xff]
    %v6602 = vld [vmem:[#allocation10 + $0xa10] sm:$0xff]
    %v6603 = vld [vmem:[#allocation10 + $0xa18] sm:$0xff]
    %v6604 = vld [vmem:[#allocation10 + $0xa20] sm:$0xff]
    %v6605 = vld [vmem:[#allocation10 + $0xa28] sm:$0xff]
    %v6606 = vld [vmem:[#allocation10 + $0xa30] sm:$0xff]
    %v6607 = vld [vmem:[#allocation10 + $0xa38] sm:$0xff]
    %v6608 = vld [vmem:[#allocation10 + $0xa40] sm:$0xff]
    %v6609 = vld [vmem:[#allocation10 + $0xa48] sm:$0xff]
    %v6610 = vld [vmem:[#allocation10 + $0xa50] sm:$0xff]
    %v6611 = vld [vmem:[#allocation10 + $0xa58] sm:$0xff]
    %v6612 = vld [vmem:[#allocation10 + $0xa60] sm:$0xff]
    %v6613 = vld [vmem:[#allocation10 + $0xa68] sm:$0xff]
    %v6614 = vld [vmem:[#allocation10 + $0xa70] sm:$0xff]
    %v6615 = vld [vmem:[#allocation10 + $0xa78] sm:$0xff]
    %v6616 = vld [vmem:[#allocation10 + $0xa80] sm:$0xff]
    %v6617 = vld [vmem:[#allocation10 + $0xa88] sm:$0xff]
    %v6618 = vld [vmem:[#allocation10 + $0xa90] sm:$0xff]
    %v6619 = vld [vmem:[#allocation10 + $0xa98] sm:$0xff]
    %v6620 = vld [vmem:[#allocation10 + $0xaa0] sm:$0xff]
    %v6621 = vld [vmem:[#allocation10 + $0xaa8] sm:$0xff]
    %v6622 = vld [vmem:[#allocation10 + $0xab0] sm:$0xff]
    %v6623 = vld [vmem:[#allocation10 + $0xab8] sm:$0xff]
    %v6624 = vld [vmem:[#allocation10 + $0xac0] sm:$0xff]
    %v6625 = vld [vmem:[#allocation10 + $0xac8] sm:$0xff]
    %v6626 = vld [vmem:[#allocation10 + $0xad0] sm:$0xff]
    %v6627 = vld [vmem:[#allocation10 + $0xad8] sm:$0xff]
    %v6628 = vld [vmem:[#allocation10 + $0xae0] sm:$0xff]
    %v6629 = vld [vmem:[#allocation10 + $0xae8] sm:$0xff]
    %v6630 = vld [vmem:[#allocation10 + $0xaf0] sm:$0xff]
    %v6631 = vld [vmem:[#allocation10 + $0xaf8] sm:$0xff]
    %v6632 = vld [vmem:[#allocation10 + $0xb00] sm:$0xff]
    %v6633 = vld [vmem:[#allocation10 + $0xb08] sm:$0xff]
    %v6634 = vld [vmem:[#allocation10 + $0xb10] sm:$0xff]
    %v6635 = vld [vmem:[#allocation10 + $0xb18] sm:$0xff]
    %v6636 = vld [vmem:[#allocation10 + $0xb20] sm:$0xff]
    %v6637 = vld [vmem:[#allocation10 + $0xb28] sm:$0xff]
    %v6638 = vld [vmem:[#allocation10 + $0xb30] sm:$0xff]
    %v6639 = vld [vmem:[#allocation10 + $0xb38] sm:$0xff]
    %v6640 = vld [vmem:[#allocation10 + $0xb40] sm:$0xff]
    %v6641 = vld [vmem:[#allocation10 + $0xb48] sm:$0xff]
    %v6642 = vld [vmem:[#allocation10 + $0xb50] sm:$0xff]
    %v6643 = vld [vmem:[#allocation10 + $0xb58] sm:$0xff]
    %v6644 = vld [vmem:[#allocation10 + $0xb60] sm:$0xff]
    %v6645 = vld [vmem:[#allocation10 + $0xb68] sm:$0xff]
    %v6646 = vld [vmem:[#allocation10 + $0xb70] sm:$0xff]
    %v6647 = vld [vmem:[#allocation10 + $0xb78] sm:$0xff]
    %v6648 = vld [vmem:[#allocation10 + $0xb80] sm:$0xff]
    %v6649 = vld [vmem:[#allocation10 + $0xb88] sm:$0xff]
    %v6650 = vld [vmem:[#allocation10 + $0xb90] sm:$0xff]
    %v6651 = vld [vmem:[#allocation10 + $0xb98] sm:$0xff]
    %v6652 = vld [vmem:[#allocation10 + $0xba0] sm:$0xff]
    %v6653 = vld [vmem:[#allocation10 + $0xba8] sm:$0xff]
    %v6654 = vld [vmem:[#allocation10 + $0xbb0] sm:$0xff]
    %v6655 = vld [vmem:[#allocation10 + $0xbb8] sm:$0xff]
    %v6656 = vld [vmem:[#allocation10 + $0xbc0] sm:$0xff]
    %v6657 = vld [vmem:[#allocation10 + $0xbc8] sm:$0xff]
    %v6658 = vld [vmem:[#allocation10 + $0xbd0] sm:$0xff]
    %v6659 = vld [vmem:[#allocation10 + $0xbd8] sm:$0xff]
    %v6660 = vld [vmem:[#allocation10 + $0xbe0] sm:$0xff]
    %v6661 = vld [vmem:[#allocation10 + $0xbe8] sm:$0xff]
    %v6662 = vld [vmem:[#allocation10 + $0xbf0] sm:$0xff]
    %v6663 = vld [vmem:[#allocation10 + $0xbf8] sm:$0xff]
    %v6664 = vld [vmem:[#allocation10 + $0xc00] sm:$0xff]
    %v6665 = vld [vmem:[#allocation10 + $0xc08] sm:$0xff]
    %v6666 = vld [vmem:[#allocation10 + $0xc10] sm:$0xff]
    %v6667 = vld [vmem:[#allocation10 + $0xc18] sm:$0xff]
    %v6668 = vld [vmem:[#allocation10 + $0xc20] sm:$0xff]
    %v6669 = vld [vmem:[#allocation10 + $0xc28] sm:$0xff]
    %v6670 = vld [vmem:[#allocation10 + $0xc30] sm:$0xff]
    %v6671 = vld [vmem:[#allocation10 + $0xc38] sm:$0xff]
    %v6672 = vld [vmem:[#allocation10 + $0xc40] sm:$0xff]
    %v6673 = vld [vmem:[#allocation10 + $0xc48] sm:$0xff]
    %v6674 = vld [vmem:[#allocation10 + $0xc50] sm:$0xff]
    %v6675 = vld [vmem:[#allocation10 + $0xc58] sm:$0xff]
    %v6676 = vld [vmem:[#allocation10 + $0xc60] sm:$0xff]
    %v6677 = vld [vmem:[#allocation10 + $0xc68] sm:$0xff]
    %v6678 = vld [vmem:[#allocation10 + $0xc70] sm:$0xff]
    %v6679 = vld [vmem:[#allocation10 + $0xc78] sm:$0xff]
    %v6680 = vld [vmem:[#allocation10 + $0xc80] sm:$0xff]
    %v6681 = vld [vmem:[#allocation10 + $0xc88] sm:$0xff]
    %v6682 = vld [vmem:[#allocation10 + $0xc90] sm:$0xff]
    %v6683 = vld [vmem:[#allocation10 + $0xc98] sm:$0xff]
    %v6684 = vld [vmem:[#allocation10 + $0xca0] sm:$0xff]
    %v6685 = vld [vmem:[#allocation10 + $0xca8] sm:$0xff]
    %v6686 = vld [vmem:[#allocation10 + $0xcb0] sm:$0xff]
    %v6687 = vld [vmem:[#allocation10 + $0xcb8] sm:$0xff]
    %v6688 = vld [vmem:[#allocation10 + $0xcc0] sm:$0xff]
    %v6689 = vld [vmem:[#allocation10 + $0xcc8] sm:$0xff]
    %v6690 = vld [vmem:[#allocation10 + $0xcd0] sm:$0xff]
    %v6691 = vld [vmem:[#allocation10 + $0xcd8] sm:$0xff]
    %v6692 = vld [vmem:[#allocation10 + $0xce0] sm:$0xff]
    %v6693 = vld [vmem:[#allocation10 + $0xce8] sm:$0xff]
    %v6694 = vld [vmem:[#allocation10 + $0xcf0] sm:$0xff]
    %v6695 = vld [vmem:[#allocation10 + $0xcf8] sm:$0xff]
    %v6696 = vld [vmem:[#allocation10 + $0xd00] sm:$0xff]
    %v6697 = vld [vmem:[#allocation10 + $0xd08] sm:$0xff]
    %v6698 = vld [vmem:[#allocation10 + $0xd10] sm:$0xff]
    %v6699 = vld [vmem:[#allocation10 + $0xd18] sm:$0xff]
    %v6700 = vld [vmem:[#allocation10 + $0xd20] sm:$0xff]
    %v6701 = vld [vmem:[#allocation10 + $0xd28] sm:$0xff]
    %v6702 = vld [vmem:[#allocation10 + $0xd30] sm:$0xff]
    %v6703 = vld [vmem:[#allocation10 + $0xd38] sm:$0xff]
    %v6704 = vld [vmem:[#allocation10 + $0xd40] sm:$0xff]
    %v6705 = vld [vmem:[#allocation10 + $0xd48] sm:$0xff]
    %v6706 = vld [vmem:[#allocation10 + $0xd50] sm:$0xff]
    %v6707 = vld [vmem:[#allocation10 + $0xd58] sm:$0xff]
    %v6708 = vld [vmem:[#allocation10 + $0xd60] sm:$0xff]
    %v6709 = vld [vmem:[#allocation10 + $0xd68] sm:$0xff]
    %v6710 = vld [vmem:[#allocation10 + $0xd70] sm:$0xff]
    %v6711 = vld [vmem:[#allocation10 + $0xd78] sm:$0xff]
    %v6712 = vld [vmem:[#allocation10 + $0xd80] sm:$0xff]
    %v6713 = vld [vmem:[#allocation10 + $0xd88] sm:$0xff]
    %v6714 = vld [vmem:[#allocation10 + $0xd90] sm:$0xff]
    %v6715 = vld [vmem:[#allocation10 + $0xd98] sm:$0xff]
    %v6716 = vld [vmem:[#allocation10 + $0xda0] sm:$0xff]
    %v6717 = vld [vmem:[#allocation10 + $0xda8] sm:$0xff]
    %v6718 = vld [vmem:[#allocation10 + $0xdb0] sm:$0xff]
    %v6719 = vld [vmem:[#allocation10 + $0xdb8] sm:$0xff]
    %v6720 = vld [vmem:[#allocation10 + $0xdc0] sm:$0xff]
    %v6721 = vld [vmem:[#allocation10 + $0xdc8] sm:$0xff]
    %v6722 = vld [vmem:[#allocation10 + $0xdd0] sm:$0xff]
    %v6723 = vld [vmem:[#allocation10 + $0xdd8] sm:$0xff]
    %v6724 = vld [vmem:[#allocation10 + $0xde0] sm:$0xff]
    %v6725 = vld [vmem:[#allocation10 + $0xde8] sm:$0xff]
    %v6726 = vld [vmem:[#allocation10 + $0xdf0] sm:$0xff]
    %v6727 = vld [vmem:[#allocation10 + $0xdf8] sm:$0xff]
    %v6728 = vld [vmem:[#allocation10 + $0xe00] sm:$0xff]
    %v6729 = vld [vmem:[#allocation10 + $0xe08] sm:$0xff]
    %v6730 = vld [vmem:[#allocation10 + $0xe10] sm:$0xff]
    %v6731 = vld [vmem:[#allocation10 + $0xe18] sm:$0xff]
    %v6732 = vld [vmem:[#allocation10 + $0xe20] sm:$0xff]
    %v6733 = vld [vmem:[#allocation10 + $0xe28] sm:$0xff]
    %v6734 = vld [vmem:[#allocation10 + $0xe30] sm:$0xff]
    %v6735 = vld [vmem:[#allocation10 + $0xe38] sm:$0xff]
    %v6736 = vld [vmem:[#allocation10 + $0xe40] sm:$0xff]
    %v6737 = vld [vmem:[#allocation10 + $0xe48] sm:$0xff]
    %v6738 = vld [vmem:[#allocation10 + $0xe50] sm:$0xff]
    %v6739 = vld [vmem:[#allocation10 + $0xe58] sm:$0xff]
    %v6740 = vld [vmem:[#allocation10 + $0xe60] sm:$0xff]
    %v6741 = vld [vmem:[#allocation10 + $0xe68] sm:$0xff]
    %v6742 = vld [vmem:[#allocation10 + $0xe70] sm:$0xff]
    %v6743 = vld [vmem:[#allocation10 + $0xe78] sm:$0xff]
    %v6744 = vld [vmem:[#allocation10 + $0xe80] sm:$0xff]
    %v6745 = vld [vmem:[#allocation10 + $0xe88] sm:$0xff]
    %v6746 = vld [vmem:[#allocation10 + $0xe90] sm:$0xff]
    %v6747 = vld [vmem:[#allocation10 + $0xe98] sm:$0xff]
    %v6748 = vld [vmem:[#allocation10 + $0xea0] sm:$0xff]
    %v6749 = vld [vmem:[#allocation10 + $0xea8] sm:$0xff]
    %v6750 = vld [vmem:[#allocation10 + $0xeb0] sm:$0xff]
    %v6751 = vld [vmem:[#allocation10 + $0xeb8] sm:$0xff]
    %v6752 = vld [vmem:[#allocation10 + $0xec0] sm:$0xff]
    %v6753 = vld [vmem:[#allocation10 + $0xec8] sm:$0xff]
    %v6754 = vld [vmem:[#allocation10 + $0xed0] sm:$0xff]
    %v6755 = vld [vmem:[#allocation10 + $0xed8] sm:$0xff]
    %v6756 = vld [vmem:[#allocation10 + $0xee0] sm:$0xff]
    %v6757 = vld [vmem:[#allocation10 + $0xee8] sm:$0xff]
    %v6758 = vld [vmem:[#allocation10 + $0xef0] sm:$0xff]
    %v6759 = vld [vmem:[#allocation10 + $0xef8] sm:$0xff]
    %v6760 = vld [vmem:[#allocation10 + $0xf00] sm:$0xff]
    %v6761 = vld [vmem:[#allocation10 + $0xf08] sm:$0xff]
    %v6762 = vld [vmem:[#allocation10 + $0xf10] sm:$0xff]
    %v6763 = vld [vmem:[#allocation10 + $0xf18] sm:$0xff]
    %v6764 = vld [vmem:[#allocation10 + $0xf20] sm:$0xff]
    %v6765 = vld [vmem:[#allocation10 + $0xf28] sm:$0xff]
    %v6766 = vld [vmem:[#allocation10 + $0xf30] sm:$0xff]
    %v6767 = vld [vmem:[#allocation10 + $0xf38] sm:$0xff]
    %v6768 = vld [vmem:[#allocation10 + $0xf40] sm:$0xff]
    %v6769 = vld [vmem:[#allocation10 + $0xf48] sm:$0xff]
    %v6770 = vld [vmem:[#allocation10 + $0xf50] sm:$0xff]
    %v6771 = vld [vmem:[#allocation10 + $0xf58] sm:$0xff]
    %v6772 = vld [vmem:[#allocation10 + $0xf60] sm:$0xff]
    %v6773 = vld [vmem:[#allocation10 + $0xf68] sm:$0xff]
    %v6774 = vld [vmem:[#allocation10 + $0xf70] sm:$0xff]
    %v6775 = vld [vmem:[#allocation10 + $0xf78] sm:$0xff]
    %v6776 = vld [vmem:[#allocation10 + $0xf80] sm:$0xff]
    %v6777 = vld [vmem:[#allocation10 + $0xf88] sm:$0xff]
    %v6778 = vld [vmem:[#allocation10 + $0xf90] sm:$0xff]
    %v6779 = vld [vmem:[#allocation10 + $0xf98] sm:$0xff]
    %v6780 = vld [vmem:[#allocation10 + $0xfa0] sm:$0xff]
    %v6781 = vld [vmem:[#allocation10 + $0xfa8] sm:$0xff]
    %v6782 = vld [vmem:[#allocation10 + $0xfb0] sm:$0xff]
    %v6783 = vld [vmem:[#allocation10 + $0xfb8] sm:$0xff]
    %v6784 = vld [vmem:[#allocation10 + $0xfc0] sm:$0xff]
    %v6785 = vld [vmem:[#allocation10 + $0xfc8] sm:$0xff]
    %v6786 = vld [vmem:[#allocation10 + $0xfd0] sm:$0xff]
    %v6787 = vld [vmem:[#allocation10 + $0xfd8] sm:$0xff]
    %v6788 = vld [vmem:[#allocation10 + $0xfe0] sm:$0xff]
    %v6789 = vld [vmem:[#allocation10 + $0xfe8] sm:$0xff]
    %v6790 = vld [vmem:[#allocation10 + $0xff0] sm:$0xff]
    %v6791 = vld [vmem:[#allocation10 + $0xff8] sm:$0xff]
    %v6792 = vld [vmem:[#allocation10 + $0x1000] sm:$0xff]
    %v6793 = vld [vmem:[#allocation10 + $0x1008] sm:$0xff]
    %v6794 = vld [vmem:[#allocation10 + $0x1010] sm:$0xff]
    %v6795 = vld [vmem:[#allocation10 + $0x1018] sm:$0xff]
    %v6796 = vld [vmem:[#allocation10 + $0x1020] sm:$0xff]
    %v6797 = vld [vmem:[#allocation10 + $0x1028] sm:$0xff]
    %v6798 = vld [vmem:[#allocation10 + $0x1030] sm:$0xff]
    %v6799 = vld [vmem:[#allocation10 + $0x1038] sm:$0xff]
    %v6800 = vld [vmem:[#allocation10 + $0x1040] sm:$0xff]
    %v6801 = vld [vmem:[#allocation10 + $0x1048] sm:$0xff]
    %v6802 = vld [vmem:[#allocation10 + $0x1050] sm:$0xff]
    %v6803 = vld [vmem:[#allocation10 + $0x1058] sm:$0xff]
    %v6804 = vld [vmem:[#allocation10 + $0x1060] sm:$0xff]
    %v6805 = vld [vmem:[#allocation10 + $0x1068] sm:$0xff]
    %v6806 = vld [vmem:[#allocation10 + $0x1070] sm:$0xff]
    %v6807 = vld [vmem:[#allocation10 + $0x1078] sm:$0xff]
    %v6808 = vld [vmem:[#allocation10 + $0x1080] sm:$0xff]
    %v6809 = vld [vmem:[#allocation10 + $0x1088] sm:$0xff]
    %v6810 = vld [vmem:[#allocation10 + $0x1090] sm:$0xff]
    %v6811 = vld [vmem:[#allocation10 + $0x1098] sm:$0xff]
    %v6812 = vld [vmem:[#allocation10 + $0x10a0] sm:$0xff]
    %v6813 = vld [vmem:[#allocation10 + $0x10a8] sm:$0xff]
    %v6814 = vld [vmem:[#allocation10 + $0x10b0] sm:$0xff]
    %v6815 = vld [vmem:[#allocation10 + $0x10b8] sm:$0xff]
    %v6816 = vld [vmem:[#allocation10 + $0x10c0] sm:$0xff]
    %v6817 = vld [vmem:[#allocation10 + $0x10c8] sm:$0xff]
    %v6818 = vld [vmem:[#allocation10 + $0x10d0] sm:$0xff]
    %v6819 = vld [vmem:[#allocation10 + $0x10d8] sm:$0xff]
    %v6820 = vld [vmem:[#allocation10 + $0x10e0] sm:$0xff]
    %v6821 = vld [vmem:[#allocation10 + $0x10e8] sm:$0xff]
    %v6822 = vld [vmem:[#allocation10 + $0x10f0] sm:$0xff]
    %v6823 = vld [vmem:[#allocation10 + $0x10f8] sm:$0xff]
    %v6824 = vld [vmem:[#allocation10 + $0x1100] sm:$0xff]
    %v6825 = vld [vmem:[#allocation10 + $0x1108] sm:$0xff]
    %v6826 = vld [vmem:[#allocation10 + $0x1110] sm:$0xff]
    %v6827 = vld [vmem:[#allocation10 + $0x1118] sm:$0xff]
    %v6828 = vld [vmem:[#allocation10 + $0x1120] sm:$0xff]
    %v6829 = vld [vmem:[#allocation10 + $0x1128] sm:$0xff]
    %v6830 = vld [vmem:[#allocation10 + $0x1130] sm:$0xff]
    %v6831 = vld [vmem:[#allocation10 + $0x1138] sm:$0xff]
    %v6832 = vld [vmem:[#allocation10 + $0x1140] sm:$0xff]
    %v6833 = vld [vmem:[#allocation10 + $0x1148] sm:$0xff]
    %v6834 = vld [vmem:[#allocation10 + $0x1150] sm:$0xff]
    %v6835 = vld [vmem:[#allocation10 + $0x1158] sm:$0xff]
    %v6836 = vld [vmem:[#allocation10 + $0x1160] sm:$0xff]
    %v6837 = vld [vmem:[#allocation10 + $0x1168] sm:$0xff]
    %v6838 = vld [vmem:[#allocation10 + $0x1170] sm:$0xff]
    %v6839 = vld [vmem:[#allocation10 + $0x1178] sm:$0xff]
    %v6840 = vld [vmem:[#allocation10 + $0x1180] sm:$0xff]
    %v6841 = vld [vmem:[#allocation10 + $0x1188] sm:$0xff]
    %v6842 = vld [vmem:[#allocation10 + $0x1190] sm:$0xff]
    %v6843 = vld [vmem:[#allocation10 + $0x1198] sm:$0xff]
    %v6844 = vld [vmem:[#allocation10 + $0x11a0] sm:$0xff]
    %v6845 = vld [vmem:[#allocation10 + $0x11a8] sm:$0xff]
    %v6846 = vld [vmem:[#allocation10 + $0x11b0] sm:$0xff]
    %v6847 = vld [vmem:[#allocation10 + $0x11b8] sm:$0xff]
    %v6848 = vld [vmem:[#allocation10 + $0x11c0] sm:$0xff]
    %v6849 = vld [vmem:[#allocation10 + $0x11c8] sm:$0xff]
    %v6850 = vld [vmem:[#allocation10 + $0x11d0] sm:$0xff]
    %v6851 = vld [vmem:[#allocation10 + $0x11d8] sm:$0xff]
    %v6852 = vld [vmem:[#allocation10 + $0x11e0] sm:$0xff]
    %v6853 = vld [vmem:[#allocation10 + $0x11e8] sm:$0xff]
    %v6854 = vld [vmem:[#allocation10 + $0x11f0] sm:$0xff]
    %v6855 = vld [vmem:[#allocation10 + $0x11f8] sm:$0xff]
    %v6856 = vld [vmem:[#allocation10 + $0x1200] sm:$0xff]
    %v6857 = vld [vmem:[#allocation10 + $0x1208] sm:$0xff]
    %v6858 = vld [vmem:[#allocation10 + $0x1210] sm:$0xff]
    %v6859 = vld [vmem:[#allocation10 + $0x1218] sm:$0xff]
    %v6860 = vld [vmem:[#allocation10 + $0x1220] sm:$0xff]
    %v6861 = vld [vmem:[#allocation10 + $0x1228] sm:$0xff]
    %v6862 = vld [vmem:[#allocation10 + $0x1230] sm:$0xff]
    %v6863 = vld [vmem:[#allocation10 + $0x1238] sm:$0xff]
    %v6864 = vld [vmem:[#allocation10 + $0x1240] sm:$0xff]
    %v6865 = vld [vmem:[#allocation10 + $0x1248] sm:$0xff]
    %v6866 = vld [vmem:[#allocation10 + $0x1250] sm:$0xff]
    %v6867 = vld [vmem:[#allocation10 + $0x1258] sm:$0xff]
    %v6868 = vld [vmem:[#allocation10 + $0x1260] sm:$0xff]
    %v6869 = vld [vmem:[#allocation10 + $0x1268] sm:$0xff]
    %v6870 = vld [vmem:[#allocation10 + $0x1270] sm:$0xff]
    %v6871 = vld [vmem:[#allocation10 + $0x1278] sm:$0xff]
    %v6872 = vld [vmem:[#allocation10 + $0x1280] sm:$0xff]
    %v6873 = vld [vmem:[#allocation10 + $0x1288] sm:$0xff]
    %v6874 = vld [vmem:[#allocation10 + $0x1290] sm:$0xff]
    %v6875 = vld [vmem:[#allocation10 + $0x1298] sm:$0xff]
    %v6876 = vld [vmem:[#allocation10 + $0x12a0] sm:$0xff]
    %v6877 = vld [vmem:[#allocation10 + $0x12a8] sm:$0xff]
    %v6878 = vld [vmem:[#allocation10 + $0x12b0] sm:$0xff]
    %v6879 = vld [vmem:[#allocation10 + $0x12b8] sm:$0xff]
    %v6880 = vld [vmem:[#allocation10 + $0x12c0] sm:$0xff]
    %v6881 = vld [vmem:[#allocation10 + $0x12c8] sm:$0xff]
    %v6882 = vld [vmem:[#allocation10 + $0x12d0] sm:$0xff]
    %v6883 = vld [vmem:[#allocation10 + $0x12d8] sm:$0xff]
    %v6884 = vld [vmem:[#allocation10 + $0x12e0] sm:$0xff]
    %v6885 = vld [vmem:[#allocation10 + $0x12e8] sm:$0xff]
    %v6886 = vld [vmem:[#allocation10 + $0x12f0] sm:$0xff]
    %v6887 = vld [vmem:[#allocation10 + $0x12f8] sm:$0xff]
    %v6888 = vld [vmem:[#allocation10 + $0x1300] sm:$0xff]
    %v6889 = vld [vmem:[#allocation10 + $0x1308] sm:$0xff]
    %v6890 = vld [vmem:[#allocation10 + $0x1310] sm:$0xff]
    %v6891 = vld [vmem:[#allocation10 + $0x1318] sm:$0xff]
    %v6892 = vld [vmem:[#allocation10 + $0x1320] sm:$0xff]
    %v6893 = vld [vmem:[#allocation10 + $0x1328] sm:$0xff]
    %v6894 = vld [vmem:[#allocation10 + $0x1330] sm:$0xff]
    %v6895 = vld [vmem:[#allocation10 + $0x1338] sm:$0xff]
    %v6896 = vld [vmem:[#allocation10 + $0x1340] sm:$0xff]
    %v6897 = vld [vmem:[#allocation10 + $0x1348] sm:$0xff]
    %v6898 = vld [vmem:[#allocation10 + $0x1350] sm:$0xff]
    %v6899 = vld [vmem:[#allocation10 + $0x1358] sm:$0xff]
    %v6900 = vld [vmem:[#allocation10 + $0x1360] sm:$0xff]
    %v6901 = vld [vmem:[#allocation10 + $0x1368] sm:$0xff]
    %v6902 = vld [vmem:[#allocation10 + $0x1370] sm:$0xff]
    %v6903 = vld [vmem:[#allocation10 + $0x1378] sm:$0xff]
    %v6904 = vld [vmem:[#allocation10 + $0x1380] sm:$0xff]
    %v6905 = vld [vmem:[#allocation10 + $0x1388] sm:$0xff]
    %v6906 = vld [vmem:[#allocation10 + $0x1390] sm:$0xff]
    %v6907 = vld [vmem:[#allocation10 + $0x1398] sm:$0xff]
    %v6908 = vld [vmem:[#allocation10 + $0x13a0] sm:$0xff]
    %v6909 = vld [vmem:[#allocation10 + $0x13a8] sm:$0xff]
    %v6910 = vld [vmem:[#allocation10 + $0x13b0] sm:$0xff]
    %v6911 = vld [vmem:[#allocation10 + $0x13b8] sm:$0xff]
    %v6912 = vld [vmem:[#allocation10 + $0x13c0] sm:$0xff]
    %v6913 = vld [vmem:[#allocation10 + $0x13c8] sm:$0xff]
    %v6914 = vld [vmem:[#allocation10 + $0x13d0] sm:$0xff]
    %v6915 = vld [vmem:[#allocation10 + $0x13d8] sm:$0xff]
    %v6916 = vld [vmem:[#allocation10 + $0x13e0] sm:$0xff]
    %v6917 = vld [vmem:[#allocation10 + $0x13e8] sm:$0xff]
    %v6918 = vld [vmem:[#allocation10 + $0x13f0] sm:$0xff]
    %v6919 = vld [vmem:[#allocation10 + $0x13f8] sm:$0xff]
    %v6920 = vld [vmem:[#allocation10 + $0x1400] sm:$0xff]
    %v6921 = vld [vmem:[#allocation10 + $0x1408] sm:$0xff]
    %v6922 = vld [vmem:[#allocation10 + $0x1410] sm:$0xff]
    %v6923 = vld [vmem:[#allocation10 + $0x1418] sm:$0xff]
    %v6924 = vld [vmem:[#allocation10 + $0x1420] sm:$0xff]
    %v6925 = vld [vmem:[#allocation10 + $0x1428] sm:$0xff]
    %v6926 = vld [vmem:[#allocation10 + $0x1430] sm:$0xff]
    %v6927 = vld [vmem:[#allocation10 + $0x1438] sm:$0xff]
    %v6928 = vld [vmem:[#allocation10 + $0x1440] sm:$0xff]
    %v6929 = vld [vmem:[#allocation10 + $0x1448] sm:$0xff]
    %v6930 = vld [vmem:[#allocation10 + $0x1450] sm:$0xff]
    %v6931 = vld [vmem:[#allocation10 + $0x1458] sm:$0xff]
    %v6932 = vld [vmem:[#allocation10 + $0x1460] sm:$0xff]
    %v6933 = vld [vmem:[#allocation10 + $0x1468] sm:$0xff]
    %v6934 = vld [vmem:[#allocation10 + $0x1470] sm:$0xff]
    %v6935 = vld [vmem:[#allocation10 + $0x1478] sm:$0xff]
    %v6936 = vld [vmem:[#allocation10 + $0x1480] sm:$0xff]
    %v6937 = vld [vmem:[#allocation10 + $0x1488] sm:$0xff]
    %v6938 = vld [vmem:[#allocation10 + $0x1490] sm:$0xff]
    %v6939 = vld [vmem:[#allocation10 + $0x1498] sm:$0xff]
    %v6940 = vld [vmem:[#allocation10 + $0x14a0] sm:$0xff]
    %v6941 = vld [vmem:[#allocation10 + $0x14a8] sm:$0xff]
    %v6942 = vld [vmem:[#allocation10 + $0x14b0] sm:$0xff]
    %v6943 = vld [vmem:[#allocation10 + $0x14b8] sm:$0xff]
    %v6944 = vld [vmem:[#allocation10 + $0x14c0] sm:$0xff]
    %v6945 = vld [vmem:[#allocation10 + $0x14c8] sm:$0xff]
    %v6946 = vld [vmem:[#allocation10 + $0x14d0] sm:$0xff]
    %v6947 = vld [vmem:[#allocation10 + $0x14d8] sm:$0xff]
    %v6948 = vld [vmem:[#allocation10 + $0x14e0] sm:$0xff]
    %v6949 = vld [vmem:[#allocation10 + $0x14e8] sm:$0xff]
    %v6950 = vld [vmem:[#allocation10 + $0x14f0] sm:$0xff]
    %v6951 = vld [vmem:[#allocation10 + $0x14f8] sm:$0xff]
    %v6952 = vld [vmem:[#allocation10 + $0x1500] sm:$0xff]
    %v6953 = vld [vmem:[#allocation10 + $0x1508] sm:$0xff]
    %v6954 = vld [vmem:[#allocation10 + $0x1510] sm:$0xff]
    %v6955 = vld [vmem:[#allocation10 + $0x1518] sm:$0xff]
    %v6956 = vld [vmem:[#allocation10 + $0x1520] sm:$0xff]
    %v6957 = vld [vmem:[#allocation10 + $0x1528] sm:$0xff]
    %v6958 = vld [vmem:[#allocation10 + $0x1530] sm:$0xff]
    %v6959 = vld [vmem:[#allocation10 + $0x1538] sm:$0xff]
    %v6960 = vld [vmem:[#allocation10 + $0x1540] sm:$0xff]
    %v6961 = vld [vmem:[#allocation10 + $0x1548] sm:$0xff]
    %v6962 = vld [vmem:[#allocation10 + $0x1550] sm:$0xff]
    %v6963 = vld [vmem:[#allocation10 + $0x1558] sm:$0xff]
    %v6964 = vld [vmem:[#allocation10 + $0x1560] sm:$0xff]
    %v6965 = vld [vmem:[#allocation10 + $0x1568] sm:$0xff]
    %v6966 = vld [vmem:[#allocation10 + $0x1570] sm:$0xff]
    %v6967 = vld [vmem:[#allocation10 + $0x1578] sm:$0xff]
    %v6968 = vld [vmem:[#allocation10 + $0x1580] sm:$0xff]
    %v6969 = vld [vmem:[#allocation10 + $0x1588] sm:$0xff]
    %v6970 = vld [vmem:[#allocation10 + $0x1590] sm:$0xff]
    %v6971 = vld [vmem:[#allocation10 + $0x1598] sm:$0xff]
    %v6972 = vld [vmem:[#allocation10 + $0x15a0] sm:$0xff]
    %v6973 = vld [vmem:[#allocation10 + $0x15a8] sm:$0xff]
    %v6974 = vld [vmem:[#allocation10 + $0x15b0] sm:$0xff]
    %v6975 = vld [vmem:[#allocation10 + $0x15b8] sm:$0xff]
    %v6976 = vld [vmem:[#allocation10 + $0x15c0] sm:$0xff]
    %v6977 = vld [vmem:[#allocation10 + $0x15c8] sm:$0xff]
    %v6978 = vld [vmem:[#allocation10 + $0x15d0] sm:$0xff]
    %v6979 = vld [vmem:[#allocation10 + $0x15d8] sm:$0xff]
    %v6980 = vld [vmem:[#allocation10 + $0x15e0] sm:$0xff]
    %v6981 = vld [vmem:[#allocation10 + $0x15e8] sm:$0xff]
    %v6982 = vld [vmem:[#allocation10 + $0x15f0] sm:$0xff]
    %v6983 = vld [vmem:[#allocation10 + $0x15f8] sm:$0xff]
    %v6984 = vld [vmem:[#allocation10 + $0x1600] sm:$0xff]
    %v6985 = vld [vmem:[#allocation10 + $0x1608] sm:$0xff]
    %v6986 = vld [vmem:[#allocation10 + $0x1610] sm:$0xff]
    %v6987 = vld [vmem:[#allocation10 + $0x1618] sm:$0xff]
    %v6988 = vld [vmem:[#allocation10 + $0x1620] sm:$0xff]
    %v6989 = vld [vmem:[#allocation10 + $0x1628] sm:$0xff]
    %v6990 = vld [vmem:[#allocation10 + $0x1630] sm:$0xff]
    %v6991 = vld [vmem:[#allocation10 + $0x1638] sm:$0xff]
    %v6992 = vld [vmem:[#allocation10 + $0x1640] sm:$0xff]
    %v6993 = vld [vmem:[#allocation10 + $0x1648] sm:$0xff]
    %v6994 = vld [vmem:[#allocation10 + $0x1650] sm:$0xff]
    %v6995 = vld [vmem:[#allocation10 + $0x1658] sm:$0xff]
    %v6996 = vld [vmem:[#allocation10 + $0x1660] sm:$0xff]
    %v6997 = vld [vmem:[#allocation10 + $0x1668] sm:$0xff]
    %v6998 = vld [vmem:[#allocation10 + $0x1670] sm:$0xff]
    %v6999 = vld [vmem:[#allocation10 + $0x1678] sm:$0xff]
    %v7000 = vld [vmem:[#allocation10 + $0x1680] sm:$0xff]
    %v7001 = vld [vmem:[#allocation10 + $0x1688] sm:$0xff]
    %v7002 = vld [vmem:[#allocation10 + $0x1690] sm:$0xff]
    %v7003 = vld [vmem:[#allocation10 + $0x1698] sm:$0xff]
    %v7004 = vld [vmem:[#allocation10 + $0x16a0] sm:$0xff]
    %v7005 = vld [vmem:[#allocation10 + $0x16a8] sm:$0xff]
    %v7006 = vld [vmem:[#allocation10 + $0x16b0] sm:$0xff]
    %v7007 = vld [vmem:[#allocation10 + $0x16b8] sm:$0xff]
    %v7008 = vld [vmem:[#allocation10 + $0x16c0] sm:$0xff]
    %v7009 = vld [vmem:[#allocation10 + $0x16c8] sm:$0xff]
    %v7010 = vld [vmem:[#allocation10 + $0x16d0] sm:$0xff]
    %v7011 = vld [vmem:[#allocation10 + $0x16d8] sm:$0xff]
    %v7012 = vld [vmem:[#allocation10 + $0x16e0] sm:$0xff]
    %v7013 = vld [vmem:[#allocation10 + $0x16e8] sm:$0xff]
    %v7014 = vld [vmem:[#allocation10 + $0x16f0] sm:$0xff]
    %v7015 = vld [vmem:[#allocation10 + $0x16f8] sm:$0xff]
    %v7016 = vld [vmem:[#allocation10 + $0x1700] sm:$0xff]
    %v7017 = vld [vmem:[#allocation10 + $0x1708] sm:$0xff]
    %v7018 = vld [vmem:[#allocation10 + $0x1710] sm:$0xff]
    %v7019 = vld [vmem:[#allocation10 + $0x1718] sm:$0xff]
    %v7020 = vld [vmem:[#allocation10 + $0x1720] sm:$0xff]
    %v7021 = vld [vmem:[#allocation10 + $0x1728] sm:$0xff]
    %v7022 = vld [vmem:[#allocation10 + $0x1730] sm:$0xff]
    %v7023 = vld [vmem:[#allocation10 + $0x1738] sm:$0xff]
    %v7024 = vld [vmem:[#allocation10 + $0x1740] sm:$0xff]
    %v7025 = vld [vmem:[#allocation10 + $0x1748] sm:$0xff]
    %v7026 = vld [vmem:[#allocation10 + $0x1750] sm:$0xff]
    %v7027 = vld [vmem:[#allocation10 + $0x1758] sm:$0xff]
    %v7028 = vld [vmem:[#allocation10 + $0x1760] sm:$0xff]
    %v7029 = vld [vmem:[#allocation10 + $0x1768] sm:$0xff]
    %v7030 = vld [vmem:[#allocation10 + $0x1770] sm:$0xff]
    %v7031 = vld [vmem:[#allocation10 + $0x1778] sm:$0xff]
    %v7032 = vld [vmem:[#allocation10 + $0x1780] sm:$0xff]
    %v7033 = vld [vmem:[#allocation10 + $0x1788] sm:$0xff]
    %v7034 = vld [vmem:[#allocation10 + $0x1790] sm:$0xff]
    %v7035 = vld [vmem:[#allocation10 + $0x1798] sm:$0xff]
    %v7036 = vld [vmem:[#allocation10 + $0x17a0] sm:$0xff]
    %v7037 = vld [vmem:[#allocation10 + $0x17a8] sm:$0xff]
    %v7038 = vld [vmem:[#allocation10 + $0x17b0] sm:$0xff]
    %v7039 = vld [vmem:[#allocation10 + $0x17b8] sm:$0xff]
    %v7040 = vld [vmem:[#allocation10 + $0x17c0] sm:$0xff]
    %v7041 = vld [vmem:[#allocation10 + $0x17c8] sm:$0xff]
    %v7042 = vld [vmem:[#allocation10 + $0x17d0] sm:$0xff]
    %v7043 = vld [vmem:[#allocation10 + $0x17d8] sm:$0xff]
    %v7044 = vld [vmem:[#allocation10 + $0x17e0] sm:$0xff]
    %v7045 = vld [vmem:[#allocation10 + $0x17e8] sm:$0xff]
    %v7046 = vld [vmem:[#allocation10 + $0x17f0] sm:$0xff]
    %v7047 = vld [vmem:[#allocation10 + $0x17f8] sm:$0xff]
    %v7048 = vld [vmem:[#allocation10 + $0x1800] sm:$0xff]
    %v7049 = vld [vmem:[#allocation10 + $0x1808] sm:$0xff]
    %v7050 = vld [vmem:[#allocation10 + $0x1810] sm:$0xff]
    %v7051 = vld [vmem:[#allocation10 + $0x1818] sm:$0xff]
    %v7052 = vld [vmem:[#allocation10 + $0x1820] sm:$0xff]
    %v7053 = vld [vmem:[#allocation10 + $0x1828] sm:$0xff]
    %v7054 = vld [vmem:[#allocation10 + $0x1830] sm:$0xff]
    %v7055 = vld [vmem:[#allocation10 + $0x1838] sm:$0xff]
    %v7056 = vld [vmem:[#allocation10 + $0x1840] sm:$0xff]
    %v7057 = vld [vmem:[#allocation10 + $0x1848] sm:$0xff]
    %v7058 = vld [vmem:[#allocation10 + $0x1850] sm:$0xff]
    %v7059 = vld [vmem:[#allocation10 + $0x1858] sm:$0xff]
    %v7060 = vld [vmem:[#allocation10 + $0x1860] sm:$0xff]
    %v7061 = vld [vmem:[#allocation10 + $0x1868] sm:$0xff]
    %v7062 = vld [vmem:[#allocation10 + $0x1870] sm:$0xff]
    %v7063 = vld [vmem:[#allocation10 + $0x1878] sm:$0xff]
    %v7064 = vld [vmem:[#allocation10 + $0x1880] sm:$0xff]
    %v7065 = vld [vmem:[#allocation10 + $0x1888] sm:$0xff]
    %v7066 = vld [vmem:[#allocation10 + $0x1890] sm:$0xff]
    %v7067 = vld [vmem:[#allocation10 + $0x1898] sm:$0xff]
    %v7068 = vld [vmem:[#allocation10 + $0x18a0] sm:$0xff]
    %v7069 = vld [vmem:[#allocation10 + $0x18a8] sm:$0xff]
    %v7070 = vld [vmem:[#allocation10 + $0x18b0] sm:$0xff]
    %v7071 = vld [vmem:[#allocation10 + $0x18b8] sm:$0xff]
    %v7072 = vld [vmem:[#allocation10 + $0x18c0] sm:$0xff]
    %v7073 = vld [vmem:[#allocation10 + $0x18c8] sm:$0xff]
    %v7074 = vld [vmem:[#allocation10 + $0x18d0] sm:$0xff]
    %v7075 = vld [vmem:[#allocation10 + $0x18d8] sm:$0xff]
    %v7076 = vld [vmem:[#allocation10 + $0x18e0] sm:$0xff]
    %v7077 = vld [vmem:[#allocation10 + $0x18e8] sm:$0xff]
    %v7078 = vld [vmem:[#allocation10 + $0x18f0] sm:$0xff]
    %v7079 = vld [vmem:[#allocation10 + $0x18f8] sm:$0xff]
    %v7080 = vld [vmem:[#allocation10 + $0x1900] sm:$0xff]
    %v7081 = vld [vmem:[#allocation10 + $0x1908] sm:$0xff]
    %v7082 = vld [vmem:[#allocation10 + $0x1910] sm:$0xff]
    %v7083 = vld [vmem:[#allocation10 + $0x1918] sm:$0xff]
    %v7084 = vld [vmem:[#allocation10 + $0x1920] sm:$0xff]
    %v7085 = vld [vmem:[#allocation10 + $0x1928] sm:$0xff]
    %v7086 = vld [vmem:[#allocation10 + $0x1930] sm:$0xff]
    %v7087 = vld [vmem:[#allocation10 + $0x1938] sm:$0xff]
    %v7088 = vld [vmem:[#allocation10 + $0x1940] sm:$0xff]
    %v7089 = vld [vmem:[#allocation10 + $0x1948] sm:$0xff]
    %v7090 = vld [vmem:[#allocation10 + $0x1950] sm:$0xff]
    %v7091 = vld [vmem:[#allocation10 + $0x1958] sm:$0xff]
    %v7092 = vld [vmem:[#allocation10 + $0x1960] sm:$0xff]
    %v7093 = vld [vmem:[#allocation10 + $0x1968] sm:$0xff]
    %v7094 = vld [vmem:[#allocation10 + $0x1970] sm:$0xff]
    %v7095 = vld [vmem:[#allocation10 + $0x1978] sm:$0xff]
    %v7096 = vld [vmem:[#allocation10 + $0x1980] sm:$0xff]
    %v7097 = vld [vmem:[#allocation10 + $0x1988] sm:$0xff]
    %v7098 = vld [vmem:[#allocation10 + $0x1990] sm:$0xff]
    %v7099 = vld [vmem:[#allocation10 + $0x1998] sm:$0xff]
    %v7100 = vld [vmem:[#allocation10 + $0x19a0] sm:$0xff]
    %v7101 = vld [vmem:[#allocation10 + $0x19a8] sm:$0xff]
    %v7102 = vld [vmem:[#allocation10 + $0x19b0] sm:$0xff]
    %v7103 = vld [vmem:[#allocation10 + $0x19b8] sm:$0xff]
    %v7104 = vld [vmem:[#allocation10 + $0x19c0] sm:$0xff]
    %v7105 = vld [vmem:[#allocation10 + $0x19c8] sm:$0xff]
    %v7106 = vld [vmem:[#allocation10 + $0x19d0] sm:$0xff]
    %v7107 = vld [vmem:[#allocation10 + $0x19d8] sm:$0xff]
    %v7108 = vld [vmem:[#allocation10 + $0x19e0] sm:$0xff]
    %v7109 = vld [vmem:[#allocation10 + $0x19e8] sm:$0xff]
    %v7110 = vld [vmem:[#allocation10 + $0x19f0] sm:$0xff]
    %v7111 = vld [vmem:[#allocation10 + $0x19f8] sm:$0xff]
    %v7112 = vld [vmem:[#allocation10 + $0x1a00] sm:$0xff]
    %v7113 = vld [vmem:[#allocation10 + $0x1a08] sm:$0xff]
    %v7114 = vld [vmem:[#allocation10 + $0x1a10] sm:$0xff]
    %v7115 = vld [vmem:[#allocation10 + $0x1a18] sm:$0xff]
    %v7116 = vld [vmem:[#allocation10 + $0x1a20] sm:$0xff]
    %v7117 = vld [vmem:[#allocation10 + $0x1a28] sm:$0xff]
    %v7118 = vld [vmem:[#allocation10 + $0x1a30] sm:$0xff]
    %v7119 = vld [vmem:[#allocation10 + $0x1a38] sm:$0xff]
    %v7120 = vld [vmem:[#allocation10 + $0x1a40] sm:$0xff]
    %v7121 = vld [vmem:[#allocation10 + $0x1a48] sm:$0xff]
    %v7122 = vld [vmem:[#allocation10 + $0x1a50] sm:$0xff]
    %v7123 = vld [vmem:[#allocation10 + $0x1a58] sm:$0xff]
    %v7124 = vld [vmem:[#allocation10 + $0x1a60] sm:$0xff]
    %v7125 = vld [vmem:[#allocation10 + $0x1a68] sm:$0xff]
    %v7126 = vld [vmem:[#allocation10 + $0x1a70] sm:$0xff]
    %v7127 = vld [vmem:[#allocation10 + $0x1a78] sm:$0xff]
    %v7128 = vld [vmem:[#allocation10 + $0x1a80] sm:$0xff]
    %v7129 = vld [vmem:[#allocation10 + $0x1a88] sm:$0xff]
    %v7130 = vld [vmem:[#allocation10 + $0x1a90] sm:$0xff]
    %v7131 = vld [vmem:[#allocation10 + $0x1a98] sm:$0xff]
    %v7132 = vld [vmem:[#allocation10 + $0x1aa0] sm:$0xff]
    %v7133 = vld [vmem:[#allocation10 + $0x1aa8] sm:$0xff]
    %v7134 = vld [vmem:[#allocation10 + $0x1ab0] sm:$0xff]
    %v7135 = vld [vmem:[#allocation10 + $0x1ab8] sm:$0xff]
    %v7136 = vld [vmem:[#allocation10 + $0x1ac0] sm:$0xff]
    %v7137 = vld [vmem:[#allocation10 + $0x1ac8] sm:$0xff]
    %v7138 = vld [vmem:[#allocation10 + $0x1ad0] sm:$0xff]
    %v7139 = vld [vmem:[#allocation10 + $0x1ad8] sm:$0xff]
    %v7140 = vld [vmem:[#allocation10 + $0x1ae0] sm:$0xff]
    %v7141 = vld [vmem:[#allocation10 + $0x1ae8] sm:$0xff]
    %v7142 = vld [vmem:[#allocation10 + $0x1af0] sm:$0xff]
    %v7143 = vld [vmem:[#allocation10 + $0x1af8] sm:$0xff]
    %v7144 = vld [vmem:[#allocation11] sm:$0xff]
    %v7145 = vld [vmem:[#allocation11 + $0x8] sm:$0xff]
    %v7146 = vld [vmem:[#allocation11 + $0x10] sm:$0x3]
    %v7150 = vlaneseq
    %v7151 = vshrl.u32 %v7150, 7
    %v7152 = vsub.s32 0, %v7151
    %v7153 = vrot.slane %v7144, %v7152
    %v7154 = vlaneseq
    %v7155 = vshrl.u32 %v7154, 7
    %v7156 = vsub.s32 1, %v7155
    %v7157 = vrot.slane %v7144, %v7156
    %v7158 = vlaneseq
    %v7159 = vshrl.u32 %v7158, 7
    %v7160 = vsub.s32 2, %v7159
    %v7161 = vrot.slane %v7144, %v7160
    %v7162 = vlaneseq
    %v7163 = vshrl.u32 %v7162, 7
    %v7164 = vsub.s32 3, %v7163
    %v7165 = vrot.slane %v7144, %v7164
    %v7166 = vlaneseq
    %v7167 = vshrl.u32 %v7166, 7
    %v7168 = vsub.s32 4, %v7167
    %v7169 = vrot.slane %v7144, %v7168
    %v7170 = vlaneseq
    %v7171 = vshrl.u32 %v7170, 7
    %v7172 = vsub.s32 5, %v7171
    %v7173 = vrot.slane %v7144, %v7172
    %v7174 = vlaneseq
    %v7175 = vshrl.u32 %v7174, 7
    %v7176 = vsub.s32 6, %v7175
    %v7177 = vrot.slane %v7144, %v7176
    %v7178 = vlaneseq
    %v7179 = vshrl.u32 %v7178, 7
    %v7180 = vsub.s32 7, %v7179
    %v7181 = vrot.slane %v7144, %v7180
    %v7182 = vlaneseq
    %v7183 = vshrl.u32 %v7182, 7
    %v7184 = vsub.s32 0, %v7183
    %v7185 = vrot.slane %v7145, %v7184
    %v7186 = vlaneseq
    %v7187 = vshrl.u32 %v7186, 7
    %v7188 = vsub.s32 1, %v7187
    %v7189 = vrot.slane %v7145, %v7188
    %v7190 = vlaneseq
    %v7191 = vshrl.u32 %v7190, 7
    %v7192 = vsub.s32 2, %v7191
    %v7193 = vrot.slane %v7145, %v7192
    %v7194 = vlaneseq
    %v7195 = vshrl.u32 %v7194, 7
    %v7196 = vsub.s32 3, %v7195
    %v7197 = vrot.slane %v7145, %v7196
    %v7198 = vlaneseq
    %v7199 = vshrl.u32 %v7198, 7
    %v7200 = vsub.s32 4, %v7199
    %v7201 = vrot.slane %v7145, %v7200
    %v7202 = vlaneseq
    %v7203 = vshrl.u32 %v7202, 7
    %v7204 = vsub.s32 5, %v7203
    %v7205 = vrot.slane %v7145, %v7204
    %v7206 = vlaneseq
    %v7207 = vshrl.u32 %v7206, 7
    %v7208 = vsub.s32 6, %v7207
    %v7209 = vrot.slane %v7145, %v7208
    %v7210 = vlaneseq
    %v7211 = vshrl.u32 %v7210, 7
    %v7212 = vsub.s32 7, %v7211
    %v7213 = vrot.slane %v7145, %v7212
    %v7214 = vlaneseq
    %v7215 = vshrl.u32 %v7214, 7
    %v7216 = vsub.s32 0, %v7215
    %v7217 = vrot.slane %v7146, %v7216
    %v7218 = vlaneseq
    %v7219 = vshrl.u32 %v7218, 7
    %v7220 = vsub.s32 1, %v7219
    %v7221 = vrot.slane %v7146, %v7220
    %v8104 = vunpack.c.l.b16 %v6280
    %v8105 = vunpack.c.h.b16 %v6280
    %v8106 = vunpack.c.l.b16 %v6281
    %v8107 = vunpack.c.h.b16 %v6281
    %v8108 = vunpack.c.l.b16 %v6282
    %v8109 = vunpack.c.h.b16 %v6282
    %v8110 = vunpack.c.l.b16 %v6283
    %v8111 = vunpack.c.h.b16 %v6283
    %v8112 = vunpack.c.l.b16 %v6284
    %v8113 = vunpack.c.h.b16 %v6284
    %v8114 = vunpack.c.l.b16 %v6285
    %v8115 = vunpack.c.h.b16 %v6285
    %v8116 = vunpack.c.l.b16 %v6286
    %v8117 = vunpack.c.h.b16 %v6286
    %v8118 = vunpack.c.l.b16 %v6287
    %v8119 = vunpack.c.h.b16 %v6287
    %v8120 = vunpack.c.l.b16 %v6288
    %v8121 = vunpack.c.h.b16 %v6288
    %v8122 = vunpack.c.l.b16 %v6289
    %v8123 = vunpack.c.h.b16 %v6289
    %v8124 = vunpack.c.l.b16 %v6290
    %v8125 = vunpack.c.h.b16 %v6290
    %v8126 = vunpack.c.l.b16 %v6291
    %v8127 = vunpack.c.h.b16 %v6291
    %v8128 = vunpack.c.l.b16 %v6292
    %v8129 = vunpack.c.h.b16 %v6292
    %v8130 = vunpack.c.l.b16 %v6293
    %v8131 = vunpack.c.h.b16 %v6293
    %v8132 = vunpack.c.l.b16 %v6294
    %v8133 = vunpack.c.h.b16 %v6294
    %v8134 = vunpack.c.l.b16 %v6295
    %v8135 = vunpack.c.h.b16 %v6295
    %v8136 = vunpack.c.l.b16 %v6296
    %v8137 = vunpack.c.h.b16 %v6296
    %v8138 = vunpack.c.l.b16 %v6297
    %v8139 = vunpack.c.h.b16 %v6297
    %v8140 = vunpack.c.l.b16 %v6298
    %v8141 = vunpack.c.h.b16 %v6298
    %v8142 = vunpack.c.l.b16 %v6299
    %v8143 = vunpack.c.h.b16 %v6299
    %v8144 = vunpack.c.l.b16 %v6300
    %v8145 = vunpack.c.h.b16 %v6300
    %v8146 = vunpack.c.l.b16 %v6301
    %v8147 = vunpack.c.h.b16 %v6301
    %v8148 = vunpack.c.l.b16 %v6302
    %v8149 = vunpack.c.h.b16 %v6302
    %v8150 = vunpack.c.l.b16 %v6303
    %v8151 = vunpack.c.h.b16 %v6303
    %v8152 = vunpack.c.l.b16 %v6304
    %v8153 = vunpack.c.h.b16 %v6304
    %v8154 = vunpack.c.l.b16 %v6305
    %v8155 = vunpack.c.h.b16 %v6305
    %v8156 = vunpack.c.l.b16 %v6306
    %v8157 = vunpack.c.h.b16 %v6306
    %v8158 = vunpack.c.l.b16 %v6307
    %v8159 = vunpack.c.h.b16 %v6307
    %v8160 = vunpack.c.l.b16 %v6308
    %v8161 = vunpack.c.h.b16 %v6308
    %v8162 = vunpack.c.l.b16 %v6309
    %v8163 = vunpack.c.h.b16 %v6309
    %v8164 = vunpack.c.l.b16 %v6310
    %v8165 = vunpack.c.h.b16 %v6310
    %v8166 = vunpack.c.l.b16 %v6311
    %v8167 = vunpack.c.h.b16 %v6311
    %v8168 = vunpack.c.l.b16 %v6312
    %v8169 = vunpack.c.h.b16 %v6312
    %v8170 = vunpack.c.l.b16 %v6313
    %v8171 = vunpack.c.h.b16 %v6313
    %v8172 = vunpack.c.l.b16 %v6314
    %v8173 = vunpack.c.h.b16 %v6314
    %v8174 = vunpack.c.l.b16 %v6315
    %v8175 = vunpack.c.h.b16 %v6315
    %v8176 = vunpack.c.l.b16 %v6316
    %v8177 = vunpack.c.h.b16 %v6316
    %v8178 = vunpack.c.l.b16 %v6317
    %v8179 = vunpack.c.h.b16 %v6317
    %v8180 = vunpack.c.l.b16 %v6318
    %v8181 = vunpack.c.h.b16 %v6318
    %v8182 = vunpack.c.l.b16 %v6319
    %v8183 = vunpack.c.h.b16 %v6319
    %v8184 = vunpack.c.l.b16 %v6320
    %v8185 = vunpack.c.h.b16 %v6320
    %v8186 = vunpack.c.l.b16 %v6321
    %v8187 = vunpack.c.h.b16 %v6321
    %v8188 = vunpack.c.l.b16 %v6322
    %v8189 = vunpack.c.h.b16 %v6322
    %v8190 = vunpack.c.l.b16 %v6323
    %v8191 = vunpack.c.h.b16 %v6323
    %v8192 = vunpack.c.l.b16 %v6324
    %v8193 = vunpack.c.h.b16 %v6324
    %v8194 = vunpack.c.l.b16 %v6325
    %v8195 = vunpack.c.h.b16 %v6325
    %v8196 = vunpack.c.l.b16 %v6326
    %v8197 = vunpack.c.h.b16 %v6326
    %v8198 = vunpack.c.l.b16 %v6327
    %v8199 = vunpack.c.h.b16 %v6327
    %v8200 = vunpack.c.l.b16 %v6328
    %v8201 = vunpack.c.h.b16 %v6328
    %v8202 = vunpack.c.l.b16 %v6329
    %v8203 = vunpack.c.h.b16 %v6329
    %v8204 = vunpack.c.l.b16 %v6330
    %v8205 = vunpack.c.h.b16 %v6330
    %v8206 = vunpack.c.l.b16 %v6331
    %v8207 = vunpack.c.h.b16 %v6331
    %v8208 = vunpack.c.l.b16 %v6332
    %v8209 = vunpack.c.h.b16 %v6332
    %v8210 = vunpack.c.l.b16 %v6333
    %v8211 = vunpack.c.h.b16 %v6333
    %v8212 = vunpack.c.l.b16 %v6334
    %v8213 = vunpack.c.h.b16 %v6334
    %v8214 = vunpack.c.l.b16 %v6335
    %v8215 = vunpack.c.h.b16 %v6335
    %v8216 = vunpack.c.l.b16 %v6336
    %v8217 = vunpack.c.h.b16 %v6336
    %v8218 = vunpack.c.l.b16 %v6337
    %v8219 = vunpack.c.h.b16 %v6337
    %v8220 = vunpack.c.l.b16 %v6338
    %v8221 = vunpack.c.h.b16 %v6338
    %v8222 = vunpack.c.l.b16 %v6339
    %v8223 = vunpack.c.h.b16 %v6339
    %v8224 = vunpack.c.l.b16 %v6340
    %v8225 = vunpack.c.h.b16 %v6340
    %v8226 = vunpack.c.l.b16 %v6341
    %v8227 = vunpack.c.h.b16 %v6341
    %v8228 = vunpack.c.l.b16 %v6342
    %v8229 = vunpack.c.h.b16 %v6342
    %v8230 = vunpack.c.l.b16 %v6343
    %v8231 = vunpack.c.h.b16 %v6343
    %v8232 = vunpack.c.l.b16 %v6344
    %v8233 = vunpack.c.h.b16 %v6344
    %v8234 = vunpack.c.l.b16 %v6345
    %v8235 = vunpack.c.h.b16 %v6345
    %v8236 = vunpack.c.l.b16 %v6346
    %v8237 = vunpack.c.h.b16 %v6346
    %v8238 = vunpack.c.l.b16 %v6347
    %v8239 = vunpack.c.h.b16 %v6347
    %v8240 = vunpack.c.l.b16 %v6348
    %v8241 = vunpack.c.h.b16 %v6348
    %v8242 = vunpack.c.l.b16 %v6349
    %v8243 = vunpack.c.h.b16 %v6349
    %v8244 = vunpack.c.l.b16 %v6350
    %v8245 = vunpack.c.h.b16 %v6350
    %v8246 = vunpack.c.l.b16 %v6351
    %v8247 = vunpack.c.h.b16 %v6351
    %v8248 = vunpack.c.l.b16 %v6352
    %v8249 = vunpack.c.h.b16 %v6352
    %v8250 = vunpack.c.l.b16 %v6353
    %v8251 = vunpack.c.h.b16 %v6353
    %v8252 = vunpack.c.l.b16 %v6354
    %v8253 = vunpack.c.h.b16 %v6354
    %v8254 = vunpack.c.l.b16 %v6355
    %v8255 = vunpack.c.h.b16 %v6355
    %v8256 = vunpack.c.l.b16 %v6356
    %v8257 = vunpack.c.h.b16 %v6356
    %v8258 = vunpack.c.l.b16 %v6357
    %v8259 = vunpack.c.h.b16 %v6357
    %v8260 = vunpack.c.l.b16 %v6358
    %v8261 = vunpack.c.h.b16 %v6358
    %v8262 = vunpack.c.l.b16 %v6359
    %v8263 = vunpack.c.h.b16 %v6359
    %v8264 = vunpack.c.l.b16 %v6360
    %v8265 = vunpack.c.h.b16 %v6360
    %v8266 = vunpack.c.l.b16 %v6361
    %v8267 = vunpack.c.h.b16 %v6361
    %v8268 = vunpack.c.l.b16 %v6362
    %v8269 = vunpack.c.h.b16 %v6362
    %v8270 = vunpack.c.l.b16 %v6363
    %v8271 = vunpack.c.h.b16 %v6363
    %v8272 = vunpack.c.l.b16 %v6364
    %v8273 = vunpack.c.h.b16 %v6364
    %v8274 = vunpack.c.l.b16 %v6365
    %v8275 = vunpack.c.h.b16 %v6365
    %v8276 = vunpack.c.l.b16 %v6366
    %v8277 = vunpack.c.h.b16 %v6366
    %v8278 = vunpack.c.l.b16 %v6367
    %v8279 = vunpack.c.h.b16 %v6367
    %v8280 = vunpack.c.l.b16 %v6368
    %v8281 = vunpack.c.h.b16 %v6368
    %v8282 = vunpack.c.l.b16 %v6369
    %v8283 = vunpack.c.h.b16 %v6369
    %v8284 = vunpack.c.l.b16 %v6370
    %v8285 = vunpack.c.h.b16 %v6370
    %v8286 = vunpack.c.l.b16 %v6371
    %v8287 = vunpack.c.h.b16 %v6371
    %v8288 = vunpack.c.l.b16 %v6372
    %v8289 = vunpack.c.h.b16 %v6372
    %v8290 = vunpack.c.l.b16 %v6373
    %v8291 = vunpack.c.h.b16 %v6373
    %v8292 = vunpack.c.l.b16 %v6374
    %v8293 = vunpack.c.h.b16 %v6374
    %v8294 = vunpack.c.l.b16 %v6375
    %v8295 = vunpack.c.h.b16 %v6375
    %v8296 = vunpack.c.l.b16 %v6376
    %v8297 = vunpack.c.h.b16 %v6376
    %v8298 = vunpack.c.l.b16 %v6377
    %v8299 = vunpack.c.h.b16 %v6377
    %v8300 = vunpack.c.l.b16 %v6378
    %v8301 = vunpack.c.h.b16 %v6378
    %v8302 = vunpack.c.l.b16 %v6379
    %v8303 = vunpack.c.h.b16 %v6379
    %v8304 = vunpack.c.l.b16 %v6380
    %v8305 = vunpack.c.h.b16 %v6380
    %v8306 = vunpack.c.l.b16 %v6381
    %v8307 = vunpack.c.h.b16 %v6381
    %v8308 = vunpack.c.l.b16 %v6382
    %v8309 = vunpack.c.h.b16 %v6382
    %v8310 = vunpack.c.l.b16 %v6383
    %v8311 = vunpack.c.h.b16 %v6383
    %v8312 = vunpack.c.l.b16 %v6384
    %v8313 = vunpack.c.h.b16 %v6384
    %v8314 = vunpack.c.l.b16 %v6385
    %v8315 = vunpack.c.h.b16 %v6385
    %v8316 = vunpack.c.l.b16 %v6386
    %v8317 = vunpack.c.h.b16 %v6386
    %v8318 = vunpack.c.l.b16 %v6387
    %v8319 = vunpack.c.h.b16 %v6387
    %v8320 = vunpack.c.l.b16 %v6388
    %v8321 = vunpack.c.h.b16 %v6388
    %v8322 = vunpack.c.l.b16 %v6389
    %v8323 = vunpack.c.h.b16 %v6389
    %v8324 = vunpack.c.l.b16 %v6390
    %v8325 = vunpack.c.h.b16 %v6390
    %v8326 = vunpack.c.l.b16 %v6391
    %v8327 = vunpack.c.h.b16 %v6391
    %v8328 = vunpack.c.l.b16 %v6392
    %v8329 = vunpack.c.h.b16 %v6392
    %v8330 = vunpack.c.l.b16 %v6393
    %v8331 = vunpack.c.h.b16 %v6393
    %v8332 = vunpack.c.l.b16 %v6394
    %v8333 = vunpack.c.h.b16 %v6394
    %v8334 = vunpack.c.l.b16 %v6395
    %v8335 = vunpack.c.h.b16 %v6395
    %v8336 = vunpack.c.l.b16 %v6396
    %v8337 = vunpack.c.h.b16 %v6396
    %v8338 = vunpack.c.l.b16 %v6397
    %v8339 = vunpack.c.h.b16 %v6397
    %v8340 = vunpack.c.l.b16 %v6398
    %v8341 = vunpack.c.h.b16 %v6398
    %v8342 = vunpack.c.l.b16 %v6399
    %v8343 = vunpack.c.h.b16 %v6399
    %v8344 = vunpack.c.l.b16 %v6400
    %v8345 = vunpack.c.h.b16 %v6400
    %v8346 = vunpack.c.l.b16 %v6401
    %v8347 = vunpack.c.h.b16 %v6401
    %v8348 = vunpack.c.l.b16 %v6402
    %v8349 = vunpack.c.h.b16 %v6402
    %v8350 = vunpack.c.l.b16 %v6403
    %v8351 = vunpack.c.h.b16 %v6403
    %v8352 = vunpack.c.l.b16 %v6404
    %v8353 = vunpack.c.h.b16 %v6404
    %v8354 = vunpack.c.l.b16 %v6405
    %v8355 = vunpack.c.h.b16 %v6405
    %v8356 = vunpack.c.l.b16 %v6406
    %v8357 = vunpack.c.h.b16 %v6406
    %v8358 = vunpack.c.l.b16 %v6407
    %v8359 = vunpack.c.h.b16 %v6407
    %v8360 = vunpack.c.l.b16 %v6408
    %v8361 = vunpack.c.h.b16 %v6408
    %v8362 = vunpack.c.l.b16 %v6409
    %v8363 = vunpack.c.h.b16 %v6409
    %v8364 = vunpack.c.l.b16 %v6410
    %v8365 = vunpack.c.h.b16 %v6410
    %v8366 = vunpack.c.l.b16 %v6411
    %v8367 = vunpack.c.h.b16 %v6411
    %v8368 = vunpack.c.l.b16 %v6412
    %v8369 = vunpack.c.h.b16 %v6412
    %v8370 = vunpack.c.l.b16 %v6413
    %v8371 = vunpack.c.h.b16 %v6413
    %v8372 = vunpack.c.l.b16 %v6414
    %v8373 = vunpack.c.h.b16 %v6414
    %v8374 = vunpack.c.l.b16 %v6415
    %v8375 = vunpack.c.h.b16 %v6415
    %v8376 = vunpack.c.l.b16 %v6416
    %v8377 = vunpack.c.h.b16 %v6416
    %v8378 = vunpack.c.l.b16 %v6417
    %v8379 = vunpack.c.h.b16 %v6417
    %v8380 = vunpack.c.l.b16 %v6418
    %v8381 = vunpack.c.h.b16 %v6418
    %v8382 = vunpack.c.l.b16 %v6419
    %v8383 = vunpack.c.h.b16 %v6419
    %v8384 = vunpack.c.l.b16 %v6420
    %v8385 = vunpack.c.h.b16 %v6420
    %v8386 = vunpack.c.l.b16 %v6421
    %v8387 = vunpack.c.h.b16 %v6421
    %v8388 = vunpack.c.l.b16 %v6422
    %v8389 = vunpack.c.h.b16 %v6422
    %v8390 = vunpack.c.l.b16 %v6423
    %v8391 = vunpack.c.h.b16 %v6423
    %v8392 = vunpack.c.l.b16 %v6424
    %v8393 = vunpack.c.h.b16 %v6424
    %v8394 = vunpack.c.l.b16 %v6425
    %v8395 = vunpack.c.h.b16 %v6425
    %v8396 = vunpack.c.l.b16 %v6426
    %v8397 = vunpack.c.h.b16 %v6426
    %v8398 = vunpack.c.l.b16 %v6427
    %v8399 = vunpack.c.h.b16 %v6427
    %v8400 = vunpack.c.l.b16 %v6428
    %v8401 = vunpack.c.h.b16 %v6428
    %v8402 = vunpack.c.l.b16 %v6429
    %v8403 = vunpack.c.h.b16 %v6429
    %v8404 = vunpack.c.l.b16 %v6430
    %v8405 = vunpack.c.h.b16 %v6430
    %v8406 = vunpack.c.l.b16 %v6431
    %v8407 = vunpack.c.h.b16 %v6431
    %v8408 = vunpack.c.l.b16 %v6432
    %v8409 = vunpack.c.h.b16 %v6432
    %v8410 = vunpack.c.l.b16 %v6433
    %v8411 = vunpack.c.h.b16 %v6433
    %v8412 = vunpack.c.l.b16 %v6434
    %v8413 = vunpack.c.h.b16 %v6434
    %v8414 = vunpack.c.l.b16 %v6435
    %v8415 = vunpack.c.h.b16 %v6435
    %v8416 = vunpack.c.l.b16 %v6436
    %v8417 = vunpack.c.h.b16 %v6436
    %v8418 = vunpack.c.l.b16 %v6437
    %v8419 = vunpack.c.h.b16 %v6437
    %v8420 = vunpack.c.l.b16 %v6438
    %v8421 = vunpack.c.h.b16 %v6438
    %v8422 = vunpack.c.l.b16 %v6439
    %v8423 = vunpack.c.h.b16 %v6439
    %v8424 = vunpack.c.l.b16 %v6440
    %v8425 = vunpack.c.h.b16 %v6440
    %v8426 = vunpack.c.l.b16 %v6441
    %v8427 = vunpack.c.h.b16 %v6441
    %v8428 = vunpack.c.l.b16 %v6442
    %v8429 = vunpack.c.h.b16 %v6442
    %v8430 = vunpack.c.l.b16 %v6443
    %v8431 = vunpack.c.h.b16 %v6443
    %v8432 = vunpack.c.l.b16 %v6444
    %v8433 = vunpack.c.h.b16 %v6444
    %v8434 = vunpack.c.l.b16 %v6445
    %v8435 = vunpack.c.h.b16 %v6445
    %v8436 = vunpack.c.l.b16 %v6446
    %v8437 = vunpack.c.h.b16 %v6446
    %v8438 = vunpack.c.l.b16 %v6447
    %v8439 = vunpack.c.h.b16 %v6447
    %v8440 = vunpack.c.l.b16 %v6448
    %v8441 = vunpack.c.h.b16 %v6448
    %v8442 = vunpack.c.l.b16 %v6449
    %v8443 = vunpack.c.h.b16 %v6449
    %v8444 = vunpack.c.l.b16 %v6450
    %v8445 = vunpack.c.h.b16 %v6450
    %v8446 = vunpack.c.l.b16 %v6451
    %v8447 = vunpack.c.h.b16 %v6451
    %v8448 = vunpack.c.l.b16 %v6452
    %v8449 = vunpack.c.h.b16 %v6452
    %v8450 = vunpack.c.l.b16 %v6453
    %v8451 = vunpack.c.h.b16 %v6453
    %v8452 = vunpack.c.l.b16 %v6454
    %v8453 = vunpack.c.h.b16 %v6454
    %v8454 = vunpack.c.l.b16 %v6455
    %v8455 = vunpack.c.h.b16 %v6455
    %v8456 = vunpack.c.l.b16 %v6456
    %v8457 = vunpack.c.h.b16 %v6456
    %v8458 = vunpack.c.l.b16 %v6457
    %v8459 = vunpack.c.h.b16 %v6457
    %v8460 = vunpack.c.l.b16 %v6458
    %v8461 = vunpack.c.h.b16 %v6458
    %v8462 = vunpack.c.l.b16 %v6459
    %v8463 = vunpack.c.h.b16 %v6459
    %v8464 = vunpack.c.l.b16 %v6460
    %v8465 = vunpack.c.h.b16 %v6460
    %v8466 = vunpack.c.l.b16 %v6461
    %v8467 = vunpack.c.h.b16 %v6461
    %v8468 = vunpack.c.l.b16 %v6462
    %v8469 = vunpack.c.h.b16 %v6462
    %v8470 = vunpack.c.l.b16 %v6463
    %v8471 = vunpack.c.h.b16 %v6463
    %v8472 = vunpack.c.l.b16 %v6464
    %v8473 = vunpack.c.h.b16 %v6464
    %v8474 = vunpack.c.l.b16 %v6465
    %v8475 = vunpack.c.h.b16 %v6465
    %v8476 = vunpack.c.l.b16 %v6466
    %v8477 = vunpack.c.h.b16 %v6466
    %v8478 = vunpack.c.l.b16 %v6467
    %v8479 = vunpack.c.h.b16 %v6467
    %v8480 = vunpack.c.l.b16 %v6468
    %v8481 = vunpack.c.h.b16 %v6468
    %v8482 = vunpack.c.l.b16 %v6469
    %v8483 = vunpack.c.h.b16 %v6469
    %v8484 = vunpack.c.l.b16 %v6470
    %v8485 = vunpack.c.h.b16 %v6470
    %v8486 = vunpack.c.l.b16 %v6471
    %v8487 = vunpack.c.h.b16 %v6471
    %v8488 = vunpack.c.l.b16 %v6472
    %v8489 = vunpack.c.h.b16 %v6472
    %v8490 = vunpack.c.l.b16 %v6473
    %v8491 = vunpack.c.h.b16 %v6473
    %v8492 = vunpack.c.l.b16 %v6474
    %v8493 = vunpack.c.h.b16 %v6474
    %v8494 = vunpack.c.l.b16 %v6475
    %v8495 = vunpack.c.h.b16 %v6475
    %v8496 = vunpack.c.l.b16 %v6476
    %v8497 = vunpack.c.h.b16 %v6476
    %v8498 = vunpack.c.l.b16 %v6477
    %v8499 = vunpack.c.h.b16 %v6477
    %v8500 = vunpack.c.l.b16 %v6478
    %v8501 = vunpack.c.h.b16 %v6478
    %v8502 = vunpack.c.l.b16 %v6479
    %v8503 = vunpack.c.h.b16 %v6479
    %v8504 = vunpack.c.l.b16 %v6480
    %v8505 = vunpack.c.h.b16 %v6480
    %v8506 = vunpack.c.l.b16 %v6481
    %v8507 = vunpack.c.h.b16 %v6481
    %v8508 = vunpack.c.l.b16 %v6482
    %v8509 = vunpack.c.h.b16 %v6482
    %v8510 = vunpack.c.l.b16 %v6483
    %v8511 = vunpack.c.h.b16 %v6483
    %v8512 = vunpack.c.l.b16 %v6484
    %v8513 = vunpack.c.h.b16 %v6484
    %v8514 = vunpack.c.l.b16 %v6485
    %v8515 = vunpack.c.h.b16 %v6485
    %v8516 = vunpack.c.l.b16 %v6486
    %v8517 = vunpack.c.h.b16 %v6486
    %v8518 = vunpack.c.l.b16 %v6487
    %v8519 = vunpack.c.h.b16 %v6487
    %v8520 = vunpack.c.l.b16 %v6488
    %v8521 = vunpack.c.h.b16 %v6488
    %v8522 = vunpack.c.l.b16 %v6489
    %v8523 = vunpack.c.h.b16 %v6489
    %v8524 = vunpack.c.l.b16 %v6490
    %v8525 = vunpack.c.h.b16 %v6490
    %v8526 = vunpack.c.l.b16 %v6491
    %v8527 = vunpack.c.h.b16 %v6491
    %v8528 = vunpack.c.l.b16 %v6492
    %v8529 = vunpack.c.h.b16 %v6492
    %v8530 = vunpack.c.l.b16 %v6493
    %v8531 = vunpack.c.h.b16 %v6493
    %v8532 = vunpack.c.l.b16 %v6494
    %v8533 = vunpack.c.h.b16 %v6494
    %v8534 = vunpack.c.l.b16 %v6495
    %v8535 = vunpack.c.h.b16 %v6495
    %v8536 = vunpack.c.l.b16 %v6496
    %v8537 = vunpack.c.h.b16 %v6496
    %v8538 = vunpack.c.l.b16 %v6497
    %v8539 = vunpack.c.h.b16 %v6497
    %v8540 = vunpack.c.l.b16 %v6498
    %v8541 = vunpack.c.h.b16 %v6498
    %v8542 = vunpack.c.l.b16 %v6499
    %v8543 = vunpack.c.h.b16 %v6499
    %v8544 = vunpack.c.l.b16 %v6500
    %v8545 = vunpack.c.h.b16 %v6500
    %v8546 = vunpack.c.l.b16 %v6501
    %v8547 = vunpack.c.h.b16 %v6501
    %v8548 = vunpack.c.l.b16 %v6502
    %v8549 = vunpack.c.h.b16 %v6502
    %v8550 = vunpack.c.l.b16 %v6503
    %v8551 = vunpack.c.h.b16 %v6503
    %v8552 = vunpack.c.l.b16 %v6504
    %v8553 = vunpack.c.h.b16 %v6504
    %v8554 = vunpack.c.l.b16 %v6505
    %v8555 = vunpack.c.h.b16 %v6505
    %v8556 = vunpack.c.l.b16 %v6506
    %v8557 = vunpack.c.h.b16 %v6506
    %v8558 = vunpack.c.l.b16 %v6507
    %v8559 = vunpack.c.h.b16 %v6507
    %v8560 = vunpack.c.l.b16 %v6508
    %v8561 = vunpack.c.h.b16 %v6508
    %v8562 = vunpack.c.l.b16 %v6509
    %v8563 = vunpack.c.h.b16 %v6509
    %v8564 = vunpack.c.l.b16 %v6510
    %v8565 = vunpack.c.h.b16 %v6510
    %v8566 = vunpack.c.l.b16 %v6511
    %v8567 = vunpack.c.h.b16 %v6511
    %v8568 = vunpack.c.l.b16 %v6512
    %v8569 = vunpack.c.h.b16 %v6512
    %v8570 = vunpack.c.l.b16 %v6513
    %v8571 = vunpack.c.h.b16 %v6513
    %v8572 = vunpack.c.l.b16 %v6514
    %v8573 = vunpack.c.h.b16 %v6514
    %v8574 = vunpack.c.l.b16 %v6515
    %v8575 = vunpack.c.h.b16 %v6515
    %v8576 = vunpack.c.l.b16 %v6516
    %v8577 = vunpack.c.h.b16 %v6516
    %v8578 = vunpack.c.l.b16 %v6517
    %v8579 = vunpack.c.h.b16 %v6517
    %v8580 = vunpack.c.l.b16 %v6518
    %v8581 = vunpack.c.h.b16 %v6518
    %v8582 = vunpack.c.l.b16 %v6519
    %v8583 = vunpack.c.h.b16 %v6519
    %v8584 = vunpack.c.l.b16 %v6520
    %v8585 = vunpack.c.h.b16 %v6520
    %v8586 = vunpack.c.l.b16 %v6521
    %v8587 = vunpack.c.h.b16 %v6521
    %v8588 = vunpack.c.l.b16 %v6522
    %v8589 = vunpack.c.h.b16 %v6522
    %v8590 = vunpack.c.l.b16 %v6523
    %v8591 = vunpack.c.h.b16 %v6523
    %v8592 = vunpack.c.l.b16 %v6524
    %v8593 = vunpack.c.h.b16 %v6524
    %v8594 = vunpack.c.l.b16 %v6525
    %v8595 = vunpack.c.h.b16 %v6525
    %v8596 = vunpack.c.l.b16 %v6526
    %v8597 = vunpack.c.h.b16 %v6526
    %v8598 = vunpack.c.l.b16 %v6527
    %v8599 = vunpack.c.h.b16 %v6527
    %v8600 = vunpack.c.l.b16 %v6528
    %v8601 = vunpack.c.h.b16 %v6528
    %v8602 = vunpack.c.l.b16 %v6529
    %v8603 = vunpack.c.h.b16 %v6529
    %v8604 = vunpack.c.l.b16 %v6530
    %v8605 = vunpack.c.h.b16 %v6530
    %v8606 = vunpack.c.l.b16 %v6531
    %v8607 = vunpack.c.h.b16 %v6531
    %v8608 = vunpack.c.l.b16 %v6532
    %v8609 = vunpack.c.h.b16 %v6532
    %v8610 = vunpack.c.l.b16 %v6533
    %v8611 = vunpack.c.h.b16 %v6533
    %v8612 = vunpack.c.l.b16 %v6534
    %v8613 = vunpack.c.h.b16 %v6534
    %v8614 = vunpack.c.l.b16 %v6535
    %v8615 = vunpack.c.h.b16 %v6535
    %v8616 = vunpack.c.l.b16 %v6536
    %v8617 = vunpack.c.h.b16 %v6536
    %v8618 = vunpack.c.l.b16 %v6537
    %v8619 = vunpack.c.h.b16 %v6537
    %v8620 = vunpack.c.l.b16 %v6538
    %v8621 = vunpack.c.h.b16 %v6538
    %v8622 = vunpack.c.l.b16 %v6539
    %v8623 = vunpack.c.h.b16 %v6539
    %v8624 = vunpack.c.l.b16 %v6540
    %v8625 = vunpack.c.h.b16 %v6540
    %v8626 = vunpack.c.l.b16 %v6541
    %v8627 = vunpack.c.h.b16 %v6541
    %v8628 = vunpack.c.l.b16 %v6542
    %v8629 = vunpack.c.h.b16 %v6542
    %v8630 = vunpack.c.l.b16 %v6543
    %v8631 = vunpack.c.h.b16 %v6543
    %v8632 = vunpack.c.l.b16 %v6544
    %v8633 = vunpack.c.h.b16 %v6544
    %v8634 = vunpack.c.l.b16 %v6545
    %v8635 = vunpack.c.h.b16 %v6545
    %v8636 = vunpack.c.l.b16 %v6546
    %v8637 = vunpack.c.h.b16 %v6546
    %v8638 = vunpack.c.l.b16 %v6547
    %v8639 = vunpack.c.h.b16 %v6547
    %v8640 = vunpack.c.l.b16 %v6548
    %v8641 = vunpack.c.h.b16 %v6548
    %v8642 = vunpack.c.l.b16 %v6549
    %v8643 = vunpack.c.h.b16 %v6549
    %v8644 = vunpack.c.l.b16 %v6550
    %v8645 = vunpack.c.h.b16 %v6550
    %v8646 = vunpack.c.l.b16 %v6551
    %v8647 = vunpack.c.h.b16 %v6551
    %v8648 = vunpack.c.l.b16 %v6552
    %v8649 = vunpack.c.h.b16 %v6552
    %v8650 = vunpack.c.l.b16 %v6553
    %v8651 = vunpack.c.h.b16 %v6553
    %v8652 = vunpack.c.l.b16 %v6554
    %v8653 = vunpack.c.h.b16 %v6554
    %v8654 = vunpack.c.l.b16 %v6555
    %v8655 = vunpack.c.h.b16 %v6555
    %v8656 = vunpack.c.l.b16 %v6556
    %v8657 = vunpack.c.h.b16 %v6556
    %v8658 = vunpack.c.l.b16 %v6557
    %v8659 = vunpack.c.h.b16 %v6557
    %v8660 = vunpack.c.l.b16 %v6558
    %v8661 = vunpack.c.h.b16 %v6558
    %v8662 = vunpack.c.l.b16 %v6559
    %v8663 = vunpack.c.h.b16 %v6559
    %v8664 = vunpack.c.l.b16 %v6560
    %v8665 = vunpack.c.h.b16 %v6560
    %v8666 = vunpack.c.l.b16 %v6561
    %v8667 = vunpack.c.h.b16 %v6561
    %v8668 = vunpack.c.l.b16 %v6562
    %v8669 = vunpack.c.h.b16 %v6562
    %v8670 = vunpack.c.l.b16 %v6563
    %v8671 = vunpack.c.h.b16 %v6563
    %v8672 = vunpack.c.l.b16 %v6564
    %v8673 = vunpack.c.h.b16 %v6564
    %v8674 = vunpack.c.l.b16 %v6565
    %v8675 = vunpack.c.h.b16 %v6565
    %v8676 = vunpack.c.l.b16 %v6566
    %v8677 = vunpack.c.h.b16 %v6566
    %v8678 = vunpack.c.l.b16 %v6567
    %v8679 = vunpack.c.h.b16 %v6567
    %v8680 = vunpack.c.l.b16 %v6568
    %v8681 = vunpack.c.h.b16 %v6568
    %v8682 = vunpack.c.l.b16 %v6569
    %v8683 = vunpack.c.h.b16 %v6569
    %v8684 = vunpack.c.l.b16 %v6570
    %v8685 = vunpack.c.h.b16 %v6570
    %v8686 = vunpack.c.l.b16 %v6571
    %v8687 = vunpack.c.h.b16 %v6571
    %v8688 = vunpack.c.l.b16 %v6572
    %v8689 = vunpack.c.h.b16 %v6572
    %v8690 = vunpack.c.l.b16 %v6573
    %v8691 = vunpack.c.h.b16 %v6573
    %v8692 = vunpack.c.l.b16 %v6574
    %v8693 = vunpack.c.h.b16 %v6574
    %v8694 = vunpack.c.l.b16 %v6575
    %v8695 = vunpack.c.h.b16 %v6575
    %v8696 = vunpack.c.l.b16 %v6576
    %v8697 = vunpack.c.h.b16 %v6576
    %v8698 = vunpack.c.l.b16 %v6577
    %v8699 = vunpack.c.h.b16 %v6577
    %v8700 = vunpack.c.l.b16 %v6578
    %v8701 = vunpack.c.h.b16 %v6578
    %v8702 = vunpack.c.l.b16 %v6579
    %v8703 = vunpack.c.h.b16 %v6579
    %v8704 = vunpack.c.l.b16 %v6580
    %v8705 = vunpack.c.h.b16 %v6580
    %v8706 = vunpack.c.l.b16 %v6581
    %v8707 = vunpack.c.h.b16 %v6581
    %v8708 = vunpack.c.l.b16 %v6582
    %v8709 = vunpack.c.h.b16 %v6582
    %v8710 = vunpack.c.l.b16 %v6583
    %v8711 = vunpack.c.h.b16 %v6583
    %v8712 = vunpack.c.l.b16 %v6584
    %v8713 = vunpack.c.h.b16 %v6584
    %v8714 = vunpack.c.l.b16 %v6585
    %v8715 = vunpack.c.h.b16 %v6585
    %v8716 = vunpack.c.l.b16 %v6586
    %v8717 = vunpack.c.h.b16 %v6586
    %v8718 = vunpack.c.l.b16 %v6587
    %v8719 = vunpack.c.h.b16 %v6587
    %v8720 = vunpack.c.l.b16 %v6588
    %v8721 = vunpack.c.h.b16 %v6588
    %v8722 = vunpack.c.l.b16 %v6589
    %v8723 = vunpack.c.h.b16 %v6589
    %v8724 = vunpack.c.l.b16 %v6590
    %v8725 = vunpack.c.h.b16 %v6590
    %v8726 = vunpack.c.l.b16 %v6591
    %v8727 = vunpack.c.h.b16 %v6591
    %v8728 = vunpack.c.l.b16 %v6592
    %v8729 = vunpack.c.h.b16 %v6592
    %v8730 = vunpack.c.l.b16 %v6593
    %v8731 = vunpack.c.h.b16 %v6593
    %v8732 = vunpack.c.l.b16 %v6594
    %v8733 = vunpack.c.h.b16 %v6594
    %v8734 = vunpack.c.l.b16 %v6595
    %v8735 = vunpack.c.h.b16 %v6595
    %v8736 = vunpack.c.l.b16 %v6596
    %v8737 = vunpack.c.h.b16 %v6596
    %v8738 = vunpack.c.l.b16 %v6597
    %v8739 = vunpack.c.h.b16 %v6597
    %v8740 = vunpack.c.l.b16 %v6598
    %v8741 = vunpack.c.h.b16 %v6598
    %v8742 = vunpack.c.l.b16 %v6599
    %v8743 = vunpack.c.h.b16 %v6599
    %v8744 = vunpack.c.l.b16 %v6600
    %v8745 = vunpack.c.h.b16 %v6600
    %v8746 = vunpack.c.l.b16 %v6601
    %v8747 = vunpack.c.h.b16 %v6601
    %v8748 = vunpack.c.l.b16 %v6602
    %v8749 = vunpack.c.h.b16 %v6602
    %v8750 = vunpack.c.l.b16 %v6603
    %v8751 = vunpack.c.h.b16 %v6603
    %v8752 = vunpack.c.l.b16 %v6604
    %v8753 = vunpack.c.h.b16 %v6604
    %v8754 = vunpack.c.l.b16 %v6605
    %v8755 = vunpack.c.h.b16 %v6605
    %v8756 = vunpack.c.l.b16 %v6606
    %v8757 = vunpack.c.h.b16 %v6606
    %v8758 = vunpack.c.l.b16 %v6607
    %v8759 = vunpack.c.h.b16 %v6607
    %v8760 = vunpack.c.l.b16 %v6608
    %v8761 = vunpack.c.h.b16 %v6608
    %v8762 = vunpack.c.l.b16 %v6609
    %v8763 = vunpack.c.h.b16 %v6609
    %v8764 = vunpack.c.l.b16 %v6610
    %v8765 = vunpack.c.h.b16 %v6610
    %v8766 = vunpack.c.l.b16 %v6611
    %v8767 = vunpack.c.h.b16 %v6611
    %v8768 = vunpack.c.l.b16 %v6612
    %v8769 = vunpack.c.h.b16 %v6612
    %v8770 = vunpack.c.l.b16 %v6613
    %v8771 = vunpack.c.h.b16 %v6613
    %v8772 = vunpack.c.l.b16 %v6614
    %v8773 = vunpack.c.h.b16 %v6614
    %v8774 = vunpack.c.l.b16 %v6615
    %v8775 = vunpack.c.h.b16 %v6615
    %v8776 = vunpack.c.l.b16 %v6616
    %v8777 = vunpack.c.h.b16 %v6616
    %v8778 = vunpack.c.l.b16 %v6617
    %v8779 = vunpack.c.h.b16 %v6617
    %v8780 = vunpack.c.l.b16 %v6618
    %v8781 = vunpack.c.h.b16 %v6618
    %v8782 = vunpack.c.l.b16 %v6619
    %v8783 = vunpack.c.h.b16 %v6619
    %v8784 = vunpack.c.l.b16 %v6620
    %v8785 = vunpack.c.h.b16 %v6620
    %v8786 = vunpack.c.l.b16 %v6621
    %v8787 = vunpack.c.h.b16 %v6621
    %v8788 = vunpack.c.l.b16 %v6622
    %v8789 = vunpack.c.h.b16 %v6622
    %v8790 = vunpack.c.l.b16 %v6623
    %v8791 = vunpack.c.h.b16 %v6623
    %v8792 = vunpack.c.l.b16 %v6624
    %v8793 = vunpack.c.h.b16 %v6624
    %v8794 = vunpack.c.l.b16 %v6625
    %v8795 = vunpack.c.h.b16 %v6625
    %v8796 = vunpack.c.l.b16 %v6626
    %v8797 = vunpack.c.h.b16 %v6626
    %v8798 = vunpack.c.l.b16 %v6627
    %v8799 = vunpack.c.h.b16 %v6627
    %v8800 = vunpack.c.l.b16 %v6628
    %v8801 = vunpack.c.h.b16 %v6628
    %v8802 = vunpack.c.l.b16 %v6629
    %v8803 = vunpack.c.h.b16 %v6629
    %v8804 = vunpack.c.l.b16 %v6630
    %v8805 = vunpack.c.h.b16 %v6630
    %v8806 = vunpack.c.l.b16 %v6631
    %v8807 = vunpack.c.h.b16 %v6631
    %v8808 = vunpack.c.l.b16 %v6632
    %v8809 = vunpack.c.h.b16 %v6632
    %v8810 = vunpack.c.l.b16 %v6633
    %v8811 = vunpack.c.h.b16 %v6633
    %v8812 = vunpack.c.l.b16 %v6634
    %v8813 = vunpack.c.h.b16 %v6634
    %v8814 = vunpack.c.l.b16 %v6635
    %v8815 = vunpack.c.h.b16 %v6635
    %v8816 = vunpack.c.l.b16 %v6636
    %v8817 = vunpack.c.h.b16 %v6636
    %v8818 = vunpack.c.l.b16 %v6637
    %v8819 = vunpack.c.h.b16 %v6637
    %v8820 = vunpack.c.l.b16 %v6638
    %v8821 = vunpack.c.h.b16 %v6638
    %v8822 = vunpack.c.l.b16 %v6639
    %v8823 = vunpack.c.h.b16 %v6639
    %v8824 = vunpack.c.l.b16 %v6640
    %v8825 = vunpack.c.h.b16 %v6640
    %v8826 = vunpack.c.l.b16 %v6641
    %v8827 = vunpack.c.h.b16 %v6641
    %v8828 = vunpack.c.l.b16 %v6642
    %v8829 = vunpack.c.h.b16 %v6642
    %v8830 = vunpack.c.l.b16 %v6643
    %v8831 = vunpack.c.h.b16 %v6643
    %v8832 = vunpack.c.l.b16 %v6644
    %v8833 = vunpack.c.h.b16 %v6644
    %v8834 = vunpack.c.l.b16 %v6645
    %v8835 = vunpack.c.h.b16 %v6645
    %v8836 = vunpack.c.l.b16 %v6646
    %v8837 = vunpack.c.h.b16 %v6646
    %v8838 = vunpack.c.l.b16 %v6647
    %v8839 = vunpack.c.h.b16 %v6647
    %v8840 = vunpack.c.l.b16 %v6648
    %v8841 = vunpack.c.h.b16 %v6648
    %v8842 = vunpack.c.l.b16 %v6649
    %v8843 = vunpack.c.h.b16 %v6649
    %v8844 = vunpack.c.l.b16 %v6650
    %v8845 = vunpack.c.h.b16 %v6650
    %v8846 = vunpack.c.l.b16 %v6651
    %v8847 = vunpack.c.h.b16 %v6651
    %v8848 = vunpack.c.l.b16 %v6652
    %v8849 = vunpack.c.h.b16 %v6652
    %v8850 = vunpack.c.l.b16 %v6653
    %v8851 = vunpack.c.h.b16 %v6653
    %v8852 = vunpack.c.l.b16 %v6654
    %v8853 = vunpack.c.h.b16 %v6654
    %v8854 = vunpack.c.l.b16 %v6655
    %v8855 = vunpack.c.h.b16 %v6655
    %v8856 = vunpack.c.l.b16 %v6656
    %v8857 = vunpack.c.h.b16 %v6656
    %v8858 = vunpack.c.l.b16 %v6657
    %v8859 = vunpack.c.h.b16 %v6657
    %v8860 = vunpack.c.l.b16 %v6658
    %v8861 = vunpack.c.h.b16 %v6658
    %v8862 = vunpack.c.l.b16 %v6659
    %v8863 = vunpack.c.h.b16 %v6659
    %v8864 = vunpack.c.l.b16 %v6660
    %v8865 = vunpack.c.h.b16 %v6660
    %v8866 = vunpack.c.l.b16 %v6661
    %v8867 = vunpack.c.h.b16 %v6661
    %v8868 = vunpack.c.l.b16 %v6662
    %v8869 = vunpack.c.h.b16 %v6662
    %v8870 = vunpack.c.l.b16 %v6663
    %v8871 = vunpack.c.h.b16 %v6663
    %v8872 = vunpack.c.l.b16 %v6664
    %v8873 = vunpack.c.h.b16 %v6664
    %v8874 = vunpack.c.l.b16 %v6665
    %v8875 = vunpack.c.h.b16 %v6665
    %v8876 = vunpack.c.l.b16 %v6666
    %v8877 = vunpack.c.h.b16 %v6666
    %v8878 = vunpack.c.l.b16 %v6667
    %v8879 = vunpack.c.h.b16 %v6667
    %v8880 = vunpack.c.l.b16 %v6668
    %v8881 = vunpack.c.h.b16 %v6668
    %v8882 = vunpack.c.l.b16 %v6669
    %v8883 = vunpack.c.h.b16 %v6669
    %v8884 = vunpack.c.l.b16 %v6670
    %v8885 = vunpack.c.h.b16 %v6670
    %v8886 = vunpack.c.l.b16 %v6671
    %v8887 = vunpack.c.h.b16 %v6671
    %v8888 = vunpack.c.l.b16 %v6672
    %v8889 = vunpack.c.h.b16 %v6672
    %v8890 = vunpack.c.l.b16 %v6673
    %v8891 = vunpack.c.h.b16 %v6673
    %v8892 = vunpack.c.l.b16 %v6674
    %v8893 = vunpack.c.h.b16 %v6674
    %v8894 = vunpack.c.l.b16 %v6675
    %v8895 = vunpack.c.h.b16 %v6675
    %v8896 = vunpack.c.l.b16 %v6676
    %v8897 = vunpack.c.h.b16 %v6676
    %v8898 = vunpack.c.l.b16 %v6677
    %v8899 = vunpack.c.h.b16 %v6677
    %v8900 = vunpack.c.l.b16 %v6678
    %v8901 = vunpack.c.h.b16 %v6678
    %v8902 = vunpack.c.l.b16 %v6679
    %v8903 = vunpack.c.h.b16 %v6679
    %v8904 = vunpack.c.l.b16 %v6680
    %v8905 = vunpack.c.h.b16 %v6680
    %v8906 = vunpack.c.l.b16 %v6681
    %v8907 = vunpack.c.h.b16 %v6681
    %v8908 = vunpack.c.l.b16 %v6682
    %v8909 = vunpack.c.h.b16 %v6682
    %v8910 = vunpack.c.l.b16 %v6683
    %v8911 = vunpack.c.h.b16 %v6683
    %v8912 = vunpack.c.l.b16 %v6684
    %v8913 = vunpack.c.h.b16 %v6684
    %v8914 = vunpack.c.l.b16 %v6685
    %v8915 = vunpack.c.h.b16 %v6685
    %v8916 = vunpack.c.l.b16 %v6686
    %v8917 = vunpack.c.h.b16 %v6686
    %v8918 = vunpack.c.l.b16 %v6687
    %v8919 = vunpack.c.h.b16 %v6687
    %v8920 = vunpack.c.l.b16 %v6688
    %v8921 = vunpack.c.h.b16 %v6688
    %v8922 = vunpack.c.l.b16 %v6689
    %v8923 = vunpack.c.h.b16 %v6689
    %v8924 = vunpack.c.l.b16 %v6690
    %v8925 = vunpack.c.h.b16 %v6690
    %v8926 = vunpack.c.l.b16 %v6691
    %v8927 = vunpack.c.h.b16 %v6691
    %v8928 = vunpack.c.l.b16 %v6692
    %v8929 = vunpack.c.h.b16 %v6692
    %v8930 = vunpack.c.l.b16 %v6693
    %v8931 = vunpack.c.h.b16 %v6693
    %v8932 = vunpack.c.l.b16 %v6694
    %v8933 = vunpack.c.h.b16 %v6694
    %v8934 = vunpack.c.l.b16 %v6695
    %v8935 = vunpack.c.h.b16 %v6695
    %v8936 = vunpack.c.l.b16 %v6696
    %v8937 = vunpack.c.h.b16 %v6696
    %v8938 = vunpack.c.l.b16 %v6697
    %v8939 = vunpack.c.h.b16 %v6697
    %v8940 = vunpack.c.l.b16 %v6698
    %v8941 = vunpack.c.h.b16 %v6698
    %v8942 = vunpack.c.l.b16 %v6699
    %v8943 = vunpack.c.h.b16 %v6699
    %v8944 = vunpack.c.l.b16 %v6700
    %v8945 = vunpack.c.h.b16 %v6700
    %v8946 = vunpack.c.l.b16 %v6701
    %v8947 = vunpack.c.h.b16 %v6701
    %v8948 = vunpack.c.l.b16 %v6702
    %v8949 = vunpack.c.h.b16 %v6702
    %v8950 = vunpack.c.l.b16 %v6703
    %v8951 = vunpack.c.h.b16 %v6703
    %v8952 = vunpack.c.l.b16 %v6704
    %v8953 = vunpack.c.h.b16 %v6704
    %v8954 = vunpack.c.l.b16 %v6705
    %v8955 = vunpack.c.h.b16 %v6705
    %v8956 = vunpack.c.l.b16 %v6706
    %v8957 = vunpack.c.h.b16 %v6706
    %v8958 = vunpack.c.l.b16 %v6707
    %v8959 = vunpack.c.h.b16 %v6707
    %v8960 = vunpack.c.l.b16 %v6708
    %v8961 = vunpack.c.h.b16 %v6708
    %v8962 = vunpack.c.l.b16 %v6709
    %v8963 = vunpack.c.h.b16 %v6709
    %v8964 = vunpack.c.l.b16 %v6710
    %v8965 = vunpack.c.h.b16 %v6710
    %v8966 = vunpack.c.l.b16 %v6711
    %v8967 = vunpack.c.h.b16 %v6711
    %v8968 = vunpack.c.l.b16 %v6712
    %v8969 = vunpack.c.h.b16 %v6712
    %v8970 = vunpack.c.l.b16 %v6713
    %v8971 = vunpack.c.h.b16 %v6713
    %v8972 = vunpack.c.l.b16 %v6714
    %v8973 = vunpack.c.h.b16 %v6714
    %v8974 = vunpack.c.l.b16 %v6715
    %v8975 = vunpack.c.h.b16 %v6715
    %v8976 = vunpack.c.l.b16 %v6716
    %v8977 = vunpack.c.h.b16 %v6716
    %v8978 = vunpack.c.l.b16 %v6717
    %v8979 = vunpack.c.h.b16 %v6717
    %v8980 = vunpack.c.l.b16 %v6718
    %v8981 = vunpack.c.h.b16 %v6718
    %v8982 = vunpack.c.l.b16 %v6719
    %v8983 = vunpack.c.h.b16 %v6719
    %v8984 = vunpack.c.l.b16 %v6720
    %v8985 = vunpack.c.h.b16 %v6720
    %v8986 = vunpack.c.l.b16 %v6721
    %v8987 = vunpack.c.h.b16 %v6721
    %v8988 = vunpack.c.l.b16 %v6722
    %v8989 = vunpack.c.h.b16 %v6722
    %v8990 = vunpack.c.l.b16 %v6723
    %v8991 = vunpack.c.h.b16 %v6723
    %v8992 = vunpack.c.l.b16 %v6724
    %v8993 = vunpack.c.h.b16 %v6724
    %v8994 = vunpack.c.l.b16 %v6725
    %v8995 = vunpack.c.h.b16 %v6725
    %v8996 = vunpack.c.l.b16 %v6726
    %v8997 = vunpack.c.h.b16 %v6726
    %v8998 = vunpack.c.l.b16 %v6727
    %v8999 = vunpack.c.h.b16 %v6727
    %v9000 = vunpack.c.l.b16 %v6728
    %v9001 = vunpack.c.h.b16 %v6728
    %v9002 = vunpack.c.l.b16 %v6729
    %v9003 = vunpack.c.h.b16 %v6729
    %v9004 = vunpack.c.l.b16 %v6730
    %v9005 = vunpack.c.h.b16 %v6730
    %v9006 = vunpack.c.l.b16 %v6731
    %v9007 = vunpack.c.h.b16 %v6731
    %v9008 = vunpack.c.l.b16 %v6732
    %v9009 = vunpack.c.h.b16 %v6732
    %v9010 = vunpack.c.l.b16 %v6733
    %v9011 = vunpack.c.h.b16 %v6733
    %v9012 = vunpack.c.l.b16 %v6734
    %v9013 = vunpack.c.h.b16 %v6734
    %v9014 = vunpack.c.l.b16 %v6735
    %v9015 = vunpack.c.h.b16 %v6735
    %v9016 = vunpack.c.l.b16 %v6736
    %v9017 = vunpack.c.h.b16 %v6736
    %v9018 = vunpack.c.l.b16 %v6737
    %v9019 = vunpack.c.h.b16 %v6737
    %v9020 = vunpack.c.l.b16 %v6738
    %v9021 = vunpack.c.h.b16 %v6738
    %v9022 = vunpack.c.l.b16 %v6739
    %v9023 = vunpack.c.h.b16 %v6739
    %v9024 = vunpack.c.l.b16 %v6740
    %v9025 = vunpack.c.h.b16 %v6740
    %v9026 = vunpack.c.l.b16 %v6741
    %v9027 = vunpack.c.h.b16 %v6741
    %v9028 = vunpack.c.l.b16 %v6742
    %v9029 = vunpack.c.h.b16 %v6742
    %v9030 = vunpack.c.l.b16 %v6743
    %v9031 = vunpack.c.h.b16 %v6743
    %v9032 = vunpack.c.l.b16 %v6744
    %v9033 = vunpack.c.h.b16 %v6744
    %v9034 = vunpack.c.l.b16 %v6745
    %v9035 = vunpack.c.h.b16 %v6745
    %v9036 = vunpack.c.l.b16 %v6746
    %v9037 = vunpack.c.h.b16 %v6746
    %v9038 = vunpack.c.l.b16 %v6747
    %v9039 = vunpack.c.h.b16 %v6747
    %v9040 = vunpack.c.l.b16 %v6748
    %v9041 = vunpack.c.h.b16 %v6748
    %v9042 = vunpack.c.l.b16 %v6749
    %v9043 = vunpack.c.h.b16 %v6749
    %v9044 = vunpack.c.l.b16 %v6750
    %v9045 = vunpack.c.h.b16 %v6750
    %v9046 = vunpack.c.l.b16 %v6751
    %v9047 = vunpack.c.h.b16 %v6751
    %v9048 = vunpack.c.l.b16 %v6752
    %v9049 = vunpack.c.h.b16 %v6752
    %v9050 = vunpack.c.l.b16 %v6753
    %v9051 = vunpack.c.h.b16 %v6753
    %v9052 = vunpack.c.l.b16 %v6754
    %v9053 = vunpack.c.h.b16 %v6754
    %v9054 = vunpack.c.l.b16 %v6755
    %v9055 = vunpack.c.h.b16 %v6755
    %v9056 = vunpack.c.l.b16 %v6756
    %v9057 = vunpack.c.h.b16 %v6756
    %v9058 = vunpack.c.l.b16 %v6757
    %v9059 = vunpack.c.h.b16 %v6757
    %v9060 = vunpack.c.l.b16 %v6758
    %v9061 = vunpack.c.h.b16 %v6758
    %v9062 = vunpack.c.l.b16 %v6759
    %v9063 = vunpack.c.h.b16 %v6759
    %v9064 = vunpack.c.l.b16 %v6760
    %v9065 = vunpack.c.h.b16 %v6760
    %v9066 = vunpack.c.l.b16 %v6761
    %v9067 = vunpack.c.h.b16 %v6761
    %v9068 = vunpack.c.l.b16 %v6762
    %v9069 = vunpack.c.h.b16 %v6762
    %v9070 = vunpack.c.l.b16 %v6763
    %v9071 = vunpack.c.h.b16 %v6763
    %v9072 = vunpack.c.l.b16 %v6764
    %v9073 = vunpack.c.h.b16 %v6764
    %v9074 = vunpack.c.l.b16 %v6765
    %v9075 = vunpack.c.h.b16 %v6765
    %v9076 = vunpack.c.l.b16 %v6766
    %v9077 = vunpack.c.h.b16 %v6766
    %v9078 = vunpack.c.l.b16 %v6767
    %v9079 = vunpack.c.h.b16 %v6767
    %v9080 = vunpack.c.l.b16 %v6768
    %v9081 = vunpack.c.h.b16 %v6768
    %v9082 = vunpack.c.l.b16 %v6769
    %v9083 = vunpack.c.h.b16 %v6769
    %v9084 = vunpack.c.l.b16 %v6770
    %v9085 = vunpack.c.h.b16 %v6770
    %v9086 = vunpack.c.l.b16 %v6771
    %v9087 = vunpack.c.h.b16 %v6771
    %v9088 = vunpack.c.l.b16 %v6772
    %v9089 = vunpack.c.h.b16 %v6772
    %v9090 = vunpack.c.l.b16 %v6773
    %v9091 = vunpack.c.h.b16 %v6773
    %v9092 = vunpack.c.l.b16 %v6774
    %v9093 = vunpack.c.h.b16 %v6774
    %v9094 = vunpack.c.l.b16 %v6775
    %v9095 = vunpack.c.h.b16 %v6775
    %v9096 = vunpack.c.l.b16 %v6776
    %v9097 = vunpack.c.h.b16 %v6776
    %v9098 = vunpack.c.l.b16 %v6777
    %v9099 = vunpack.c.h.b16 %v6777
    %v9100 = vunpack.c.l.b16 %v6778
    %v9101 = vunpack.c.h.b16 %v6778
    %v9102 = vunpack.c.l.b16 %v6779
    %v9103 = vunpack.c.h.b16 %v6779
    %v9104 = vunpack.c.l.b16 %v6780
    %v9105 = vunpack.c.h.b16 %v6780
    %v9106 = vunpack.c.l.b16 %v6781
    %v9107 = vunpack.c.h.b16 %v6781
    %v9108 = vunpack.c.l.b16 %v6782
    %v9109 = vunpack.c.h.b16 %v6782
    %v9110 = vunpack.c.l.b16 %v6783
    %v9111 = vunpack.c.h.b16 %v6783
    %v9112 = vunpack.c.l.b16 %v6784
    %v9113 = vunpack.c.h.b16 %v6784
    %v9114 = vunpack.c.l.b16 %v6785
    %v9115 = vunpack.c.h.b16 %v6785
    %v9116 = vunpack.c.l.b16 %v6786
    %v9117 = vunpack.c.h.b16 %v6786
    %v9118 = vunpack.c.l.b16 %v6787
    %v9119 = vunpack.c.h.b16 %v6787
    %v9120 = vunpack.c.l.b16 %v6788
    %v9121 = vunpack.c.h.b16 %v6788
    %v9122 = vunpack.c.l.b16 %v6789
    %v9123 = vunpack.c.h.b16 %v6789
    %v9124 = vunpack.c.l.b16 %v6790
    %v9125 = vunpack.c.h.b16 %v6790
    %v9126 = vunpack.c.l.b16 %v6791
    %v9127 = vunpack.c.h.b16 %v6791
    %v9128 = vunpack.c.l.b16 %v6792
    %v9129 = vunpack.c.h.b16 %v6792
    %v9130 = vunpack.c.l.b16 %v6793
    %v9131 = vunpack.c.h.b16 %v6793
    %v9132 = vunpack.c.l.b16 %v6794
    %v9133 = vunpack.c.h.b16 %v6794
    %v9134 = vunpack.c.l.b16 %v6795
    %v9135 = vunpack.c.h.b16 %v6795
    %v9136 = vunpack.c.l.b16 %v6796
    %v9137 = vunpack.c.h.b16 %v6796
    %v9138 = vunpack.c.l.b16 %v6797
    %v9139 = vunpack.c.h.b16 %v6797
    %v9140 = vunpack.c.l.b16 %v6798
    %v9141 = vunpack.c.h.b16 %v6798
    %v9142 = vunpack.c.l.b16 %v6799
    %v9143 = vunpack.c.h.b16 %v6799
    %v9144 = vunpack.c.l.b16 %v6800
    %v9145 = vunpack.c.h.b16 %v6800
    %v9146 = vunpack.c.l.b16 %v6801
    %v9147 = vunpack.c.h.b16 %v6801
    %v9148 = vunpack.c.l.b16 %v6802
    %v9149 = vunpack.c.h.b16 %v6802
    %v9150 = vunpack.c.l.b16 %v6803
    %v9151 = vunpack.c.h.b16 %v6803
    %v9152 = vunpack.c.l.b16 %v6804
    %v9153 = vunpack.c.h.b16 %v6804
    %v9154 = vunpack.c.l.b16 %v6805
    %v9155 = vunpack.c.h.b16 %v6805
    %v9156 = vunpack.c.l.b16 %v6806
    %v9157 = vunpack.c.h.b16 %v6806
    %v9158 = vunpack.c.l.b16 %v6807
    %v9159 = vunpack.c.h.b16 %v6807
    %v9160 = vunpack.c.l.b16 %v6808
    %v9161 = vunpack.c.h.b16 %v6808
    %v9162 = vunpack.c.l.b16 %v6809
    %v9163 = vunpack.c.h.b16 %v6809
    %v9164 = vunpack.c.l.b16 %v6810
    %v9165 = vunpack.c.h.b16 %v6810
    %v9166 = vunpack.c.l.b16 %v6811
    %v9167 = vunpack.c.h.b16 %v6811
    %v9168 = vunpack.c.l.b16 %v6812
    %v9169 = vunpack.c.h.b16 %v6812
    %v9170 = vunpack.c.l.b16 %v6813
    %v9171 = vunpack.c.h.b16 %v6813
    %v9172 = vunpack.c.l.b16 %v6814
    %v9173 = vunpack.c.h.b16 %v6814
    %v9174 = vunpack.c.l.b16 %v6815
    %v9175 = vunpack.c.h.b16 %v6815
    %v9176 = vunpack.c.l.b16 %v6816
    %v9177 = vunpack.c.h.b16 %v6816
    %v9178 = vunpack.c.l.b16 %v6817
    %v9179 = vunpack.c.h.b16 %v6817
    %v9180 = vunpack.c.l.b16 %v6818
    %v9181 = vunpack.c.h.b16 %v6818
    %v9182 = vunpack.c.l.b16 %v6819
    %v9183 = vunpack.c.h.b16 %v6819
    %v9184 = vunpack.c.l.b16 %v6820
    %v9185 = vunpack.c.h.b16 %v6820
    %v9186 = vunpack.c.l.b16 %v6821
    %v9187 = vunpack.c.h.b16 %v6821
    %v9188 = vunpack.c.l.b16 %v6822
    %v9189 = vunpack.c.h.b16 %v6822
    %v9190 = vunpack.c.l.b16 %v6823
    %v9191 = vunpack.c.h.b16 %v6823
    %v9192 = vunpack.c.l.b16 %v6824
    %v9193 = vunpack.c.h.b16 %v6824
    %v9194 = vunpack.c.l.b16 %v6825
    %v9195 = vunpack.c.h.b16 %v6825
    %v9196 = vunpack.c.l.b16 %v6826
    %v9197 = vunpack.c.h.b16 %v6826
    %v9198 = vunpack.c.l.b16 %v6827
    %v9199 = vunpack.c.h.b16 %v6827
    %v9200 = vunpack.c.l.b16 %v6828
    %v9201 = vunpack.c.h.b16 %v6828
    %v9202 = vunpack.c.l.b16 %v6829
    %v9203 = vunpack.c.h.b16 %v6829
    %v9204 = vunpack.c.l.b16 %v6830
    %v9205 = vunpack.c.h.b16 %v6830
    %v9206 = vunpack.c.l.b16 %v6831
    %v9207 = vunpack.c.h.b16 %v6831
    %v9208 = vunpack.c.l.b16 %v6832
    %v9209 = vunpack.c.h.b16 %v6832
    %v9210 = vunpack.c.l.b16 %v6833
    %v9211 = vunpack.c.h.b16 %v6833
    %v9212 = vunpack.c.l.b16 %v6834
    %v9213 = vunpack.c.h.b16 %v6834
    %v9214 = vunpack.c.l.b16 %v6835
    %v9215 = vunpack.c.h.b16 %v6835
    %v9216 = vunpack.c.l.b16 %v6836
    %v9217 = vunpack.c.h.b16 %v6836
    %v9218 = vunpack.c.l.b16 %v6837
    %v9219 = vunpack.c.h.b16 %v6837
    %v9220 = vunpack.c.l.b16 %v6838
    %v9221 = vunpack.c.h.b16 %v6838
    %v9222 = vunpack.c.l.b16 %v6839
    %v9223 = vunpack.c.h.b16 %v6839
    %v9224 = vunpack.c.l.b16 %v6840
    %v9225 = vunpack.c.h.b16 %v6840
    %v9226 = vunpack.c.l.b16 %v6841
    %v9227 = vunpack.c.h.b16 %v6841
    %v9228 = vunpack.c.l.b16 %v6842
    %v9229 = vunpack.c.h.b16 %v6842
    %v9230 = vunpack.c.l.b16 %v6843
    %v9231 = vunpack.c.h.b16 %v6843
    %v9232 = vunpack.c.l.b16 %v6844
    %v9233 = vunpack.c.h.b16 %v6844
    %v9234 = vunpack.c.l.b16 %v6845
    %v9235 = vunpack.c.h.b16 %v6845
    %v9236 = vunpack.c.l.b16 %v6846
    %v9237 = vunpack.c.h.b16 %v6846
    %v9238 = vunpack.c.l.b16 %v6847
    %v9239 = vunpack.c.h.b16 %v6847
    %v9240 = vunpack.c.l.b16 %v6848
    %v9241 = vunpack.c.h.b16 %v6848
    %v9242 = vunpack.c.l.b16 %v6849
    %v9243 = vunpack.c.h.b16 %v6849
    %v9244 = vunpack.c.l.b16 %v6850
    %v9245 = vunpack.c.h.b16 %v6850
    %v9246 = vunpack.c.l.b16 %v6851
    %v9247 = vunpack.c.h.b16 %v6851
    %v9248 = vunpack.c.l.b16 %v6852
    %v9249 = vunpack.c.h.b16 %v6852
    %v9250 = vunpack.c.l.b16 %v6853
    %v9251 = vunpack.c.h.b16 %v6853
    %v9252 = vunpack.c.l.b16 %v6854
    %v9253 = vunpack.c.h.b16 %v6854
    %v9254 = vunpack.c.l.b16 %v6855
    %v9255 = vunpack.c.h.b16 %v6855
    %v9256 = vunpack.c.l.b16 %v6856
    %v9257 = vunpack.c.h.b16 %v6856
    %v9258 = vunpack.c.l.b16 %v6857
    %v9259 = vunpack.c.h.b16 %v6857
    %v9260 = vunpack.c.l.b16 %v6858
    %v9261 = vunpack.c.h.b16 %v6858
    %v9262 = vunpack.c.l.b16 %v6859
    %v9263 = vunpack.c.h.b16 %v6859
    %v9264 = vunpack.c.l.b16 %v6860
    %v9265 = vunpack.c.h.b16 %v6860
    %v9266 = vunpack.c.l.b16 %v6861
    %v9267 = vunpack.c.h.b16 %v6861
    %v9268 = vunpack.c.l.b16 %v6862
    %v9269 = vunpack.c.h.b16 %v6862
    %v9270 = vunpack.c.l.b16 %v6863
    %v9271 = vunpack.c.h.b16 %v6863
    %v9272 = vunpack.c.l.b16 %v6864
    %v9273 = vunpack.c.h.b16 %v6864
    %v9274 = vunpack.c.l.b16 %v6865
    %v9275 = vunpack.c.h.b16 %v6865
    %v9276 = vunpack.c.l.b16 %v6866
    %v9277 = vunpack.c.h.b16 %v6866
    %v9278 = vunpack.c.l.b16 %v6867
    %v9279 = vunpack.c.h.b16 %v6867
    %v9280 = vunpack.c.l.b16 %v6868
    %v9281 = vunpack.c.h.b16 %v6868
    %v9282 = vunpack.c.l.b16 %v6869
    %v9283 = vunpack.c.h.b16 %v6869
    %v9284 = vunpack.c.l.b16 %v6870
    %v9285 = vunpack.c.h.b16 %v6870
    %v9286 = vunpack.c.l.b16 %v6871
    %v9287 = vunpack.c.h.b16 %v6871
    %v9288 = vunpack.c.l.b16 %v6872
    %v9289 = vunpack.c.h.b16 %v6872
    %v9290 = vunpack.c.l.b16 %v6873
    %v9291 = vunpack.c.h.b16 %v6873
    %v9292 = vunpack.c.l.b16 %v6874
    %v9293 = vunpack.c.h.b16 %v6874
    %v9294 = vunpack.c.l.b16 %v6875
    %v9295 = vunpack.c.h.b16 %v6875
    %v9296 = vunpack.c.l.b16 %v6876
    %v9297 = vunpack.c.h.b16 %v6876
    %v9298 = vunpack.c.l.b16 %v6877
    %v9299 = vunpack.c.h.b16 %v6877
    %v9300 = vunpack.c.l.b16 %v6878
    %v9301 = vunpack.c.h.b16 %v6878
    %v9302 = vunpack.c.l.b16 %v6879
    %v9303 = vunpack.c.h.b16 %v6879
    %v9304 = vunpack.c.l.b16 %v6880
    %v9305 = vunpack.c.h.b16 %v6880
    %v9306 = vunpack.c.l.b16 %v6881
    %v9307 = vunpack.c.h.b16 %v6881
    %v9308 = vunpack.c.l.b16 %v6882
    %v9309 = vunpack.c.h.b16 %v6882
    %v9310 = vunpack.c.l.b16 %v6883
    %v9311 = vunpack.c.h.b16 %v6883
    %v9312 = vunpack.c.l.b16 %v6884
    %v9313 = vunpack.c.h.b16 %v6884
    %v9314 = vunpack.c.l.b16 %v6885
    %v9315 = vunpack.c.h.b16 %v6885
    %v9316 = vunpack.c.l.b16 %v6886
    %v9317 = vunpack.c.h.b16 %v6886
    %v9318 = vunpack.c.l.b16 %v6887
    %v9319 = vunpack.c.h.b16 %v6887
    %v9320 = vunpack.c.l.b16 %v6888
    %v9321 = vunpack.c.h.b16 %v6888
    %v9322 = vunpack.c.l.b16 %v6889
    %v9323 = vunpack.c.h.b16 %v6889
    %v9324 = vunpack.c.l.b16 %v6890
    %v9325 = vunpack.c.h.b16 %v6890
    %v9326 = vunpack.c.l.b16 %v6891
    %v9327 = vunpack.c.h.b16 %v6891
    %v9328 = vunpack.c.l.b16 %v6892
    %v9329 = vunpack.c.h.b16 %v6892
    %v9330 = vunpack.c.l.b16 %v6893
    %v9331 = vunpack.c.h.b16 %v6893
    %v9332 = vunpack.c.l.b16 %v6894
    %v9333 = vunpack.c.h.b16 %v6894
    %v9334 = vunpack.c.l.b16 %v6895
    %v9335 = vunpack.c.h.b16 %v6895
    %v9336 = vunpack.c.l.b16 %v6896
    %v9337 = vunpack.c.h.b16 %v6896
    %v9338 = vunpack.c.l.b16 %v6897
    %v9339 = vunpack.c.h.b16 %v6897
    %v9340 = vunpack.c.l.b16 %v6898
    %v9341 = vunpack.c.h.b16 %v6898
    %v9342 = vunpack.c.l.b16 %v6899
    %v9343 = vunpack.c.h.b16 %v6899
    %v9344 = vunpack.c.l.b16 %v6900
    %v9345 = vunpack.c.h.b16 %v6900
    %v9346 = vunpack.c.l.b16 %v6901
    %v9347 = vunpack.c.h.b16 %v6901
    %v9348 = vunpack.c.l.b16 %v6902
    %v9349 = vunpack.c.h.b16 %v6902
    %v9350 = vunpack.c.l.b16 %v6903
    %v9351 = vunpack.c.h.b16 %v6903
    %v9352 = vunpack.c.l.b16 %v6904
    %v9353 = vunpack.c.h.b16 %v6904
    %v9354 = vunpack.c.l.b16 %v6905
    %v9355 = vunpack.c.h.b16 %v6905
    %v9356 = vunpack.c.l.b16 %v6906
    %v9357 = vunpack.c.h.b16 %v6906
    %v9358 = vunpack.c.l.b16 %v6907
    %v9359 = vunpack.c.h.b16 %v6907
    %v9360 = vunpack.c.l.b16 %v6908
    %v9361 = vunpack.c.h.b16 %v6908
    %v9362 = vunpack.c.l.b16 %v6909
    %v9363 = vunpack.c.h.b16 %v6909
    %v9364 = vunpack.c.l.b16 %v6910
    %v9365 = vunpack.c.h.b16 %v6910
    %v9366 = vunpack.c.l.b16 %v6911
    %v9367 = vunpack.c.h.b16 %v6911
    %v9368 = vunpack.c.l.b16 %v6912
    %v9369 = vunpack.c.h.b16 %v6912
    %v9370 = vunpack.c.l.b16 %v6913
    %v9371 = vunpack.c.h.b16 %v6913
    %v9372 = vunpack.c.l.b16 %v6914
    %v9373 = vunpack.c.h.b16 %v6914
    %v9374 = vunpack.c.l.b16 %v6915
    %v9375 = vunpack.c.h.b16 %v6915
    %v9376 = vunpack.c.l.b16 %v6916
    %v9377 = vunpack.c.h.b16 %v6916
    %v9378 = vunpack.c.l.b16 %v6917
    %v9379 = vunpack.c.h.b16 %v6917
    %v9380 = vunpack.c.l.b16 %v6918
    %v9381 = vunpack.c.h.b16 %v6918
    %v9382 = vunpack.c.l.b16 %v6919
    %v9383 = vunpack.c.h.b16 %v6919
    %v9384 = vunpack.c.l.b16 %v6920
    %v9385 = vunpack.c.h.b16 %v6920
    %v9386 = vunpack.c.l.b16 %v6921
    %v9387 = vunpack.c.h.b16 %v6921
    %v9388 = vunpack.c.l.b16 %v6922
    %v9389 = vunpack.c.h.b16 %v6922
    %v9390 = vunpack.c.l.b16 %v6923
    %v9391 = vunpack.c.h.b16 %v6923
    %v9392 = vunpack.c.l.b16 %v6924
    %v9393 = vunpack.c.h.b16 %v6924
    %v9394 = vunpack.c.l.b16 %v6925
    %v9395 = vunpack.c.h.b16 %v6925
    %v9396 = vunpack.c.l.b16 %v6926
    %v9397 = vunpack.c.h.b16 %v6926
    %v9398 = vunpack.c.l.b16 %v6927
    %v9399 = vunpack.c.h.b16 %v6927
    %v9400 = vunpack.c.l.b16 %v6928
    %v9401 = vunpack.c.h.b16 %v6928
    %v9402 = vunpack.c.l.b16 %v6929
    %v9403 = vunpack.c.h.b16 %v6929
    %v9404 = vunpack.c.l.b16 %v6930
    %v9405 = vunpack.c.h.b16 %v6930
    %v9406 = vunpack.c.l.b16 %v6931
    %v9407 = vunpack.c.h.b16 %v6931
    %v9408 = vunpack.c.l.b16 %v6932
    %v9409 = vunpack.c.h.b16 %v6932
    %v9410 = vunpack.c.l.b16 %v6933
    %v9411 = vunpack.c.h.b16 %v6933
    %v9412 = vunpack.c.l.b16 %v6934
    %v9413 = vunpack.c.h.b16 %v6934
    %v9414 = vunpack.c.l.b16 %v6935
    %v9415 = vunpack.c.h.b16 %v6935
    %v9416 = vunpack.c.l.b16 %v6936
    %v9417 = vunpack.c.h.b16 %v6936
    %v9418 = vunpack.c.l.b16 %v6937
    %v9419 = vunpack.c.h.b16 %v6937
    %v9420 = vunpack.c.l.b16 %v6938
    %v9421 = vunpack.c.h.b16 %v6938
    %v9422 = vunpack.c.l.b16 %v6939
    %v9423 = vunpack.c.h.b16 %v6939
    %v9424 = vunpack.c.l.b16 %v6940
    %v9425 = vunpack.c.h.b16 %v6940
    %v9426 = vunpack.c.l.b16 %v6941
    %v9427 = vunpack.c.h.b16 %v6941
    %v9428 = vunpack.c.l.b16 %v6942
    %v9429 = vunpack.c.h.b16 %v6942
    %v9430 = vunpack.c.l.b16 %v6943
    %v9431 = vunpack.c.h.b16 %v6943
    %v9432 = vunpack.c.l.b16 %v6944
    %v9433 = vunpack.c.h.b16 %v6944
    %v9434 = vunpack.c.l.b16 %v6945
    %v9435 = vunpack.c.h.b16 %v6945
    %v9436 = vunpack.c.l.b16 %v6946
    %v9437 = vunpack.c.h.b16 %v6946
    %v9438 = vunpack.c.l.b16 %v6947
    %v9439 = vunpack.c.h.b16 %v6947
    %v9440 = vunpack.c.l.b16 %v6948
    %v9441 = vunpack.c.h.b16 %v6948
    %v9442 = vunpack.c.l.b16 %v6949
    %v9443 = vunpack.c.h.b16 %v6949
    %v9444 = vunpack.c.l.b16 %v6950
    %v9445 = vunpack.c.h.b16 %v6950
    %v9446 = vunpack.c.l.b16 %v6951
    %v9447 = vunpack.c.h.b16 %v6951
    %v9448 = vunpack.c.l.b16 %v6952
    %v9449 = vunpack.c.h.b16 %v6952
    %v9450 = vunpack.c.l.b16 %v6953
    %v9451 = vunpack.c.h.b16 %v6953
    %v9452 = vunpack.c.l.b16 %v6954
    %v9453 = vunpack.c.h.b16 %v6954
    %v9454 = vunpack.c.l.b16 %v6955
    %v9455 = vunpack.c.h.b16 %v6955
    %v9456 = vunpack.c.l.b16 %v6956
    %v9457 = vunpack.c.h.b16 %v6956
    %v9458 = vunpack.c.l.b16 %v6957
    %v9459 = vunpack.c.h.b16 %v6957
    %v9460 = vunpack.c.l.b16 %v6958
    %v9461 = vunpack.c.h.b16 %v6958
    %v9462 = vunpack.c.l.b16 %v6959
    %v9463 = vunpack.c.h.b16 %v6959
    %v9464 = vunpack.c.l.b16 %v6960
    %v9465 = vunpack.c.h.b16 %v6960
    %v9466 = vunpack.c.l.b16 %v6961
    %v9467 = vunpack.c.h.b16 %v6961
    %v9468 = vunpack.c.l.b16 %v6962
    %v9469 = vunpack.c.h.b16 %v6962
    %v9470 = vunpack.c.l.b16 %v6963
    %v9471 = vunpack.c.h.b16 %v6963
    %v9472 = vunpack.c.l.b16 %v6964
    %v9473 = vunpack.c.h.b16 %v6964
    %v9474 = vunpack.c.l.b16 %v6965
    %v9475 = vunpack.c.h.b16 %v6965
    %v9476 = vunpack.c.l.b16 %v6966
    %v9477 = vunpack.c.h.b16 %v6966
    %v9478 = vunpack.c.l.b16 %v6967
    %v9479 = vunpack.c.h.b16 %v6967
    %v9480 = vunpack.c.l.b16 %v6968
    %v9481 = vunpack.c.h.b16 %v6968
    %v9482 = vunpack.c.l.b16 %v6969
    %v9483 = vunpack.c.h.b16 %v6969
    %v9484 = vunpack.c.l.b16 %v6970
    %v9485 = vunpack.c.h.b16 %v6970
    %v9486 = vunpack.c.l.b16 %v6971
    %v9487 = vunpack.c.h.b16 %v6971
    %v9488 = vunpack.c.l.b16 %v6972
    %v9489 = vunpack.c.h.b16 %v6972
    %v9490 = vunpack.c.l.b16 %v6973
    %v9491 = vunpack.c.h.b16 %v6973
    %v9492 = vunpack.c.l.b16 %v6974
    %v9493 = vunpack.c.h.b16 %v6974
    %v9494 = vunpack.c.l.b16 %v6975
    %v9495 = vunpack.c.h.b16 %v6975
    %v9496 = vunpack.c.l.b16 %v6976
    %v9497 = vunpack.c.h.b16 %v6976
    %v9498 = vunpack.c.l.b16 %v6977
    %v9499 = vunpack.c.h.b16 %v6977
    %v9500 = vunpack.c.l.b16 %v6978
    %v9501 = vunpack.c.h.b16 %v6978
    %v9502 = vunpack.c.l.b16 %v6979
    %v9503 = vunpack.c.h.b16 %v6979
    %v9504 = vunpack.c.l.b16 %v6980
    %v9505 = vunpack.c.h.b16 %v6980
    %v9506 = vunpack.c.l.b16 %v6981
    %v9507 = vunpack.c.h.b16 %v6981
    %v9508 = vunpack.c.l.b16 %v6982
    %v9509 = vunpack.c.h.b16 %v6982
    %v9510 = vunpack.c.l.b16 %v6983
    %v9511 = vunpack.c.h.b16 %v6983
    %v9512 = vunpack.c.l.b16 %v6984
    %v9513 = vunpack.c.h.b16 %v6984
    %v9514 = vunpack.c.l.b16 %v6985
    %v9515 = vunpack.c.h.b16 %v6985
    %v9516 = vunpack.c.l.b16 %v6986
    %v9517 = vunpack.c.h.b16 %v6986
    %v9518 = vunpack.c.l.b16 %v6987
    %v9519 = vunpack.c.h.b16 %v6987
    %v9520 = vunpack.c.l.b16 %v6988
    %v9521 = vunpack.c.h.b16 %v6988
    %v9522 = vunpack.c.l.b16 %v6989
    %v9523 = vunpack.c.h.b16 %v6989
    %v9524 = vunpack.c.l.b16 %v6990
    %v9525 = vunpack.c.h.b16 %v6990
    %v9526 = vunpack.c.l.b16 %v6991
    %v9527 = vunpack.c.h.b16 %v6991
    %v9528 = vunpack.c.l.b16 %v6992
    %v9529 = vunpack.c.h.b16 %v6992
    %v9530 = vunpack.c.l.b16 %v6993
    %v9531 = vunpack.c.h.b16 %v6993
    %v9532 = vunpack.c.l.b16 %v6994
    %v9533 = vunpack.c.h.b16 %v6994
    %v9534 = vunpack.c.l.b16 %v6995
    %v9535 = vunpack.c.h.b16 %v6995
    %v9536 = vunpack.c.l.b16 %v6996
    %v9537 = vunpack.c.h.b16 %v6996
    %v9538 = vunpack.c.l.b16 %v6997
    %v9539 = vunpack.c.h.b16 %v6997
    %v9540 = vunpack.c.l.b16 %v6998
    %v9541 = vunpack.c.h.b16 %v6998
    %v9542 = vunpack.c.l.b16 %v6999
    %v9543 = vunpack.c.h.b16 %v6999
    %v9544 = vunpack.c.l.b16 %v7000
    %v9545 = vunpack.c.h.b16 %v7000
    %v9546 = vunpack.c.l.b16 %v7001
    %v9547 = vunpack.c.h.b16 %v7001
    %v9548 = vunpack.c.l.b16 %v7002
    %v9549 = vunpack.c.h.b16 %v7002
    %v9550 = vunpack.c.l.b16 %v7003
    %v9551 = vunpack.c.h.b16 %v7003
    %v9552 = vunpack.c.l.b16 %v7004
    %v9553 = vunpack.c.h.b16 %v7004
    %v9554 = vunpack.c.l.b16 %v7005
    %v9555 = vunpack.c.h.b16 %v7005
    %v9556 = vunpack.c.l.b16 %v7006
    %v9557 = vunpack.c.h.b16 %v7006
    %v9558 = vunpack.c.l.b16 %v7007
    %v9559 = vunpack.c.h.b16 %v7007
    %v9560 = vunpack.c.l.b16 %v7008
    %v9561 = vunpack.c.h.b16 %v7008
    %v9562 = vunpack.c.l.b16 %v7009
    %v9563 = vunpack.c.h.b16 %v7009
    %v9564 = vunpack.c.l.b16 %v7010
    %v9565 = vunpack.c.h.b16 %v7010
    %v9566 = vunpack.c.l.b16 %v7011
    %v9567 = vunpack.c.h.b16 %v7011
    %v9568 = vunpack.c.l.b16 %v7012
    %v9569 = vunpack.c.h.b16 %v7012
    %v9570 = vunpack.c.l.b16 %v7013
    %v9571 = vunpack.c.h.b16 %v7013
    %v9572 = vunpack.c.l.b16 %v7014
    %v9573 = vunpack.c.h.b16 %v7014
    %v9574 = vunpack.c.l.b16 %v7015
    %v9575 = vunpack.c.h.b16 %v7015
    %v9576 = vunpack.c.l.b16 %v7016
    %v9577 = vunpack.c.h.b16 %v7016
    %v9578 = vunpack.c.l.b16 %v7017
    %v9579 = vunpack.c.h.b16 %v7017
    %v9580 = vunpack.c.l.b16 %v7018
    %v9581 = vunpack.c.h.b16 %v7018
    %v9582 = vunpack.c.l.b16 %v7019
    %v9583 = vunpack.c.h.b16 %v7019
    %v9584 = vunpack.c.l.b16 %v7020
    %v9585 = vunpack.c.h.b16 %v7020
    %v9586 = vunpack.c.l.b16 %v7021
    %v9587 = vunpack.c.h.b16 %v7021
    %v9588 = vunpack.c.l.b16 %v7022
    %v9589 = vunpack.c.h.b16 %v7022
    %v9590 = vunpack.c.l.b16 %v7023
    %v9591 = vunpack.c.h.b16 %v7023
    %v9592 = vunpack.c.l.b16 %v7024
    %v9593 = vunpack.c.h.b16 %v7024
    %v9594 = vunpack.c.l.b16 %v7025
    %v9595 = vunpack.c.h.b16 %v7025
    %v9596 = vunpack.c.l.b16 %v7026
    %v9597 = vunpack.c.h.b16 %v7026
    %v9598 = vunpack.c.l.b16 %v7027
    %v9599 = vunpack.c.h.b16 %v7027
    %v9600 = vunpack.c.l.b16 %v7028
    %v9601 = vunpack.c.h.b16 %v7028
    %v9602 = vunpack.c.l.b16 %v7029
    %v9603 = vunpack.c.h.b16 %v7029
    %v9604 = vunpack.c.l.b16 %v7030
    %v9605 = vunpack.c.h.b16 %v7030
    %v9606 = vunpack.c.l.b16 %v7031
    %v9607 = vunpack.c.h.b16 %v7031
    %v9608 = vunpack.c.l.b16 %v7032
    %v9609 = vunpack.c.h.b16 %v7032
    %v9610 = vunpack.c.l.b16 %v7033
    %v9611 = vunpack.c.h.b16 %v7033
    %v9612 = vunpack.c.l.b16 %v7034
    %v9613 = vunpack.c.h.b16 %v7034
    %v9614 = vunpack.c.l.b16 %v7035
    %v9615 = vunpack.c.h.b16 %v7035
    %v9616 = vunpack.c.l.b16 %v7036
    %v9617 = vunpack.c.h.b16 %v7036
    %v9618 = vunpack.c.l.b16 %v7037
    %v9619 = vunpack.c.h.b16 %v7037
    %v9620 = vunpack.c.l.b16 %v7038
    %v9621 = vunpack.c.h.b16 %v7038
    %v9622 = vunpack.c.l.b16 %v7039
    %v9623 = vunpack.c.h.b16 %v7039
    %v9624 = vunpack.c.l.b16 %v7040
    %v9625 = vunpack.c.h.b16 %v7040
    %v9626 = vunpack.c.l.b16 %v7041
    %v9627 = vunpack.c.h.b16 %v7041
    %v9628 = vunpack.c.l.b16 %v7042
    %v9629 = vunpack.c.h.b16 %v7042
    %v9630 = vunpack.c.l.b16 %v7043
    %v9631 = vunpack.c.h.b16 %v7043
    %v9632 = vunpack.c.l.b16 %v7044
    %v9633 = vunpack.c.h.b16 %v7044
    %v9634 = vunpack.c.l.b16 %v7045
    %v9635 = vunpack.c.h.b16 %v7045
    %v9636 = vunpack.c.l.b16 %v7046
    %v9637 = vunpack.c.h.b16 %v7046
    %v9638 = vunpack.c.l.b16 %v7047
    %v9639 = vunpack.c.h.b16 %v7047
    %v9640 = vunpack.c.l.b16 %v7048
    %v9641 = vunpack.c.h.b16 %v7048
    %v9642 = vunpack.c.l.b16 %v7049
    %v9643 = vunpack.c.h.b16 %v7049
    %v9644 = vunpack.c.l.b16 %v7050
    %v9645 = vunpack.c.h.b16 %v7050
    %v9646 = vunpack.c.l.b16 %v7051
    %v9647 = vunpack.c.h.b16 %v7051
    %v9648 = vunpack.c.l.b16 %v7052
    %v9649 = vunpack.c.h.b16 %v7052
    %v9650 = vunpack.c.l.b16 %v7053
    %v9651 = vunpack.c.h.b16 %v7053
    %v9652 = vunpack.c.l.b16 %v7054
    %v9653 = vunpack.c.h.b16 %v7054
    %v9654 = vunpack.c.l.b16 %v7055
    %v9655 = vunpack.c.h.b16 %v7055
    %v9656 = vunpack.c.l.b16 %v7056
    %v9657 = vunpack.c.h.b16 %v7056
    %v9658 = vunpack.c.l.b16 %v7057
    %v9659 = vunpack.c.h.b16 %v7057
    %v9660 = vunpack.c.l.b16 %v7058
    %v9661 = vunpack.c.h.b16 %v7058
    %v9662 = vunpack.c.l.b16 %v7059
    %v9663 = vunpack.c.h.b16 %v7059
    %v9664 = vunpack.c.l.b16 %v7060
    %v9665 = vunpack.c.h.b16 %v7060
    %v9666 = vunpack.c.l.b16 %v7061
    %v9667 = vunpack.c.h.b16 %v7061
    %v9668 = vunpack.c.l.b16 %v7062
    %v9669 = vunpack.c.h.b16 %v7062
    %v9670 = vunpack.c.l.b16 %v7063
    %v9671 = vunpack.c.h.b16 %v7063
    %v9672 = vunpack.c.l.b16 %v7064
    %v9673 = vunpack.c.h.b16 %v7064
    %v9674 = vunpack.c.l.b16 %v7065
    %v9675 = vunpack.c.h.b16 %v7065
    %v9676 = vunpack.c.l.b16 %v7066
    %v9677 = vunpack.c.h.b16 %v7066
    %v9678 = vunpack.c.l.b16 %v7067
    %v9679 = vunpack.c.h.b16 %v7067
    %v9680 = vunpack.c.l.b16 %v7068
    %v9681 = vunpack.c.h.b16 %v7068
    %v9682 = vunpack.c.l.b16 %v7069
    %v9683 = vunpack.c.h.b16 %v7069
    %v9684 = vunpack.c.l.b16 %v7070
    %v9685 = vunpack.c.h.b16 %v7070
    %v9686 = vunpack.c.l.b16 %v7071
    %v9687 = vunpack.c.h.b16 %v7071
    %v9688 = vunpack.c.l.b16 %v7072
    %v9689 = vunpack.c.h.b16 %v7072
    %v9690 = vunpack.c.l.b16 %v7073
    %v9691 = vunpack.c.h.b16 %v7073
    %v9692 = vunpack.c.l.b16 %v7074
    %v9693 = vunpack.c.h.b16 %v7074
    %v9694 = vunpack.c.l.b16 %v7075
    %v9695 = vunpack.c.h.b16 %v7075
    %v9696 = vunpack.c.l.b16 %v7076
    %v9697 = vunpack.c.h.b16 %v7076
    %v9698 = vunpack.c.l.b16 %v7077
    %v9699 = vunpack.c.h.b16 %v7077
    %v9700 = vunpack.c.l.b16 %v7078
    %v9701 = vunpack.c.h.b16 %v7078
    %v9702 = vunpack.c.l.b16 %v7079
    %v9703 = vunpack.c.h.b16 %v7079
    %v9704 = vunpack.c.l.b16 %v7080
    %v9705 = vunpack.c.h.b16 %v7080
    %v9706 = vunpack.c.l.b16 %v7081
    %v9707 = vunpack.c.h.b16 %v7081
    %v9708 = vunpack.c.l.b16 %v7082
    %v9709 = vunpack.c.h.b16 %v7082
    %v9710 = vunpack.c.l.b16 %v7083
    %v9711 = vunpack.c.h.b16 %v7083
    %v9712 = vunpack.c.l.b16 %v7084
    %v9713 = vunpack.c.h.b16 %v7084
    %v9714 = vunpack.c.l.b16 %v7085
    %v9715 = vunpack.c.h.b16 %v7085
    %v9716 = vunpack.c.l.b16 %v7086
    %v9717 = vunpack.c.h.b16 %v7086
    %v9718 = vunpack.c.l.b16 %v7087
    %v9719 = vunpack.c.h.b16 %v7087
    %v9720 = vunpack.c.l.b16 %v7088
    %v9721 = vunpack.c.h.b16 %v7088
    %v9722 = vunpack.c.l.b16 %v7089
    %v9723 = vunpack.c.h.b16 %v7089
    %v9724 = vunpack.c.l.b16 %v7090
    %v9725 = vunpack.c.h.b16 %v7090
    %v9726 = vunpack.c.l.b16 %v7091
    %v9727 = vunpack.c.h.b16 %v7091
    %v9728 = vunpack.c.l.b16 %v7092
    %v9729 = vunpack.c.h.b16 %v7092
    %v9730 = vunpack.c.l.b16 %v7093
    %v9731 = vunpack.c.h.b16 %v7093
    %v9732 = vunpack.c.l.b16 %v7094
    %v9733 = vunpack.c.h.b16 %v7094
    %v9734 = vunpack.c.l.b16 %v7095
    %v9735 = vunpack.c.h.b16 %v7095
    %v9736 = vunpack.c.l.b16 %v7096
    %v9737 = vunpack.c.h.b16 %v7096
    %v9738 = vunpack.c.l.b16 %v7097
    %v9739 = vunpack.c.h.b16 %v7097
    %v9740 = vunpack.c.l.b16 %v7098
    %v9741 = vunpack.c.h.b16 %v7098
    %v9742 = vunpack.c.l.b16 %v7099
    %v9743 = vunpack.c.h.b16 %v7099
    %v9744 = vunpack.c.l.b16 %v7100
    %v9745 = vunpack.c.h.b16 %v7100
    %v9746 = vunpack.c.l.b16 %v7101
    %v9747 = vunpack.c.h.b16 %v7101
    %v9748 = vunpack.c.l.b16 %v7102
    %v9749 = vunpack.c.h.b16 %v7102
    %v9750 = vunpack.c.l.b16 %v7103
    %v9751 = vunpack.c.h.b16 %v7103
    %v9752 = vunpack.c.l.b16 %v7104
    %v9753 = vunpack.c.h.b16 %v7104
    %v9754 = vunpack.c.l.b16 %v7105
    %v9755 = vunpack.c.h.b16 %v7105
    %v9756 = vunpack.c.l.b16 %v7106
    %v9757 = vunpack.c.h.b16 %v7106
    %v9758 = vunpack.c.l.b16 %v7107
    %v9759 = vunpack.c.h.b16 %v7107
    %v9760 = vunpack.c.l.b16 %v7108
    %v9761 = vunpack.c.h.b16 %v7108
    %v9762 = vunpack.c.l.b16 %v7109
    %v9763 = vunpack.c.h.b16 %v7109
    %v9764 = vunpack.c.l.b16 %v7110
    %v9765 = vunpack.c.h.b16 %v7110
    %v9766 = vunpack.c.l.b16 %v7111
    %v9767 = vunpack.c.h.b16 %v7111
    %v9768 = vunpack.c.l.b16 %v7112
    %v9769 = vunpack.c.h.b16 %v7112
    %v9770 = vunpack.c.l.b16 %v7113
    %v9771 = vunpack.c.h.b16 %v7113
    %v9772 = vunpack.c.l.b16 %v7114
    %v9773 = vunpack.c.h.b16 %v7114
    %v9774 = vunpack.c.l.b16 %v7115
    %v9775 = vunpack.c.h.b16 %v7115
    %v9776 = vunpack.c.l.b16 %v7116
    %v9777 = vunpack.c.h.b16 %v7116
    %v9778 = vunpack.c.l.b16 %v7117
    %v9779 = vunpack.c.h.b16 %v7117
    %v9780 = vunpack.c.l.b16 %v7118
    %v9781 = vunpack.c.h.b16 %v7118
    %v9782 = vunpack.c.l.b16 %v7119
    %v9783 = vunpack.c.h.b16 %v7119
    %v9784 = vunpack.c.l.b16 %v7120
    %v9785 = vunpack.c.h.b16 %v7120
    %v9786 = vunpack.c.l.b16 %v7121
    %v9787 = vunpack.c.h.b16 %v7121
    %v9788 = vunpack.c.l.b16 %v7122
    %v9789 = vunpack.c.h.b16 %v7122
    %v9790 = vunpack.c.l.b16 %v7123
    %v9791 = vunpack.c.h.b16 %v7123
    %v9792 = vunpack.c.l.b16 %v7124
    %v9793 = vunpack.c.h.b16 %v7124
    %v9794 = vunpack.c.l.b16 %v7125
    %v9795 = vunpack.c.h.b16 %v7125
    %v9796 = vunpack.c.l.b16 %v7126
    %v9797 = vunpack.c.h.b16 %v7126
    %v9798 = vunpack.c.l.b16 %v7127
    %v9799 = vunpack.c.h.b16 %v7127
    %v9800 = vunpack.c.l.b16 %v7128
    %v9801 = vunpack.c.h.b16 %v7128
    %v9802 = vunpack.c.l.b16 %v7129
    %v9803 = vunpack.c.h.b16 %v7129
    %v9804 = vunpack.c.l.b16 %v7130
    %v9805 = vunpack.c.h.b16 %v7130
    %v9806 = vunpack.c.l.b16 %v7131
    %v9807 = vunpack.c.h.b16 %v7131
    %v9808 = vunpack.c.l.b16 %v7132
    %v9809 = vunpack.c.h.b16 %v7132
    %v9810 = vunpack.c.l.b16 %v7133
    %v9811 = vunpack.c.h.b16 %v7133
    %v9812 = vunpack.c.l.b16 %v7134
    %v9813 = vunpack.c.h.b16 %v7134
    %v9814 = vunpack.c.l.b16 %v7135
    %v9815 = vunpack.c.h.b16 %v7135
    %v9816 = vunpack.c.l.b16 %v7136
    %v9817 = vunpack.c.h.b16 %v7136
    %v9818 = vunpack.c.l.b16 %v7137
    %v9819 = vunpack.c.h.b16 %v7137
    %v9820 = vunpack.c.l.b16 %v7138
    %v9821 = vunpack.c.h.b16 %v7138
    %v9822 = vunpack.c.l.b16 %v7139
    %v9823 = vunpack.c.h.b16 %v7139
    %v9824 = vunpack.c.l.b16 %v7140
    %v9825 = vunpack.c.h.b16 %v7140
    %v9826 = vunpack.c.l.b16 %v7141
    %v9827 = vunpack.c.h.b16 %v7141
    %v9828 = vunpack.c.l.b16 %v7142
    %v9829 = vunpack.c.h.b16 %v7142
    %v9830 = vunpack.c.l.b16 %v7143
    %v9831 = vunpack.c.h.b16 %v7143
    %v9832 = vpack.c.b16 %v8122, %v8104
    %v9833 = vpack.c.b16 %v8123, %v8105
    %v9834 = vpack.c.b16 %v8124, %v8106
    %v9835 = vpack.c.b16 %v8125, %v8107
    %v9836 = vpack.c.b16 %v8126, %v8108
    %v9837 = vpack.c.b16 %v8127, %v8109
    %v9838 = vpack.c.b16 %v8128, %v8110
    %v9839 = vpack.c.b16 %v8129, %v8111
    %v9840 = vpack.c.b16 %v8130, %v8112
    %v9841 = vpack.c.b16 %v8131, %v8113
    %v9842 = vpack.c.b16 %v8132, %v8114
    %v9843 = vpack.c.b16 %v8133, %v8115
    %v9844 = vpack.c.b16 %v8134, %v8116
    %v9845 = vpack.c.b16 %v8135, %v8117
    %v9846 = vpack.c.b16 %v8136, %v8118
    %v9847 = vpack.c.b16 %v8137, %v8119
    %v9848 = vpack.c.b16 %v8138, %v8120
    %v9849 = vpack.c.b16 %v8139, %v8121
    %v9850 = vpack.c.b16 %v8158, %v8140
    %v9851 = vpack.c.b16 %v8159, %v8141
    %v9852 = vpack.c.b16 %v8160, %v8142
    %v9853 = vpack.c.b16 %v8161, %v8143
    %v9854 = vpack.c.b16 %v8162, %v8144
    %v9855 = vpack.c.b16 %v8163, %v8145
    %v9856 = vpack.c.b16 %v8164, %v8146
    %v9857 = vpack.c.b16 %v8165, %v8147
    %v9858 = vpack.c.b16 %v8166, %v8148
    %v9859 = vpack.c.b16 %v8167, %v8149
    %v9860 = vpack.c.b16 %v8168, %v8150
    %v9861 = vpack.c.b16 %v8169, %v8151
    %v9862 = vpack.c.b16 %v8170, %v8152
    %v9863 = vpack.c.b16 %v8171, %v8153
    %v9864 = vpack.c.b16 %v8172, %v8154
    %v9865 = vpack.c.b16 %v8173, %v8155
    %v9866 = vpack.c.b16 %v8174, %v8156
    %v9867 = vpack.c.b16 %v8175, %v8157
    %v9868 = vpack.c.b16 %v8194, %v8176
    %v9869 = vpack.c.b16 %v8195, %v8177
    %v9870 = vpack.c.b16 %v8196, %v8178
    %v9871 = vpack.c.b16 %v8197, %v8179
    %v9872 = vpack.c.b16 %v8198, %v8180
    %v9873 = vpack.c.b16 %v8199, %v8181
    %v9874 = vpack.c.b16 %v8200, %v8182
    %v9875 = vpack.c.b16 %v8201, %v8183
    %v9876 = vpack.c.b16 %v8202, %v8184
    %v9877 = vpack.c.b16 %v8203, %v8185
    %v9878 = vpack.c.b16 %v8204, %v8186
    %v9879 = vpack.c.b16 %v8205, %v8187
    %v9880 = vpack.c.b16 %v8206, %v8188
    %v9881 = vpack.c.b16 %v8207, %v8189
    %v9882 = vpack.c.b16 %v8208, %v8190
    %v9883 = vpack.c.b16 %v8209, %v8191
    %v9884 = vpack.c.b16 %v8210, %v8192
    %v9885 = vpack.c.b16 %v8211, %v8193
    %v9886 = vpack.c.b16 %v8230, %v8212
    %v9887 = vpack.c.b16 %v8231, %v8213
    %v9888 = vpack.c.b16 %v8232, %v8214
    %v9889 = vpack.c.b16 %v8233, %v8215
    %v9890 = vpack.c.b16 %v8234, %v8216
    %v9891 = vpack.c.b16 %v8235, %v8217
    %v9892 = vpack.c.b16 %v8236, %v8218
    %v9893 = vpack.c.b16 %v8237, %v8219
    %v9894 = vpack.c.b16 %v8238, %v8220
    %v9895 = vpack.c.b16 %v8239, %v8221
    %v9896 = vpack.c.b16 %v8240, %v8222
    %v9897 = vpack.c.b16 %v8241, %v8223
    %v9898 = vpack.c.b16 %v8242, %v8224
    %v9899 = vpack.c.b16 %v8243, %v8225
    %v9900 = vpack.c.b16 %v8244, %v8226
    %v9901 = vpack.c.b16 %v8245, %v8227
    %v9902 = vpack.c.b16 %v8246, %v8228
    %v9903 = vpack.c.b16 %v8247, %v8229
    %v9904 = vpack.c.b16 %v8266, %v8248
    %v9905 = vpack.c.b16 %v8267, %v8249
    %v9906 = vpack.c.b16 %v8268, %v8250
    %v9907 = vpack.c.b16 %v8269, %v8251
    %v9908 = vpack.c.b16 %v8270, %v8252
    %v9909 = vpack.c.b16 %v8271, %v8253
    %v9910 = vpack.c.b16 %v8272, %v8254
    %v9911 = vpack.c.b16 %v8273, %v8255
    %v9912 = vpack.c.b16 %v8274, %v8256
    %v9913 = vpack.c.b16 %v8275, %v8257
    %v9914 = vpack.c.b16 %v8276, %v8258
    %v9915 = vpack.c.b16 %v8277, %v8259
    %v9916 = vpack.c.b16 %v8278, %v8260
    %v9917 = vpack.c.b16 %v8279, %v8261
    %v9918 = vpack.c.b16 %v8280, %v8262
    %v9919 = vpack.c.b16 %v8281, %v8263
    %v9920 = vpack.c.b16 %v8282, %v8264
    %v9921 = vpack.c.b16 %v8283, %v8265
    %v9922 = vpack.c.b16 %v8302, %v8284
    %v9923 = vpack.c.b16 %v8303, %v8285
    %v9924 = vpack.c.b16 %v8304, %v8286
    %v9925 = vpack.c.b16 %v8305, %v8287
    %v9926 = vpack.c.b16 %v8306, %v8288
    %v9927 = vpack.c.b16 %v8307, %v8289
    %v9928 = vpack.c.b16 %v8308, %v8290
    %v9929 = vpack.c.b16 %v8309, %v8291
    %v9930 = vpack.c.b16 %v8310, %v8292
    %v9931 = vpack.c.b16 %v8311, %v8293
    %v9932 = vpack.c.b16 %v8312, %v8294
    %v9933 = vpack.c.b16 %v8313, %v8295
    %v9934 = vpack.c.b16 %v8314, %v8296
    %v9935 = vpack.c.b16 %v8315, %v8297
    %v9936 = vpack.c.b16 %v8316, %v8298
    %v9937 = vpack.c.b16 %v8317, %v8299
    %v9938 = vpack.c.b16 %v8318, %v8300
    %v9939 = vpack.c.b16 %v8319, %v8301
    %v9940 = vpack.c.b16 %v8338, %v8320
    %v9941 = vpack.c.b16 %v8339, %v8321
    %v9942 = vpack.c.b16 %v8340, %v8322
    %v9943 = vpack.c.b16 %v8341, %v8323
    %v9944 = vpack.c.b16 %v8342, %v8324
    %v9945 = vpack.c.b16 %v8343, %v8325
    %v9946 = vpack.c.b16 %v8344, %v8326
    %v9947 = vpack.c.b16 %v8345, %v8327
    %v9948 = vpack.c.b16 %v8346, %v8328
    %v9949 = vpack.c.b16 %v8347, %v8329
    %v9950 = vpack.c.b16 %v8348, %v8330
    %v9951 = vpack.c.b16 %v8349, %v8331
    %v9952 = vpack.c.b16 %v8350, %v8332
    %v9953 = vpack.c.b16 %v8351, %v8333
    %v9954 = vpack.c.b16 %v8352, %v8334
    %v9955 = vpack.c.b16 %v8353, %v8335
    %v9956 = vpack.c.b16 %v8354, %v8336
    %v9957 = vpack.c.b16 %v8355, %v8337
    %v9958 = vpack.c.b16 %v8374, %v8356
    %v9959 = vpack.c.b16 %v8375, %v8357
    %v9960 = vpack.c.b16 %v8376, %v8358
    %v9961 = vpack.c.b16 %v8377, %v8359
    %v9962 = vpack.c.b16 %v8378, %v8360
    %v9963 = vpack.c.b16 %v8379, %v8361
    %v9964 = vpack.c.b16 %v8380, %v8362
    %v9965 = vpack.c.b16 %v8381, %v8363
    %v9966 = vpack.c.b16 %v8382, %v8364
    %v9967 = vpack.c.b16 %v8383, %v8365
    %v9968 = vpack.c.b16 %v8384, %v8366
    %v9969 = vpack.c.b16 %v8385, %v8367
    %v9970 = vpack.c.b16 %v8386, %v8368
    %v9971 = vpack.c.b16 %v8387, %v8369
    %v9972 = vpack.c.b16 %v8388, %v8370
    %v9973 = vpack.c.b16 %v8389, %v8371
    %v9974 = vpack.c.b16 %v8390, %v8372
    %v9975 = vpack.c.b16 %v8391, %v8373
    %v9976 = vpack.c.b16 %v8410, %v8392
    %v9977 = vpack.c.b16 %v8411, %v8393
    %v9978 = vpack.c.b16 %v8412, %v8394
    %v9979 = vpack.c.b16 %v8413, %v8395
    %v9980 = vpack.c.b16 %v8414, %v8396
    %v9981 = vpack.c.b16 %v8415, %v8397
    %v9982 = vpack.c.b16 %v8416, %v8398
    %v9983 = vpack.c.b16 %v8417, %v8399
    %v9984 = vpack.c.b16 %v8418, %v8400
    %v9985 = vpack.c.b16 %v8419, %v8401
    %v9986 = vpack.c.b16 %v8420, %v8402
    %v9987 = vpack.c.b16 %v8421, %v8403
    %v9988 = vpack.c.b16 %v8422, %v8404
    %v9989 = vpack.c.b16 %v8423, %v8405
    %v9990 = vpack.c.b16 %v8424, %v8406
    %v9991 = vpack.c.b16 %v8425, %v8407
    %v9992 = vpack.c.b16 %v8426, %v8408
    %v9993 = vpack.c.b16 %v8427, %v8409
    %v9994 = vpack.c.b16 %v8446, %v8428
    %v9995 = vpack.c.b16 %v8447, %v8429
    %v9996 = vpack.c.b16 %v8448, %v8430
    %v9997 = vpack.c.b16 %v8449, %v8431
    %v9998 = vpack.c.b16 %v8450, %v8432
    %v9999 = vpack.c.b16 %v8451, %v8433
    %v10000 = vpack.c.b16 %v8452, %v8434
    %v10001 = vpack.c.b16 %v8453, %v8435
    %v10002 = vpack.c.b16 %v8454, %v8436
    %v10003 = vpack.c.b16 %v8455, %v8437
    %v10004 = vpack.c.b16 %v8456, %v8438
    %v10005 = vpack.c.b16 %v8457, %v8439
    %v10006 = vpack.c.b16 %v8458, %v8440
    %v10007 = vpack.c.b16 %v8459, %v8441
    %v10008 = vpack.c.b16 %v8460, %v8442
    %v10009 = vpack.c.b16 %v8461, %v8443
    %v10010 = vpack.c.b16 %v8462, %v8444
    %v10011 = vpack.c.b16 %v8463, %v8445
    %v10012 = vpack.c.b16 %v8482, %v8464
    %v10013 = vpack.c.b16 %v8483, %v8465
    %v10014 = vpack.c.b16 %v8484, %v8466
    %v10015 = vpack.c.b16 %v8485, %v8467
    %v10016 = vpack.c.b16 %v8486, %v8468
    %v10017 = vpack.c.b16 %v8487, %v8469
    %v10018 = vpack.c.b16 %v8488, %v8470
    %v10019 = vpack.c.b16 %v8489, %v8471
    %v10020 = vpack.c.b16 %v8490, %v8472
    %v10021 = vpack.c.b16 %v8491, %v8473
    %v10022 = vpack.c.b16 %v8492, %v8474
    %v10023 = vpack.c.b16 %v8493, %v8475
    %v10024 = vpack.c.b16 %v8494, %v8476
    %v10025 = vpack.c.b16 %v8495, %v8477
    %v10026 = vpack.c.b16 %v8496, %v8478
    %v10027 = vpack.c.b16 %v8497, %v8479
    %v10028 = vpack.c.b16 %v8498, %v8480
    %v10029 = vpack.c.b16 %v8499, %v8481
    %v10030 = vpack.c.b16 %v8518, %v8500
    %v10031 = vpack.c.b16 %v8519, %v8501
    %v10032 = vpack.c.b16 %v8520, %v8502
    %v10033 = vpack.c.b16 %v8521, %v8503
    %v10034 = vpack.c.b16 %v8522, %v8504
    %v10035 = vpack.c.b16 %v8523, %v8505
    %v10036 = vpack.c.b16 %v8524, %v8506
    %v10037 = vpack.c.b16 %v8525, %v8507
    %v10038 = vpack.c.b16 %v8526, %v8508
    %v10039 = vpack.c.b16 %v8527, %v8509
    %v10040 = vpack.c.b16 %v8528, %v8510
    %v10041 = vpack.c.b16 %v8529, %v8511
    %v10042 = vpack.c.b16 %v8530, %v8512
    %v10043 = vpack.c.b16 %v8531, %v8513
    %v10044 = vpack.c.b16 %v8532, %v8514
    %v10045 = vpack.c.b16 %v8533, %v8515
    %v10046 = vpack.c.b16 %v8534, %v8516
    %v10047 = vpack.c.b16 %v8535, %v8517
    %v10048 = vpack.c.b16 %v8554, %v8536
    %v10049 = vpack.c.b16 %v8555, %v8537
    %v10050 = vpack.c.b16 %v8556, %v8538
    %v10051 = vpack.c.b16 %v8557, %v8539
    %v10052 = vpack.c.b16 %v8558, %v8540
    %v10053 = vpack.c.b16 %v8559, %v8541
    %v10054 = vpack.c.b16 %v8560, %v8542
    %v10055 = vpack.c.b16 %v8561, %v8543
    %v10056 = vpack.c.b16 %v8562, %v8544
    %v10057 = vpack.c.b16 %v8563, %v8545
    %v10058 = vpack.c.b16 %v8564, %v8546
    %v10059 = vpack.c.b16 %v8565, %v8547
    %v10060 = vpack.c.b16 %v8566, %v8548
    %v10061 = vpack.c.b16 %v8567, %v8549
    %v10062 = vpack.c.b16 %v8568, %v8550
    %v10063 = vpack.c.b16 %v8569, %v8551
    %v10064 = vpack.c.b16 %v8570, %v8552
    %v10065 = vpack.c.b16 %v8571, %v8553
    %v10066 = vpack.c.b16 %v8590, %v8572
    %v10067 = vpack.c.b16 %v8591, %v8573
    %v10068 = vpack.c.b16 %v8592, %v8574
    %v10069 = vpack.c.b16 %v8593, %v8575
    %v10070 = vpack.c.b16 %v8594, %v8576
    %v10071 = vpack.c.b16 %v8595, %v8577
    %v10072 = vpack.c.b16 %v8596, %v8578
    %v10073 = vpack.c.b16 %v8597, %v8579
    %v10074 = vpack.c.b16 %v8598, %v8580
    %v10075 = vpack.c.b16 %v8599, %v8581
    %v10076 = vpack.c.b16 %v8600, %v8582
    %v10077 = vpack.c.b16 %v8601, %v8583
    %v10078 = vpack.c.b16 %v8602, %v8584
    %v10079 = vpack.c.b16 %v8603, %v8585
    %v10080 = vpack.c.b16 %v8604, %v8586
    %v10081 = vpack.c.b16 %v8605, %v8587
    %v10082 = vpack.c.b16 %v8606, %v8588
    %v10083 = vpack.c.b16 %v8607, %v8589
    %v10084 = vpack.c.b16 %v8626, %v8608
    %v10085 = vpack.c.b16 %v8627, %v8609
    %v10086 = vpack.c.b16 %v8628, %v8610
    %v10087 = vpack.c.b16 %v8629, %v8611
    %v10088 = vpack.c.b16 %v8630, %v8612
    %v10089 = vpack.c.b16 %v8631, %v8613
    %v10090 = vpack.c.b16 %v8632, %v8614
    %v10091 = vpack.c.b16 %v8633, %v8615
    %v10092 = vpack.c.b16 %v8634, %v8616
    %v10093 = vpack.c.b16 %v8635, %v8617
    %v10094 = vpack.c.b16 %v8636, %v8618
    %v10095 = vpack.c.b16 %v8637, %v8619
    %v10096 = vpack.c.b16 %v8638, %v8620
    %v10097 = vpack.c.b16 %v8639, %v8621
    %v10098 = vpack.c.b16 %v8640, %v8622
    %v10099 = vpack.c.b16 %v8641, %v8623
    %v10100 = vpack.c.b16 %v8642, %v8624
    %v10101 = vpack.c.b16 %v8643, %v8625
    %v10102 = vpack.c.b16 %v8662, %v8644
    %v10103 = vpack.c.b16 %v8663, %v8645
    %v10104 = vpack.c.b16 %v8664, %v8646
    %v10105 = vpack.c.b16 %v8665, %v8647
    %v10106 = vpack.c.b16 %v8666, %v8648
    %v10107 = vpack.c.b16 %v8667, %v8649
    %v10108 = vpack.c.b16 %v8668, %v8650
    %v10109 = vpack.c.b16 %v8669, %v8651
    %v10110 = vpack.c.b16 %v8670, %v8652
    %v10111 = vpack.c.b16 %v8671, %v8653
    %v10112 = vpack.c.b16 %v8672, %v8654
    %v10113 = vpack.c.b16 %v8673, %v8655
    %v10114 = vpack.c.b16 %v8674, %v8656
    %v10115 = vpack.c.b16 %v8675, %v8657
    %v10116 = vpack.c.b16 %v8676, %v8658
    %v10117 = vpack.c.b16 %v8677, %v8659
    %v10118 = vpack.c.b16 %v8678, %v8660
    %v10119 = vpack.c.b16 %v8679, %v8661
    %v10120 = vpack.c.b16 %v8698, %v8680
    %v10121 = vpack.c.b16 %v8699, %v8681
    %v10122 = vpack.c.b16 %v8700, %v8682
    %v10123 = vpack.c.b16 %v8701, %v8683
    %v10124 = vpack.c.b16 %v8702, %v8684
    %v10125 = vpack.c.b16 %v8703, %v8685
    %v10126 = vpack.c.b16 %v8704, %v8686
    %v10127 = vpack.c.b16 %v8705, %v8687
    %v10128 = vpack.c.b16 %v8706, %v8688
    %v10129 = vpack.c.b16 %v8707, %v8689
    %v10130 = vpack.c.b16 %v8708, %v8690
    %v10131 = vpack.c.b16 %v8709, %v8691
    %v10132 = vpack.c.b16 %v8710, %v8692
    %v10133 = vpack.c.b16 %v8711, %v8693
    %v10134 = vpack.c.b16 %v8712, %v8694
    %v10135 = vpack.c.b16 %v8713, %v8695
    %v10136 = vpack.c.b16 %v8714, %v8696
    %v10137 = vpack.c.b16 %v8715, %v8697
    %v10138 = vpack.c.b16 %v8734, %v8716
    %v10139 = vpack.c.b16 %v8735, %v8717
    %v10140 = vpack.c.b16 %v8736, %v8718
    %v10141 = vpack.c.b16 %v8737, %v8719
    %v10142 = vpack.c.b16 %v8738, %v8720
    %v10143 = vpack.c.b16 %v8739, %v8721
    %v10144 = vpack.c.b16 %v8740, %v8722
    %v10145 = vpack.c.b16 %v8741, %v8723
    %v10146 = vpack.c.b16 %v8742, %v8724
    %v10147 = vpack.c.b16 %v8743, %v8725
    %v10148 = vpack.c.b16 %v8744, %v8726
    %v10149 = vpack.c.b16 %v8745, %v8727
    %v10150 = vpack.c.b16 %v8746, %v8728
    %v10151 = vpack.c.b16 %v8747, %v8729
    %v10152 = vpack.c.b16 %v8748, %v8730
    %v10153 = vpack.c.b16 %v8749, %v8731
    %v10154 = vpack.c.b16 %v8750, %v8732
    %v10155 = vpack.c.b16 %v8751, %v8733
    %v10156 = vpack.c.b16 %v8770, %v8752
    %v10157 = vpack.c.b16 %v8771, %v8753
    %v10158 = vpack.c.b16 %v8772, %v8754
    %v10159 = vpack.c.b16 %v8773, %v8755
    %v10160 = vpack.c.b16 %v8774, %v8756
    %v10161 = vpack.c.b16 %v8775, %v8757
    %v10162 = vpack.c.b16 %v8776, %v8758
    %v10163 = vpack.c.b16 %v8777, %v8759
    %v10164 = vpack.c.b16 %v8778, %v8760
    %v10165 = vpack.c.b16 %v8779, %v8761
    %v10166 = vpack.c.b16 %v8780, %v8762
    %v10167 = vpack.c.b16 %v8781, %v8763
    %v10168 = vpack.c.b16 %v8782, %v8764
    %v10169 = vpack.c.b16 %v8783, %v8765
    %v10170 = vpack.c.b16 %v8784, %v8766
    %v10171 = vpack.c.b16 %v8785, %v8767
    %v10172 = vpack.c.b16 %v8786, %v8768
    %v10173 = vpack.c.b16 %v8787, %v8769
    %v10174 = vpack.c.b16 %v8806, %v8788
    %v10175 = vpack.c.b16 %v8807, %v8789
    %v10176 = vpack.c.b16 %v8808, %v8790
    %v10177 = vpack.c.b16 %v8809, %v8791
    %v10178 = vpack.c.b16 %v8810, %v8792
    %v10179 = vpack.c.b16 %v8811, %v8793
    %v10180 = vpack.c.b16 %v8812, %v8794
    %v10181 = vpack.c.b16 %v8813, %v8795
    %v10182 = vpack.c.b16 %v8814, %v8796
    %v10183 = vpack.c.b16 %v8815, %v8797
    %v10184 = vpack.c.b16 %v8816, %v8798
    %v10185 = vpack.c.b16 %v8817, %v8799
    %v10186 = vpack.c.b16 %v8818, %v8800
    %v10187 = vpack.c.b16 %v8819, %v8801
    %v10188 = vpack.c.b16 %v8820, %v8802
    %v10189 = vpack.c.b16 %v8821, %v8803
    %v10190 = vpack.c.b16 %v8822, %v8804
    %v10191 = vpack.c.b16 %v8823, %v8805
    %v10192 = vpack.c.b16 %v8842, %v8824
    %v10193 = vpack.c.b16 %v8843, %v8825
    %v10194 = vpack.c.b16 %v8844, %v8826
    %v10195 = vpack.c.b16 %v8845, %v8827
    %v10196 = vpack.c.b16 %v8846, %v8828
    %v10197 = vpack.c.b16 %v8847, %v8829
    %v10198 = vpack.c.b16 %v8848, %v8830
    %v10199 = vpack.c.b16 %v8849, %v8831
    %v10200 = vpack.c.b16 %v8850, %v8832
    %v10201 = vpack.c.b16 %v8851, %v8833
    %v10202 = vpack.c.b16 %v8852, %v8834
    %v10203 = vpack.c.b16 %v8853, %v8835
    %v10204 = vpack.c.b16 %v8854, %v8836
    %v10205 = vpack.c.b16 %v8855, %v8837
    %v10206 = vpack.c.b16 %v8856, %v8838
    %v10207 = vpack.c.b16 %v8857, %v8839
    %v10208 = vpack.c.b16 %v8858, %v8840
    %v10209 = vpack.c.b16 %v8859, %v8841
    %v10210 = vpack.c.b16 %v8878, %v8860
    %v10211 = vpack.c.b16 %v8879, %v8861
    %v10212 = vpack.c.b16 %v8880, %v8862
    %v10213 = vpack.c.b16 %v8881, %v8863
    %v10214 = vpack.c.b16 %v8882, %v8864
    %v10215 = vpack.c.b16 %v8883, %v8865
    %v10216 = vpack.c.b16 %v8884, %v8866
    %v10217 = vpack.c.b16 %v8885, %v8867
    %v10218 = vpack.c.b16 %v8886, %v8868
    %v10219 = vpack.c.b16 %v8887, %v8869
    %v10220 = vpack.c.b16 %v8888, %v8870
    %v10221 = vpack.c.b16 %v8889, %v8871
    %v10222 = vpack.c.b16 %v8890, %v8872
    %v10223 = vpack.c.b16 %v8891, %v8873
    %v10224 = vpack.c.b16 %v8892, %v8874
    %v10225 = vpack.c.b16 %v8893, %v8875
    %v10226 = vpack.c.b16 %v8894, %v8876
    %v10227 = vpack.c.b16 %v8895, %v8877
    %v10228 = vpack.c.b16 %v8914, %v8896
    %v10229 = vpack.c.b16 %v8915, %v8897
    %v10230 = vpack.c.b16 %v8916, %v8898
    %v10231 = vpack.c.b16 %v8917, %v8899
    %v10232 = vpack.c.b16 %v8918, %v8900
    %v10233 = vpack.c.b16 %v8919, %v8901
    %v10234 = vpack.c.b16 %v8920, %v8902
    %v10235 = vpack.c.b16 %v8921, %v8903
    %v10236 = vpack.c.b16 %v8922, %v8904
    %v10237 = vpack.c.b16 %v8923, %v8905
    %v10238 = vpack.c.b16 %v8924, %v8906
    %v10239 = vpack.c.b16 %v8925, %v8907
    %v10240 = vpack.c.b16 %v8926, %v8908
    %v10241 = vpack.c.b16 %v8927, %v8909
    %v10242 = vpack.c.b16 %v8928, %v8910
    %v10243 = vpack.c.b16 %v8929, %v8911
    %v10244 = vpack.c.b16 %v8930, %v8912
    %v10245 = vpack.c.b16 %v8931, %v8913
    %v10246 = vpack.c.b16 %v8950, %v8932
    %v10247 = vpack.c.b16 %v8951, %v8933
    %v10248 = vpack.c.b16 %v8952, %v8934
    %v10249 = vpack.c.b16 %v8953, %v8935
    %v10250 = vpack.c.b16 %v8954, %v8936
    %v10251 = vpack.c.b16 %v8955, %v8937
    %v10252 = vpack.c.b16 %v8956, %v8938
    %v10253 = vpack.c.b16 %v8957, %v8939
    %v10254 = vpack.c.b16 %v8958, %v8940
    %v10255 = vpack.c.b16 %v8959, %v8941
    %v10256 = vpack.c.b16 %v8960, %v8942
    %v10257 = vpack.c.b16 %v8961, %v8943
    %v10258 = vpack.c.b16 %v8962, %v8944
    %v10259 = vpack.c.b16 %v8963, %v8945
    %v10260 = vpack.c.b16 %v8964, %v8946
    %v10261 = vpack.c.b16 %v8965, %v8947
    %v10262 = vpack.c.b16 %v8966, %v8948
    %v10263 = vpack.c.b16 %v8967, %v8949
    %v10264 = vpack.c.b16 %v8986, %v8968
    %v10265 = vpack.c.b16 %v8987, %v8969
    %v10266 = vpack.c.b16 %v8988, %v8970
    %v10267 = vpack.c.b16 %v8989, %v8971
    %v10268 = vpack.c.b16 %v8990, %v8972
    %v10269 = vpack.c.b16 %v8991, %v8973
    %v10270 = vpack.c.b16 %v8992, %v8974
    %v10271 = vpack.c.b16 %v8993, %v8975
    %v10272 = vpack.c.b16 %v8994, %v8976
    %v10273 = vpack.c.b16 %v8995, %v8977
    %v10274 = vpack.c.b16 %v8996, %v8978
    %v10275 = vpack.c.b16 %v8997, %v8979
    %v10276 = vpack.c.b16 %v8998, %v8980
    %v10277 = vpack.c.b16 %v8999, %v8981
    %v10278 = vpack.c.b16 %v9000, %v8982
    %v10279 = vpack.c.b16 %v9001, %v8983
    %v10280 = vpack.c.b16 %v9002, %v8984
    %v10281 = vpack.c.b16 %v9003, %v8985
    %v10282 = vpack.c.b16 %v9022, %v9004
    %v10283 = vpack.c.b16 %v9023, %v9005
    %v10284 = vpack.c.b16 %v9024, %v9006
    %v10285 = vpack.c.b16 %v9025, %v9007
    %v10286 = vpack.c.b16 %v9026, %v9008
    %v10287 = vpack.c.b16 %v9027, %v9009
    %v10288 = vpack.c.b16 %v9028, %v9010
    %v10289 = vpack.c.b16 %v9029, %v9011
    %v10290 = vpack.c.b16 %v9030, %v9012
    %v10291 = vpack.c.b16 %v9031, %v9013
    %v10292 = vpack.c.b16 %v9032, %v9014
    %v10293 = vpack.c.b16 %v9033, %v9015
    %v10294 = vpack.c.b16 %v9034, %v9016
    %v10295 = vpack.c.b16 %v9035, %v9017
    %v10296 = vpack.c.b16 %v9036, %v9018
    %v10297 = vpack.c.b16 %v9037, %v9019
    %v10298 = vpack.c.b16 %v9038, %v9020
    %v10299 = vpack.c.b16 %v9039, %v9021
    %v10300 = vpack.c.b16 %v9058, %v9040
    %v10301 = vpack.c.b16 %v9059, %v9041
    %v10302 = vpack.c.b16 %v9060, %v9042
    %v10303 = vpack.c.b16 %v9061, %v9043
    %v10304 = vpack.c.b16 %v9062, %v9044
    %v10305 = vpack.c.b16 %v9063, %v9045
    %v10306 = vpack.c.b16 %v9064, %v9046
    %v10307 = vpack.c.b16 %v9065, %v9047
    %v10308 = vpack.c.b16 %v9066, %v9048
    %v10309 = vpack.c.b16 %v9067, %v9049
    %v10310 = vpack.c.b16 %v9068, %v9050
    %v10311 = vpack.c.b16 %v9069, %v9051
    %v10312 = vpack.c.b16 %v9070, %v9052
    %v10313 = vpack.c.b16 %v9071, %v9053
    %v10314 = vpack.c.b16 %v9072, %v9054
    %v10315 = vpack.c.b16 %v9073, %v9055
    %v10316 = vpack.c.b16 %v9074, %v9056
    %v10317 = vpack.c.b16 %v9075, %v9057
    %v10318 = vpack.c.b16 %v9094, %v9076
    %v10319 = vpack.c.b16 %v9095, %v9077
    %v10320 = vpack.c.b16 %v9096, %v9078
    %v10321 = vpack.c.b16 %v9097, %v9079
    %v10322 = vpack.c.b16 %v9098, %v9080
    %v10323 = vpack.c.b16 %v9099, %v9081
    %v10324 = vpack.c.b16 %v9100, %v9082
    %v10325 = vpack.c.b16 %v9101, %v9083
    %v10326 = vpack.c.b16 %v9102, %v9084
    %v10327 = vpack.c.b16 %v9103, %v9085
    %v10328 = vpack.c.b16 %v9104, %v9086
    %v10329 = vpack.c.b16 %v9105, %v9087
    %v10330 = vpack.c.b16 %v9106, %v9088
    %v10331 = vpack.c.b16 %v9107, %v9089
    %v10332 = vpack.c.b16 %v9108, %v9090
    %v10333 = vpack.c.b16 %v9109, %v9091
    %v10334 = vpack.c.b16 %v9110, %v9092
    %v10335 = vpack.c.b16 %v9111, %v9093
    %v10336 = vpack.c.b16 %v9130, %v9112
    %v10337 = vpack.c.b16 %v9131, %v9113
    %v10338 = vpack.c.b16 %v9132, %v9114
    %v10339 = vpack.c.b16 %v9133, %v9115
    %v10340 = vpack.c.b16 %v9134, %v9116
    %v10341 = vpack.c.b16 %v9135, %v9117
    %v10342 = vpack.c.b16 %v9136, %v9118
    %v10343 = vpack.c.b16 %v9137, %v9119
    %v10344 = vpack.c.b16 %v9138, %v9120
    %v10345 = vpack.c.b16 %v9139, %v9121
    %v10346 = vpack.c.b16 %v9140, %v9122
    %v10347 = vpack.c.b16 %v9141, %v9123
    %v10348 = vpack.c.b16 %v9142, %v9124
    %v10349 = vpack.c.b16 %v9143, %v9125
    %v10350 = vpack.c.b16 %v9144, %v9126
    %v10351 = vpack.c.b16 %v9145, %v9127
    %v10352 = vpack.c.b16 %v9146, %v9128
    %v10353 = vpack.c.b16 %v9147, %v9129
    %v10354 = vpack.c.b16 %v9166, %v9148
    %v10355 = vpack.c.b16 %v9167, %v9149
    %v10356 = vpack.c.b16 %v9168, %v9150
    %v10357 = vpack.c.b16 %v9169, %v9151
    %v10358 = vpack.c.b16 %v9170, %v9152
    %v10359 = vpack.c.b16 %v9171, %v9153
    %v10360 = vpack.c.b16 %v9172, %v9154
    %v10361 = vpack.c.b16 %v9173, %v9155
    %v10362 = vpack.c.b16 %v9174, %v9156
    %v10363 = vpack.c.b16 %v9175, %v9157
    %v10364 = vpack.c.b16 %v9176, %v9158
    %v10365 = vpack.c.b16 %v9177, %v9159
    %v10366 = vpack.c.b16 %v9178, %v9160
    %v10367 = vpack.c.b16 %v9179, %v9161
    %v10368 = vpack.c.b16 %v9180, %v9162
    %v10369 = vpack.c.b16 %v9181, %v9163
    %v10370 = vpack.c.b16 %v9182, %v9164
    %v10371 = vpack.c.b16 %v9183, %v9165
    %v10372 = vpack.c.b16 %v9202, %v9184
    %v10373 = vpack.c.b16 %v9203, %v9185
    %v10374 = vpack.c.b16 %v9204, %v9186
    %v10375 = vpack.c.b16 %v9205, %v9187
    %v10376 = vpack.c.b16 %v9206, %v9188
    %v10377 = vpack.c.b16 %v9207, %v9189
    %v10378 = vpack.c.b16 %v9208, %v9190
    %v10379 = vpack.c.b16 %v9209, %v9191
    %v10380 = vpack.c.b16 %v9210, %v9192
    %v10381 = vpack.c.b16 %v9211, %v9193
    %v10382 = vpack.c.b16 %v9212, %v9194
    %v10383 = vpack.c.b16 %v9213, %v9195
    %v10384 = vpack.c.b16 %v9214, %v9196
    %v10385 = vpack.c.b16 %v9215, %v9197
    %v10386 = vpack.c.b16 %v9216, %v9198
    %v10387 = vpack.c.b16 %v9217, %v9199
    %v10388 = vpack.c.b16 %v9218, %v9200
    %v10389 = vpack.c.b16 %v9219, %v9201
    %v10390 = vpack.c.b16 %v9238, %v9220
    %v10391 = vpack.c.b16 %v9239, %v9221
    %v10392 = vpack.c.b16 %v9240, %v9222
    %v10393 = vpack.c.b16 %v9241, %v9223
    %v10394 = vpack.c.b16 %v9242, %v9224
    %v10395 = vpack.c.b16 %v9243, %v9225
    %v10396 = vpack.c.b16 %v9244, %v9226
    %v10397 = vpack.c.b16 %v9245, %v9227
    %v10398 = vpack.c.b16 %v9246, %v9228
    %v10399 = vpack.c.b16 %v9247, %v9229
    %v10400 = vpack.c.b16 %v9248, %v9230
    %v10401 = vpack.c.b16 %v9249, %v9231
    %v10402 = vpack.c.b16 %v9250, %v9232
    %v10403 = vpack.c.b16 %v9251, %v9233
    %v10404 = vpack.c.b16 %v9252, %v9234
    %v10405 = vpack.c.b16 %v9253, %v9235
    %v10406 = vpack.c.b16 %v9254, %v9236
    %v10407 = vpack.c.b16 %v9255, %v9237
    %v10408 = vpack.c.b16 %v9274, %v9256
    %v10409 = vpack.c.b16 %v9275, %v9257
    %v10410 = vpack.c.b16 %v9276, %v9258
    %v10411 = vpack.c.b16 %v9277, %v9259
    %v10412 = vpack.c.b16 %v9278, %v9260
    %v10413 = vpack.c.b16 %v9279, %v9261
    %v10414 = vpack.c.b16 %v9280, %v9262
    %v10415 = vpack.c.b16 %v9281, %v9263
    %v10416 = vpack.c.b16 %v9282, %v9264
    %v10417 = vpack.c.b16 %v9283, %v9265
    %v10418 = vpack.c.b16 %v9284, %v9266
    %v10419 = vpack.c.b16 %v9285, %v9267
    %v10420 = vpack.c.b16 %v9286, %v9268
    %v10421 = vpack.c.b16 %v9287, %v9269
    %v10422 = vpack.c.b16 %v9288, %v9270
    %v10423 = vpack.c.b16 %v9289, %v9271
    %v10424 = vpack.c.b16 %v9290, %v9272
    %v10425 = vpack.c.b16 %v9291, %v9273
    %v10426 = vpack.c.b16 %v9310, %v9292
    %v10427 = vpack.c.b16 %v9311, %v9293
    %v10428 = vpack.c.b16 %v9312, %v9294
    %v10429 = vpack.c.b16 %v9313, %v9295
    %v10430 = vpack.c.b16 %v9314, %v9296
    %v10431 = vpack.c.b16 %v9315, %v9297
    %v10432 = vpack.c.b16 %v9316, %v9298
    %v10433 = vpack.c.b16 %v9317, %v9299
    %v10434 = vpack.c.b16 %v9318, %v9300
    %v10435 = vpack.c.b16 %v9319, %v9301
    %v10436 = vpack.c.b16 %v9320, %v9302
    %v10437 = vpack.c.b16 %v9321, %v9303
    %v10438 = vpack.c.b16 %v9322, %v9304
    %v10439 = vpack.c.b16 %v9323, %v9305
    %v10440 = vpack.c.b16 %v9324, %v9306
    %v10441 = vpack.c.b16 %v9325, %v9307
    %v10442 = vpack.c.b16 %v9326, %v9308
    %v10443 = vpack.c.b16 %v9327, %v9309
    %v10444 = vpack.c.b16 %v9346, %v9328
    %v10445 = vpack.c.b16 %v9347, %v9329
    %v10446 = vpack.c.b16 %v9348, %v9330
    %v10447 = vpack.c.b16 %v9349, %v9331
    %v10448 = vpack.c.b16 %v9350, %v9332
    %v10449 = vpack.c.b16 %v9351, %v9333
    %v10450 = vpack.c.b16 %v9352, %v9334
    %v10451 = vpack.c.b16 %v9353, %v9335
    %v10452 = vpack.c.b16 %v9354, %v9336
    %v10453 = vpack.c.b16 %v9355, %v9337
    %v10454 = vpack.c.b16 %v9356, %v9338
    %v10455 = vpack.c.b16 %v9357, %v9339
    %v10456 = vpack.c.b16 %v9358, %v9340
    %v10457 = vpack.c.b16 %v9359, %v9341
    %v10458 = vpack.c.b16 %v9360, %v9342
    %v10459 = vpack.c.b16 %v9361, %v9343
    %v10460 = vpack.c.b16 %v9362, %v9344
    %v10461 = vpack.c.b16 %v9363, %v9345
    %v10462 = vpack.c.b16 %v9382, %v9364
    %v10463 = vpack.c.b16 %v9383, %v9365
    %v10464 = vpack.c.b16 %v9384, %v9366
    %v10465 = vpack.c.b16 %v9385, %v9367
    %v10466 = vpack.c.b16 %v9386, %v9368
    %v10467 = vpack.c.b16 %v9387, %v9369
    %v10468 = vpack.c.b16 %v9388, %v9370
    %v10469 = vpack.c.b16 %v9389, %v9371
    %v10470 = vpack.c.b16 %v9390, %v9372
    %v10471 = vpack.c.b16 %v9391, %v9373
    %v10472 = vpack.c.b16 %v9392, %v9374
    %v10473 = vpack.c.b16 %v9393, %v9375
    %v10474 = vpack.c.b16 %v9394, %v9376
    %v10475 = vpack.c.b16 %v9395, %v9377
    %v10476 = vpack.c.b16 %v9396, %v9378
    %v10477 = vpack.c.b16 %v9397, %v9379
    %v10478 = vpack.c.b16 %v9398, %v9380
    %v10479 = vpack.c.b16 %v9399, %v9381
    %v10480 = vpack.c.b16 %v9418, %v9400
    %v10481 = vpack.c.b16 %v9419, %v9401
    %v10482 = vpack.c.b16 %v9420, %v9402
    %v10483 = vpack.c.b16 %v9421, %v9403
    %v10484 = vpack.c.b16 %v9422, %v9404
    %v10485 = vpack.c.b16 %v9423, %v9405
    %v10486 = vpack.c.b16 %v9424, %v9406
    %v10487 = vpack.c.b16 %v9425, %v9407
    %v10488 = vpack.c.b16 %v9426, %v9408
    %v10489 = vpack.c.b16 %v9427, %v9409
    %v10490 = vpack.c.b16 %v9428, %v9410
    %v10491 = vpack.c.b16 %v9429, %v9411
    %v10492 = vpack.c.b16 %v9430, %v9412
    %v10493 = vpack.c.b16 %v9431, %v9413
    %v10494 = vpack.c.b16 %v9432, %v9414
    %v10495 = vpack.c.b16 %v9433, %v9415
    %v10496 = vpack.c.b16 %v9434, %v9416
    %v10497 = vpack.c.b16 %v9435, %v9417
    %v10498 = vpack.c.b16 %v9454, %v9436
    %v10499 = vpack.c.b16 %v9455, %v9437
    %v10500 = vpack.c.b16 %v9456, %v9438
    %v10501 = vpack.c.b16 %v9457, %v9439
    %v10502 = vpack.c.b16 %v9458, %v9440
    %v10503 = vpack.c.b16 %v9459, %v9441
    %v10504 = vpack.c.b16 %v9460, %v9442
    %v10505 = vpack.c.b16 %v9461, %v9443
    %v10506 = vpack.c.b16 %v9462, %v9444
    %v10507 = vpack.c.b16 %v9463, %v9445
    %v10508 = vpack.c.b16 %v9464, %v9446
    %v10509 = vpack.c.b16 %v9465, %v9447
    %v10510 = vpack.c.b16 %v9466, %v9448
    %v10511 = vpack.c.b16 %v9467, %v9449
    %v10512 = vpack.c.b16 %v9468, %v9450
    %v10513 = vpack.c.b16 %v9469, %v9451
    %v10514 = vpack.c.b16 %v9470, %v9452
    %v10515 = vpack.c.b16 %v9471, %v9453
    %v10516 = vpack.c.b16 %v9490, %v9472
    %v10517 = vpack.c.b16 %v9491, %v9473
    %v10518 = vpack.c.b16 %v9492, %v9474
    %v10519 = vpack.c.b16 %v9493, %v9475
    %v10520 = vpack.c.b16 %v9494, %v9476
    %v10521 = vpack.c.b16 %v9495, %v9477
    %v10522 = vpack.c.b16 %v9496, %v9478
    %v10523 = vpack.c.b16 %v9497, %v9479
    %v10524 = vpack.c.b16 %v9498, %v9480
    %v10525 = vpack.c.b16 %v9499, %v9481
    %v10526 = vpack.c.b16 %v9500, %v9482
    %v10527 = vpack.c.b16 %v9501, %v9483
    %v10528 = vpack.c.b16 %v9502, %v9484
    %v10529 = vpack.c.b16 %v9503, %v9485
    %v10530 = vpack.c.b16 %v9504, %v9486
    %v10531 = vpack.c.b16 %v9505, %v9487
    %v10532 = vpack.c.b16 %v9506, %v9488
    %v10533 = vpack.c.b16 %v9507, %v9489
    %v10534 = vpack.c.b16 %v9526, %v9508
    %v10535 = vpack.c.b16 %v9527, %v9509
    %v10536 = vpack.c.b16 %v9528, %v9510
    %v10537 = vpack.c.b16 %v9529, %v9511
    %v10538 = vpack.c.b16 %v9530, %v9512
    %v10539 = vpack.c.b16 %v9531, %v9513
    %v10540 = vpack.c.b16 %v9532, %v9514
    %v10541 = vpack.c.b16 %v9533, %v9515
    %v10542 = vpack.c.b16 %v9534, %v9516
    %v10543 = vpack.c.b16 %v9535, %v9517
    %v10544 = vpack.c.b16 %v9536, %v9518
    %v10545 = vpack.c.b16 %v9537, %v9519
    %v10546 = vpack.c.b16 %v9538, %v9520
    %v10547 = vpack.c.b16 %v9539, %v9521
    %v10548 = vpack.c.b16 %v9540, %v9522
    %v10549 = vpack.c.b16 %v9541, %v9523
    %v10550 = vpack.c.b16 %v9542, %v9524
    %v10551 = vpack.c.b16 %v9543, %v9525
    %v10552 = vpack.c.b16 %v9562, %v9544
    %v10553 = vpack.c.b16 %v9563, %v9545
    %v10554 = vpack.c.b16 %v9564, %v9546
    %v10555 = vpack.c.b16 %v9565, %v9547
    %v10556 = vpack.c.b16 %v9566, %v9548
    %v10557 = vpack.c.b16 %v9567, %v9549
    %v10558 = vpack.c.b16 %v9568, %v9550
    %v10559 = vpack.c.b16 %v9569, %v9551
    %v10560 = vpack.c.b16 %v9570, %v9552
    %v10561 = vpack.c.b16 %v9571, %v9553
    %v10562 = vpack.c.b16 %v9572, %v9554
    %v10563 = vpack.c.b16 %v9573, %v9555
    %v10564 = vpack.c.b16 %v9574, %v9556
    %v10565 = vpack.c.b16 %v9575, %v9557
    %v10566 = vpack.c.b16 %v9576, %v9558
    %v10567 = vpack.c.b16 %v9577, %v9559
    %v10568 = vpack.c.b16 %v9578, %v9560
    %v10569 = vpack.c.b16 %v9579, %v9561
    %v10570 = vpack.c.b16 %v9598, %v9580
    %v10571 = vpack.c.b16 %v9599, %v9581
    %v10572 = vpack.c.b16 %v9600, %v9582
    %v10573 = vpack.c.b16 %v9601, %v9583
    %v10574 = vpack.c.b16 %v9602, %v9584
    %v10575 = vpack.c.b16 %v9603, %v9585
    %v10576 = vpack.c.b16 %v9604, %v9586
    %v10577 = vpack.c.b16 %v9605, %v9587
    %v10578 = vpack.c.b16 %v9606, %v9588
    %v10579 = vpack.c.b16 %v9607, %v9589
    %v10580 = vpack.c.b16 %v9608, %v9590
    %v10581 = vpack.c.b16 %v9609, %v9591
    %v10582 = vpack.c.b16 %v9610, %v9592
    %v10583 = vpack.c.b16 %v9611, %v9593
    %v10584 = vpack.c.b16 %v9612, %v9594
    %v10585 = vpack.c.b16 %v9613, %v9595
    %v10586 = vpack.c.b16 %v9614, %v9596
    %v10587 = vpack.c.b16 %v9615, %v9597
    %v10588 = vpack.c.b16 %v9634, %v9616
    %v10589 = vpack.c.b16 %v9635, %v9617
    %v10590 = vpack.c.b16 %v9636, %v9618
    %v10591 = vpack.c.b16 %v9637, %v9619
    %v10592 = vpack.c.b16 %v9638, %v9620
    %v10593 = vpack.c.b16 %v9639, %v9621
    %v10594 = vpack.c.b16 %v9640, %v9622
    %v10595 = vpack.c.b16 %v9641, %v9623
    %v10596 = vpack.c.b16 %v9642, %v9624
    %v10597 = vpack.c.b16 %v9643, %v9625
    %v10598 = vpack.c.b16 %v9644, %v9626
    %v10599 = vpack.c.b16 %v9645, %v9627
    %v10600 = vpack.c.b16 %v9646, %v9628
    %v10601 = vpack.c.b16 %v9647, %v9629
    %v10602 = vpack.c.b16 %v9648, %v9630
    %v10603 = vpack.c.b16 %v9649, %v9631
    %v10604 = vpack.c.b16 %v9650, %v9632
    %v10605 = vpack.c.b16 %v9651, %v9633
    %v10606 = vpack.c.b16 %v9670, %v9652
    %v10607 = vpack.c.b16 %v9671, %v9653
    %v10608 = vpack.c.b16 %v9672, %v9654
    %v10609 = vpack.c.b16 %v9673, %v9655
    %v10610 = vpack.c.b16 %v9674, %v9656
    %v10611 = vpack.c.b16 %v9675, %v9657
    %v10612 = vpack.c.b16 %v9676, %v9658
    %v10613 = vpack.c.b16 %v9677, %v9659
    %v10614 = vpack.c.b16 %v9678, %v9660
    %v10615 = vpack.c.b16 %v9679, %v9661
    %v10616 = vpack.c.b16 %v9680, %v9662
    %v10617 = vpack.c.b16 %v9681, %v9663
    %v10618 = vpack.c.b16 %v9682, %v9664
    %v10619 = vpack.c.b16 %v9683, %v9665
    %v10620 = vpack.c.b16 %v9684, %v9666
    %v10621 = vpack.c.b16 %v9685, %v9667
    %v10622 = vpack.c.b16 %v9686, %v9668
    %v10623 = vpack.c.b16 %v9687, %v9669
    %v10624 = vpack.c.b16 %v9706, %v9688
    %v10625 = vpack.c.b16 %v9707, %v9689
    %v10626 = vpack.c.b16 %v9708, %v9690
    %v10627 = vpack.c.b16 %v9709, %v9691
    %v10628 = vpack.c.b16 %v9710, %v9692
    %v10629 = vpack.c.b16 %v9711, %v9693
    %v10630 = vpack.c.b16 %v9712, %v9694
    %v10631 = vpack.c.b16 %v9713, %v9695
    %v10632 = vpack.c.b16 %v9714, %v9696
    %v10633 = vpack.c.b16 %v9715, %v9697
    %v10634 = vpack.c.b16 %v9716, %v9698
    %v10635 = vpack.c.b16 %v9717, %v9699
    %v10636 = vpack.c.b16 %v9718, %v9700
    %v10637 = vpack.c.b16 %v9719, %v9701
    %v10638 = vpack.c.b16 %v9720, %v9702
    %v10639 = vpack.c.b16 %v9721, %v9703
    %v10640 = vpack.c.b16 %v9722, %v9704
    %v10641 = vpack.c.b16 %v9723, %v9705
    %v10642 = vpack.c.b16 %v9742, %v9724
    %v10643 = vpack.c.b16 %v9743, %v9725
    %v10644 = vpack.c.b16 %v9744, %v9726
    %v10645 = vpack.c.b16 %v9745, %v9727
    %v10646 = vpack.c.b16 %v9746, %v9728
    %v10647 = vpack.c.b16 %v9747, %v9729
    %v10648 = vpack.c.b16 %v9748, %v9730
    %v10649 = vpack.c.b16 %v9749, %v9731
    %v10650 = vpack.c.b16 %v9750, %v9732
    %v10651 = vpack.c.b16 %v9751, %v9733
    %v10652 = vpack.c.b16 %v9752, %v9734
    %v10653 = vpack.c.b16 %v9753, %v9735
    %v10654 = vpack.c.b16 %v9754, %v9736
    %v10655 = vpack.c.b16 %v9755, %v9737
    %v10656 = vpack.c.b16 %v9756, %v9738
    %v10657 = vpack.c.b16 %v9757, %v9739
    %v10658 = vpack.c.b16 %v9758, %v9740
    %v10659 = vpack.c.b16 %v9759, %v9741
    %v10660 = vpack.c.b16 %v9778, %v9760
    %v10661 = vpack.c.b16 %v9779, %v9761
    %v10662 = vpack.c.b16 %v9780, %v9762
    %v10663 = vpack.c.b16 %v9781, %v9763
    %v10664 = vpack.c.b16 %v9782, %v9764
    %v10665 = vpack.c.b16 %v9783, %v9765
    %v10666 = vpack.c.b16 %v9784, %v9766
    %v10667 = vpack.c.b16 %v9785, %v9767
    %v10668 = vpack.c.b16 %v9786, %v9768
    %v10669 = vpack.c.b16 %v9787, %v9769
    %v10670 = vpack.c.b16 %v9788, %v9770
    %v10671 = vpack.c.b16 %v9789, %v9771
    %v10672 = vpack.c.b16 %v9790, %v9772
    %v10673 = vpack.c.b16 %v9791, %v9773
    %v10674 = vpack.c.b16 %v9792, %v9774
    %v10675 = vpack.c.b16 %v9793, %v9775
    %v10676 = vpack.c.b16 %v9794, %v9776
    %v10677 = vpack.c.b16 %v9795, %v9777
    %v10678 = vpack.c.b16 %v9814, %v9796
    %v10679 = vpack.c.b16 %v9815, %v9797
    %v10680 = vpack.c.b16 %v9816, %v9798
    %v10681 = vpack.c.b16 %v9817, %v9799
    %v10682 = vpack.c.b16 %v9818, %v9800
    %v10683 = vpack.c.b16 %v9819, %v9801
    %v10684 = vpack.c.b16 %v9820, %v9802
    %v10685 = vpack.c.b16 %v9821, %v9803
    %v10686 = vpack.c.b16 %v9822, %v9804
    %v10687 = vpack.c.b16 %v9823, %v9805
    %v10688 = vpack.c.b16 %v9824, %v9806
    %v10689 = vpack.c.b16 %v9825, %v9807
    %v10690 = vpack.c.b16 %v9826, %v9808
    %v10691 = vpack.c.b16 %v9827, %v9809
    %v10692 = vpack.c.b16 %v9828, %v9810
    %v10693 = vpack.c.b16 %v9829, %v9811
    %v10694 = vpack.c.b16 %v9830, %v9812
    %v10695 = vpack.c.b16 %v9831, %v9813
    %11560 = vmatprep.subr.bf16.mxu0 %v9959
    %11561 = vmatpush1.bf16.msra.mxu0 %v9958
    %11562 = vmatprep.subr.bf16.mxu0 %v9941
    %11563 = vmatpush1.bf16.msra.mxu0 %v9940
    %11564 = vmatprep.subr.bf16.mxu0 %v9923
    %11565 = vmatpush1.bf16.msra.mxu0 %v9922
    %11566 = vmatprep.subr.bf16.mxu0 %v9905
    %11567 = vmatpush1.bf16.msra.mxu0 %v9904
    %11568 = vmatprep.subr.bf16.mxu0 %v9887
    %11569 = vmatpush1.bf16.msra.mxu0 %v9886
    %11570 = vmatprep.subr.bf16.mxu0 %v9869
    %11571 = vmatpush1.bf16.msra.mxu0 %v9868
    %11572 = vmatprep.subr.bf16.mxu0 %v9851
    %11573 = vmatpush1.bf16.msra.mxu0 %v9850
    %11574 = vmatprep.subr.bf16.mxu0 %v9833
    %11575 = vmatpush1.bf16.msra.mxu0 %v9832
    %11576 = vmatprep.subr.bf16.mxu0 %v10103
    %11577 = vmatpush2.bf16.msra.mxu0 %v10102
    %11578 = vmatprep.subr.bf16.mxu0 %v10085
    %11579 = vmatpush2.bf16.msra.mxu0 %v10084
    %11580 = vmatprep.subr.bf16.mxu0 %v10067
    %11581 = vmatpush2.bf16.msra.mxu0 %v10066
    %11582 = vmatprep.subr.bf16.mxu0 %v10049
    %11583 = vmatpush2.bf16.msra.mxu0 %v10048
    %11584 = vmatprep.subr.bf16.mxu0 %v10031
    %11585 = vmatpush2.bf16.msra.mxu0 %v10030
    %11586 = vmatprep.subr.bf16.mxu0 %v10013
    %11587 = vmatpush2.bf16.msra.mxu0 %v10012
    %11588 = vmatprep.subr.bf16.mxu0 %v9995
    %11589 = vmatpush2.bf16.msra.mxu0 %v9994
    %11590 = vmatprep.subr.bf16.mxu0 %v9977
    %11591 = vmatpush2.bf16.msra.mxu0 %v9976
    %11592 = vmatprep.mubr.bf16.mxu0 %v6275
    %11593 = vmatmul.mubr.bf16.gmra.mxu0 %v6274
    %v11594 = vpop.f32.mrf.mxu0
    %v11595 = vadd.f32 %v7153, %v11594
    %v11596 = vpop.f32.mrf.mxu0
    %v11597 = vadd.f32 %v7157, %v11596
    %v11598 = vpop.f32.mrf.mxu0
    %v11599 = vadd.f32 %v7153, %v11598
    %v11600 = vpop.f32.mrf.mxu0
    %v11601 = vadd.f32 %v7157, %v11600
    %11602 = vdwg.mxu0
    %11603 = vmatprep.subr.bf16.mxu0 %v10247
    %11604 = vmatpush1.bf16.msra.mxu0 %v10246
    %11605 = vmatprep.subr.bf16.mxu0 %v10229
    %11606 = vmatpush1.bf16.msra.mxu0 %v10228
    %11607 = vmatprep.subr.bf16.mxu0 %v10211
    %11608 = vmatpush1.bf16.msra.mxu0 %v10210
    %11609 = vmatprep.subr.bf16.mxu0 %v10193
    %11610 = vmatpush1.bf16.msra.mxu0 %v10192
    %11611 = vmatprep.subr.bf16.mxu0 %v10175
    %11612 = vmatpush1.bf16.msra.mxu0 %v10174
    %11613 = vmatprep.subr.bf16.mxu0 %v10157
    %11614 = vmatpush1.bf16.msra.mxu0 %v10156
    %11615 = vmatprep.subr.bf16.mxu0 %v10139
    %11616 = vmatpush1.bf16.msra.mxu0 %v10138
    %11617 = vmatprep.subr.bf16.mxu0 %v10121
    %11618 = vmatpush1.bf16.msra.mxu0 %v10120
    %11619 = vmatprep.subr.bf16.mxu0 %v10391
    %11620 = vmatpush2.bf16.msra.mxu0 %v10390
    %11621 = vmatprep.subr.bf16.mxu0 %v10373
    %11622 = vmatpush2.bf16.msra.mxu0 %v10372
    %11623 = vmatprep.subr.bf16.mxu0 %v10355
    %11624 = vmatpush2.bf16.msra.mxu0 %v10354
    %11625 = vmatprep.subr.bf16.mxu0 %v10337
    %11626 = vmatpush2.bf16.msra.mxu0 %v10336
    %11627 = vmatprep.subr.bf16.mxu0 %v10319
    %11628 = vmatpush2.bf16.msra.mxu0 %v10318
    %11629 = vmatprep.subr.bf16.mxu0 %v10301
    %11630 = vmatpush2.bf16.msra.mxu0 %v10300
    %11631 = vmatprep.subr.bf16.mxu0 %v10283
    %11632 = vmatpush2.bf16.msra.mxu0 %v10282
    %11633 = vmatprep.subr.bf16.mxu0 %v10265
    %11634 = vmatpush2.bf16.msra.mxu0 %v10264
    %11635 = vmatprep.mubr.bf16.mxu0 %v6277
    %11636 = vmatmul.mubr.bf16.gmra.mxu0 %v6276
    %v11637 = vpop.f32.mrf.mxu0
    %v11638 = vadd.f32 %v11595, %v11637
    %v11639 = vpop.f32.mrf.mxu0
    %v11640 = vadd.f32 %v11597, %v11639
    %v11641 = vpop.f32.mrf.mxu0
    %v11642 = vadd.f32 %v11599, %v11641
    %v11643 = vpop.f32.mrf.mxu0
    %v11644 = vadd.f32 %v11601, %v11643
    %11645 = vdwg.mxu0
    %11646 = vmatprep.subr.bf16.mxu0 %v10535
    %11647 = vmatpush1.bf16.msra.mxu0 %v10534
    %11648 = vmatprep.subr.bf16.mxu0 %v10517
    %11649 = vmatpush1.bf16.msra.mxu0 %v10516
    %11650 = vmatprep.subr.bf16.mxu0 %v10499
    %11651 = vmatpush1.bf16.msra.mxu0 %v10498
    %11652 = vmatprep.subr.bf16.mxu0 %v10481
    %11653 = vmatpush1.bf16.msra.mxu0 %v10480
    %11654 = vmatprep.subr.bf16.mxu0 %v10463
    %11655 = vmatpush1.bf16.msra.mxu0 %v10462
    %11656 = vmatprep.subr.bf16.mxu0 %v10445
    %11657 = vmatpush1.bf16.msra.mxu0 %v10444
    %11658 = vmatprep.subr.bf16.mxu0 %v10427
    %11659 = vmatpush1.bf16.msra.mxu0 %v10426
    %11660 = vmatprep.subr.bf16.mxu0 %v10409
    %11661 = vmatpush1.bf16.msra.mxu0 %v10408
    %11662 = vmatprep.subr.bf16.mxu0 %v10679
    %11663 = vmatpush2.bf16.msra.mxu0 %v10678
    %11664 = vmatprep.subr.bf16.mxu0 %v10661
    %11665 = vmatpush2.bf16.msra.mxu0 %v10660
    %11666 = vmatprep.subr.bf16.mxu0 %v10643
    %11667 = vmatpush2.bf16.msra.mxu0 %v10642
    %11668 = vmatprep.subr.bf16.mxu0 %v10625
    %11669 = vmatpush2.bf16.msra.mxu0 %v10624
    %11670 = vmatprep.subr.bf16.mxu0 %v10607
    %11671 = vmatpush2.bf16.msra.mxu0 %v10606
    %11672 = vmatprep.subr.bf16.mxu0 %v10589
    %11673 = vmatpush2.bf16.msra.mxu0 %v10588
    %11674 = vmatprep.subr.bf16.mxu0 %v10571
    %11675 = vmatpush2.bf16.msra.mxu0 %v10570
    %11676 = vmatprep.subr.bf16.mxu0 %v10553
    %11677 = vmatpush2.bf16.msra.mxu0 %v10552
    %11678 = vmatprep.mubr.bf16.mxu0 %v6279
    %11679 = vmatmul.mubr.bf16.gmra.mxu0 %v6278
    %v11680 = vpop.f32.mrf.mxu0
    %v11681 = vadd.f32 %v11638, %v11680
    %v11682 = vpop.f32.mrf.mxu0
    %v11683 = vadd.f32 %v11640, %v11682
    %v11684 = vpop.f32.mrf.mxu0
    %v11685 = vadd.f32 %v11642, %v11684
    %v11686 = vpop.f32.mrf.mxu0
    %v11687 = vadd.f32 %v11644, %v11686
    %11688 = vdwg.mxu0
    %11689 = vmatprep.subr.bf16.mxu0 %v9961
    %11690 = vmatpush1.bf16.msra.mxu0 %v9960
    %11691 = vmatprep.subr.bf16.mxu0 %v9943
    %11692 = vmatpush1.bf16.msra.mxu0 %v9942
    %11693 = vmatprep.subr.bf16.mxu0 %v9925
    %11694 = vmatpush1.bf16.msra.mxu0 %v9924
    %11695 = vmatprep.subr.bf16.mxu0 %v9907
    %11696 = vmatpush1.bf16.msra.mxu0 %v9906
    %11697 = vmatprep.subr.bf16.mxu0 %v9889
    %11698 = vmatpush1.bf16.msra.mxu0 %v9888
    %11699 = vmatprep.subr.bf16.mxu0 %v9871
    %11700 = vmatpush1.bf16.msra.mxu0 %v9870
    %11701 = vmatprep.subr.bf16.mxu0 %v9853
    %11702 = vmatpush1.bf16.msra.mxu0 %v9852
    %11703 = vmatprep.subr.bf16.mxu0 %v9835
    %11704 = vmatpush1.bf16.msra.mxu0 %v9834
    %11705 = vmatprep.subr.bf16.mxu0 %v10105
    %11706 = vmatpush2.bf16.msra.mxu0 %v10104
    %11707 = vmatprep.subr.bf16.mxu0 %v10087
    %11708 = vmatpush2.bf16.msra.mxu0 %v10086
    %11709 = vmatprep.subr.bf16.mxu0 %v10069
    %11710 = vmatpush2.bf16.msra.mxu0 %v10068
    %11711 = vmatprep.subr.bf16.mxu0 %v10051
    %11712 = vmatpush2.bf16.msra.mxu0 %v10050
    %11713 = vmatprep.subr.bf16.mxu0 %v10033
    %11714 = vmatpush2.bf16.msra.mxu0 %v10032
    %11715 = vmatprep.subr.bf16.mxu0 %v10015
    %11716 = vmatpush2.bf16.msra.mxu0 %v10014
    %11717 = vmatprep.subr.bf16.mxu0 %v9997
    %11718 = vmatpush2.bf16.msra.mxu0 %v9996
    %11719 = vmatprep.subr.bf16.mxu0 %v9979
    %11720 = vmatpush2.bf16.msra.mxu0 %v9978
    %11721 = vmatprep.mubr.bf16.mxu0 %v6275
    %11722 = vmatmul.mubr.bf16.gmra.mxu0 %v6274
    %v11723 = vpop.f32.mrf.mxu0
    %v11724 = vadd.f32 %v7161, %v11723
    %v11725 = vpop.f32.mrf.mxu0
    %v11726 = vadd.f32 %v7165, %v11725
    %v11727 = vpop.f32.mrf.mxu0
    %v11728 = vadd.f32 %v7161, %v11727
    %v11729 = vpop.f32.mrf.mxu0
    %v11730 = vadd.f32 %v7165, %v11729
    %11731 = vdwg.mxu0
    %11732 = vmatprep.subr.bf16.mxu0 %v10249
    %11733 = vmatpush1.bf16.msra.mxu0 %v10248
    %11734 = vmatprep.subr.bf16.mxu0 %v10231
    %11735 = vmatpush1.bf16.msra.mxu0 %v10230
    %11736 = vmatprep.subr.bf16.mxu0 %v10213
    %11737 = vmatpush1.bf16.msra.mxu0 %v10212
    %11738 = vmatprep.subr.bf16.mxu0 %v10195
    %11739 = vmatpush1.bf16.msra.mxu0 %v10194
    %11740 = vmatprep.subr.bf16.mxu0 %v10177
    %11741 = vmatpush1.bf16.msra.mxu0 %v10176
    %11742 = vmatprep.subr.bf16.mxu0 %v10159
    %11743 = vmatpush1.bf16.msra.mxu0 %v10158
    %11744 = vmatprep.subr.bf16.mxu0 %v10141
    %11745 = vmatpush1.bf16.msra.mxu0 %v10140
    %11746 = vmatprep.subr.bf16.mxu0 %v10123
    %11747 = vmatpush1.bf16.msra.mxu0 %v10122
    %11748 = vmatprep.subr.bf16.mxu0 %v10393
    %11749 = vmatpush2.bf16.msra.mxu0 %v10392
    %11750 = vmatprep.subr.bf16.mxu0 %v10375
    %11751 = vmatpush2.bf16.msra.mxu0 %v10374
    %11752 = vmatprep.subr.bf16.mxu0 %v10357
    %11753 = vmatpush2.bf16.msra.mxu0 %v10356
    %11754 = vmatprep.subr.bf16.mxu0 %v10339
    %11755 = vmatpush2.bf16.msra.mxu0 %v10338
    %11756 = vmatprep.subr.bf16.mxu0 %v10321
    %11757 = vmatpush2.bf16.msra.mxu0 %v10320
    %11758 = vmatprep.subr.bf16.mxu0 %v10303
    %11759 = vmatpush2.bf16.msra.mxu0 %v10302
    %11760 = vmatprep.subr.bf16.mxu0 %v10285
    %11761 = vmatpush2.bf16.msra.mxu0 %v10284
    %11762 = vmatprep.subr.bf16.mxu0 %v10267
    %11763 = vmatpush2.bf16.msra.mxu0 %v10266
    %11764 = vmatprep.mubr.bf16.mxu0 %v6277
    %11765 = vmatmul.mubr.bf16.gmra.mxu0 %v6276
    %v11766 = vpop.f32.mrf.mxu0
    %v11767 = vadd.f32 %v11724, %v11766
    %v11768 = vpop.f32.mrf.mxu0
    %v11769 = vadd.f32 %v11726, %v11768
    %v11770 = vpop.f32.mrf.mxu0
    %v11771 = vadd.f32 %v11728, %v11770
    %v11772 = vpop.f32.mrf.mxu0
    %v11773 = vadd.f32 %v11730, %v11772
    %11774 = vdwg.mxu0
    %11775 = vmatprep.subr.bf16.mxu0 %v10537
    %11776 = vmatpush1.bf16.msra.mxu0 %v10536
    %11777 = vmatprep.subr.bf16.mxu0 %v10519
    %11778 = vmatpush1.bf16.msra.mxu0 %v10518
    %11779 = vmatprep.subr.bf16.mxu0 %v10501
    %11780 = vmatpush1.bf16.msra.mxu0 %v10500
    %11781 = vmatprep.subr.bf16.mxu0 %v10483
    %11782 = vmatpush1.bf16.msra.mxu0 %v10482
    %11783 = vmatprep.subr.bf16.mxu0 %v10465
    %11784 = vmatpush1.bf16.msra.mxu0 %v10464
    %11785 = vmatprep.subr.bf16.mxu0 %v10447
    %11786 = vmatpush1.bf16.msra.mxu0 %v10446
    %11787 = vmatprep.subr.bf16.mxu0 %v10429
    %11788 = vmatpush1.bf16.msra.mxu0 %v10428
    %11789 = vmatprep.subr.bf16.mxu0 %v10411
    %11790 = vmatpush1.bf16.msra.mxu0 %v10410
    %11791 = vmatprep.subr.bf16.mxu0 %v10681
    %11792 = vmatpush2.bf16.msra.mxu0 %v10680
    %11793 = vmatprep.subr.bf16.mxu0 %v10663
    %11794 = vmatpush2.bf16.msra.mxu0 %v10662
    %11795 = vmatprep.subr.bf16.mxu0 %v10645
    %11796 = vmatpush2.bf16.msra.mxu0 %v10644
    %11797 = vmatprep.subr.bf16.mxu0 %v10627
    %11798 = vmatpush2.bf16.msra.mxu0 %v10626
    %11799 = vmatprep.subr.bf16.mxu0 %v10609
    %11800 = vmatpush2.bf16.msra.mxu0 %v10608
    %11801 = vmatprep.subr.bf16.mxu0 %v10591
    %11802 = vmatpush2.bf16.msra.mxu0 %v10590
    %11803 = vmatprep.subr.bf16.mxu0 %v10573
    %11804 = vmatpush2.bf16.msra.mxu0 %v10572
    %11805 = vmatprep.subr.bf16.mxu0 %v10555
    %11806 = vmatpush2.bf16.msra.mxu0 %v10554
    %11807 = vmatprep.mubr.bf16.mxu0 %v6279
    %11808 = vmatmul.mubr.bf16.gmra.mxu0 %v6278
    %v11809 = vpop.f32.mrf.mxu0
    %v11810 = vadd.f32 %v11767, %v11809
    %v11811 = vpop.f32.mrf.mxu0
    %v11812 = vadd.f32 %v11769, %v11811
    %v11813 = vpop.f32.mrf.mxu0
    %v11814 = vadd.f32 %v11771, %v11813
    %v11815 = vpop.f32.mrf.mxu0
    %v11816 = vadd.f32 %v11773, %v11815
    %11817 = vdwg.mxu0
    %11818 = vmatprep.subr.bf16.mxu0 %v9963
    %11819 = vmatpush1.bf16.msra.mxu0 %v9962
    %11820 = vmatprep.subr.bf16.mxu0 %v9945
    %11821 = vmatpush1.bf16.msra.mxu0 %v9944
    %11822 = vmatprep.subr.bf16.mxu0 %v9927
    %11823 = vmatpush1.bf16.msra.mxu0 %v9926
    %11824 = vmatprep.subr.bf16.mxu0 %v9909
    %11825 = vmatpush1.bf16.msra.mxu0 %v9908
    %11826 = vmatprep.subr.bf16.mxu0 %v9891
    %11827 = vmatpush1.bf16.msra.mxu0 %v9890
    %11828 = vmatprep.subr.bf16.mxu0 %v9873
    %11829 = vmatpush1.bf16.msra.mxu0 %v9872
    %11830 = vmatprep.subr.bf16.mxu0 %v9855
    %11831 = vmatpush1.bf16.msra.mxu0 %v9854
    %11832 = vmatprep.subr.bf16.mxu0 %v9837
    %11833 = vmatpush1.bf16.msra.mxu0 %v9836
    %11834 = vmatprep.subr.bf16.mxu0 %v10107
    %11835 = vmatpush2.bf16.msra.mxu0 %v10106
    %11836 = vmatprep.subr.bf16.mxu0 %v10089
    %11837 = vmatpush2.bf16.msra.mxu0 %v10088
    %11838 = vmatprep.subr.bf16.mxu0 %v10071
    %11839 = vmatpush2.bf16.msra.mxu0 %v10070
    %11840 = vmatprep.subr.bf16.mxu0 %v10053
    %11841 = vmatpush2.bf16.msra.mxu0 %v10052
    %11842 = vmatprep.subr.bf16.mxu0 %v10035
    %11843 = vmatpush2.bf16.msra.mxu0 %v10034
    %11844 = vmatprep.subr.bf16.mxu0 %v10017
    %11845 = vmatpush2.bf16.msra.mxu0 %v10016
    %11846 = vmatprep.subr.bf16.mxu0 %v9999
    %11847 = vmatpush2.bf16.msra.mxu0 %v9998
    %11848 = vmatprep.subr.bf16.mxu0 %v9981
    %11849 = vmatpush2.bf16.msra.mxu0 %v9980
    %11850 = vmatprep.mubr.bf16.mxu0 %v6275
    %11851 = vmatmul.mubr.bf16.gmra.mxu0 %v6274
    %v11852 = vpop.f32.mrf.mxu0
    %v11853 = vadd.f32 %v7169, %v11852
    %v11854 = vpop.f32.mrf.mxu0
    %v11855 = vadd.f32 %v7173, %v11854
    %v11856 = vpop.f32.mrf.mxu0
    %v11857 = vadd.f32 %v7169, %v11856
    %v11858 = vpop.f32.mrf.mxu0
    %v11859 = vadd.f32 %v7173, %v11858
    %11860 = vdwg.mxu0
    %11861 = vmatprep.subr.bf16.mxu0 %v10251
    %11862 = vmatpush1.bf16.msra.mxu0 %v10250
    %11863 = vmatprep.subr.bf16.mxu0 %v10233
    %11864 = vmatpush1.bf16.msra.mxu0 %v10232
    %11865 = vmatprep.subr.bf16.mxu0 %v10215
    %11866 = vmatpush1.bf16.msra.mxu0 %v10214
    %11867 = vmatprep.subr.bf16.mxu0 %v10197
    %11868 = vmatpush1.bf16.msra.mxu0 %v10196
    %11869 = vmatprep.subr.bf16.mxu0 %v10179
    %11870 = vmatpush1.bf16.msra.mxu0 %v10178
    %11871 = vmatprep.subr.bf16.mxu0 %v10161
    %11872 = vmatpush1.bf16.msra.mxu0 %v10160
    %11873 = vmatprep.subr.bf16.mxu0 %v10143
    %11874 = vmatpush1.bf16.msra.mxu0 %v10142
    %11875 = vmatprep.subr.bf16.mxu0 %v10125
    %11876 = vmatpush1.bf16.msra.mxu0 %v10124
    %11877 = vmatprep.subr.bf16.mxu0 %v10395
    %11878 = vmatpush2.bf16.msra.mxu0 %v10394
    %11879 = vmatprep.subr.bf16.mxu0 %v10377
    %11880 = vmatpush2.bf16.msra.mxu0 %v10376
    %11881 = vmatprep.subr.bf16.mxu0 %v10359
    %11882 = vmatpush2.bf16.msra.mxu0 %v10358
    %11883 = vmatprep.subr.bf16.mxu0 %v10341
    %11884 = vmatpush2.bf16.msra.mxu0 %v10340
    %11885 = vmatprep.subr.bf16.mxu0 %v10323
    %11886 = vmatpush2.bf16.msra.mxu0 %v10322
    %11887 = vmatprep.subr.bf16.mxu0 %v10305
    %11888 = vmatpush2.bf16.msra.mxu0 %v10304
    %11889 = vmatprep.subr.bf16.mxu0 %v10287
    %11890 = vmatpush2.bf16.msra.mxu0 %v10286
    %11891 = vmatprep.subr.bf16.mxu0 %v10269
    %11892 = vmatpush2.bf16.msra.mxu0 %v10268
    %11893 = vmatprep.mubr.bf16.mxu0 %v6277
    %11894 = vmatmul.mubr.bf16.gmra.mxu0 %v6276
    %v11895 = vpop.f32.mrf.mxu0
    %v11896 = vadd.f32 %v11853, %v11895
    %v11897 = vpop.f32.mrf.mxu0
    %v11898 = vadd.f32 %v11855, %v11897
    %v11899 = vpop.f32.mrf.mxu0
    %v11900 = vadd.f32 %v11857, %v11899
    %v11901 = vpop.f32.mrf.mxu0
    %v11902 = vadd.f32 %v11859, %v11901
    %11903 = vdwg.mxu0
    %11904 = vmatprep.subr.bf16.mxu0 %v10539
    %11905 = vmatpush1.bf16.msra.mxu0 %v10538
    %11906 = vmatprep.subr.bf16.mxu0 %v10521
    %11907 = vmatpush1.bf16.msra.mxu0 %v10520
    %11908 = vmatprep.subr.bf16.mxu0 %v10503
    %11909 = vmatpush1.bf16.msra.mxu0 %v10502
    %11910 = vmatprep.subr.bf16.mxu0 %v10485
    %11911 = vmatpush1.bf16.msra.mxu0 %v10484
    %11912 = vmatprep.subr.bf16.mxu0 %v10467
    %11913 = vmatpush1.bf16.msra.mxu0 %v10466
    %11914 = vmatprep.subr.bf16.mxu0 %v10449
    %11915 = vmatpush1.bf16.msra.mxu0 %v10448
    %11916 = vmatprep.subr.bf16.mxu0 %v10431
    %11917 = vmatpush1.bf16.msra.mxu0 %v10430
    %11918 = vmatprep.subr.bf16.mxu0 %v10413
    %11919 = vmatpush1.bf16.msra.mxu0 %v10412
    %11920 = vmatprep.subr.bf16.mxu0 %v10683
    %11921 = vmatpush2.bf16.msra.mxu0 %v10682
    %11922 = vmatprep.subr.bf16.mxu0 %v10665
    %11923 = vmatpush2.bf16.msra.mxu0 %v10664
    %11924 = vmatprep.subr.bf16.mxu0 %v10647
    %11925 = vmatpush2.bf16.msra.mxu0 %v10646
    %11926 = vmatprep.subr.bf16.mxu0 %v10629
    %11927 = vmatpush2.bf16.msra.mxu0 %v10628
    %11928 = vmatprep.subr.bf16.mxu0 %v10611
    %11929 = vmatpush2.bf16.msra.mxu0 %v10610
    %11930 = vmatprep.subr.bf16.mxu0 %v10593
    %11931 = vmatpush2.bf16.msra.mxu0 %v10592
    %11932 = vmatprep.subr.bf16.mxu0 %v10575
    %11933 = vmatpush2.bf16.msra.mxu0 %v10574
    %11934 = vmatprep.subr.bf16.mxu0 %v10557
    %11935 = vmatpush2.bf16.msra.mxu0 %v10556
    %11936 = vmatprep.mubr.bf16.mxu0 %v6279
    %11937 = vmatmul.mubr.bf16.gmra.mxu0 %v6278
    %v11938 = vpop.f32.mrf.mxu0
    %v11939 = vadd.f32 %v11896, %v11938
    %v11940 = vpop.f32.mrf.mxu0
    %v11941 = vadd.f32 %v11898, %v11940
    %v11942 = vpop.f32.mrf.mxu0
    %v11943 = vadd.f32 %v11900, %v11942
    %v11944 = vpop.f32.mrf.mxu0
    %v11945 = vadd.f32 %v11902, %v11944
    %11946 = vdwg.mxu0
    %11947 = vmatprep.subr.bf16.mxu0 %v9965
    %11948 = vmatpush1.bf16.msra.mxu0 %v9964
    %11949 = vmatprep.subr.bf16.mxu0 %v9947
    %11950 = vmatpush1.bf16.msra.mxu0 %v9946
    %11951 = vmatprep.subr.bf16.mxu0 %v9929
    %11952 = vmatpush1.bf16.msra.mxu0 %v9928
    %11953 = vmatprep.subr.bf16.mxu0 %v9911
    %11954 = vmatpush1.bf16.msra.mxu0 %v9910
    %11955 = vmatprep.subr.bf16.mxu0 %v9893
    %11956 = vmatpush1.bf16.msra.mxu0 %v9892
    %11957 = vmatprep.subr.bf16.mxu0 %v9875
    %11958 = vmatpush1.bf16.msra.mxu0 %v9874
    %11959 = vmatprep.subr.bf16.mxu0 %v9857
    %11960 = vmatpush1.bf16.msra.mxu0 %v9856
    %11961 = vmatprep.subr.bf16.mxu0 %v9839
    %11962 = vmatpush1.bf16.msra.mxu0 %v9838
    %11963 = vmatprep.subr.bf16.mxu0 %v10109
    %11964 = vmatpush2.bf16.msra.mxu0 %v10108
    %11965 = vmatprep.subr.bf16.mxu0 %v10091
    %11966 = vmatpush2.bf16.msra.mxu0 %v10090
    %11967 = vmatprep.subr.bf16.mxu0 %v10073
    %11968 = vmatpush2.bf16.msra.mxu0 %v10072
    %11969 = vmatprep.subr.bf16.mxu0 %v10055
    %11970 = vmatpush2.bf16.msra.mxu0 %v10054
    %11971 = vmatprep.subr.bf16.mxu0 %v10037
    %11972 = vmatpush2.bf16.msra.mxu0 %v10036
    %11973 = vmatprep.subr.bf16.mxu0 %v10019
    %11974 = vmatpush2.bf16.msra.mxu0 %v10018
    %11975 = vmatprep.subr.bf16.mxu0 %v10001
    %11976 = vmatpush2.bf16.msra.mxu0 %v10000
    %11977 = vmatprep.subr.bf16.mxu0 %v9983
    %11978 = vmatpush2.bf16.msra.mxu0 %v9982
    %11979 = vmatprep.mubr.bf16.mxu0 %v6275
    %11980 = vmatmul.mubr.bf16.gmra.mxu0 %v6274
    %v11981 = vpop.f32.mrf.mxu0
    %v11982 = vadd.f32 %v7177, %v11981
    %v11983 = vpop.f32.mrf.mxu0
    %v11984 = vadd.f32 %v7181, %v11983
    %v11985 = vpop.f32.mrf.mxu0
    %v11986 = vadd.f32 %v7177, %v11985
    %v11987 = vpop.f32.mrf.mxu0
    %v11988 = vadd.f32 %v7181, %v11987
    %11989 = vdwg.mxu0
    %11990 = vmatprep.subr.bf16.mxu0 %v10253
    %11991 = vmatpush1.bf16.msra.mxu0 %v10252
    %11992 = vmatprep.subr.bf16.mxu0 %v10235
    %11993 = vmatpush1.bf16.msra.mxu0 %v10234
    %11994 = vmatprep.subr.bf16.mxu0 %v10217
    %11995 = vmatpush1.bf16.msra.mxu0 %v10216
    %11996 = vmatprep.subr.bf16.mxu0 %v10199
    %11997 = vmatpush1.bf16.msra.mxu0 %v10198
    %11998 = vmatprep.subr.bf16.mxu0 %v10181
    %11999 = vmatpush1.bf16.msra.mxu0 %v10180
    %12000 = vmatprep.subr.bf16.mxu0 %v10163
    %12001 = vmatpush1.bf16.msra.mxu0 %v10162
    %12002 = vmatprep.subr.bf16.mxu0 %v10145
    %12003 = vmatpush1.bf16.msra.mxu0 %v10144
    %12004 = vmatprep.subr.bf16.mxu0 %v10127
    %12005 = vmatpush1.bf16.msra.mxu0 %v10126
    %12006 = vmatprep.subr.bf16.mxu0 %v10397
    %12007 = vmatpush2.bf16.msra.mxu0 %v10396
    %12008 = vmatprep.subr.bf16.mxu0 %v10379
    %12009 = vmatpush2.bf16.msra.mxu0 %v10378
    %12010 = vmatprep.subr.bf16.mxu0 %v10361
    %12011 = vmatpush2.bf16.msra.mxu0 %v10360
    %12012 = vmatprep.subr.bf16.mxu0 %v10343
    %12013 = vmatpush2.bf16.msra.mxu0 %v10342
    %12014 = vmatprep.subr.bf16.mxu0 %v10325
    %12015 = vmatpush2.bf16.msra.mxu0 %v10324
    %12016 = vmatprep.subr.bf16.mxu0 %v10307
    %12017 = vmatpush2.bf16.msra.mxu0 %v10306
    %12018 = vmatprep.subr.bf16.mxu0 %v10289
    %12019 = vmatpush2.bf16.msra.mxu0 %v10288
    %12020 = vmatprep.subr.bf16.mxu0 %v10271
    %12021 = vmatpush2.bf16.msra.mxu0 %v10270
    %12022 = vmatprep.mubr.bf16.mxu0 %v6277
    %12023 = vmatmul.mubr.bf16.gmra.mxu0 %v6276
    %v12024 = vpop.f32.mrf.mxu0
    %v12025 = vadd.f32 %v11982, %v12024
    %v12026 = vpop.f32.mrf.mxu0
    %v12027 = vadd.f32 %v11984, %v12026
    %v12028 = vpop.f32.mrf.mxu0
    %v12029 = vadd.f32 %v11986, %v12028
    %v12030 = vpop.f32.mrf.mxu0
    %v12031 = vadd.f32 %v11988, %v12030
    %12032 = vdwg.mxu0
    %12033 = vmatprep.subr.bf16.mxu0 %v10541
    %12034 = vmatpush1.bf16.msra.mxu0 %v10540
    %12035 = vmatprep.subr.bf16.mxu0 %v10523
    %12036 = vmatpush1.bf16.msra.mxu0 %v10522
    %12037 = vmatprep.subr.bf16.mxu0 %v10505
    %12038 = vmatpush1.bf16.msra.mxu0 %v10504
    %12039 = vmatprep.subr.bf16.mxu0 %v10487
    %12040 = vmatpush1.bf16.msra.mxu0 %v10486
    %12041 = vmatprep.subr.bf16.mxu0 %v10469
    %12042 = vmatpush1.bf16.msra.mxu0 %v10468
    %12043 = vmatprep.subr.bf16.mxu0 %v10451
    %12044 = vmatpush1.bf16.msra.mxu0 %v10450
    %12045 = vmatprep.subr.bf16.mxu0 %v10433
    %12046 = vmatpush1.bf16.msra.mxu0 %v10432
    %12047 = vmatprep.subr.bf16.mxu0 %v10415
    %12048 = vmatpush1.bf16.msra.mxu0 %v10414
    %12049 = vmatprep.subr.bf16.mxu0 %v10685
    %12050 = vmatpush2.bf16.msra.mxu0 %v10684
    %12051 = vmatprep.subr.bf16.mxu0 %v10667
    %12052 = vmatpush2.bf16.msra.mxu0 %v10666
    %12053 = vmatprep.subr.bf16.mxu0 %v10649
    %12054 = vmatpush2.bf16.msra.mxu0 %v10648
    %12055 = vmatprep.subr.bf16.mxu0 %v10631
    %12056 = vmatpush2.bf16.msra.mxu0 %v10630
    %12057 = vmatprep.subr.bf16.mxu0 %v10613
    %12058 = vmatpush2.bf16.msra.mxu0 %v10612
    %12059 = vmatprep.subr.bf16.mxu0 %v10595
    %12060 = vmatpush2.bf16.msra.mxu0 %v10594
    %12061 = vmatprep.subr.bf16.mxu0 %v10577
    %12062 = vmatpush2.bf16.msra.mxu0 %v10576
    %12063 = vmatprep.subr.bf16.mxu0 %v10559
    %12064 = vmatpush2.bf16.msra.mxu0 %v10558
    %12065 = vmatprep.mubr.bf16.mxu0 %v6279
    %12066 = vmatmul.mubr.bf16.gmra.mxu0 %v6278
    %v12067 = vpop.f32.mrf.mxu0
    %v12068 = vadd.f32 %v12025, %v12067
    %v12069 = vpop.f32.mrf.mxu0
    %v12070 = vadd.f32 %v12027, %v12069
    %v12071 = vpop.f32.mrf.mxu0
    %v12072 = vadd.f32 %v12029, %v12071
    %v12073 = vpop.f32.mrf.mxu0
    %v12074 = vadd.f32 %v12031, %v12073
    %12075 = vdwg.mxu0
    %12076 = vmatprep.subr.bf16.mxu0 %v9967
    %12077 = vmatpush1.bf16.msra.mxu0 %v9966
    %12078 = vmatprep.subr.bf16.mxu0 %v9949
    %12079 = vmatpush1.bf16.msra.mxu0 %v9948
    %12080 = vmatprep.subr.bf16.mxu0 %v9931
    %12081 = vmatpush1.bf16.msra.mxu0 %v9930
    %12082 = vmatprep.subr.bf16.mxu0 %v9913
    %12083 = vmatpush1.bf16.msra.mxu0 %v9912
    %12084 = vmatprep.subr.bf16.mxu0 %v9895
    %12085 = vmatpush1.bf16.msra.mxu0 %v9894
    %12086 = vmatprep.subr.bf16.mxu0 %v9877
    %12087 = vmatpush1.bf16.msra.mxu0 %v9876
    %12088 = vmatprep.subr.bf16.mxu0 %v9859
    %12089 = vmatpush1.bf16.msra.mxu0 %v9858
    %12090 = vmatprep.subr.bf16.mxu0 %v9841
    %12091 = vmatpush1.bf16.msra.mxu0 %v9840
    %12092 = vmatprep.subr.bf16.mxu0 %v10111
    %12093 = vmatpush2.bf16.msra.mxu0 %v10110
    %12094 = vmatprep.subr.bf16.mxu0 %v10093
    %12095 = vmatpush2.bf16.msra.mxu0 %v10092
    %12096 = vmatprep.subr.bf16.mxu0 %v10075
    %12097 = vmatpush2.bf16.msra.mxu0 %v10074
    %12098 = vmatprep.subr.bf16.mxu0 %v10057
    %12099 = vmatpush2.bf16.msra.mxu0 %v10056
    %12100 = vmatprep.subr.bf16.mxu0 %v10039
    %12101 = vmatpush2.bf16.msra.mxu0 %v10038
    %12102 = vmatprep.subr.bf16.mxu0 %v10021
    %12103 = vmatpush2.bf16.msra.mxu0 %v10020
    %12104 = vmatprep.subr.bf16.mxu0 %v10003
    %12105 = vmatpush2.bf16.msra.mxu0 %v10002
    %12106 = vmatprep.subr.bf16.mxu0 %v9985
    %12107 = vmatpush2.bf16.msra.mxu0 %v9984
    %12108 = vmatprep.mubr.bf16.mxu0 %v6275
    %12109 = vmatmul.mubr.bf16.gmra.mxu0 %v6274
    %v12110 = vpop.f32.mrf.mxu0
    %v12111 = vadd.f32 %v7185, %v12110
    %v12112 = vpop.f32.mrf.mxu0
    %v12113 = vadd.f32 %v7189, %v12112
    %v12114 = vpop.f32.mrf.mxu0
    %v12115 = vadd.f32 %v7185, %v12114
    %v12116 = vpop.f32.mrf.mxu0
    %v12117 = vadd.f32 %v7189, %v12116
    %12118 = vdwg.mxu0
    %12119 = vmatprep.subr.bf16.mxu0 %v10255
    %12120 = vmatpush1.bf16.msra.mxu0 %v10254
    %12121 = vmatprep.subr.bf16.mxu0 %v10237
    %12122 = vmatpush1.bf16.msra.mxu0 %v10236
    %12123 = vmatprep.subr.bf16.mxu0 %v10219
    %12124 = vmatpush1.bf16.msra.mxu0 %v10218
    %12125 = vmatprep.subr.bf16.mxu0 %v10201
    %12126 = vmatpush1.bf16.msra.mxu0 %v10200
    %12127 = vmatprep.subr.bf16.mxu0 %v10183
    %12128 = vmatpush1.bf16.msra.mxu0 %v10182
    %12129 = vmatprep.subr.bf16.mxu0 %v10165
    %12130 = vmatpush1.bf16.msra.mxu0 %v10164
    %12131 = vmatprep.subr.bf16.mxu0 %v10147
    %12132 = vmatpush1.bf16.msra.mxu0 %v10146
    %12133 = vmatprep.subr.bf16.mxu0 %v10129
    %12134 = vmatpush1.bf16.msra.mxu0 %v10128
    %12135 = vmatprep.subr.bf16.mxu0 %v10399
    %12136 = vmatpush2.bf16.msra.mxu0 %v10398
    %12137 = vmatprep.subr.bf16.mxu0 %v10381
    %12138 = vmatpush2.bf16.msra.mxu0 %v10380
    %12139 = vmatprep.subr.bf16.mxu0 %v10363
    %12140 = vmatpush2.bf16.msra.mxu0 %v10362
    %12141 = vmatprep.subr.bf16.mxu0 %v10345
    %12142 = vmatpush2.bf16.msra.mxu0 %v10344
    %12143 = vmatprep.subr.bf16.mxu0 %v10327
    %12144 = vmatpush2.bf16.msra.mxu0 %v10326
    %12145 = vmatprep.subr.bf16.mxu0 %v10309
    %12146 = vmatpush2.bf16.msra.mxu0 %v10308
    %12147 = vmatprep.subr.bf16.mxu0 %v10291
    %12148 = vmatpush2.bf16.msra.mxu0 %v10290
    %12149 = vmatprep.subr.bf16.mxu0 %v10273
    %12150 = vmatpush2.bf16.msra.mxu0 %v10272
    %12151 = vmatprep.mubr.bf16.mxu0 %v6277
    %12152 = vmatmul.mubr.bf16.gmra.mxu0 %v6276
    %v12153 = vpop.f32.mrf.mxu0
    %v12154 = vadd.f32 %v12111, %v12153
    %v12155 = vpop.f32.mrf.mxu0
    %v12156 = vadd.f32 %v12113, %v12155
    %v12157 = vpop.f32.mrf.mxu0
    %v12158 = vadd.f32 %v12115, %v12157
    %v12159 = vpop.f32.mrf.mxu0
    %v12160 = vadd.f32 %v12117, %v12159
    %12161 = vdwg.mxu0
    %12162 = vmatprep.subr.bf16.mxu0 %v10543
    %12163 = vmatpush1.bf16.msra.mxu0 %v10542
    %12164 = vmatprep.subr.bf16.mxu0 %v10525
    %12165 = vmatpush1.bf16.msra.mxu0 %v10524
    %12166 = vmatprep.subr.bf16.mxu0 %v10507
    %12167 = vmatpush1.bf16.msra.mxu0 %v10506
    %12168 = vmatprep.subr.bf16.mxu0 %v10489
    %12169 = vmatpush1.bf16.msra.mxu0 %v10488
    %12170 = vmatprep.subr.bf16.mxu0 %v10471
    %12171 = vmatpush1.bf16.msra.mxu0 %v10470
    %12172 = vmatprep.subr.bf16.mxu0 %v10453
    %12173 = vmatpush1.bf16.msra.mxu0 %v10452
    %12174 = vmatprep.subr.bf16.mxu0 %v10435
    %12175 = vmatpush1.bf16.msra.mxu0 %v10434
    %12176 = vmatprep.subr.bf16.mxu0 %v10417
    %12177 = vmatpush1.bf16.msra.mxu0 %v10416
    %12178 = vmatprep.subr.bf16.mxu0 %v10687
    %12179 = vmatpush2.bf16.msra.mxu0 %v10686
    %12180 = vmatprep.subr.bf16.mxu0 %v10669
    %12181 = vmatpush2.bf16.msra.mxu0 %v10668
    %12182 = vmatprep.subr.bf16.mxu0 %v10651
    %12183 = vmatpush2.bf16.msra.mxu0 %v10650
    %12184 = vmatprep.subr.bf16.mxu0 %v10633
    %12185 = vmatpush2.bf16.msra.mxu0 %v10632
    %12186 = vmatprep.subr.bf16.mxu0 %v10615
    %12187 = vmatpush2.bf16.msra.mxu0 %v10614
    %12188 = vmatprep.subr.bf16.mxu0 %v10597
    %12189 = vmatpush2.bf16.msra.mxu0 %v10596
    %12190 = vmatprep.subr.bf16.mxu0 %v10579
    %12191 = vmatpush2.bf16.msra.mxu0 %v10578
    %12192 = vmatprep.subr.bf16.mxu0 %v10561
    %12193 = vmatpush2.bf16.msra.mxu0 %v10560
    %12194 = vmatprep.mubr.bf16.mxu0 %v6279
    %12195 = vmatmul.mubr.bf16.gmra.mxu0 %v6278
    %v12196 = vpop.f32.mrf.mxu0
    %v12197 = vadd.f32 %v12154, %v12196
    %v12198 = vpop.f32.mrf.mxu0
    %v12199 = vadd.f32 %v12156, %v12198
    %v12200 = vpop.f32.mrf.mxu0
    %v12201 = vadd.f32 %v12158, %v12200
    %v12202 = vpop.f32.mrf.mxu0
    %v12203 = vadd.f32 %v12160, %v12202
    %12204 = vdwg.mxu0
    %12205 = vmatprep.subr.bf16.mxu0 %v9969
    %12206 = vmatpush1.bf16.msra.mxu0 %v9968
    %12207 = vmatprep.subr.bf16.mxu0 %v9951
    %12208 = vmatpush1.bf16.msra.mxu0 %v9950
    %12209 = vmatprep.subr.bf16.mxu0 %v9933
    %12210 = vmatpush1.bf16.msra.mxu0 %v9932
    %12211 = vmatprep.subr.bf16.mxu0 %v9915
    %12212 = vmatpush1.bf16.msra.mxu0 %v9914
    %12213 = vmatprep.subr.bf16.mxu0 %v9897
    %12214 = vmatpush1.bf16.msra.mxu0 %v9896
    %12215 = vmatprep.subr.bf16.mxu0 %v9879
    %12216 = vmatpush1.bf16.msra.mxu0 %v9878
    %12217 = vmatprep.subr.bf16.mxu0 %v9861
    %12218 = vmatpush1.bf16.msra.mxu0 %v9860
    %12219 = vmatprep.subr.bf16.mxu0 %v9843
    %12220 = vmatpush1.bf16.msra.mxu0 %v9842
    %12221 = vmatprep.subr.bf16.mxu0 %v10113
    %12222 = vmatpush2.bf16.msra.mxu0 %v10112
    %12223 = vmatprep.subr.bf16.mxu0 %v10095
    %12224 = vmatpush2.bf16.msra.mxu0 %v10094
    %12225 = vmatprep.subr.bf16.mxu0 %v10077
    %12226 = vmatpush2.bf16.msra.mxu0 %v10076
    %12227 = vmatprep.subr.bf16.mxu0 %v10059
    %12228 = vmatpush2.bf16.msra.mxu0 %v10058
    %12229 = vmatprep.subr.bf16.mxu0 %v10041
    %12230 = vmatpush2.bf16.msra.mxu0 %v10040
    %12231 = vmatprep.subr.bf16.mxu0 %v10023
    %12232 = vmatpush2.bf16.msra.mxu0 %v10022
    %12233 = vmatprep.subr.bf16.mxu0 %v10005
    %12234 = vmatpush2.bf16.msra.mxu0 %v10004
    %12235 = vmatprep.subr.bf16.mxu0 %v9987
    %12236 = vmatpush2.bf16.msra.mxu0 %v9986
    %12237 = vmatprep.mubr.bf16.mxu0 %v6275
    %12238 = vmatmul.mubr.bf16.gmra.mxu0 %v6274
    %v12239 = vpop.f32.mrf.mxu0
    %v12240 = vadd.f32 %v7193, %v12239
    %v12241 = vpop.f32.mrf.mxu0
    %v12242 = vadd.f32 %v7197, %v12241
    %v12243 = vpop.f32.mrf.mxu0
    %v12244 = vadd.f32 %v7193, %v12243
    %v12245 = vpop.f32.mrf.mxu0
    %v12246 = vadd.f32 %v7197, %v12245
    %12247 = vdwg.mxu0
    %12248 = vmatprep.subr.bf16.mxu0 %v10257
    %12249 = vmatpush1.bf16.msra.mxu0 %v10256
    %12250 = vmatprep.subr.bf16.mxu0 %v10239
    %12251 = vmatpush1.bf16.msra.mxu0 %v10238
    %12252 = vmatprep.subr.bf16.mxu0 %v10221
    %12253 = vmatpush1.bf16.msra.mxu0 %v10220
    %12254 = vmatprep.subr.bf16.mxu0 %v10203
    %12255 = vmatpush1.bf16.msra.mxu0 %v10202
    %12256 = vmatprep.subr.bf16.mxu0 %v10185
    %12257 = vmatpush1.bf16.msra.mxu0 %v10184
    %12258 = vmatprep.subr.bf16.mxu0 %v10167
    %12259 = vmatpush1.bf16.msra.mxu0 %v10166
    %12260 = vmatprep.subr.bf16.mxu0 %v10149
    %12261 = vmatpush1.bf16.msra.mxu0 %v10148
    %12262 = vmatprep.subr.bf16.mxu0 %v10131
    %12263 = vmatpush1.bf16.msra.mxu0 %v10130
    %12264 = vmatprep.subr.bf16.mxu0 %v10401
    %12265 = vmatpush2.bf16.msra.mxu0 %v10400
    %12266 = vmatprep.subr.bf16.mxu0 %v10383
    %12267 = vmatpush2.bf16.msra.mxu0 %v10382
    %12268 = vmatprep.subr.bf16.mxu0 %v10365
    %12269 = vmatpush2.bf16.msra.mxu0 %v10364
    %12270 = vmatprep.subr.bf16.mxu0 %v10347
    %12271 = vmatpush2.bf16.msra.mxu0 %v10346
    %12272 = vmatprep.subr.bf16.mxu0 %v10329
    %12273 = vmatpush2.bf16.msra.mxu0 %v10328
    %12274 = vmatprep.subr.bf16.mxu0 %v10311
    %12275 = vmatpush2.bf16.msra.mxu0 %v10310
    %12276 = vmatprep.subr.bf16.mxu0 %v10293
    %12277 = vmatpush2.bf16.msra.mxu0 %v10292
    %12278 = vmatprep.subr.bf16.mxu0 %v10275
    %12279 = vmatpush2.bf16.msra.mxu0 %v10274
    %12280 = vmatprep.mubr.bf16.mxu0 %v6277
    %12281 = vmatmul.mubr.bf16.gmra.mxu0 %v6276
    %v12282 = vpop.f32.mrf.mxu0
    %v12283 = vadd.f32 %v12240, %v12282
    %v12284 = vpop.f32.mrf.mxu0
    %v12285 = vadd.f32 %v12242, %v12284
    %v12286 = vpop.f32.mrf.mxu0
    %v12287 = vadd.f32 %v12244, %v12286
    %v12288 = vpop.f32.mrf.mxu0
    %v12289 = vadd.f32 %v12246, %v12288
    %12290 = vdwg.mxu0
    %12291 = vmatprep.subr.bf16.mxu0 %v10545
    %12292 = vmatpush1.bf16.msra.mxu0 %v10544
    %12293 = vmatprep.subr.bf16.mxu0 %v10527
    %12294 = vmatpush1.bf16.msra.mxu0 %v10526
    %12295 = vmatprep.subr.bf16.mxu0 %v10509
    %12296 = vmatpush1.bf16.msra.mxu0 %v10508
    %12297 = vmatprep.subr.bf16.mxu0 %v10491
    %12298 = vmatpush1.bf16.msra.mxu0 %v10490
    %12299 = vmatprep.subr.bf16.mxu0 %v10473
    %12300 = vmatpush1.bf16.msra.mxu0 %v10472
    %12301 = vmatprep.subr.bf16.mxu0 %v10455
    %12302 = vmatpush1.bf16.msra.mxu0 %v10454
    %12303 = vmatprep.subr.bf16.mxu0 %v10437
    %12304 = vmatpush1.bf16.msra.mxu0 %v10436
    %12305 = vmatprep.subr.bf16.mxu0 %v10419
    %12306 = vmatpush1.bf16.msra.mxu0 %v10418
    %12307 = vmatprep.subr.bf16.mxu0 %v10689
    %12308 = vmatpush2.bf16.msra.mxu0 %v10688
    %12309 = vmatprep.subr.bf16.mxu0 %v10671
    %12310 = vmatpush2.bf16.msra.mxu0 %v10670
    %12311 = vmatprep.subr.bf16.mxu0 %v10653
    %12312 = vmatpush2.bf16.msra.mxu0 %v10652
    %12313 = vmatprep.subr.bf16.mxu0 %v10635
    %12314 = vmatpush2.bf16.msra.mxu0 %v10634
    %12315 = vmatprep.subr.bf16.mxu0 %v10617
    %12316 = vmatpush2.bf16.msra.mxu0 %v10616
    %12317 = vmatprep.subr.bf16.mxu0 %v10599
    %12318 = vmatpush2.bf16.msra.mxu0 %v10598
    %12319 = vmatprep.subr.bf16.mxu0 %v10581
    %12320 = vmatpush2.bf16.msra.mxu0 %v10580
    %12321 = vmatprep.subr.bf16.mxu0 %v10563
    %12322 = vmatpush2.bf16.msra.mxu0 %v10562
    %12323 = vmatprep.mubr.bf16.mxu0 %v6279
    %12324 = vmatmul.mubr.bf16.gmra.mxu0 %v6278
    %v12325 = vpop.f32.mrf.mxu0
    %v12326 = vadd.f32 %v12283, %v12325
    %v12327 = vpop.f32.mrf.mxu0
    %v12328 = vadd.f32 %v12285, %v12327
    %v12329 = vpop.f32.mrf.mxu0
    %v12330 = vadd.f32 %v12287, %v12329
    %v12331 = vpop.f32.mrf.mxu0
    %v12332 = vadd.f32 %v12289, %v12331
    %12333 = vdwg.mxu0
    %12334 = vmatprep.subr.bf16.mxu0 %v9971
    %12335 = vmatpush1.bf16.msra.mxu0 %v9970
    %12336 = vmatprep.subr.bf16.mxu0 %v9953
    %12337 = vmatpush1.bf16.msra.mxu0 %v9952
    %12338 = vmatprep.subr.bf16.mxu0 %v9935
    %12339 = vmatpush1.bf16.msra.mxu0 %v9934
    %12340 = vmatprep.subr.bf16.mxu0 %v9917
    %12341 = vmatpush1.bf16.msra.mxu0 %v9916
    %12342 = vmatprep.subr.bf16.mxu0 %v9899
    %12343 = vmatpush1.bf16.msra.mxu0 %v9898
    %12344 = vmatprep.subr.bf16.mxu0 %v9881
    %12345 = vmatpush1.bf16.msra.mxu0 %v9880
    %12346 = vmatprep.subr.bf16.mxu0 %v9863
    %12347 = vmatpush1.bf16.msra.mxu0 %v9862
    %12348 = vmatprep.subr.bf16.mxu0 %v9845
    %12349 = vmatpush1.bf16.msra.mxu0 %v9844
    %12350 = vmatprep.subr.bf16.mxu0 %v10115
    %12351 = vmatpush2.bf16.msra.mxu0 %v10114
    %12352 = vmatprep.subr.bf16.mxu0 %v10097
    %12353 = vmatpush2.bf16.msra.mxu0 %v10096
    %12354 = vmatprep.subr.bf16.mxu0 %v10079
    %12355 = vmatpush2.bf16.msra.mxu0 %v10078
    %12356 = vmatprep.subr.bf16.mxu0 %v10061
    %12357 = vmatpush2.bf16.msra.mxu0 %v10060
    %12358 = vmatprep.subr.bf16.mxu0 %v10043
    %12359 = vmatpush2.bf16.msra.mxu0 %v10042
    %12360 = vmatprep.subr.bf16.mxu0 %v10025
    %12361 = vmatpush2.bf16.msra.mxu0 %v10024
    %12362 = vmatprep.subr.bf16.mxu0 %v10007
    %12363 = vmatpush2.bf16.msra.mxu0 %v10006
    %12364 = vmatprep.subr.bf16.mxu0 %v9989
    %12365 = vmatpush2.bf16.msra.mxu0 %v9988
    %12366 = vmatprep.mubr.bf16.mxu0 %v6275
    %12367 = vmatmul.mubr.bf16.gmra.mxu0 %v6274
    %v12368 = vpop.f32.mrf.mxu0
    %v12369 = vadd.f32 %v7201, %v12368
    %v12370 = vpop.f32.mrf.mxu0
    %v12371 = vadd.f32 %v7205, %v12370
    %v12372 = vpop.f32.mrf.mxu0
    %v12373 = vadd.f32 %v7201, %v12372
    %v12374 = vpop.f32.mrf.mxu0
    %v12375 = vadd.f32 %v7205, %v12374
    %12376 = vdwg.mxu0
    %12377 = vmatprep.subr.bf16.mxu0 %v10259
    %12378 = vmatpush1.bf16.msra.mxu0 %v10258
    %12379 = vmatprep.subr.bf16.mxu0 %v10241
    %12380 = vmatpush1.bf16.msra.mxu0 %v10240
    %12381 = vmatprep.subr.bf16.mxu0 %v10223
    %12382 = vmatpush1.bf16.msra.mxu0 %v10222
    %12383 = vmatprep.subr.bf16.mxu0 %v10205
    %12384 = vmatpush1.bf16.msra.mxu0 %v10204
    %12385 = vmatprep.subr.bf16.mxu0 %v10187
    %12386 = vmatpush1.bf16.msra.mxu0 %v10186
    %12387 = vmatprep.subr.bf16.mxu0 %v10169
    %12388 = vmatpush1.bf16.msra.mxu0 %v10168
    %12389 = vmatprep.subr.bf16.mxu0 %v10151
    %12390 = vmatpush1.bf16.msra.mxu0 %v10150
    %12391 = vmatprep.subr.bf16.mxu0 %v10133
    %12392 = vmatpush1.bf16.msra.mxu0 %v10132
    %12393 = vmatprep.subr.bf16.mxu0 %v10403
    %12394 = vmatpush2.bf16.msra.mxu0 %v10402
    %12395 = vmatprep.subr.bf16.mxu0 %v10385
    %12396 = vmatpush2.bf16.msra.mxu0 %v10384
    %12397 = vmatprep.subr.bf16.mxu0 %v10367
    %12398 = vmatpush2.bf16.msra.mxu0 %v10366
    %12399 = vmatprep.subr.bf16.mxu0 %v10349
    %12400 = vmatpush2.bf16.msra.mxu0 %v10348
    %12401 = vmatprep.subr.bf16.mxu0 %v10331
    %12402 = vmatpush2.bf16.msra.mxu0 %v10330
    %12403 = vmatprep.subr.bf16.mxu0 %v10313
    %12404 = vmatpush2.bf16.msra.mxu0 %v10312
    %12405 = vmatprep.subr.bf16.mxu0 %v10295
    %12406 = vmatpush2.bf16.msra.mxu0 %v10294
    %12407 = vmatprep.subr.bf16.mxu0 %v10277
    %12408 = vmatpush2.bf16.msra.mxu0 %v10276
    %12409 = vmatprep.mubr.bf16.mxu0 %v6277
    %12410 = vmatmul.mubr.bf16.gmra.mxu0 %v6276
    %v12411 = vpop.f32.mrf.mxu0
    %v12412 = vadd.f32 %v12369, %v12411
    %v12413 = vpop.f32.mrf.mxu0
    %v12414 = vadd.f32 %v12371, %v12413
    %v12415 = vpop.f32.mrf.mxu0
    %v12416 = vadd.f32 %v12373, %v12415
    %v12417 = vpop.f32.mrf.mxu0
    %v12418 = vadd.f32 %v12375, %v12417
    %12419 = vdwg.mxu0
    %12420 = vmatprep.subr.bf16.mxu0 %v10547
    %12421 = vmatpush1.bf16.msra.mxu0 %v10546
    %12422 = vmatprep.subr.bf16.mxu0 %v10529
    %12423 = vmatpush1.bf16.msra.mxu0 %v10528
    %12424 = vmatprep.subr.bf16.mxu0 %v10511
    %12425 = vmatpush1.bf16.msra.mxu0 %v10510
    %12426 = vmatprep.subr.bf16.mxu0 %v10493
    %12427 = vmatpush1.bf16.msra.mxu0 %v10492
    %12428 = vmatprep.subr.bf16.mxu0 %v10475
    %12429 = vmatpush1.bf16.msra.mxu0 %v10474
    %12430 = vmatprep.subr.bf16.mxu0 %v10457
    %12431 = vmatpush1.bf16.msra.mxu0 %v10456
    %12432 = vmatprep.subr.bf16.mxu0 %v10439
    %12433 = vmatpush1.bf16.msra.mxu0 %v10438
    %12434 = vmatprep.subr.bf16.mxu0 %v10421
    %12435 = vmatpush1.bf16.msra.mxu0 %v10420
    %12436 = vmatprep.subr.bf16.mxu0 %v10691
    %12437 = vmatpush2.bf16.msra.mxu0 %v10690
    %12438 = vmatprep.subr.bf16.mxu0 %v10673
    %12439 = vmatpush2.bf16.msra.mxu0 %v10672
    %12440 = vmatprep.subr.bf16.mxu0 %v10655
    %12441 = vmatpush2.bf16.msra.mxu0 %v10654
    %12442 = vmatprep.subr.bf16.mxu0 %v10637
    %12443 = vmatpush2.bf16.msra.mxu0 %v10636
    %12444 = vmatprep.subr.bf16.mxu0 %v10619
    %12445 = vmatpush2.bf16.msra.mxu0 %v10618
    %12446 = vmatprep.subr.bf16.mxu0 %v10601
    %12447 = vmatpush2.bf16.msra.mxu0 %v10600
    %12448 = vmatprep.subr.bf16.mxu0 %v10583
    %12449 = vmatpush2.bf16.msra.mxu0 %v10582
    %12450 = vmatprep.subr.bf16.mxu0 %v10565
    %12451 = vmatpush2.bf16.msra.mxu0 %v10564
    %12452 = vmatprep.mubr.bf16.mxu0 %v6279
    %12453 = vmatmul.mubr.bf16.gmra.mxu0 %v6278
    %v12454 = vpop.f32.mrf.mxu0
    %v12455 = vadd.f32 %v12412, %v12454
    %v12456 = vpop.f32.mrf.mxu0
    %v12457 = vadd.f32 %v12414, %v12456
    %v12458 = vpop.f32.mrf.mxu0
    %v12459 = vadd.f32 %v12416, %v12458
    %v12460 = vpop.f32.mrf.mxu0
    %v12461 = vadd.f32 %v12418, %v12460
    %12462 = vdwg.mxu0
    %12463 = vmatprep.subr.bf16.mxu0 %v9973
    %12464 = vmatpush1.bf16.msra.mxu0 %v9972
    %12465 = vmatprep.subr.bf16.mxu0 %v9955
    %12466 = vmatpush1.bf16.msra.mxu0 %v9954
    %12467 = vmatprep.subr.bf16.mxu0 %v9937
    %12468 = vmatpush1.bf16.msra.mxu0 %v9936
    %12469 = vmatprep.subr.bf16.mxu0 %v9919
    %12470 = vmatpush1.bf16.msra.mxu0 %v9918
    %12471 = vmatprep.subr.bf16.mxu0 %v9901
    %12472 = vmatpush1.bf16.msra.mxu0 %v9900
    %12473 = vmatprep.subr.bf16.mxu0 %v9883
    %12474 = vmatpush1.bf16.msra.mxu0 %v9882
    %12475 = vmatprep.subr.bf16.mxu0 %v9865
    %12476 = vmatpush1.bf16.msra.mxu0 %v9864
    %12477 = vmatprep.subr.bf16.mxu0 %v9847
    %12478 = vmatpush1.bf16.msra.mxu0 %v9846
    %12479 = vmatprep.subr.bf16.mxu0 %v10117
    %12480 = vmatpush2.bf16.msra.mxu0 %v10116
    %12481 = vmatprep.subr.bf16.mxu0 %v10099
    %12482 = vmatpush2.bf16.msra.mxu0 %v10098
    %12483 = vmatprep.subr.bf16.mxu0 %v10081
    %12484 = vmatpush2.bf16.msra.mxu0 %v10080
    %12485 = vmatprep.subr.bf16.mxu0 %v10063
    %12486 = vmatpush2.bf16.msra.mxu0 %v10062
    %12487 = vmatprep.subr.bf16.mxu0 %v10045
    %12488 = vmatpush2.bf16.msra.mxu0 %v10044
    %12489 = vmatprep.subr.bf16.mxu0 %v10027
    %12490 = vmatpush2.bf16.msra.mxu0 %v10026
    %12491 = vmatprep.subr.bf16.mxu0 %v10009
    %12492 = vmatpush2.bf16.msra.mxu0 %v10008
    %12493 = vmatprep.subr.bf16.mxu0 %v9991
    %12494 = vmatpush2.bf16.msra.mxu0 %v9990
    %12495 = vmatprep.mubr.bf16.mxu0 %v6275
    %12496 = vmatmul.mubr.bf16.gmra.mxu0 %v6274
    %v12497 = vpop.f32.mrf.mxu0
    %v12498 = vadd.f32 %v7209, %v12497
    %v12499 = vpop.f32.mrf.mxu0
    %v12500 = vadd.f32 %v7213, %v12499
    %v12501 = vpop.f32.mrf.mxu0
    %v12502 = vadd.f32 %v7209, %v12501
    %v12503 = vpop.f32.mrf.mxu0
    %v12504 = vadd.f32 %v7213, %v12503
    %12505 = vdwg.mxu0
    %12506 = vmatprep.subr.bf16.mxu0 %v10261
    %12507 = vmatpush1.bf16.msra.mxu0 %v10260
    %12508 = vmatprep.subr.bf16.mxu0 %v10243
    %12509 = vmatpush1.bf16.msra.mxu0 %v10242
    %12510 = vmatprep.subr.bf16.mxu0 %v10225
    %12511 = vmatpush1.bf16.msra.mxu0 %v10224
    %12512 = vmatprep.subr.bf16.mxu0 %v10207
    %12513 = vmatpush1.bf16.msra.mxu0 %v10206
    %12514 = vmatprep.subr.bf16.mxu0 %v10189
    %12515 = vmatpush1.bf16.msra.mxu0 %v10188
    %12516 = vmatprep.subr.bf16.mxu0 %v10171
    %12517 = vmatpush1.bf16.msra.mxu0 %v10170
    %12518 = vmatprep.subr.bf16.mxu0 %v10153
    %12519 = vmatpush1.bf16.msra.mxu0 %v10152
    %12520 = vmatprep.subr.bf16.mxu0 %v10135
    %12521 = vmatpush1.bf16.msra.mxu0 %v10134
    %12522 = vmatprep.subr.bf16.mxu0 %v10405
    %12523 = vmatpush2.bf16.msra.mxu0 %v10404
    %12524 = vmatprep.subr.bf16.mxu0 %v10387
    %12525 = vmatpush2.bf16.msra.mxu0 %v10386
    %12526 = vmatprep.subr.bf16.mxu0 %v10369
    %12527 = vmatpush2.bf16.msra.mxu0 %v10368
    %12528 = vmatprep.subr.bf16.mxu0 %v10351
    %12529 = vmatpush2.bf16.msra.mxu0 %v10350
    %12530 = vmatprep.subr.bf16.mxu0 %v10333
    %12531 = vmatpush2.bf16.msra.mxu0 %v10332
    %12532 = vmatprep.subr.bf16.mxu0 %v10315
    %12533 = vmatpush2.bf16.msra.mxu0 %v10314
    %12534 = vmatprep.subr.bf16.mxu0 %v10297
    %12535 = vmatpush2.bf16.msra.mxu0 %v10296
    %12536 = vmatprep.subr.bf16.mxu0 %v10279
    %12537 = vmatpush2.bf16.msra.mxu0 %v10278
    %12538 = vmatprep.mubr.bf16.mxu0 %v6277
    %12539 = vmatmul.mubr.bf16.gmra.mxu0 %v6276
    %v12540 = vpop.f32.mrf.mxu0
    %v12541 = vadd.f32 %v12498, %v12540
    %v12542 = vpop.f32.mrf.mxu0
    %v12543 = vadd.f32 %v12500, %v12542
    %v12544 = vpop.f32.mrf.mxu0
    %v12545 = vadd.f32 %v12502, %v12544
    %v12546 = vpop.f32.mrf.mxu0
    %v12547 = vadd.f32 %v12504, %v12546
    %12548 = vdwg.mxu0
    %12549 = vmatprep.subr.bf16.mxu0 %v10549
    %12550 = vmatpush1.bf16.msra.mxu0 %v10548
    %12551 = vmatprep.subr.bf16.mxu0 %v10531
    %12552 = vmatpush1.bf16.msra.mxu0 %v10530
    %12553 = vmatprep.subr.bf16.mxu0 %v10513
    %12554 = vmatpush1.bf16.msra.mxu0 %v10512
    %12555 = vmatprep.subr.bf16.mxu0 %v10495
    %12556 = vmatpush1.bf16.msra.mxu0 %v10494
    %12557 = vmatprep.subr.bf16.mxu0 %v10477
    %12558 = vmatpush1.bf16.msra.mxu0 %v10476
    %12559 = vmatprep.subr.bf16.mxu0 %v10459
    %12560 = vmatpush1.bf16.msra.mxu0 %v10458
    %12561 = vmatprep.subr.bf16.mxu0 %v10441
    %12562 = vmatpush1.bf16.msra.mxu0 %v10440
    %12563 = vmatprep.subr.bf16.mxu0 %v10423
    %12564 = vmatpush1.bf16.msra.mxu0 %v10422
    %12565 = vmatprep.subr.bf16.mxu0 %v10693
    %12566 = vmatpush2.bf16.msra.mxu0 %v10692
    %12567 = vmatprep.subr.bf16.mxu0 %v10675
    %12568 = vmatpush2.bf16.msra.mxu0 %v10674
    %12569 = vmatprep.subr.bf16.mxu0 %v10657
    %12570 = vmatpush2.bf16.msra.mxu0 %v10656
    %12571 = vmatprep.subr.bf16.mxu0 %v10639
    %12572 = vmatpush2.bf16.msra.mxu0 %v10638
    %12573 = vmatprep.subr.bf16.mxu0 %v10621
    %12574 = vmatpush2.bf16.msra.mxu0 %v10620
    %12575 = vmatprep.subr.bf16.mxu0 %v10603
    %12576 = vmatpush2.bf16.msra.mxu0 %v10602
    %12577 = vmatprep.subr.bf16.mxu0 %v10585
    %12578 = vmatpush2.bf16.msra.mxu0 %v10584
    %12579 = vmatprep.subr.bf16.mxu0 %v10567
    %12580 = vmatpush2.bf16.msra.mxu0 %v10566
    %12581 = vmatprep.mubr.bf16.mxu0 %v6279
    %12582 = vmatmul.mubr.bf16.gmra.mxu0 %v6278
    %v12583 = vpop.f32.mrf.mxu0
    %v12584 = vadd.f32 %v12541, %v12583
    %v12585 = vpop.f32.mrf.mxu0
    %v12586 = vadd.f32 %v12543, %v12585
    %v12587 = vpop.f32.mrf.mxu0
    %v12588 = vadd.f32 %v12545, %v12587
    %v12589 = vpop.f32.mrf.mxu0
    %v12590 = vadd.f32 %v12547, %v12589
    %12591 = vdwg.mxu0
    %12592 = vmatprep.subr.bf16.mxu0 %v9975
    %12593 = vmatpush1.bf16.msra.mxu0 %v9974
    %12594 = vmatprep.subr.bf16.mxu0 %v9957
    %12595 = vmatpush1.bf16.msra.mxu0 %v9956
    %12596 = vmatprep.subr.bf16.mxu0 %v9939
    %12597 = vmatpush1.bf16.msra.mxu0 %v9938
    %12598 = vmatprep.subr.bf16.mxu0 %v9921
    %12599 = vmatpush1.bf16.msra.mxu0 %v9920
    %12600 = vmatprep.subr.bf16.mxu0 %v9903
    %12601 = vmatpush1.bf16.msra.mxu0 %v9902
    %12602 = vmatprep.subr.bf16.mxu0 %v9885
    %12603 = vmatpush1.bf16.msra.mxu0 %v9884
    %12604 = vmatprep.subr.bf16.mxu0 %v9867
    %12605 = vmatpush1.bf16.msra.mxu0 %v9866
    %12606 = vmatprep.subr.bf16.mxu0 %v9849
    %12607 = vmatpush1.bf16.msra.mxu0 %v9848
    %12608 = vmatprep.subr.bf16.mxu0 %v10119
    %12609 = vmatpush2.bf16.msra.mxu0 %v10118
    %12610 = vmatprep.subr.bf16.mxu0 %v10101
    %12611 = vmatpush2.bf16.msra.mxu0 %v10100
    %12612 = vmatprep.subr.bf16.mxu0 %v10083
    %12613 = vmatpush2.bf16.msra.mxu0 %v10082
    %12614 = vmatprep.subr.bf16.mxu0 %v10065
    %12615 = vmatpush2.bf16.msra.mxu0 %v10064
    %12616 = vmatprep.subr.bf16.mxu0 %v10047
    %12617 = vmatpush2.bf16.msra.mxu0 %v10046
    %12618 = vmatprep.subr.bf16.mxu0 %v10029
    %12619 = vmatpush2.bf16.msra.mxu0 %v10028
    %12620 = vmatprep.subr.bf16.mxu0 %v10011
    %12621 = vmatpush2.bf16.msra.mxu0 %v10010
    %12622 = vmatprep.subr.bf16.mxu0 %v9993
    %12623 = vmatpush2.bf16.msra.mxu0 %v9992
    %12624 = vmatprep.mubr.bf16.mxu0 %v6275
    %12625 = vmatmul.mubr.bf16.gmra.mxu0 %v6274
    %v12626 = vpop.f32.mrf.mxu0
    %v12627 = vadd.f32 %v7217, %v12626
    %v12628 = vpop.f32.mrf.mxu0
    %v12629 = vadd.f32 %v7221, %v12628
    %v12630 = vpop.f32.mrf.mxu0
    %v12631 = vadd.f32 %v7217, %v12630
    %v12632 = vpop.f32.mrf.mxu0
    %v12633 = vadd.f32 %v7221, %v12632
    %12634 = vdwg.mxu0
    %12635 = vmatprep.subr.bf16.mxu0 %v10263
    %12636 = vmatpush1.bf16.msra.mxu0 %v10262
    %12637 = vmatprep.subr.bf16.mxu0 %v10245
    %12638 = vmatpush1.bf16.msra.mxu0 %v10244
    %12639 = vmatprep.subr.bf16.mxu0 %v10227
    %12640 = vmatpush1.bf16.msra.mxu0 %v10226
    %12641 = vmatprep.subr.bf16.mxu0 %v10209
    %12642 = vmatpush1.bf16.msra.mxu0 %v10208
    %12643 = vmatprep.subr.bf16.mxu0 %v10191
    %12644 = vmatpush1.bf16.msra.mxu0 %v10190
    %12645 = vmatprep.subr.bf16.mxu0 %v10173
    %12646 = vmatpush1.bf16.msra.mxu0 %v10172
    %12647 = vmatprep.subr.bf16.mxu0 %v10155
    %12648 = vmatpush1.bf16.msra.mxu0 %v10154
    %12649 = vmatprep.subr.bf16.mxu0 %v10137
    %12650 = vmatpush1.bf16.msra.mxu0 %v10136
    %12651 = vmatprep.subr.bf16.mxu0 %v10407
    %12652 = vmatpush2.bf16.msra.mxu0 %v10406
    %12653 = vmatprep.subr.bf16.mxu0 %v10389
    %12654 = vmatpush2.bf16.msra.mxu0 %v10388
    %12655 = vmatprep.subr.bf16.mxu0 %v10371
    %12656 = vmatpush2.bf16.msra.mxu0 %v10370
    %12657 = vmatprep.subr.bf16.mxu0 %v10353
    %12658 = vmatpush2.bf16.msra.mxu0 %v10352
    %12659 = vmatprep.subr.bf16.mxu0 %v10335
    %12660 = vmatpush2.bf16.msra.mxu0 %v10334
    %12661 = vmatprep.subr.bf16.mxu0 %v10317
    %12662 = vmatpush2.bf16.msra.mxu0 %v10316
    %12663 = vmatprep.subr.bf16.mxu0 %v10299
    %12664 = vmatpush2.bf16.msra.mxu0 %v10298
    %12665 = vmatprep.subr.bf16.mxu0 %v10281
    %12666 = vmatpush2.bf16.msra.mxu0 %v10280
    %12667 = vmatprep.mubr.bf16.mxu0 %v6277
    %12668 = vmatmul.mubr.bf16.gmra.mxu0 %v6276
    %v12669 = vpop.f32.mrf.mxu0
    %v12670 = vadd.f32 %v12627, %v12669
    %v12671 = vpop.f32.mrf.mxu0
    %v12672 = vadd.f32 %v12629, %v12671
    %v12673 = vpop.f32.mrf.mxu0
    %v12674 = vadd.f32 %v12631, %v12673
    %v12675 = vpop.f32.mrf.mxu0
    %v12676 = vadd.f32 %v12633, %v12675
    %12677 = vdwg.mxu0
    %12678 = vmatprep.subr.bf16.mxu0 %v10551
    %12679 = vmatpush1.bf16.msra.mxu0 %v10550
    %12680 = vmatprep.subr.bf16.mxu0 %v10533
    %12681 = vmatpush1.bf16.msra.mxu0 %v10532
    %12682 = vmatprep.subr.bf16.mxu0 %v10515
    %12683 = vmatpush1.bf16.msra.mxu0 %v10514
    %12684 = vmatprep.subr.bf16.mxu0 %v10497
    %12685 = vmatpush1.bf16.msra.mxu0 %v10496
    %12686 = vmatprep.subr.bf16.mxu0 %v10479
    %12687 = vmatpush1.bf16.msra.mxu0 %v10478
    %12688 = vmatprep.subr.bf16.mxu0 %v10461
    %12689 = vmatpush1.bf16.msra.mxu0 %v10460
    %12690 = vmatprep.subr.bf16.mxu0 %v10443
    %12691 = vmatpush1.bf16.msra.mxu0 %v10442
    %12692 = vmatprep.subr.bf16.mxu0 %v10425
    %12693 = vmatpush1.bf16.msra.mxu0 %v10424
    %12694 = vmatprep.subr.bf16.mxu0 %v10695
    %12695 = vmatpush2.bf16.msra.mxu0 %v10694
    %12696 = vmatprep.subr.bf16.mxu0 %v10677
    %12697 = vmatpush2.bf16.msra.mxu0 %v10676
    %12698 = vmatprep.subr.bf16.mxu0 %v10659
    %12699 = vmatpush2.bf16.msra.mxu0 %v10658
    %12700 = vmatprep.subr.bf16.mxu0 %v10641
    %12701 = vmatpush2.bf16.msra.mxu0 %v10640
    %12702 = vmatprep.subr.bf16.mxu0 %v10623
    %12703 = vmatpush2.bf16.msra.mxu0 %v10622
    %12704 = vmatprep.subr.bf16.mxu0 %v10605
    %12705 = vmatpush2.bf16.msra.mxu0 %v10604
    %12706 = vmatprep.subr.bf16.mxu0 %v10587
    %12707 = vmatpush2.bf16.msra.mxu0 %v10586
    %12708 = vmatprep.subr.bf16.mxu0 %v10569
    %12709 = vmatpush2.bf16.msra.mxu0 %v10568
    %12710 = vmatprep.mubr.bf16.mxu0 %v6279
    %12711 = vmatmul.mubr.bf16.gmra.mxu0 %v6278
    %v12712 = vpop.f32.mrf.mxu0
    %v12713 = vadd.f32 %v12670, %v12712
    %v12714 = vpop.f32.mrf.mxu0
    %v12715 = vadd.f32 %v12672, %v12714
    %v12716 = vpop.f32.mrf.mxu0
    %v12717 = vadd.f32 %v12674, %v12716
    %v12718 = vpop.f32.mrf.mxu0
    %v12719 = vadd.f32 %v12676, %v12718
    %12720 = vdwg.mxu0
    %v12721 = vpack.c.bf16 %v11681, %v11681
    %v12722 = vpack.c.bf16 %v11683, %v11683
    %v12723 = vpack.c.bf16 %v11810, %v11810
    %v12724 = vpack.c.bf16 %v11812, %v11812
    %v12725 = vpack.c.bf16 %v11939, %v11939
    %v12726 = vpack.c.bf16 %v11941, %v11941
    %v12727 = vpack.c.bf16 %v11685, %v11685
    %v12728 = vpack.c.bf16 %v11687, %v11687
    %v12729 = vpack.c.bf16 %v11814, %v11814
    %v12730 = vpack.c.bf16 %v11816, %v11816
    %v12731 = vpack.c.bf16 %v11943, %v11943
    %v12732 = vpack.c.bf16 %v11945, %v11945
    %v12733 = vpack.c.bf16 %v12068, %v12068
    %v12734 = vpack.c.bf16 %v12070, %v12070
    %v12735 = vpack.c.bf16 %v12197, %v12197
    %v12736 = vpack.c.bf16 %v12199, %v12199
    %v12737 = vpack.c.bf16 %v12326, %v12326
    %v12738 = vpack.c.bf16 %v12328, %v12328
    %v12739 = vpack.c.bf16 %v12072, %v12072
    %v12740 = vpack.c.bf16 %v12074, %v12074
    %v12741 = vpack.c.bf16 %v12201, %v12201
    %v12742 = vpack.c.bf16 %v12203, %v12203
    %v12743 = vpack.c.bf16 %v12330, %v12330
    %v12744 = vpack.c.bf16 %v12332, %v12332
    %12745 = vmatprep.subr.bf16.mxu0 0
    %12746 = vmatpush1.bf16.xpose.msra.mxu0 0
    %12747 = vmatprep.subr.bf16.mxu0 0
    %12748 = vmatpush1.bf16.xpose.msra.mxu0 0
    %12749 = vmatprep.subr.bf16.mxu0 0
    %12750 = vmatpush1.bf16.xpose.msra.mxu0 0
    %12751 = vmatprep.subr.bf16.mxu0 0
    %12752 = vmatpush1.bf16.xpose.msra.mxu0 0
    %12753 = vmatprep.subr.bf16.mxu0 0
    %12754 = vmatpush1.bf16.xpose.msra.mxu0 0
    %12755 = vmatprep.subr.bf16.mxu0 0
    %12756 = vmatpush1.bf16.xpose.msra.mxu0 0
    %12757 = vmatprep.subr.bf16.mxu0 0
    %12758 = vmatpush1.bf16.xpose.msra.mxu0 0
    %12759 = vmatprep.subr.bf16.mxu0 %v12734
    %12760 = vmatpush1.bf16.xpose.msra.mxu0 %v12733
    %12761 = vmatprep.subr.bf16.mxu0 0
    %12762 = vmatpush2.bf16.xpose.msra.mxu0 0
    %12763 = vmatprep.subr.bf16.mxu0 0
    %12764 = vmatpush2.bf16.xpose.msra.mxu0 0
    %12765 = vmatprep.subr.bf16.mxu0 0
    %12766 = vmatpush2.bf16.xpose.msra.mxu0 0
    %12767 = vmatprep.subr.bf16.mxu0 0
    %12768 = vmatpush2.bf16.xpose.msra.mxu0 0
    %12769 = vmatprep.subr.bf16.mxu0 0
    %12770 = vmatpush2.bf16.xpose.msra.mxu0 0
    %12771 = vmatprep.subr.bf16.mxu0 0
    %12772 = vmatpush2.bf16.xpose.msra.mxu0 0
    %12773 = vmatprep.subr.bf16.mxu0 0
    %12774 = vmatpush2.bf16.xpose.msra.mxu0 0
    %12775 = vmatprep.subr.bf16.mxu0 0
    %12776 = vmatpush2.bf16.xpose.msra.mxu0 0
    %12777 = vmatprep.mubr.bf16.mxu0 %v12722
    %12778 = vmatmul.mubr.bf16.gmra.mxu0 %v12721
    %v12779 = vpop.f32.mrf.mxu0
    %v12780 = vadd.f32 0.0, %v12779
    %v12781 = vpop.f32.mrf.mxu0
    %v12782 = vpop.f32.mrf.mxu0
    %v12783 = vpop.f32.mrf.mxu0
    %12784 = vdwg.mxu0
    %12785 = vmatprep.subr.bf16.mxu0 0
    %12786 = vmatpush1.bf16.xpose.msra.mxu0 0
    %12787 = vmatprep.subr.bf16.mxu0 0
    %12788 = vmatpush1.bf16.xpose.msra.mxu0 0
    %12789 = vmatprep.subr.bf16.mxu0 0
    %12790 = vmatpush1.bf16.xpose.msra.mxu0 0
    %12791 = vmatprep.subr.bf16.mxu0 0
    %12792 = vmatpush1.bf16.xpose.msra.mxu0 0
    %12793 = vmatprep.subr.bf16.mxu0 0
    %12794 = vmatpush1.bf16.xpose.msra.mxu0 0
    %12795 = vmatprep.subr.bf16.mxu0 0
    %12796 = vmatpush1.bf16.xpose.msra.mxu0 0
    %12797 = vmatprep.subr.bf16.mxu0 0
    %12798 = vmatpush1.bf16.xpose.msra.mxu0 0
    %12799 = vmatprep.subr.bf16.mxu0 %v12736
    %12800 = vmatpush1.bf16.xpose.msra.mxu0 %v12735
    %12801 = vmatprep.subr.bf16.mxu0 0
    %12802 = vmatpush2.bf16.xpose.msra.mxu0 0
    %12803 = vmatprep.subr.bf16.mxu0 0
    %12804 = vmatpush2.bf16.xpose.msra.mxu0 0
    %12805 = vmatprep.subr.bf16.mxu0 0
    %12806 = vmatpush2.bf16.xpose.msra.mxu0 0
    %12807 = vmatprep.subr.bf16.mxu0 0
    %12808 = vmatpush2.bf16.xpose.msra.mxu0 0
    %12809 = vmatprep.subr.bf16.mxu0 0
    %12810 = vmatpush2.bf16.xpose.msra.mxu0 0
    %12811 = vmatprep.subr.bf16.mxu0 0
    %12812 = vmatpush2.bf16.xpose.msra.mxu0 0
    %12813 = vmatprep.subr.bf16.mxu0 0
    %12814 = vmatpush2.bf16.xpose.msra.mxu0 0
    %12815 = vmatprep.subr.bf16.mxu0 0
    %12816 = vmatpush2.bf16.xpose.msra.mxu0 0
    %12817 = vmatprep.mubr.bf16.mxu0 %v12724
    %12818 = vmatmul.mubr.bf16.gmra.mxu0 %v12723
    %v12819 = vpop.f32.mrf.mxu0
    %v12820 = vadd.f32 %v12780, %v12819
    %v12821 = vpop.f32.mrf.mxu0
    %v12822 = vpop.f32.mrf.mxu0
    %v12823 = vpop.f32.mrf.mxu0
    %12824 = vdwg.mxu0
    %12825 = vmatprep.subr.bf16.mxu0 0
    %12826 = vmatpush1.bf16.xpose.msra.mxu0 0
    %12827 = vmatprep.subr.bf16.mxu0 0
    %12828 = vmatpush1.bf16.xpose.msra.mxu0 0
    %12829 = vmatprep.subr.bf16.mxu0 0
    %12830 = vmatpush1.bf16.xpose.msra.mxu0 0
    %12831 = vmatprep.subr.bf16.mxu0 0
    %12832 = vmatpush1.bf16.xpose.msra.mxu0 0
    %12833 = vmatprep.subr.bf16.mxu0 0
    %12834 = vmatpush1.bf16.xpose.msra.mxu0 0
    %12835 = vmatprep.subr.bf16.mxu0 0
    %12836 = vmatpush1.bf16.xpose.msra.mxu0 0
    %12837 = vmatprep.subr.bf16.mxu0 0
    %12838 = vmatpush1.bf16.xpose.msra.mxu0 0
    %12839 = vmatprep.subr.bf16.mxu0 %v12738
    %12840 = vmatpush1.bf16.xpose.msra.mxu0 %v12737
    %12841 = vmatprep.subr.bf16.mxu0 0
    %12842 = vmatpush2.bf16.xpose.msra.mxu0 0
    %12843 = vmatprep.subr.bf16.mxu0 0
    %12844 = vmatpush2.bf16.xpose.msra.mxu0 0
    %12845 = vmatprep.subr.bf16.mxu0 0
    %12846 = vmatpush2.bf16.xpose.msra.mxu0 0
    %12847 = vmatprep.subr.bf16.mxu0 0
    %12848 = vmatpush2.bf16.xpose.msra.mxu0 0
    %12849 = vmatprep.subr.bf16.mxu0 0
    %12850 = vmatpush2.bf16.xpose.msra.mxu0 0
    %12851 = vmatprep.subr.bf16.mxu0 0
    %12852 = vmatpush2.bf16.xpose.msra.mxu0 0
    %12853 = vmatprep.subr.bf16.mxu0 0
    %12854 = vmatpush2.bf16.xpose.msra.mxu0 0
    %12855 = vmatprep.subr.bf16.mxu0 0
    %12856 = vmatpush2.bf16.xpose.msra.mxu0 0
    %12857 = vmatprep.mubr.bf16.mxu0 %v12726
    %12858 = vmatmul.mubr.bf16.gmra.mxu0 %v12725
    %v12859 = vpop.f32.mrf.mxu0
    %v12860 = vadd.f32 %v12820, %v12859
    %v12861 = vpop.f32.mrf.mxu0
    %v12862 = vpop.f32.mrf.mxu0
    %v12863 = vpop.f32.mrf.mxu0
    %12864 = vdwg.mxu0
    %12865 = vmatprep.subr.bf16.mxu0 0
    %12866 = vmatpush1.bf16.xpose.msra.mxu0 0
    %12867 = vmatprep.subr.bf16.mxu0 0
    %12868 = vmatpush1.bf16.xpose.msra.mxu0 0
    %12869 = vmatprep.subr.bf16.mxu0 0
    %12870 = vmatpush1.bf16.xpose.msra.mxu0 0
    %12871 = vmatprep.subr.bf16.mxu0 0
    %12872 = vmatpush1.bf16.xpose.msra.mxu0 0
    %12873 = vmatprep.subr.bf16.mxu0 0
    %12874 = vmatpush1.bf16.xpose.msra.mxu0 0
    %12875 = vmatprep.subr.bf16.mxu0 0
    %12876 = vmatpush1.bf16.xpose.msra.mxu0 0
    %12877 = vmatprep.subr.bf16.mxu0 0
    %12878 = vmatpush1.bf16.xpose.msra.mxu0 0
    %12879 = vmatprep.subr.bf16.mxu0 %v12740
    %12880 = vmatpush1.bf16.xpose.msra.mxu0 %v12739
    %12881 = vmatprep.subr.bf16.mxu0 0
    %12882 = vmatpush2.bf16.xpose.msra.mxu0 0
    %12883 = vmatprep.subr.bf16.mxu0 0
    %12884 = vmatpush2.bf16.xpose.msra.mxu0 0
    %12885 = vmatprep.subr.bf16.mxu0 0
    %12886 = vmatpush2.bf16.xpose.msra.mxu0 0
    %12887 = vmatprep.subr.bf16.mxu0 0
    %12888 = vmatpush2.bf16.xpose.msra.mxu0 0
    %12889 = vmatprep.subr.bf16.mxu0 0
    %12890 = vmatpush2.bf16.xpose.msra.mxu0 0
    %12891 = vmatprep.subr.bf16.mxu0 0
    %12892 = vmatpush2.bf16.xpose.msra.mxu0 0
    %12893 = vmatprep.subr.bf16.mxu0 0
    %12894 = vmatpush2.bf16.xpose.msra.mxu0 0
    %12895 = vmatprep.subr.bf16.mxu0 0
    %12896 = vmatpush2.bf16.xpose.msra.mxu0 0
    %12897 = vmatprep.mubr.bf16.mxu0 %v12728
    %12898 = vmatmul.mubr.bf16.gmra.mxu0 %v12727
    %v12899 = vpop.f32.mrf.mxu0
    %v12900 = vadd.f32 0.0, %v12899
    %v12901 = vpop.f32.mrf.mxu0
    %v12902 = vpop.f32.mrf.mxu0
    %v12903 = vpop.f32.mrf.mxu0
    %12904 = vdwg.mxu0
    %12905 = vmatprep.subr.bf16.mxu0 0
    %12906 = vmatpush1.bf16.xpose.msra.mxu0 0
    %12907 = vmatprep.subr.bf16.mxu0 0
    %12908 = vmatpush1.bf16.xpose.msra.mxu0 0
    %12909 = vmatprep.subr.bf16.mxu0 0
    %12910 = vmatpush1.bf16.xpose.msra.mxu0 0
    %12911 = vmatprep.subr.bf16.mxu0 0
    %12912 = vmatpush1.bf16.xpose.msra.mxu0 0
    %12913 = vmatprep.subr.bf16.mxu0 0
    %12914 = vmatpush1.bf16.xpose.msra.mxu0 0
    %12915 = vmatprep.subr.bf16.mxu0 0
    %12916 = vmatpush1.bf16.xpose.msra.mxu0 0
    %12917 = vmatprep.subr.bf16.mxu0 0
    %12918 = vmatpush1.bf16.xpose.msra.mxu0 0
    %12919 = vmatprep.subr.bf16.mxu0 %v12742
    %12920 = vmatpush1.bf16.xpose.msra.mxu0 %v12741
    %12921 = vmatprep.subr.bf16.mxu0 0
    %12922 = vmatpush2.bf16.xpose.msra.mxu0 0
    %12923 = vmatprep.subr.bf16.mxu0 0
    %12924 = vmatpush2.bf16.xpose.msra.mxu0 0
    %12925 = vmatprep.subr.bf16.mxu0 0
    %12926 = vmatpush2.bf16.xpose.msra.mxu0 0
    %12927 = vmatprep.subr.bf16.mxu0 0
    %12928 = vmatpush2.bf16.xpose.msra.mxu0 0
    %12929 = vmatprep.subr.bf16.mxu0 0
    %12930 = vmatpush2.bf16.xpose.msra.mxu0 0
    %12931 = vmatprep.subr.bf16.mxu0 0
    %12932 = vmatpush2.bf16.xpose.msra.mxu0 0
    %12933 = vmatprep.subr.bf16.mxu0 0
    %12934 = vmatpush2.bf16.xpose.msra.mxu0 0
    %12935 = vmatprep.subr.bf16.mxu0 0
    %12936 = vmatpush2.bf16.xpose.msra.mxu0 0
    %12937 = vmatprep.mubr.bf16.mxu0 %v12730
    %12938 = vmatmul.mubr.bf16.gmra.mxu0 %v12729
    %v12939 = vpop.f32.mrf.mxu0
    %v12940 = vadd.f32 %v12900, %v12939
    %v12941 = vpop.f32.mrf.mxu0
    %v12942 = vpop.f32.mrf.mxu0
    %v12943 = vpop.f32.mrf.mxu0
    %12944 = vdwg.mxu0
    %12945 = vmatprep.subr.bf16.mxu0 0
    %12946 = vmatpush1.bf16.xpose.msra.mxu0 0
    %12947 = vmatprep.subr.bf16.mxu0 0
    %12948 = vmatpush1.bf16.xpose.msra.mxu0 0
    %12949 = vmatprep.subr.bf16.mxu0 0
    %12950 = vmatpush1.bf16.xpose.msra.mxu0 0
    %12951 = vmatprep.subr.bf16.mxu0 0
    %12952 = vmatpush1.bf16.xpose.msra.mxu0 0
    %12953 = vmatprep.subr.bf16.mxu0 0
    %12954 = vmatpush1.bf16.xpose.msra.mxu0 0
    %12955 = vmatprep.subr.bf16.mxu0 0
    %12956 = vmatpush1.bf16.xpose.msra.mxu0 0
    %12957 = vmatprep.subr.bf16.mxu0 0
    %12958 = vmatpush1.bf16.xpose.msra.mxu0 0
    %12959 = vmatprep.subr.bf16.mxu0 %v12744
    %12960 = vmatpush1.bf16.xpose.msra.mxu0 %v12743
    %12961 = vmatprep.subr.bf16.mxu0 0
    %12962 = vmatpush2.bf16.xpose.msra.mxu0 0
    %12963 = vmatprep.subr.bf16.mxu0 0
    %12964 = vmatpush2.bf16.xpose.msra.mxu0 0
    %12965 = vmatprep.subr.bf16.mxu0 0
    %12966 = vmatpush2.bf16.xpose.msra.mxu0 0
    %12967 = vmatprep.subr.bf16.mxu0 0
    %12968 = vmatpush2.bf16.xpose.msra.mxu0 0
    %12969 = vmatprep.subr.bf16.mxu0 0
    %12970 = vmatpush2.bf16.xpose.msra.mxu0 0
    %12971 = vmatprep.subr.bf16.mxu0 0
    %12972 = vmatpush2.bf16.xpose.msra.mxu0 0
    %12973 = vmatprep.subr.bf16.mxu0 0
    %12974 = vmatpush2.bf16.xpose.msra.mxu0 0
    %12975 = vmatprep.subr.bf16.mxu0 0
    %12976 = vmatpush2.bf16.xpose.msra.mxu0 0
    %12977 = vmatprep.mubr.bf16.mxu0 %v12732
    %12978 = vmatmul.mubr.bf16.gmra.mxu0 %v12731
    %v12979 = vpop.f32.mrf.mxu0
    %v12980 = vadd.f32 %v12940, %v12979
    %v12981 = vpop.f32.mrf.mxu0
    %v12982 = vpop.f32.mrf.mxu0
    %v12983 = vpop.f32.mrf.mxu0
    %12984 = vdwg.mxu0
    %vm12985 = vcmask 64512
    %v12986 = vsel %vm12985, %v12860, -inf
    %12987 = vmax.xlane.f32.xlu0 %v12986
    %v12988 = vpop.xlane.xlu0 %12987
    %v12989 = vsel %vm12985, %v12980, -inf
    %12990 = vmax.xlane.f32.xlu0 %v12989
    %v12991 = vpop.xlane.xlu0 %12990
    %v12992 = vsub.f32 %v12860, %v12988
    %v12993 = vsub.f32 %v12980, %v12991
    %v12994 = vmul.f32 %v12992, 1.442695
    %v12995 = vpow.pop %v12994
    %v12996 = vmul.f32 %v12993, 1.442695
    %v12997 = vpow.pop %v12996
    %v12998 = vsel %vm12985, %v12995, 0.0
    %12999 = vadd.xlane.f32.xlu0 %v12998
    %v13000 = vpop.xlane.xlu0 %12999
    %v13001 = vsel %vm12985, %v12997, 0.0
    %13002 = vadd.xlane.f32.xlu0 %v13001
    %v13003 = vpop.xlane.xlu0 %13002
    %v13004 = vrcp.pop %v13000
    %v13005 = vrcp.pop %v13003
    %v13006 = vmul.f32 %v12995, %v13004
    %v13007 = vmul.f32 %v12997, %v13005
    %v13008 = vsel %vm12985, %v13006, 0.0
    %v13009 = vrot.slane %v13008, 4
    %v13010 = vadd.f32 %v13008, %v13009
    %v13011 = vrot.slane %v13010, 2
    %v13012 = vadd.f32 %v13010, %v13011
    %v13013 = vrot.slane %v13012, 1
    %v13014 = vadd.f32 %v13012, %v13013
    %v13015 = vsel %vm12985, %v13007, 0.0
    %v13016 = vrot.slane %v13015, 4
    %v13017 = vadd.f32 %v13015, %v13016
    %v13018 = vrot.slane %v13017, 2
    %v13019 = vadd.f32 %v13017, %v13018
    %v13020 = vrot.slane %v13019, 1
    %v13021 = vadd.f32 %v13019, %v13020
    %v13022 = vrcp.pop 8.0
    %v13023 = vmul.f32 %v13014, %v13022
    %v13024 = vmul.f32 %v13021, %v13022
    %13026 = vbcast.lane.b32.xlu0 %v13023, 256
    %v13027 = vpop.permute.xlu0 %13026
    %13029 = vbcast.lane.b32.xlu0 %v13024, 256
    %v13030 = vpop.permute.xlu0 %13029
    %v13031 = vmul.f32 %v13027, %v12455
    %v13032 = vmul.f32 %v13027, %v12457
    %v13033 = vmul.f32 %v13027, %v12584
    %v13034 = vmul.f32 %v13027, %v12586
    %v13035 = vmul.f32 %v13027, %v12713
    %v13036 = vmul.f32 %v13027, %v12715
    %v13037 = vmul.f32 %v13030, %v12459
    %v13038 = vmul.f32 %v13030, %v12461
    %v13039 = vmul.f32 %v13030, %v12588
    %v13040 = vmul.f32 %v13030, %v12590
    %v13041 = vmul.f32 %v13030, %v12717
    %v13042 = vmul.f32 %v13030, %v12719
    %v13043 = vrot.slane %v13031, 4
    %v13044 = vadd.f32 %v13031, %v13043
    %v13045 = vrot.slane %v13044, 2
    %v13046 = vadd.f32 %v13044, %v13045
    %v13047 = vrot.slane %v13046, 1
    %v13048 = vadd.f32 %v13046, %v13047
    %v13049 = vrot.slane %v13032, 4
    %v13050 = vadd.f32 %v13032, %v13049
    %v13051 = vrot.slane %v13050, 2
    %v13052 = vadd.f32 %v13050, %v13051
    %v13053 = vrot.slane %v13052, 1
    %v13054 = vadd.f32 %v13052, %v13053
    %v13055 = vrot.slane %v13033, 4
    %v13056 = vadd.f32 %v13033, %v13055
    %v13057 = vrot.slane %v13056, 2
    %v13058 = vadd.f32 %v13056, %v13057
    %v13059 = vrot.slane %v13058, 1
    %v13060 = vadd.f32 %v13058, %v13059
    %v13061 = vrot.slane %v13034, 4
    %v13062 = vadd.f32 %v13034, %v13061
    %v13063 = vrot.slane %v13062, 2
    %v13064 = vadd.f32 %v13062, %v13063
    %v13065 = vrot.slane %v13064, 1
    %v13066 = vadd.f32 %v13064, %v13065
    %v13067 = vrot.slane %v13035, 4
    %v13068 = vadd.f32 %v13035, %v13067
    %v13069 = vrot.slane %v13068, 2
    %v13070 = vadd.f32 %v13068, %v13069
    %v13071 = vrot.slane %v13070, 1
    %v13072 = vadd.f32 %v13070, %v13071
    %v13073 = vrot.slane %v13036, 4
    %v13074 = vadd.f32 %v13036, %v13073
    %v13075 = vrot.slane %v13074, 2
    %v13076 = vadd.f32 %v13074, %v13075
    %v13077 = vrot.slane %v13076, 1
    %v13078 = vadd.f32 %v13076, %v13077
    %v13079 = vrot.slane %v13037, 4
    %v13080 = vadd.f32 %v13037, %v13079
    %v13081 = vrot.slane %v13080, 2
    %v13082 = vadd.f32 %v13080, %v13081
    %v13083 = vrot.slane %v13082, 1
    %v13084 = vadd.f32 %v13082, %v13083
    %v13085 = vrot.slane %v13038, 4
    %v13086 = vadd.f32 %v13038, %v13085
    %v13087 = vrot.slane %v13086, 2
    %v13088 = vadd.f32 %v13086, %v13087
    %v13089 = vrot.slane %v13088, 1
    %v13090 = vadd.f32 %v13088, %v13089
    %v13091 = vrot.slane %v13039, 4
    %v13092 = vadd.f32 %v13039, %v13091
    %v13093 = vrot.slane %v13092, 2
    %v13094 = vadd.f32 %v13092, %v13093
    %v13095 = vrot.slane %v13094, 1
    %v13096 = vadd.f32 %v13094, %v13095
    %v13097 = vrot.slane %v13040, 4
    %v13098 = vadd.f32 %v13040, %v13097
    %v13099 = vrot.slane %v13098, 2
    %v13100 = vadd.f32 %v13098, %v13099
    %v13101 = vrot.slane %v13100, 1
    %v13102 = vadd.f32 %v13100, %v13101
    %v13103 = vrot.slane %v13041, 4
    %v13104 = vadd.f32 %v13041, %v13103
    %v13105 = vrot.slane %v13104, 2
    %v13106 = vadd.f32 %v13104, %v13105
    %v13107 = vrot.slane %v13106, 1
    %v13108 = vadd.f32 %v13106, %v13107
    %v13109 = vrot.slane %v13042, 4
    %v13110 = vadd.f32 %v13042, %v13109
    %v13111 = vrot.slane %v13110, 2
    %v13112 = vadd.f32 %v13110, %v13111
    %v13113 = vrot.slane %v13112, 1
    %v13114 = vadd.f32 %v13112, %v13113
    %v13115 = vld [vmem:[%s7] sm:$0xff]
    %v13116 = vld [vmem:[%s7 + $0x8] sm:$0xff]
    %v13117 = vld [vmem:[%s7 + $0x10] sm:$0xff]
    %v13118 = vld [vmem:[%s7 + $0x18] sm:$0xff]
    %v13119 = vld [vmem:[%s7 + $0x20] sm:$0xff]
    %v13120 = vld [vmem:[%s7 + $0x28] sm:$0xff]
    %v13121 = vld [vmem:[%s7 + $0x30] sm:$0xff]
    %v13122 = vld [vmem:[%s7 + $0x38] sm:$0xff]
    %v13123 = vld [vmem:[%s7 + $0x40] sm:$0xff]
    %v13124 = vld [vmem:[%s7 + $0x48] sm:$0xff]
    %v13125 = vld [vmem:[%s7 + $0x50] sm:$0xff]
    %v13126 = vld [vmem:[%s7 + $0x58] sm:$0xff]
    %v13127 = vld [vmem:[%s7 + $0x60] sm:$0xff]
    %v13128 = vld [vmem:[%s7 + $0x68] sm:$0xff]
    %v13129 = vld [vmem:[%s7 + $0x70] sm:$0xff]
    %v13130 = vld [vmem:[%s7 + $0x78] sm:$0xff]
    %v13131 = vld [vmem:[%s7 + $0x80] sm:$0xff]
    %v13132 = vld [vmem:[%s7 + $0x88] sm:$0xff]
    %v13133 = vld [vmem:[%s7 + $0x90] sm:$0xff]
    %v13134 = vld [vmem:[%s7 + $0x98] sm:$0xff]
    %v13135 = vld [vmem:[%s7 + $0xa0] sm:$0xff]
    %v13136 = vld [vmem:[%s7 + $0xa8] sm:$0xff]
    %v13137 = vld [vmem:[%s7 + $0xb0] sm:$0xff]
    %v13138 = vld [vmem:[%s7 + $0xb8] sm:$0xff]
    %v13139 = vld [vmem:[%s7 + $0xc0] sm:$0xff]
    %v13140 = vld [vmem:[%s7 + $0xc8] sm:$0xff]
    %v13141 = vld [vmem:[%s7 + $0xd0] sm:$0xff]
    %v13142 = vld [vmem:[%s7 + $0xd8] sm:$0xff]
    %v13143 = vld [vmem:[%s7 + $0xe0] sm:$0xff]
    %v13144 = vld [vmem:[%s7 + $0xe8] sm:$0xff]
    %v13145 = vld [vmem:[%s7 + $0xf0] sm:$0xff]
    %v13146 = vld [vmem:[%s7 + $0xf8] sm:$0xff]
    %v13147 = vld [vmem:[%s7 + $0x100] sm:$0xff]
    %v13148 = vld [vmem:[%s7 + $0x108] sm:$0xff]
    %v13149 = vld [vmem:[%s7 + $0x110] sm:$0xff]
    %v13150 = vld [vmem:[%s7 + $0x118] sm:$0xff]
    %v13151 = vld [vmem:[%s7 + $0x120] sm:$0xff]
    %v13152 = vld [vmem:[%s7 + $0x128] sm:$0xff]
    %v13153 = vld [vmem:[%s7 + $0x130] sm:$0xff]
    %v13154 = vld [vmem:[%s7 + $0x138] sm:$0xff]
    %v13155 = vld [vmem:[%s7 + $0x140] sm:$0xff]
    %v13156 = vld [vmem:[%s7 + $0x148] sm:$0xff]
    %v13157 = vld [vmem:[%s7 + $0x150] sm:$0xff]
    %v13158 = vld [vmem:[%s7 + $0x158] sm:$0xff]
    %v13159 = vld [vmem:[%s7 + $0x160] sm:$0xff]
    %v13160 = vld [vmem:[%s7 + $0x168] sm:$0xff]
    %v13161 = vld [vmem:[%s7 + $0x170] sm:$0xff]
    %v13162 = vld [vmem:[%s7 + $0x178] sm:$0xff]
    %v13163 = vld [vmem:[%s7 + $0x180] sm:$0xff]
    %v13164 = vld [vmem:[%s7 + $0x188] sm:$0xff]
    %v13165 = vld [vmem:[%s7 + $0x190] sm:$0xff]
    %v13166 = vld [vmem:[%s7 + $0x198] sm:$0xff]
    %v13167 = vld [vmem:[%s7 + $0x1a0] sm:$0xff]
    %v13168 = vld [vmem:[%s7 + $0x1a8] sm:$0xff]
    %v13169 = vld [vmem:[%s7 + $0x1b0] sm:$0xff]
    %v13170 = vld [vmem:[%s7 + $0x1b8] sm:$0xff]
    %v13171 = vld [vmem:[%s7 + $0x1c0] sm:$0xff]
    %v13172 = vld [vmem:[%s7 + $0x1c8] sm:$0xff]
    %v13173 = vld [vmem:[%s7 + $0x1d0] sm:$0xff]
    %v13174 = vld [vmem:[%s7 + $0x1d8] sm:$0xff]
    %v13175 = vld [vmem:[%s7 + $0x1e0] sm:$0xff]
    %v13176 = vld [vmem:[%s7 + $0x1e8] sm:$0xff]
    %v13177 = vld [vmem:[%s7 + $0x1f0] sm:$0xff]
    %v13178 = vld [vmem:[%s7 + $0x1f8] sm:$0xff]
    %v13179 = vld [vmem:[%s7 + $0x200] sm:$0xff]
    %v13180 = vld [vmem:[%s7 + $0x208] sm:$0xff]
    %v13181 = vld [vmem:[%s7 + $0x210] sm:$0xff]
    %v13182 = vld [vmem:[%s7 + $0x218] sm:$0xff]
    %v13183 = vld [vmem:[%s7 + $0x220] sm:$0xff]
    %v13184 = vld [vmem:[%s7 + $0x228] sm:$0xff]
    %v13185 = vld [vmem:[%s7 + $0x230] sm:$0xff]
    %v13186 = vld [vmem:[%s7 + $0x238] sm:$0xff]
    %v13187 = vld [vmem:[%s7 + $0x240] sm:$0xff]
    %v13188 = vld [vmem:[%s7 + $0x248] sm:$0xff]
    %v13189 = vld [vmem:[%s7 + $0x250] sm:$0xff]
    %v13190 = vld [vmem:[%s7 + $0x258] sm:$0xff]
    %v13191 = vld [vmem:[%s7 + $0x260] sm:$0xff]
    %v13192 = vld [vmem:[%s7 + $0x268] sm:$0xff]
    %v13193 = vld [vmem:[%s7 + $0x270] sm:$0xff]
    %v13194 = vld [vmem:[%s7 + $0x278] sm:$0xff]
    %v13195 = vld [vmem:[%s7 + $0x280] sm:$0xff]
    %v13196 = vld [vmem:[%s7 + $0x288] sm:$0xff]
    %v13197 = vld [vmem:[%s7 + $0x290] sm:$0xff]
    %v13198 = vld [vmem:[%s7 + $0x298] sm:$0xff]
    %v13199 = vld [vmem:[%s7 + $0x2a0] sm:$0xff]
    %v13200 = vld [vmem:[%s7 + $0x2a8] sm:$0xff]
    %v13201 = vld [vmem:[%s7 + $0x2b0] sm:$0xff]
    %v13202 = vld [vmem:[%s7 + $0x2b8] sm:$0xff]
    %v13203 = vld [vmem:[%s7 + $0x2c0] sm:$0xff]
    %v13204 = vld [vmem:[%s7 + $0x2c8] sm:$0xff]
    %v13205 = vld [vmem:[%s7 + $0x2d0] sm:$0xff]
    %v13206 = vld [vmem:[%s7 + $0x2d8] sm:$0xff]
    %v13207 = vld [vmem:[%s7 + $0x2e0] sm:$0xff]
    %v13208 = vld [vmem:[%s7 + $0x2e8] sm:$0xff]
    %v13209 = vld [vmem:[%s7 + $0x2f0] sm:$0xff]
    %v13210 = vld [vmem:[%s7 + $0x2f8] sm:$0xff]
    %v13211 = vld [vmem:[#allocation13] sm:$0x1]
    %v13213 = vlaneseq
    %v13214 = vshrl.u32 %v13213, 7
    %v13215 = vsub.s32 0, %v13214
    %v13216 = vrot.slane %v13211, %v13215
    %vm13230 = vcmask 1041409
    %v13231 = vsel %vm13230, %v13084, %v13048
    %v13232 = vsel %vm13230, %v13090, %v13054
    %v13233 = vsel %vm13230, %v13096, %v13060
    %v13234 = vsel %vm13230, %v13102, %v13066
    %v13235 = vsel %vm13230, %v13108, %v13072
    %v13236 = vsel %vm13230, %v13114, %v13078
    %13243 = vmatprep.subr.mxu0 0.0
    %13244 = vmatpush1.msra.mxu0 %v13130
    %13245 = vmatprep.subr.mxu0 0.0
    %13246 = vmatpush1.msra.mxu0 %v13129
    %13247 = vmatprep.subr.mxu0 0.0
    %13248 = vmatpush1.msra.mxu0 %v13128
    %13249 = vmatprep.subr.mxu0 0.0
    %13250 = vmatpush1.msra.mxu0 %v13127
    %13251 = vmatprep.subr.mxu0 0.0
    %13252 = vmatpush1.msra.mxu0 %v13126
    %13253 = vmatprep.subr.mxu0 0.0
    %13254 = vmatpush1.msra.mxu0 %v13125
    %13255 = vmatprep.subr.mxu0 0.0
    %13256 = vmatpush1.msra.mxu0 %v13124
    %13257 = vmatprep.subr.mxu0 0.0
    %13258 = vmatpush1.msra.mxu0 %v13123
    %13259 = vmatprep.subr.mxu0 0.0
    %13260 = vmatpush1.msra.mxu0 %v13122
    %13261 = vmatprep.subr.mxu0 0.0
    %13262 = vmatpush1.msra.mxu0 %v13121
    %13263 = vmatprep.subr.mxu0 0.0
    %13264 = vmatpush1.msra.mxu0 %v13120
    %13265 = vmatprep.subr.mxu0 0.0
    %13266 = vmatpush1.msra.mxu0 %v13119
    %13267 = vmatprep.subr.mxu0 0.0
    %13268 = vmatpush1.msra.mxu0 %v13118
    %13269 = vmatprep.subr.mxu0 0.0
    %13270 = vmatpush1.msra.mxu0 %v13117
    %13271 = vmatprep.subr.mxu0 0.0
    %13272 = vmatpush1.msra.mxu0 %v13116
    %13273 = vmatprep.subr.mxu0 0.0
    %13274 = vmatpush1.msra.mxu0 %v13115
    %13275 = vmatprep.subr.mxu0 0.0
    %13276 = vmatpush2.msra.mxu0 %v13146
    %13277 = vmatprep.subr.mxu0 0.0
    %13278 = vmatpush2.msra.mxu0 %v13145
    %13279 = vmatprep.subr.mxu0 0.0
    %13280 = vmatpush2.msra.mxu0 %v13144
    %13281 = vmatprep.subr.mxu0 0.0
    %13282 = vmatpush2.msra.mxu0 %v13143
    %13283 = vmatprep.subr.mxu0 0.0
    %13284 = vmatpush2.msra.mxu0 %v13142
    %13285 = vmatprep.subr.mxu0 0.0
    %13286 = vmatpush2.msra.mxu0 %v13141
    %13287 = vmatprep.subr.mxu0 0.0
    %13288 = vmatpush2.msra.mxu0 %v13140
    %13289 = vmatprep.subr.mxu0 0.0
    %13290 = vmatpush2.msra.mxu0 %v13139
    %13291 = vmatprep.subr.mxu0 0.0
    %13292 = vmatpush2.msra.mxu0 %v13138
    %13293 = vmatprep.subr.mxu0 0.0
    %13294 = vmatpush2.msra.mxu0 %v13137
    %13295 = vmatprep.subr.mxu0 0.0
    %13296 = vmatpush2.msra.mxu0 %v13136
    %13297 = vmatprep.subr.mxu0 0.0
    %13298 = vmatpush2.msra.mxu0 %v13135
    %13299 = vmatprep.subr.mxu0 0.0
    %13300 = vmatpush2.msra.mxu0 %v13134
    %13301 = vmatprep.subr.mxu0 0.0
    %13302 = vmatpush2.msra.mxu0 %v13133
    %13303 = vmatprep.subr.mxu0 0.0
    %13304 = vmatpush2.msra.mxu0 %v13132
    %13305 = vmatprep.subr.mxu0 0.0
    %13306 = vmatpush2.msra.mxu0 %v13131
    %13307 = vmatprep.mubr.f32.mxu0 %v13232
    %13308 = vmatmul.mubr.f32.gmra.mxu0 %v13231
    %v13309 = vpop.f32.mrf.mxu0
    %v13310 = vadd.f32 %v13216, %v13309
    %v13311 = vpop.f32.mrf.mxu0
    %13312 = vdwg.mxu0
    %13313 = vmatprep.subr.mxu0 0.0
    %13314 = vmatpush1.msra.mxu0 %v13162
    %13315 = vmatprep.subr.mxu0 0.0
    %13316 = vmatpush1.msra.mxu0 %v13161
    %13317 = vmatprep.subr.mxu0 0.0
    %13318 = vmatpush1.msra.mxu0 %v13160
    %13319 = vmatprep.subr.mxu0 0.0
    %13320 = vmatpush1.msra.mxu0 %v13159
    %13321 = vmatprep.subr.mxu0 0.0
    %13322 = vmatpush1.msra.mxu0 %v13158
    %13323 = vmatprep.subr.mxu0 0.0
    %13324 = vmatpush1.msra.mxu0 %v13157
    %13325 = vmatprep.subr.mxu0 0.0
    %13326 = vmatpush1.msra.mxu0 %v13156
    %13327 = vmatprep.subr.mxu0 0.0
    %13328 = vmatpush1.msra.mxu0 %v13155
    %13329 = vmatprep.subr.mxu0 0.0
    %13330 = vmatpush1.msra.mxu0 %v13154
    %13331 = vmatprep.subr.mxu0 0.0
    %13332 = vmatpush1.msra.mxu0 %v13153
    %13333 = vmatprep.subr.mxu0 0.0
    %13334 = vmatpush1.msra.mxu0 %v13152
    %13335 = vmatprep.subr.mxu0 0.0
    %13336 = vmatpush1.msra.mxu0 %v13151
    %13337 = vmatprep.subr.mxu0 0.0
    %13338 = vmatpush1.msra.mxu0 %v13150
    %13339 = vmatprep.subr.mxu0 0.0
    %13340 = vmatpush1.msra.mxu0 %v13149
    %13341 = vmatprep.subr.mxu0 0.0
    %13342 = vmatpush1.msra.mxu0 %v13148
    %13343 = vmatprep.subr.mxu0 0.0
    %13344 = vmatpush1.msra.mxu0 %v13147
    %13345 = vmatprep.subr.mxu0 0.0
    %13346 = vmatpush2.msra.mxu0 %v13178
    %13347 = vmatprep.subr.mxu0 0.0
    %13348 = vmatpush2.msra.mxu0 %v13177
    %13349 = vmatprep.subr.mxu0 0.0
    %13350 = vmatpush2.msra.mxu0 %v13176
    %13351 = vmatprep.subr.mxu0 0.0
    %13352 = vmatpush2.msra.mxu0 %v13175
    %13353 = vmatprep.subr.mxu0 0.0
    %13354 = vmatpush2.msra.mxu0 %v13174
    %13355 = vmatprep.subr.mxu0 0.0
    %13356 = vmatpush2.msra.mxu0 %v13173
    %13357 = vmatprep.subr.mxu0 0.0
    %13358 = vmatpush2.msra.mxu0 %v13172
    %13359 = vmatprep.subr.mxu0 0.0
    %13360 = vmatpush2.msra.mxu0 %v13171
    %13361 = vmatprep.subr.mxu0 0.0
    %13362 = vmatpush2.msra.mxu0 %v13170
    %13363 = vmatprep.subr.mxu0 0.0
    %13364 = vmatpush2.msra.mxu0 %v13169
    %13365 = vmatprep.subr.mxu0 0.0
    %13366 = vmatpush2.msra.mxu0 %v13168
    %13367 = vmatprep.subr.mxu0 0.0
    %13368 = vmatpush2.msra.mxu0 %v13167
    %13369 = vmatprep.subr.mxu0 0.0
    %13370 = vmatpush2.msra.mxu0 %v13166
    %13371 = vmatprep.subr.mxu0 0.0
    %13372 = vmatpush2.msra.mxu0 %v13165
    %13373 = vmatprep.subr.mxu0 0.0
    %13374 = vmatpush2.msra.mxu0 %v13164
    %13375 = vmatprep.subr.mxu0 0.0
    %13376 = vmatpush2.msra.mxu0 %v13163
    %13377 = vmatprep.mubr.f32.mxu0 %v13234
    %13378 = vmatmul.mubr.f32.gmra.mxu0 %v13233
    %v13379 = vpop.f32.mrf.mxu0
    %v13380 = vadd.f32 %v13310, %v13379
    %v13381 = vpop.f32.mrf.mxu0
    %13382 = vdwg.mxu0
    %13383 = vmatprep.subr.mxu0 0.0
    %13384 = vmatpush1.msra.mxu0 %v13194
    %13385 = vmatprep.subr.mxu0 0.0
    %13386 = vmatpush1.msra.mxu0 %v13193
    %13387 = vmatprep.subr.mxu0 0.0
    %13388 = vmatpush1.msra.mxu0 %v13192
    %13389 = vmatprep.subr.mxu0 0.0
    %13390 = vmatpush1.msra.mxu0 %v13191
    %13391 = vmatprep.subr.mxu0 0.0
    %13392 = vmatpush1.msra.mxu0 %v13190
    %13393 = vmatprep.subr.mxu0 0.0
    %13394 = vmatpush1.msra.mxu0 %v13189
    %13395 = vmatprep.subr.mxu0 0.0
    %13396 = vmatpush1.msra.mxu0 %v13188
    %13397 = vmatprep.subr.mxu0 0.0
    %13398 = vmatpush1.msra.mxu0 %v13187
    %13399 = vmatprep.subr.mxu0 0.0
    %13400 = vmatpush1.msra.mxu0 %v13186
    %13401 = vmatprep.subr.mxu0 0.0
    %13402 = vmatpush1.msra.mxu0 %v13185
    %13403 = vmatprep.subr.mxu0 0.0
    %13404 = vmatpush1.msra.mxu0 %v13184
    %13405 = vmatprep.subr.mxu0 0.0
    %13406 = vmatpush1.msra.mxu0 %v13183
    %13407 = vmatprep.subr.mxu0 0.0
    %13408 = vmatpush1.msra.mxu0 %v13182
    %13409 = vmatprep.subr.mxu0 0.0
    %13410 = vmatpush1.msra.mxu0 %v13181
    %13411 = vmatprep.subr.mxu0 0.0
    %13412 = vmatpush1.msra.mxu0 %v13180
    %13413 = vmatprep.subr.mxu0 0.0
    %13414 = vmatpush1.msra.mxu0 %v13179
    %13415 = vmatprep.subr.mxu0 0.0
    %13416 = vmatpush2.msra.mxu0 %v13210
    %13417 = vmatprep.subr.mxu0 0.0
    %13418 = vmatpush2.msra.mxu0 %v13209
    %13419 = vmatprep.subr.mxu0 0.0
    %13420 = vmatpush2.msra.mxu0 %v13208
    %13421 = vmatprep.subr.mxu0 0.0
    %13422 = vmatpush2.msra.mxu0 %v13207
    %13423 = vmatprep.subr.mxu0 0.0
    %13424 = vmatpush2.msra.mxu0 %v13206
    %13425 = vmatprep.subr.mxu0 0.0
    %13426 = vmatpush2.msra.mxu0 %v13205
    %13427 = vmatprep.subr.mxu0 0.0
    %13428 = vmatpush2.msra.mxu0 %v13204
    %13429 = vmatprep.subr.mxu0 0.0
    %13430 = vmatpush2.msra.mxu0 %v13203
    %13431 = vmatprep.subr.mxu0 0.0
    %13432 = vmatpush2.msra.mxu0 %v13202
    %13433 = vmatprep.subr.mxu0 0.0
    %13434 = vmatpush2.msra.mxu0 %v13201
    %13435 = vmatprep.subr.mxu0 0.0
    %13436 = vmatpush2.msra.mxu0 %v13200
    %13437 = vmatprep.subr.mxu0 0.0
    %13438 = vmatpush2.msra.mxu0 %v13199
    %13439 = vmatprep.subr.mxu0 0.0
    %13440 = vmatpush2.msra.mxu0 %v13198
    %13441 = vmatprep.subr.mxu0 0.0
    %13442 = vmatpush2.msra.mxu0 %v13197
    %13443 = vmatprep.subr.mxu0 0.0
    %13444 = vmatpush2.msra.mxu0 %v13196
    %13445 = vmatprep.subr.mxu0 0.0
    %13446 = vmatpush2.msra.mxu0 %v13195
    %13447 = vmatprep.mubr.f32.mxu0 %v13236
    %13448 = vmatmul.mubr.f32.gmra.mxu0 %v13235
    %v13449 = vpop.f32.mrf.mxu0
    %v13450 = vadd.f32 %v13380, %v13449
    %v13451 = vpop.f32.mrf.mxu0
    %13452 = vdwg.mxu0
    %v13453 = vtanh.pop %v13450
    %v13454 = vld [vmem:[#allocation14] sm:$0xff]
    %v13455 = vld [vmem:[#allocation14 + $0x8] sm:$0xff]
    %v13456 = vld [vmem:[#allocation16] sm:$0x1]
    %v13458 = vlaneseq
    %v13459 = vshrl.u32 %v13458, 7
    %v13460 = vsub.s32 0, %v13459
    %v13461 = vrot.slane %v13456, %v13460
    %vm13463 = vcmask 130048
    %v13465 = vsel %vm13463, %v13453, 0
    %13467 = vmatprep.subr.mxu0 0.0
    %13468 = vmatpush1.msra.mxu0 0.0
    %13469 = vmatprep.subr.mxu0 0.0
    %13470 = vmatpush1.msra.mxu0 0.0
    %13471 = vmatprep.subr.mxu0 0.0
    %13472 = vmatpush1.msra.mxu0 0.0
    %13473 = vmatprep.subr.mxu0 0.0
    %13474 = vmatpush1.msra.mxu0 0.0
    %13475 = vmatprep.subr.mxu0 0.0
    %13476 = vmatpush1.msra.mxu0 0.0
    %13477 = vmatprep.subr.mxu0 0.0
    %13478 = vmatpush1.msra.mxu0 0.0
    %13479 = vmatprep.subr.mxu0 0.0
    %13480 = vmatpush1.msra.mxu0 0.0
    %13481 = vmatprep.subr.mxu0 0.0
    %13482 = vmatpush1.msra.mxu0 0.0
    %13483 = vmatprep.subr.mxu0 0.0
    %13484 = vmatpush1.msra.mxu0 0.0
    %13485 = vmatprep.subr.mxu0 0.0
    %13486 = vmatpush1.msra.mxu0 0.0
    %13487 = vmatprep.subr.mxu0 0.0
    %13488 = vmatpush1.msra.mxu0 0.0
    %13489 = vmatprep.subr.mxu0 0.0
    %13490 = vmatpush1.msra.mxu0 0.0
    %13491 = vmatprep.subr.mxu0 0.0
    %13492 = vmatpush1.msra.mxu0 0.0
    %13493 = vmatprep.subr.mxu0 0.0
    %13494 = vmatpush1.msra.mxu0 0.0
    %13495 = vmatprep.subr.mxu0 0.0
    %13496 = vmatpush1.msra.mxu0 %v13455
    %13497 = vmatprep.subr.mxu0 0.0
    %13498 = vmatpush1.msra.mxu0 %v13454
    %13499 = vmatprep.subr.mxu0 0.0
    %13500 = vmatpush2.msra.mxu0 0.0
    %13501 = vmatprep.subr.mxu0 0.0
    %13502 = vmatpush2.msra.mxu0 0.0
    %13503 = vmatprep.subr.mxu0 0.0
    %13504 = vmatpush2.msra.mxu0 0.0
    %13505 = vmatprep.subr.mxu0 0.0
    %13506 = vmatpush2.msra.mxu0 0.0
    %13507 = vmatprep.subr.mxu0 0.0
    %13508 = vmatpush2.msra.mxu0 0.0
    %13509 = vmatprep.subr.mxu0 0.0
    %13510 = vmatpush2.msra.mxu0 0.0
    %13511 = vmatprep.subr.mxu0 0.0
    %13512 = vmatpush2.msra.mxu0 0.0
    %13513 = vmatprep.subr.mxu0 0.0
    %13514 = vmatpush2.msra.mxu0 0.0
    %13515 = vmatprep.subr.mxu0 0.0
    %13516 = vmatpush2.msra.mxu0 0.0
    %13517 = vmatprep.subr.mxu0 0.0
    %13518 = vmatpush2.msra.mxu0 0.0
    %13519 = vmatprep.subr.mxu0 0.0
    %13520 = vmatpush2.msra.mxu0 0.0
    %13521 = vmatprep.subr.mxu0 0.0
    %13522 = vmatpush2.msra.mxu0 0.0
    %13523 = vmatprep.subr.mxu0 0.0
    %13524 = vmatpush2.msra.mxu0 0.0
    %13525 = vmatprep.subr.mxu0 0.0
    %13526 = vmatpush2.msra.mxu0 0.0
    %13527 = vmatprep.subr.mxu0 0.0
    %13528 = vmatpush2.msra.mxu0 0.0
    %13529 = vmatprep.subr.mxu0 0.0
    %13530 = vmatpush2.msra.mxu0 0.0
    %13531 = vmatprep.mubr.f32.mxu0 0.0
    %13532 = vmatmul.mubr.f32.gmra.mxu0 %v13465
    %v13533 = vpop.f32.mrf.mxu0
    %v13534 = vadd.f32 %v13461, %v13533
    %v13535 = vpop.f32.mrf.mxu0
    %13536 = vdwg.mxu0
    %13537 = vst [vmem:[#allocation17] sm:$0x3] %v13534
    // Predicated region
    $region82: #{tpu_custom_call.1} parent=1 // pred_check
      _
    $region83: #{tpu_custom_call.1} parent=1 // pred_check_branch
      %13539 = sbr.rel (0) target = $region85
    $region84: #{tpu_custom_call.1} parent=1 // pred_region
      %s13541 = ssub.s32 32, 32
      %13542 = vsyncadd [#allocation4], %s13541
      %s13544 = sshll.u32 [#allocation17], 4
      %s13545 = int_to_ptr.vmem [resolvable:$true] %s13544
      %13547 = dma.vmem_to_hbm [thread:$0]  %s13545, 32, %s11, [#allocation4]
    $region85: #{tpu_custom_call.1} parent=1 // pred_fallthru
      _
    // Predicated region
    $region86: #{tpu_custom_call.1} parent=1 // pred_check
      _
    $region87: #{tpu_custom_call.1} parent=1 // pred_check_branch
      %13549 = sbr.rel (0) target = $region89
    $region88: #{tpu_custom_call.1} parent=1 // pred_region
      %13550 = dma.done [#allocation4], 32
    $region89: #{tpu_custom_call.1} parent=1 // pred_fallthru
      _
    %13551 = vsyncpa [#allocation3], 1
    %13552 = vsyncpa [#allocation6], 1
    %13553 = vsyncpa [#allocation9], 1
    %13554 = vsyncpa [#allocation12], 1
    %13555 = vsyncpa [#allocation15], 1
    %13556 = vsyncpa [#allocation4], 1

</llo_original>
